<compile_context>
chip_gen: v7x
topology: tpu7x:2x2x1
jax: 0.10.0
libtpu: 0.0.40
codegen_flags: <defaults>
</compile_context>

<pallas_src>
import functools

import jax
import jax.numpy as jnp
from jax.experimental import pallas as pl
from jax.experimental.pallas import tpu as pltpu

EPS = 1e-5
VMEM_LIMIT = 32 * 1024 * 1024

_VMEM = pl.BlockSpec(memory_space=pltpu.MemorySpace.VMEM)


# ------------------------- Pallas kernels -------------------------

def _stem_kernel(p_ref, w_ref, shift_ref, o_ref):
    """Stem conv as one GEMM: (N*Ho, 7*W*Cin) @ (7*W*Cin, Wo*C0) + shift, ReLU.

    Output rows are (n, i) and columns are (j, c): the last dim is Wo*C0 = 128
    lanes, so stores are unmasked / lane-dense.  bf16 MXU inputs, f32 epilogue.
    """
    acc = jnp.dot(p_ref[...], w_ref[...], preferred_element_type=jnp.float32)
    acc = acc + shift_ref[...]
    o_ref[...] = jnp.maximum(acc, 0.0).astype(o_ref.dtype)


def _backbone_heads_kernel(*refs, plan):
    """Entire post-pool backbone (8 BasicBlocks) + all six folded heads +
    final FC in a single VMEM-resident kernel.

    refs = [flat0,
            {W1, shift1, W2, shift_tail, (Wd)} x 8 blocks,
            V0..V4, head_bias, out]

    Activations stay as (N, H*W*C) bf16 values (NHWC flatten order); each conv
    is one MXU matmul against its pre-unrolled, BN-scale-folded weight matrix.
    Accumulation / shift / residual / ReLU epilogues are f32 (v5e-safe).
    """
    out_ref = refs[-1]
    idx = 0
    x = refs[idx][...]                      # (N, F0) bf16
    idx += 1
    stage = [x]                             # stage[0] = x0 (post stem+pool)

    for has_down in plan:
        w1, s1, w2, st = refs[idx], refs[idx + 1], refs[idx + 2], refs[idx + 3]
        idx += 4
        # conv1 + BN + ReLU
        mid = jnp.dot(x, w1[...], preferred_element_type=jnp.float32) + s1[...]
        mid = jnp.maximum(mid, 0.0).astype(jnp.bfloat16)
        # conv2 + BN (+ downsample conv+BN | identity) + add + ReLU
        acc = jnp.dot(mid, w2[...], preferred_element_type=jnp.float32) + st[...]
        if has_down:
            acc = acc + jnp.dot(x, refs[idx][...],
                                preferred_element_type=jnp.float32)
            idx += 1
        else:
            acc = acc + x.astype(jnp.float32)
        x = jnp.maximum(acc, 0.0).astype(jnp.bfloat16)
        stage.append(x)

    # stage features consumed by the heads: x0, x1(=after block 2), x2, x3, x4
    feats = [stage[0], stage[2], stage[4], stage[6], stage[8]]
    logits = None
    for i in range(5):
        t = jnp.dot(feats[i], refs[idx + i][...],
                    preferred_element_type=jnp.float32)
        logits = t if logits is None else logits + t
    out_ref[...] = logits + refs[idx + 5][...]     # + folded bias, f32 out


# ------------------------- parameter init -------------------------

def _fold_bn(gamma, beta, mean, var):
    scale = gamma / jnp.sqrt(var + EPS)
    shift = beta - mean * scale
    return scale, shift


def _rand_conv_bn(key, kh, kw, cin, cout):
    k = jax.random.split(key, 5)
    w = jax.random.normal(k[0], (kh, kw, cin, cout), jnp.float32) / jnp.sqrt(kh * kw * cin)
    gamma = 1.0 + 0.1 * jax.random.normal(k[1], (cout,), jnp.float32)
    beta = 0.1 * jax.random.normal(k[2], (cout,), jnp.float32)
    mean = 0.1 * jax.random.normal(k[3], (cout,), jnp.float32)
    var = jnp.abs(jax.random.normal(k[4], (cout,), jnp.float32)) * 0.1 + 1.0
    scale, shift = _fold_bn(gamma, beta, mean, var)
    return w, scale, shift


def init_linear(key, fin, fout):
    k1, k2 = jax.random.split(key)
    w = jax.random.normal(k1, (fin, fout), jnp.float32) / jnp.sqrt(fin)
    b = 0.1 * jax.random.normal(k2, (fout,), jnp.float32)
    return w, b


def conv_matrix(k_hwio, in_hwc, stride, padding, scale):
    """Exact matrix of eval-mode (conv2d + folded BN scale) on the NHWC-flat
    input: flat_out = flat_in @ M.

    Built once at INIT by pushing the identity basis through lax.conv -- this
    is weight preprocessing only (no runtime activation data ever goes through
    an XLA conv).  The fold is done in f32, the result is cast to bf16 later.
    """
    Hi, Wi, Ci = in_hwc
    k = (k_hwio * scale[None, None, None, :]).astype(jnp.float32)
    Co = k.shape[-1]
    basis = jnp.eye(Hi * Wi * Ci, dtype=jnp.float32).reshape(Hi * Wi * Ci, Hi, Wi, Ci)
    out = jax.lax.conv_general_dilated(
        basis, k, window_strides=(stride, stride),
        padding=((padding, padding), (padding, padding)),
        dimension_numbers=('NHWC', 'HWIO', 'NHWC'),
        precision=jax.lax.Precision.HIGHEST)
    Ho, Wo = out.shape[1], out.shape[2]
    return out.reshape(Hi * Wi * Ci, Ho * Wo * Co), (Ho, Wo, Co)


def init_block_flat(key, in_hwc, cout, stride):
    """BasicBlock in flat/unrolled-weight form (BN scale folded, shifts flat)."""
    k = jax.random.split(key, 3)
    Hi, Wi, Ci = in_hwc
    w1, s1, sh1 = _rand_conv_bn(k[0], 3, 3, Ci, cout)
    W1, out_hwc = conv_matrix(w1, in_hwc, stride, 1, s1)
    Ho, Wo, _ = out_hwc
    w2, s2, sh2 = _rand_conv_bn(k[1], 3, 3, cout, cout)
    W2, _ = conv_matrix(w2, out_hwc, 1, 1, s2)
    shift_tail = jnp.tile(sh2, Ho * Wo)
    blk = dict(W1=W1.astype(jnp.bfloat16),
               shift1=jnp.tile(sh1, Ho * Wo).reshape(1, -1).astype(jnp.float32),
               W2=W2.astype(jnp.bfloat16))
    if stride != 1 or Ci != cout:
        wd, sd, shd = _rand_conv_bn(k[2], 1, 1, Ci, cout)
        Wd, _ = conv_matrix(wd, in_hwc, stride, 0, sd)
        blk['Wd'] = Wd.astype(jnp.bfloat16)
        shift_tail = shift_tail + jnp.tile(shd, Ho * Wo)   # pre-sum ds shift
    blk['shift_tail'] = shift_tail.reshape(1, -1).astype(jnp.float32)
    return blk, out_hwc


def init_model(key, n_class=7, c0=8, input_size=32):
    keys = iter(jax.random.split(key, 64))
    params = {'n_class': n_class, 'c0': c0}

    # ---- stem: 7x7 s2 p3 conv + BN.  W-direction taps + W-padding are
    #      unrolled into the weight matrix; H-direction taps come from 7
    #      cheap shifted slices in the wrapper.
    w7, sc, sh = _rand_conv_bn(next(keys), 7, 7, 3, c0)
    Wi = input_size
    Ho = Wo = (input_size + 2 * 3 - 7) // 2 + 1
    kf = (w7 * sc[None, None, None, :]).astype(jnp.float32)
    basis = jnp.eye(7 * Wi * 3, dtype=jnp.float32).reshape(7 * Wi * 3, 7, Wi, 3)
    srm = jax.lax.conv_general_dilated(
        basis, kf, window_strides=(1, 2), padding=((0, 0), (3, 3)),
        dimension_numbers=('NHWC', 'HWIO', 'NHWC'),
        precision=jax.lax.Precision.HIGHEST)        # (7*Wi*3, 1, Wo, c0)
    params['stem_W'] = srm.reshape(7 * Wi * 3, Wo * c0).astype(jnp.bfloat16)
    params['stem_shift'] = jnp.tile(sh, Wo).reshape(1, -1).astype(jnp.float32)
    params['stem_hw'] = (Ho, Wo)

    # ---- backbone blocks ----
    sp = (Ho + 2 * 1 - 3) // 2 + 1                  # after maxpool 3x3 s2 p1
    cur = (sp, sp, c0)
    stage_hwc = [cur]
    blocks, plan = [], []
    for li, cout in enumerate([c0, 2 * c0, 4 * c0, 8 * c0]):
        stride = 1 if li == 0 else 2
        for bi in range(2):
            blk, cur = init_block_flat(next(keys), cur, cout,
                                       stride if bi == 0 else 1)
            blocks.append(blk)
            plan.append('Wd' in blk)
        stage_hwc.append(cur)
    params['blocks'] = blocks
    params['plan'] = tuple(plan)

    # ---- heads: side conv1x1+BN+Dropout(id)+FC (x5), avgpool+fc5, and the
    #      final agg FC, exactly pre-folded into five matrices + one bias.
    Wf, bf_ = init_linear(next(keys), n_class * 6, n_class)
    head_V, b_acc = [], bf_
    for i, (H, W, C) in enumerate(stage_hwc):
        sk = jax.random.split(next(keys), 6)
        w_side = jax.random.normal(sk[0], (C,), jnp.float32) / jnp.sqrt(C)
        bias = 0.1 * jax.random.normal(sk[1], (1,), jnp.float32)
        gamma = 1.0 + 0.1 * jax.random.normal(sk[2], (1,), jnp.float32)
        beta = 0.1 * jax.random.normal(sk[3], (1,), jnp.float32)
        mean = 0.1 * jax.random.normal(sk[4], (1,), jnp.float32)
        var = jnp.abs(jax.random.normal(sk[5], (1,), jnp.float32)) * 0.1 + 1.0
        Wfc, bfc = init_linear(next(keys), H * W, n_class)
        bn_scale = (gamma / jnp.sqrt(var + EPS))[0]
        a = w_side * bn_scale                              # per-channel weight
        d = (bias[0] - mean[0]) * bn_scale + beta[0]       # constant offset
        # NHWC flat index order is (h*W + w)*C + c
        W_i = (Wfc[:, None, :] * a[None, :, None]).reshape(H * W * C, n_class)
        b_i = bfc + d * jnp.sum(Wfc, axis=0)
        Wf_i = Wf[n_class * i:n_class * (i + 1), :]
        head_V.append(W_i @ Wf_i)
        b_acc = b_acc + b_i @ Wf_i
    # head 5 (global avgpool + fc5) also acts on flat(x4)
    H4, W4, C4 = stage_hwc[-1]
    Wfc5, b5 = init_linear(next(keys), C4, n_class)
    W5 = jnp.broadcast_to(Wfc5[None, :, :] / float(H4 * W4),
                          (H4 * W4, C4, n_class)).reshape(H4 * W4 * C4, n_class)
    Wf_5 = Wf[n_class * 5:n_class * 6, :]
    head_V[4] = head_V[4] + W5 @ Wf_5
    b_acc = b_acc + b5 @ Wf_5
    params['head_V'] = [v.astype(jnp.bfloat16) for v in head_V]
    params['head_b'] = b_acc.reshape(1, n_class).astype(jnp.float32)
    return params


# ------------------------- forward pass -------------------------

def deep_branch_resnet_forward(params, x_nchw):
    n_class = params['n_class']
    c0 = params['c0']
    Ho, Wo = params['stem_hw']

    # boundary conversion: PyTorch NCHW -> internal NHWC, bf16 activations
    x = jnp.transpose(x_nchw, (0, 2, 3, 1)).astype(jnp.bfloat16)
    N, H, W, C = x.shape

    # Stem patches: pad H only and take 7 H-taps at stride 2 -> (N*Ho, 7*W*C).
    # W-direction taps/padding are already folded into params['stem_W'].
    xh = jnp.pad(x, ((0, 0), (3, 3), (0, 0), (0, 0)))
    taps = [xh[:, u:u + 2 * Ho:2, :, :] for u in range(7)]
    p = jnp.stack(taps, axis=2).reshape(N * Ho, 7 * W * C)

    stem = pl.pallas_call(
        _stem_kernel,
        out_shape=jax.ShapeDtypeStruct((N * Ho, Wo * c0), jnp.bfloat16),
        in_specs=[_VMEM] * 3,
        out_specs=_VMEM,
        compiler_params=pltpu.CompilerParams(vmem_limit_bytes=VMEM_LIMIT),
    )(p, params['stem_W'], params['stem_shift'])

    # MaxPool 3x3 s2 p1 in the wrapper (lax.reduce_window), as recommended:
    # no standalone Pallas call, no 9x tap materialization kernel.
    x0 = stem.reshape(N, Ho, Wo, c0)
    x0 = jax.lax.reduce_window(
        x0, jnp.array(-jnp.inf, x0.dtype), jax.lax.max,
        window_dimensions=(1, 3, 3, 1), window_strides=(1, 2, 2, 1),
        padding=((0, 0), (1, 1), (1, 1), (0, 0)))
    flat0 = x0.reshape(N, -1)                        # (N, 8*8*c0) bf16

    # Whole post-pool backbone + all heads + final FC in ONE Pallas call.
    ins = [flat0]
    for blk in params['blocks']:
        ins += [blk['W1'], blk['shift1'], blk['W2'], blk['shift_tail']]
        if 'Wd' in blk:
            ins.append(blk['Wd'])
    ins += list(params['head_V'])
    ins.append(params['head_b'])

    kernel = functools.partial(_backbone_heads_kernel, plan=params['plan'])
    return pl.pallas_call(
        kernel,
        out_shape=jax.ShapeDtypeStruct((N, n_class), jnp.float32),
        in_specs=[_VMEM] * len(ins),
        out_specs=_VMEM,
        compiler_params=pltpu.CompilerParams(vmem_limit_bytes=VMEM_LIMIT),
    )(*ins)


# ------------------------- main -------------------------

if __name__ == "__main__":
    key = jax.random.PRNGKey(0)
    pkey, xkey = jax.random.split(key)

    N_CLASS = 7
    params = init_model(pkey, n_class=N_CLASS, c0=8, input_size=32)

    # small input consistent with the module (NCHW, 3 input channels)
    x = jax.random.normal(xkey, (2, 3, 32, 32), jnp.float32)

    fwd = jax.jit(lambda inp: deep_branch_resnet_forward(params, inp))
    out = fwd(x)
    jax.block_until_ready(out)
    assert out.shape == (2, N_CLASS), out.shape
    assert bool(jnp.all(jnp.isfinite(out)))
    print("KERNEL_OK")
</pallas_src>

<mosaic_0001>
module attributes {stable_mosaic.version = 11 : i64} {
  func.func @_stem_kernel(%arg0: memref<32x672xbf16, #tpu.memory_space<vmem>>, %arg1: memref<672x128xbf16, #tpu.memory_space<vmem>>, %arg2: memref<1x128xf32, #tpu.memory_space<vmem>>, %arg3: memref<32x128xbf16, #tpu.memory_space<vmem>>) attributes {dimension_semantics = [], scalar_prefetch = 0 : i64, scratch_operands = 0 : i64, tpu.core_type = #tpu.core_type<tc>} {
    %c0 = arith.constant 0 : index
    %c0_0 = arith.constant 0 : index
    %0 = vector.load %arg0[%c0, %c0_0] : memref<32x672xbf16, #tpu.memory_space<vmem>>, vector<32x672xbf16>
    %c0_1 = arith.constant 0 : index
    %c0_2 = arith.constant 0 : index
    %1 = vector.load %arg1[%c0_1, %c0_2] : memref<672x128xbf16, #tpu.memory_space<vmem>>, vector<672x128xbf16>
    %cst = arith.constant dense<0.000000e+00> : vector<32x128xf32>
    %2 = tpu.matmul %0, %1, %cst {dimension_numbers = #tpu.dot_dimension_numbers<[1], [0], [0], [1], [0, 0, 1, 1], [], []>} : vector<32x672xbf16>, vector<672x128xbf16>, vector<32x128xf32> -> vector<32x128xf32>
    %c0_3 = arith.constant 0 : index
    %c0_4 = arith.constant 0 : index
    %3 = vector.load %arg2[%c0_3, %c0_4] : memref<1x128xf32, #tpu.memory_space<vmem>>, vector<1x128xf32>
    %4 = vector.broadcast %3 : vector<1x128xf32> to vector<32x128xf32>
    %5 = arith.addf %2, %4 : vector<32x128xf32>
    %cst_5 = arith.constant 0.000000e+00 : f32
    %6 = vector.broadcast %cst_5 : f32 to vector<32x128xf32>
    %7 = arith.maximumf %5, %6 : vector<32x128xf32>
    %8 = arith.truncf %7 : vector<32x128xf32> to vector<32x128xbf16>
    %c0_6 = arith.constant 0 : index
    %c0_7 = arith.constant 0 : index
    %9 = vector.load %arg3[%c0_6, %c0_7] : memref<32x128xbf16, #tpu.memory_space<vmem>>, vector<32x128xbf16>
    tpu.vector_store %arg3[%c0_6, %c0_7], %8 {strides = array<i32>} : memref<32x128xbf16, #tpu.memory_space<vmem>>, vector<32x128xbf16>,
    return
  }
}

module attributes {stable_mosaic.version = 11 : i64} {
  func.func @_backbone_heads_kernel(%arg0: memref<2x512xbf16, #tpu.memory_space<vmem>>, %arg1: memref<512x512xbf16, #tpu.memory_space<vmem>>, %arg2: memref<1x512xf32, #tpu.memory_space<vmem>>, %arg3: memref<512x512xbf16, #tpu.memory_space<vmem>>, %arg4: memref<1x512xf32, #tpu.memory_space<vmem>>, %arg5: memref<512x512xbf16, #tpu.memory_space<vmem>>, %arg6: memref<1x512xf32, #tpu.memory_space<vmem>>, %arg7: memref<512x512xbf16, #tpu.memory_space<vmem>>, %arg8: memref<1x512xf32, #tpu.memory_space<vmem>>, %arg9: memref<512x256xbf16, #tpu.memory_space<vmem>>, %arg10: memref<1x256xf32, #tpu.memory_space<vmem>>, %arg11: memref<256x256xbf16, #tpu.memory_space<vmem>>, %arg12: memref<1x256xf32, #tpu.memory_space<vmem>>, %arg13: memref<512x256xbf16, #tpu.memory_space<vmem>>, %arg14: memref<256x256xbf16, #tpu.memory_space<vmem>>, %arg15: memref<1x256xf32, #tpu.memory_space<vmem>>, %arg16: memref<256x256xbf16, #tpu.memory_space<vmem>>, %arg17: memref<1x256xf32, #tpu.memory_space<vmem>>, %arg18: memref<256x128xbf16, #tpu.memory_space<vmem>>, %arg19: memref<1x128xf32, #tpu.memory_space<vmem>>, %arg20: memref<128x128xbf16, #tpu.memory_space<vmem>>, %arg21: memref<1x128xf32, #tpu.memory_space<vmem>>, %arg22: memref<256x128xbf16, #tpu.memory_space<vmem>>, %arg23: memref<128x128xbf16, #tpu.memory_space<vmem>>, %arg24: memref<1x128xf32, #tpu.memory_space<vmem>>, %arg25: memref<128x128xbf16, #tpu.memory_space<vmem>>, %arg26: memref<1x128xf32, #tpu.memory_space<vmem>>, %arg27: memref<128x64xbf16, #tpu.memory_space<vmem>>, %arg28: memref<1x64xf32, #tpu.memory_space<vmem>>, %arg29: memref<64x64xbf16, #tpu.memory_space<vmem>>, %arg30: memref<1x64xf32, #tpu.memory_space<vmem>>, %arg31: memref<128x64xbf16, #tpu.memory_space<vmem>>, %arg32: memref<64x64xbf16, #tpu.memory_space<vmem>>, %arg33: memref<1x64xf32, #tpu.memory_space<vmem>>, %arg34: memref<64x64xbf16, #tpu.memory_space<vmem>>, %arg35: memref<1x64xf32, #tpu.memory_space<vmem>>, %arg36: memref<512x7xbf16, #tpu.memory_space<vmem>>, %arg37: memref<512x7xbf16, #tpu.memory_space<vmem>>, %arg38: memref<256x7xbf16, #tpu.memory_space<vmem>>, %arg39: memref<128x7xbf16, #tpu.memory_space<vmem>>, %arg40: memref<64x7xbf16, #tpu.memory_space<vmem>>, %arg41: memref<1x7xf32, #tpu.memory_space<vmem>>, %arg42: memref<2x7xf32, #tpu.memory_space<vmem>>) attributes {dimension_semantics = [], scalar_prefetch = 0 : i64, scratch_operands = 0 : i64, tpu.core_type = #tpu.core_type<tc>} {
    %c0 = arith.constant 0 : index
    %c0_0 = arith.constant 0 : index
    %0 = vector.load %arg0[%c0, %c0_0] : memref<2x512xbf16, #tpu.memory_space<vmem>>, vector<2x512xbf16>
    %c0_1 = arith.constant 0 : index
    %c0_2 = arith.constant 0 : index
    %1 = vector.load %arg1[%c0_1, %c0_2] : memref<512x512xbf16, #tpu.memory_space<vmem>>, vector<512x512xbf16>
    %cst = arith.constant dense<0.000000e+00> : vector<2x512xf32>
    %2 = tpu.matmul %0, %1, %cst {dimension_numbers = #tpu.dot_dimension_numbers<[1], [0], [0], [1], [0, 0, 1, 1], [], []>} : vector<2x512xbf16>, vector<512x512xbf16>, vector<2x512xf32> -> vector<2x512xf32>
    %c0_3 = arith.constant 0 : index
    %c0_4 = arith.constant 0 : index
    %3 = vector.load %arg2[%c0_3, %c0_4] : memref<1x512xf32, #tpu.memory_space<vmem>>, vector<1x512xf32>
    %4 = vector.broadcast %3 : vector<1x512xf32> to vector<2x512xf32>
    %5 = arith.addf %2, %4 : vector<2x512xf32>
    %cst_5 = arith.constant 0.000000e+00 : f32
    %6 = vector.broadcast %cst_5 : f32 to vector<2x512xf32>
    %7 = arith.maximumf %5, %6 : vector<2x512xf32>
    %8 = arith.truncf %7 : vector<2x512xf32> to vector<2x512xbf16>
    %c0_6 = arith.constant 0 : index
    %c0_7 = arith.constant 0 : index
    %9 = vector.load %arg3[%c0_6, %c0_7] : memref<512x512xbf16, #tpu.memory_space<vmem>>, vector<512x512xbf16>
    %cst_8 = arith.constant dense<0.000000e+00> : vector<2x512xf32>
    %10 = tpu.matmul %8, %9, %cst_8 {dimension_numbers = #tpu.dot_dimension_numbers<[1], [0], [0], [1], [0, 0, 1, 1], [], []>} : vector<2x512xbf16>, vector<512x512xbf16>, vector<2x512xf32> -> vector<2x512xf32>
    %c0_9 = arith.constant 0 : index
    %c0_10 = arith.constant 0 : index
    %11 = vector.load %arg4[%c0_9, %c0_10] : memref<1x512xf32, #tpu.memory_space<vmem>>, vector<1x512xf32>
    %12 = vector.broadcast %11 : vector<1x512xf32> to vector<2x512xf32>
    %13 = arith.addf %10, %12 : vector<2x512xf32>
    %14 = arith.extf %0 : vector<2x512xbf16> to vector<2x512xf32>
    %15 = arith.addf %13, %14 : vector<2x512xf32>
    %cst_11 = arith.constant 0.000000e+00 : f32
    %16 = vector.broadcast %cst_11 : f32 to vector<2x512xf32>
    %17 = arith.maximumf %15, %16 : vector<2x512xf32>
    %18 = arith.truncf %17 : vector<2x512xf32> to vector<2x512xbf16>
    %c0_12 = arith.constant 0 : index
    %c0_13 = arith.constant 0 : index
    %19 = vector.load %arg5[%c0_12, %c0_13] : memref<512x512xbf16, #tpu.memory_space<vmem>>, vector<512x512xbf16>
    %cst_14 = arith.constant dense<0.000000e+00> : vector<2x512xf32>
    %20 = tpu.matmul %18, %19, %cst_14 {dimension_numbers = #tpu.dot_dimension_numbers<[1], [0], [0], [1], [0, 0, 1, 1], [], []>} : vector<2x512xbf16>, vector<512x512xbf16>, vector<2x512xf32> -> vector<2x512xf32>
    %c0_15 = arith.constant 0 : index
    %c0_16 = arith.constant 0 : index
    %21 = vector.load %arg6[%c0_15, %c0_16] : memref<1x512xf32, #tpu.memory_space<vmem>>, vector<1x512xf32>
    %22 = vector.broadcast %21 : vector<1x512xf32> to vector<2x512xf32>
    %23 = arith.addf %20, %22 : vector<2x512xf32>
    %cst_17 = arith.constant 0.000000e+00 : f32
    %24 = vector.broadcast %cst_17 : f32 to vector<2x512xf32>
    %25 = arith.maximumf %23, %24 : vector<2x512xf32>
    %26 = arith.truncf %25 : vector<2x512xf32> to vector<2x512xbf16>
    %c0_18 = arith.constant 0 : index
    %c0_19 = arith.constant 0 : index
    %27 = vector.load %arg7[%c0_18, %c0_19] : memref<512x512xbf16, #tpu.memory_space<vmem>>, vector<512x512xbf16>
    %cst_20 = arith.constant dense<0.000000e+00> : vector<2x512xf32>
    %28 = tpu.matmul %26, %27, %cst_20 {dimension_numbers = #tpu.dot_dimension_numbers<[1], [0], [0], [1], [0, 0, 1, 1], [], []>} : vector<2x512xbf16>, vector<512x512xbf16>, vector<2x512xf32> -> vector<2x512xf32>
    %c0_21 = arith.constant 0 : index
    %c0_22 = arith.constant 0 : index
    %29 = vector.load %arg8[%c0_21, %c0_22] : memref<1x512xf32, #tpu.memory_space<vmem>>, vector<1x512xf32>
    %30 = vector.broadcast %29 : vector<1x512xf32> to vector<2x512xf32>
    %31 = arith.addf %28, %30 : vector<2x512xf32>
    %32 = arith.extf %18 : vector<2x512xbf16> to vector<2x512xf32>
    %33 = arith.addf %31, %32 : vector<2x512xf32>
    %cst_23 = arith.constant 0.000000e+00 : f32
    %34 = vector.broadcast %cst_23 : f32 to vector<2x512xf32>
    %35 = arith.maximumf %33, %34 : vector<2x512xf32>
    %36 = arith.truncf %35 : vector<2x512xf32> to vector<2x512xbf16>
    %c0_24 = arith.constant 0 : index
    %c0_25 = arith.constant 0 : index
    %37 = vector.load %arg9[%c0_24, %c0_25] : memref<512x256xbf16, #tpu.memory_space<vmem>>, vector<512x256xbf16>
    %cst_26 = arith.constant dense<0.000000e+00> : vector<2x256xf32>
    %38 = tpu.matmul %36, %37, %cst_26 {dimension_numbers = #tpu.dot_dimension_numbers<[1], [0], [0], [1], [0, 0, 1, 1], [], []>} : vector<2x512xbf16>, vector<512x256xbf16>, vector<2x256xf32> -> vector<2x256xf32>
    %c0_27 = arith.constant 0 : index
    %c0_28 = arith.constant 0 : index
    %39 = vector.load %arg10[%c0_27, %c0_28] : memref<1x256xf32, #tpu.memory_space<vmem>>, vector<1x256xf32>
    %40 = vector.broadcast %39 : vector<1x256xf32> to vector<2x256xf32>
    %41 = arith.addf %38, %40 : vector<2x256xf32>
    %cst_29 = arith.constant 0.000000e+00 : f32
    %42 = vector.broadcast %cst_29 : f32 to vector<2x256xf32>
    %43 = arith.maximumf %41, %42 : vector<2x256xf32>
    %44 = arith.truncf %43 : vector<2x256xf32> to vector<2x256xbf16>
    %c0_30 = arith.constant 0 : index
    %c0_31 = arith.constant 0 : index
    %45 = vector.load %arg11[%c0_30, %c0_31] : memref<256x256xbf16, #tpu.memory_space<vmem>>, vector<256x256xbf16>
    %cst_32 = arith.constant dense<0.000000e+00> : vector<2x256xf32>
    %46 = tpu.matmul %44, %45, %cst_32 {dimension_numbers = #tpu.dot_dimension_numbers<[1], [0], [0], [1], [0, 0, 1, 1], [], []>} : vector<2x256xbf16>, vector<256x256xbf16>, vector<2x256xf32> -> vector<2x256xf32>
    %c0_33 = arith.constant 0 : index
    %c0_34 = arith.constant 0 : index
    %47 = vector.load %arg12[%c0_33, %c0_34] : memref<1x256xf32, #tpu.memory_space<vmem>>, vector<1x256xf32>
    %48 = vector.broadcast %47 : vector<1x256xf32> to vector<2x256xf32>
    %49 = arith.addf %46, %48 : vector<2x256xf32>
    %c0_35 = arith.constant 0 : index
    %c0_36 = arith.constant 0 : index
    %50 = vector.load %arg13[%c0_35, %c0_36] : memref<512x256xbf16, #tpu.memory_space<vmem>>, vector<512x256xbf16>
    %cst_37 = arith.constant dense<0.000000e+00> : vector<2x256xf32>
    %51 = tpu.matmul %36, %50, %cst_37 {dimension_numbers = #tpu.dot_dimension_numbers<[1], [0], [0], [1], [0, 0, 1, 1], [], []>} : vector<2x512xbf16>, vector<512x256xbf16>, vector<2x256xf32> -> vector<2x256xf32>
    %52 = arith.addf %49, %51 : vector<2x256xf32>
    %cst_38 = arith.constant 0.000000e+00 : f32
    %53 = vector.broadcast %cst_38 : f32 to vector<2x256xf32>
    %54 = arith.maximumf %52, %53 : vector<2x256xf32>
    %55 = arith.truncf %54 : vector<2x256xf32> to vector<2x256xbf16>
    %c0_39 = arith.constant 0 : index
    %c0_40 = arith.constant 0 : index
    %56 = vector.load %arg14[%c0_39, %c0_40] : memref<256x256xbf16, #tpu.memory_space<vmem>>, vector<256x256xbf16>
    %cst_41 = arith.constant dense<0.000000e+00> : vector<2x256xf32>
    %57 = tpu.matmul %55, %56, %cst_41 {dimension_numbers = #tpu.dot_dimension_numbers<[1], [0], [0], [1], [0, 0, 1, 1], [], []>} : vector<2x256xbf16>, vector<256x256xbf16>, vector<2x256xf32> -> vector<2x256xf32>
    %c0_42 = arith.constant 0 : index
    %c0_43 = arith.constant 0 : index
    %58 = vector.load %arg15[%c0_42, %c0_43] : memref<1x256xf32, #tpu.memory_space<vmem>>, vector<1x256xf32>
    %59 = vector.broadcast %58 : vector<1x256xf32> to vector<2x256xf32>
    %60 = arith.addf %57, %59 : vector<2x256xf32>
    %cst_44 = arith.constant 0.000000e+00 : f32
    %61 = vector.broadcast %cst_44 : f32 to vector<2x256xf32>
    %62 = arith.maximumf %60, %61 : vector<2x256xf32>
    %63 = arith.truncf %62 : vector<2x256xf32> to vector<2x256xbf16>
    %c0_45 = arith.constant 0 : index
    %c0_46 = arith.constant 0 : index
    %64 = vector.load %arg16[%c0_45, %c0_46] : memref<256x256xbf16, #tpu.memory_space<vmem>>, vector<256x256xbf16>
    %cst_47 = arith.constant dense<0.000000e+00> : vector<2x256xf32>
    %65 = tpu.matmul %63, %64, %cst_47 {dimension_numbers = #tpu.dot_dimension_numbers<[1], [0], [0], [1], [0, 0, 1, 1], [], []>} : vector<2x256xbf16>, vector<256x256xbf16>, vector<2x256xf32> -> vector<2x256xf32>
    %c0_48 = arith.constant 0 : index
    %c0_49 = arith.constant 0 : index
    %66 = vector.load %arg17[%c0_48, %c0_49] : memref<1x256xf32, #tpu.memory_space<vmem>>, vector<1x256xf32>
    %67 = vector.broadcast %66 : vector<1x256xf32> to vector<2x256xf32>
    %68 = arith.addf %65, %67 : vector<2x256xf32>
    %69 = arith.extf %55 : vector<2x256xbf16> to vector<2x256xf32>
    %70 = arith.addf %68, %69 : vector<2x256xf32>
    %cst_50 = arith.constant 0.000000e+00 : f32
    %71 = vector.broadcast %cst_50 : f32 to vector<2x256xf32>
    %72 = arith.maximumf %70, %71 : vector<2x256xf32>
    %73 = arith.truncf %72 : vector<2x256xf32> to vector<2x256xbf16>
    %c0_51 = arith.constant 0 : index
    %c0_52 = arith.constant 0 : index
    %74 = vector.load %arg18[%c0_51, %c0_52] : memref<256x128xbf16, #tpu.memory_space<vmem>>, vector<256x128xbf16>
    %cst_53 = arith.constant dense<0.000000e+00> : vector<2x128xf32>
    %75 = tpu.matmul %73, %74, %cst_53 {dimension_numbers = #tpu.dot_dimension_numbers<[1], [0], [0], [1], [0, 0, 1, 1], [], []>} : vector<2x256xbf16>, vector<256x128xbf16>, vector<2x128xf32> -> vector<2x128xf32>
    %c0_54 = arith.constant 0 : index
    %c0_55 = arith.constant 0 : index
    %76 = vector.load %arg19[%c0_54, %c0_55] : memref<1x128xf32, #tpu.memory_space<vmem>>, vector<1x128xf32>
    %77 = vector.broadcast %76 : vector<1x128xf32> to vector<2x128xf32>
    %78 = arith.addf %75, %77 : vector<2x128xf32>
    %cst_56 = arith.constant 0.000000e+00 : f32
    %79 = vector.broadcast %cst_56 : f32 to vector<2x128xf32>
    %80 = arith.maximumf %78, %79 : vector<2x128xf32>
    %81 = arith.truncf %80 : vector<2x128xf32> to vector<2x128xbf16>
    %c0_57 = arith.constant 0 : index
    %c0_58 = arith.constant 0 : index
    %82 = vector.load %arg20[%c0_57, %c0_58] : memref<128x128xbf16, #tpu.memory_space<vmem>>, vector<128x128xbf16>
    %cst_59 = arith.constant dense<0.000000e+00> : vector<2x128xf32>
    %83 = tpu.matmul %81, %82, %cst_59 {dimension_numbers = #tpu.dot_dimension_numbers<[1], [0], [0], [1], [0, 0, 1, 1], [], []>} : vector<2x128xbf16>, vector<128x128xbf16>, vector<2x128xf32> -> vector<2x128xf32>
    %c0_60 = arith.constant 0 : index
    %c0_61 = arith.constant 0 : index
    %84 = vector.load %arg21[%c0_60, %c0_61] : memref<1x128xf32, #tpu.memory_space<vmem>>, vector<1x128xf32>
    %85 = vector.broadcast %84 : vector<1x128xf32> to vector<2x128xf32>
    %86 = arith.addf %83, %85 : vector<2x128xf32>
    %c0_62 = arith.constant 0 : index
    %c0_63 = arith.constant 0 : index
    %87 = vector.load %arg22[%c0_62, %c0_63] : memref<256x128xbf16, #tpu.memory_space<vmem>>, vector<256x128xbf16>
    %cst_64 = arith.constant dense<0.000000e+00> : vector<2x128xf32>
    %88 = tpu.matmul %73, %87, %cst_64 {dimension_numbers = #tpu.dot_dimension_numbers<[1], [0], [0], [1], [0, 0, 1, 1], [], []>} : vector<2x256xbf16>, vector<256x128xbf16>, vector<2x128xf32> -> vector<2x128xf32>
    %89 = arith.addf %86, %88 : vector<2x128xf32>
    %cst_65 = arith.constant 0.000000e+00 : f32
    %90 = vector.broadcast %cst_65 : f32 to vector<2x128xf32>
    %91 = arith.maximumf %89, %90 : vector<2x128xf32>
    %92 = arith.truncf %91 : vector<2x128xf32> to vector<2x128xbf16>
    %c0_66 = arith.constant 0 : index
    %c0_67 = arith.constant 0 : index
    %93 = vector.load %arg23[%c0_66, %c0_67] : memref<128x128xbf16, #tpu.memory_space<vmem>>, vector<128x128xbf16>
    %cst_68 = arith.constant dense<0.000000e+00> : vector<2x128xf32>
    %94 = tpu.matmul %92, %93, %cst_68 {dimension_numbers = #tpu.dot_dimension_numbers<[1], [0], [0], [1], [0, 0, 1, 1], [], []>} : vector<2x128xbf16>, vector<128x128xbf16>, vector<2x128xf32> -> vector<2x128xf32>
    %c0_69 = arith.constant 0 : index
    %c0_70 = arith.constant 0 : index
    %95 = vector.load %arg24[%c0_69, %c0_70] : memref<1x128xf32, #tpu.memory_space<vmem>>, vector<1x128xf32>
    %96 = vector.broadcast %95 : vector<1x128xf32> to vector<2x128xf32>
    %97 = arith.addf %94, %96 : vector<2x128xf32>
    %cst_71 = arith.constant 0.000000e+00 : f32
    %98 = vector.broadcast %cst_71 : f32 to vector<2x128xf32>
    %99 = arith.maximumf %97, %98 : vector<2x128xf32>
    %100 = arith.truncf %99 : vector<2x128xf32> to vector<2x128xbf16>
    %c0_72 = arith.constant 0 : index
    %c0_73 = arith.constant 0 : index
    %101 = vector.load %arg25[%c0_72, %c0_73] : memref<128x128xbf16, #tpu.memory_space<vmem>>, vector<128x128xbf16>
    %cst_74 = arith.constant dense<0.000000e+00> : vector<2x128xf32>
    %102 = tpu.matmul %100, %101, %cst_74 {dimension_numbers = #tpu.dot_dimension_numbers<[1], [0], [0], [1], [0, 0, 1, 1], [], []>} : vector<2x128xbf16>, vector<128x128xbf16>, vector<2x128xf32> -> vector<2x128xf32>
    %c0_75 = arith.constant 0 : index
    %c0_76 = arith.constant 0 : index
    %103 = vector.load %arg26[%c0_75, %c0_76] : memref<1x128xf32, #tpu.memory_space<vmem>>, vector<1x128xf32>
    %104 = vector.broadcast %103 : vector<1x128xf32> to vector<2x128xf32>
    %105 = arith.addf %102, %104 : vector<2x128xf32>
    %106 = arith.extf %92 : vector<2x128xbf16> to vector<2x128xf32>
    %107 = arith.addf %105, %106 : vector<2x128xf32>
    %cst_77 = arith.constant 0.000000e+00 : f32
    %108 = vector.broadcast %cst_77 : f32 to vector<2x128xf32>
    %109 = arith.maximumf %107, %108 : vector<2x128xf32>
    %110 = arith.truncf %109 : vector<2x128xf32> to vector<2x128xbf16>
    %c0_78 = arith.constant 0 : index
    %c0_79 = arith.constant 0 : index
    %111 = vector.load %arg27[%c0_78, %c0_79] : memref<128x64xbf16, #tpu.memory_space<vmem>>, vector<128x64xbf16>
    %cst_80 = arith.constant dense<0.000000e+00> : vector<2x64xf32>
    %112 = tpu.matmul %110, %111, %cst_80 {dimension_numbers = #tpu.dot_dimension_numbers<[1], [0], [0], [1], [0, 0, 1, 1], [], []>} : vector<2x128xbf16>, vector<128x64xbf16>, vector<2x64xf32> -> vector<2x64xf32>
    %c0_81 = arith.constant 0 : index
    %c0_82 = arith.constant 0 : index
    %113 = vector.load %arg28[%c0_81, %c0_82] : memref<1x64xf32, #tpu.memory_space<vmem>>, vector<1x64xf32>
    %114 = vector.broadcast %113 : vector<1x64xf32> to vector<2x64xf32>
    %115 = arith.addf %112, %114 : vector<2x64xf32>
    %cst_83 = arith.constant 0.000000e+00 : f32
    %116 = vector.broadcast %cst_83 : f32 to vector<2x64xf32>
    %117 = arith.maximumf %115, %116 : vector<2x64xf32>
    %118 = arith.truncf %117 : vector<2x64xf32> to vector<2x64xbf16>
    %c0_84 = arith.constant 0 : index
    %c0_85 = arith.constant 0 : index
    %119 = vector.load %arg29[%c0_84, %c0_85] : memref<64x64xbf16, #tpu.memory_space<vmem>>, vector<64x64xbf16>
    %cst_86 = arith.constant dense<0.000000e+00> : vector<2x64xf32>
    %120 = tpu.matmul %118, %119, %cst_86 {dimension_numbers = #tpu.dot_dimension_numbers<[1], [0], [0], [1], [0, 0, 1, 1], [], []>} : vector<2x64xbf16>, vector<64x64xbf16>, vector<2x64xf32> -> vector<2x64xf32>
    %c0_87 = arith.constant 0 : index
    %c0_88 = arith.constant 0 : index
    %121 = vector.load %arg30[%c0_87, %c0_88] : memref<1x64xf32, #tpu.memory_space<vmem>>, vector<1x64xf32>
    %122 = vector.broadcast %121 : vector<1x64xf32> to vector<2x64xf32>
    %123 = arith.addf %120, %122 : vector<2x64xf32>
    %c0_89 = arith.constant 0 : index
    %c0_90 = arith.constant 0 : index
    %124 = vector.load %arg31[%c0_89, %c0_90] : memref<128x64xbf16, #tpu.memory_space<vmem>>, vector<128x64xbf16>
    %cst_91 = arith.constant dense<0.000000e+00> : vector<2x64xf32>
    %125 = tpu.matmul %110, %124, %cst_91 {dimension_numbers = #tpu.dot_dimension_numbers<[1], [0], [0], [1], [0, 0, 1, 1], [], []>} : vector<2x128xbf16>, vector<128x64xbf16>, vector<2x64xf32> -> vector<2x64xf32>
    %126 = arith.addf %123, %125 : vector<2x64xf32>
    %cst_92 = arith.constant 0.000000e+00 : f32
    %127 = vector.broadcast %cst_92 : f32 to vector<2x64xf32>
    %128 = arith.maximumf %126, %127 : vector<2x64xf32>
    %129 = arith.truncf %128 : vector<2x64xf32> to vector<2x64xbf16>
    %c0_93 = arith.constant 0 : index
    %c0_94 = arith.constant 0 : index
    %130 = vector.load %arg32[%c0_93, %c0_94] : memref<64x64xbf16, #tpu.memory_space<vmem>>, vector<64x64xbf16>
    %cst_95 = arith.constant dense<0.000000e+00> : vector<2x64xf32>
    %131 = tpu.matmul %129, %130, %cst_95 {dimension_numbers = #tpu.dot_dimension_numbers<[1], [0], [0], [1], [0, 0, 1, 1], [], []>} : vector<2x64xbf16>, vector<64x64xbf16>, vector<2x64xf32> -> vector<2x64xf32>
    %c0_96 = arith.constant 0 : index
    %c0_97 = arith.constant 0 : index
    %132 = vector.load %arg33[%c0_96, %c0_97] : memref<1x64xf32, #tpu.memory_space<vmem>>, vector<1x64xf32>
    %133 = vector.broadcast %132 : vector<1x64xf32> to vector<2x64xf32>
    %134 = arith.addf %131, %133 : vector<2x64xf32>
    %cst_98 = arith.constant 0.000000e+00 : f32
    %135 = vector.broadcast %cst_98 : f32 to vector<2x64xf32>
    %136 = arith.maximumf %134, %135 : vector<2x64xf32>
    %137 = arith.truncf %136 : vector<2x64xf32> to vector<2x64xbf16>
    %c0_99 = arith.constant 0 : index
    %c0_100 = arith.constant 0 : index
    %138 = vector.load %arg34[%c0_99, %c0_100] : memref<64x64xbf16, #tpu.memory_space<vmem>>, vector<64x64xbf16>
    %cst_101 = arith.constant dense<0.000000e+00> : vector<2x64xf32>
    %139 = tpu.matmul %137, %138, %cst_101 {dimension_numbers = #tpu.dot_dimension_numbers<[1], [0], [0], [1], [0, 0, 1, 1], [], []>} : vector<2x64xbf16>, vector<64x64xbf16>, vector<2x64xf32> -> vector<2x64xf32>
    %c0_102 = arith.constant 0 : index
    %c0_103 = arith.constant 0 : index
    %140 = vector.load %arg35[%c0_102, %c0_103] : memref<1x64xf32, #tpu.memory_space<vmem>>, vector<1x64xf32>
    %141 = vector.broadcast %140 : vector<1x64xf32> to vector<2x64xf32>
    %142 = arith.addf %139, %141 : vector<2x64xf32>
    %143 = arith.extf %129 : vector<2x64xbf16> to vector<2x64xf32>
    %144 = arith.addf %142, %143 : vector<2x64xf32>
    %cst_104 = arith.constant 0.000000e+00 : f32
    %145 = vector.broadcast %cst_104 : f32 to vector<2x64xf32>
    %146 = arith.maximumf %144, %145 : vector<2x64xf32>
    %147 = arith.truncf %146 : vector<2x64xf32> to vector<2x64xbf16>
    %c0_105 = arith.constant 0 : index
    %c0_106 = arith.constant 0 : index
    %148 = vector.load %arg36[%c0_105, %c0_106] : memref<512x7xbf16, #tpu.memory_space<vmem>>, vector<512x7xbf16>
    %cst_107 = arith.constant dense<0.000000e+00> : vector<2x7xf32>
    %149 = tpu.matmul %0, %148, %cst_107 {dimension_numbers = #tpu.dot_dimension_numbers<[1], [0], [0], [1], [0, 0, 1, 1], [], []>} : vector<2x512xbf16>, vector<512x7xbf16>, vector<2x7xf32> -> vector<2x7xf32>
    %c0_108 = arith.constant 0 : index
    %c0_109 = arith.constant 0 : index
    %150 = vector.load %arg37[%c0_108, %c0_109] : memref<512x7xbf16, #tpu.memory_space<vmem>>, vector<512x7xbf16>
    %cst_110 = arith.constant dense<0.000000e+00> : vector<2x7xf32>
    %151 = tpu.matmul %36, %150, %cst_110 {dimension_numbers = #tpu.dot_dimension_numbers<[1], [0], [0], [1], [0, 0, 1, 1], [], []>} : vector<2x512xbf16>, vector<512x7xbf16>, vector<2x7xf32> -> vector<2x7xf32>
    %152 = arith.addf %149, %151 : vector<2x7xf32>
    %c0_111 = arith.constant 0 : index
    %c0_112 = arith.constant 0 : index
    %153 = vector.load %arg38[%c0_111, %c0_112] : memref<256x7xbf16, #tpu.memory_space<vmem>>, vector<256x7xbf16>
    %cst_113 = arith.constant dense<0.000000e+00> : vector<2x7xf32>
    %154 = tpu.matmul %73, %153, %cst_113 {dimension_numbers = #tpu.dot_dimension_numbers<[1], [0], [0], [1], [0, 0, 1, 1], [], []>} : vector<2x256xbf16>, vector<256x7xbf16>, vector<2x7xf32> -> vector<2x7xf32>
    %155 = arith.addf %152, %154 : vector<2x7xf32>
    %c0_114 = arith.constant 0 : index
    %c0_115 = arith.constant 0 : index
    %156 = vector.load %arg39[%c0_114, %c0_115] : memref<128x7xbf16, #tpu.memory_space<vmem>>, vector<128x7xbf16>
    %cst_116 = arith.constant dense<0.000000e+00> : vector<2x7xf32>
    %157 = tpu.matmul %110, %156, %cst_116 {dimension_numbers = #tpu.dot_dimension_numbers<[1], [0], [0], [1], [0, 0, 1, 1], [], []>} : vector<2x128xbf16>, vector<128x7xbf16>, vector<2x7xf32> -> vector<2x7xf32>
    %158 = arith.addf %155, %157 : vector<2x7xf32>
    %c0_117 = arith.constant 0 : index
    %c0_118 = arith.constant 0 : index
    %159 = vector.load %arg40[%c0_117, %c0_118] : memref<64x7xbf16, #tpu.memory_space<vmem>>, vector<64x7xbf16>
    %cst_119 = arith.constant dense<0.000000e+00> : vector<2x7xf32>
    %160 = tpu.matmul %147, %159, %cst_119 {dimension_numbers = #tpu.dot_dimension_numbers<[1], [0], [0], [1], [0, 0, 1, 1], [], []>} : vector<2x64xbf16>, vector<64x7xbf16>, vector<2x7xf32> -> vector<2x7xf32>
    %161 = arith.addf %158, %160 : vector<2x7xf32>
    %c0_120 = arith.constant 0 : index
    %c0_121 = arith.constant 0 : index
    %162 = vector.load %arg41[%c0_120, %c0_121] : memref<1x7xf32, #tpu.memory_space<vmem>>, vector<1x7xf32>
    %163 = vector.broadcast %162 : vector<1x7xf32> to vector<2x7xf32>
    %164 = arith.addf %161, %163 : vector<2x7xf32>
    %c0_122 = arith.constant 0 : index
    %c0_123 = arith.constant 0 : index
    %165 = vector.load %arg42[%c0_122, %c0_123] : memref<2x7xf32, #tpu.memory_space<vmem>>, vector<2x7xf32>
    tpu.vector_store %arg42[%c0_122, %c0_123], %164 {strides = array<i32>} : memref<2x7xf32, #tpu.memory_space<vmem>>, vector<2x7xf32>,
    return
  }
}

</mosaic_0001>

<llo_original>
// kernel: _lambda_.2
$region0: #{_lambda_.2}
  #allocation0 [shape = 'u32[]', space=smem, size = 0x4, offset = 0x4, fixed_abs, tag = 'smem constant byte address 0x4 - core index']
  #allocation1 [shape = 'u32[144,128]{1,0:T(1,128)}', space=vmem, size = 0x12000, scoped, tag = 'internal scratch']
  %s0 = inlined_call_operand.vmem [shape: bf16[32,672], index: 0, kind: input, shape index: {}]
  %s1 = inlined_call_operand.vmem [shape: bf16[672,128], index: 1, kind: input, shape index: {}]
  %s2 = inlined_call_operand.vmem [shape: f32[1,128], index: 2, kind: input, shape index: {}]
  %s3 = inlined_call_operand.vmem [shape: bf16[32,128], index: 3, kind: output, shape index: {}]
  %s4 = sld [smem:[#allocation0]]
  $region22: #{_lambda_.2} parent=0
    _
  %s6 = ssub.s32 1, %s4
  %s7 = scalar_select 0, %s6, %s4
  // Predicated region
  $region2: #{_lambda_.2} parent=0 // pred_check
    _
  $region3: #{_lambda_.2} parent=0 // pred_check_branch
    %9 = sbr.rel (0) target = $region5
  $region4: #{_lambda_.2} parent=0 // pred_region
    _
  $region5: #{_lambda_.2} parent=0 // pred_fallthru
    _
  // Predicated region
  $region6: #{_lambda_.2} parent=0 // pred_check
    _
  $region7: #{_lambda_.2} parent=0 // pred_check_branch
    %11 = sbr.rel (0) target = $region9
  $region8: #{_lambda_.2} parent=0 // pred_region
    _
  $region9: #{_lambda_.2} parent=0 // pred_fallthru
    _
  // Predicated region
  $region10: #{_lambda_.2} parent=0 // pred_check
    _
  $region11: #{_lambda_.2} parent=0 // pred_check_branch
    %13 = sbr.rel (0) target = $region13
  $region12: #{_lambda_.2} parent=0 // pred_region
    _
  $region13: #{_lambda_.2} parent=0 // pred_fallthru
    _
  %v15 = vld [vmem:[%s0] sm:$0xff]
  %v16 = vld [vmem:[%s0 + $0x8] sm:$0xff]
  %v17 = vld [vmem:[%s0 + $0x10] sm:$0xff]
  %v18 = vld [vmem:[%s0 + $0x18] sm:$0xff]
  %v19 = vld [vmem:[%s0 + $0x20] sm:$0xff]
  %v20 = vld [vmem:[%s0 + $0x28] sm:$0xff]
  %v21 = vld [vmem:[%s0 + $0x30] sm:$0xff]
  %v22 = vld [vmem:[%s0 + $0x38] sm:$0xff]
  %v23 = vld [vmem:[%s0 + $0x40] sm:$0xff]
  %v24 = vld [vmem:[%s0 + $0x48] sm:$0xff]
  %v25 = vld [vmem:[%s0 + $0x50] sm:$0xff]
  %v26 = vld [vmem:[%s0 + $0x58] sm:$0xff]
  %v27 = vld [vmem:[%s1] sm:$0xf]
  %v28 = vld [vmem:[%s1 + $0x4] sm:$0xf]
  %v29 = vld [vmem:[%s1 + $0x8] sm:$0xf]
  %v30 = vld [vmem:[%s1 + $0xc] sm:$0xf]
  %v31 = vld [vmem:[%s1 + $0x10] sm:$0xf]
  %v32 = vld [vmem:[%s1 + $0x14] sm:$0xf]
  %v33 = vld [vmem:[%s1 + $0x18] sm:$0xf]
  %v34 = vld [vmem:[%s1 + $0x1c] sm:$0xf]
  %v35 = vld [vmem:[%s1 + $0x20] sm:$0xf]
  %v36 = vld [vmem:[%s1 + $0x24] sm:$0xf]
  %v37 = vld [vmem:[%s1 + $0x28] sm:$0xf]
  %v38 = vld [vmem:[%s1 + $0x2c] sm:$0xf]
  %v39 = vld [vmem:[%s1 + $0x30] sm:$0xf]
  %v40 = vld [vmem:[%s1 + $0x34] sm:$0xf]
  %v41 = vld [vmem:[%s1 + $0x38] sm:$0xf]
  %v42 = vld [vmem:[%s1 + $0x3c] sm:$0xf]
  %v43 = vld [vmem:[%s1 + $0x40] sm:$0xf]
  %v44 = vld [vmem:[%s1 + $0x44] sm:$0xf]
  %v45 = vld [vmem:[%s1 + $0x48] sm:$0xf]
  %v46 = vld [vmem:[%s1 + $0x4c] sm:$0xf]
  %v47 = vld [vmem:[%s1 + $0x50] sm:$0xf]
  %v48 = vld [vmem:[%s1 + $0x54] sm:$0xf]
  %v49 = vld [vmem:[%s1 + $0x58] sm:$0xf]
  %v50 = vld [vmem:[%s1 + $0x5c] sm:$0xf]
  %v51 = vld [vmem:[%s1 + $0x60] sm:$0xf]
  %v52 = vld [vmem:[%s1 + $0x64] sm:$0xf]
  %v53 = vld [vmem:[%s1 + $0x68] sm:$0xf]
  %v54 = vld [vmem:[%s1 + $0x6c] sm:$0xf]
  %v55 = vld [vmem:[%s1 + $0x70] sm:$0xf]
  %v56 = vld [vmem:[%s1 + $0x74] sm:$0xf]
  %v57 = vld [vmem:[%s1 + $0x78] sm:$0xf]
  %v58 = vld [vmem:[%s1 + $0x7c] sm:$0xf]
  %v59 = vld [vmem:[%s1 + $0x80] sm:$0xf]
  %v60 = vld [vmem:[%s1 + $0x84] sm:$0xf]
  %v61 = vld [vmem:[%s1 + $0x88] sm:$0xf]
  %v62 = vld [vmem:[%s1 + $0x8c] sm:$0xf]
  %v63 = vld [vmem:[%s1 + $0x90] sm:$0xf]
  %v64 = vld [vmem:[%s1 + $0x94] sm:$0xf]
  %v65 = vld [vmem:[%s1 + $0x98] sm:$0xf]
  %v66 = vld [vmem:[%s1 + $0x9c] sm:$0xf]
  %v67 = vld [vmem:[%s1 + $0xa0] sm:$0xf]
  %v68 = vld [vmem:[%s1 + $0xa4] sm:$0xf]
  %v69 = vld [vmem:[%s1 + $0xa8] sm:$0xf]
  %v70 = vld [vmem:[%s1 + $0xac] sm:$0xf]
  %v71 = vld [vmem:[%s1 + $0xb0] sm:$0xf]
  %v72 = vld [vmem:[%s1 + $0xb4] sm:$0xf]
  %v73 = vld [vmem:[%s1 + $0xb8] sm:$0xf]
  %v74 = vld [vmem:[%s1 + $0xbc] sm:$0xf]
  %v75 = vld [vmem:[%s1 + $0xc0] sm:$0xf]
  %v76 = vld [vmem:[%s1 + $0xc4] sm:$0xf]
  %v77 = vld [vmem:[%s1 + $0xc8] sm:$0xf]
  %v78 = vld [vmem:[%s1 + $0xcc] sm:$0xf]
  %v79 = vld [vmem:[%s1 + $0xd0] sm:$0xf]
  %v80 = vld [vmem:[%s1 + $0xd4] sm:$0xf]
  %v81 = vld [vmem:[%s1 + $0xd8] sm:$0xf]
  %v82 = vld [vmem:[%s1 + $0xdc] sm:$0xf]
  %v83 = vld [vmem:[%s1 + $0xe0] sm:$0xf]
  %v84 = vld [vmem:[%s1 + $0xe4] sm:$0xf]
  %v85 = vld [vmem:[%s1 + $0xe8] sm:$0xf]
  %v86 = vld [vmem:[%s1 + $0xec] sm:$0xf]
  %v87 = vld [vmem:[%s1 + $0xf0] sm:$0xf]
  %v88 = vld [vmem:[%s1 + $0xf4] sm:$0xf]
  %v89 = vld [vmem:[%s1 + $0xf8] sm:$0xf]
  %v90 = vld [vmem:[%s1 + $0xfc] sm:$0xf]
  %v91 = vld [vmem:[%s1 + $0x100] sm:$0xf]
  %v92 = vld [vmem:[%s1 + $0x104] sm:$0xf]
  %v93 = vld [vmem:[%s1 + $0x108] sm:$0xf]
  %v94 = vld [vmem:[%s1 + $0x10c] sm:$0xf]
  %v95 = vld [vmem:[%s1 + $0x110] sm:$0xf]
  %v96 = vld [vmem:[%s1 + $0x114] sm:$0xf]
  %v97 = vld [vmem:[%s1 + $0x118] sm:$0xf]
  %v98 = vld [vmem:[%s1 + $0x11c] sm:$0xf]
  %v99 = vld [vmem:[%s1 + $0x120] sm:$0xf]
  %v100 = vld [vmem:[%s1 + $0x124] sm:$0xf]
  %v101 = vld [vmem:[%s1 + $0x128] sm:$0xf]
  %v102 = vld [vmem:[%s1 + $0x12c] sm:$0xf]
  %v103 = vld [vmem:[%s1 + $0x130] sm:$0xf]
  %v104 = vld [vmem:[%s1 + $0x134] sm:$0xf]
  %v105 = vld [vmem:[%s1 + $0x138] sm:$0xf]
  %v106 = vld [vmem:[%s1 + $0x13c] sm:$0xf]
  %v107 = vld [vmem:[%s1 + $0x140] sm:$0xf]
  %v108 = vld [vmem:[%s1 + $0x144] sm:$0xf]
  %v109 = vld [vmem:[%s1 + $0x148] sm:$0xf]
  %v110 = vld [vmem:[%s1 + $0x14c] sm:$0xf]
  %v111 = vld [vmem:[%s2] sm:$0x1]
  %v113 = vlaneseq
  %v114 = vshrl.u32 %v113, 7
  %v115 = vsub.s32 0, %v114
  %v116 = vrot.slane %v111, %v115
  %v130 = vunpack.c.l.b16 %v15
  %v131 = vunpack.c.h.b16 %v15
  %v132 = vunpack.c.l.b16 %v16
  %v133 = vunpack.c.h.b16 %v16
  %v134 = vunpack.c.l.b16 %v17
  %v135 = vunpack.c.h.b16 %v17
  %v136 = vunpack.c.l.b16 %v18
  %v137 = vunpack.c.h.b16 %v18
  %v138 = vunpack.c.l.b16 %v19
  %v139 = vunpack.c.h.b16 %v19
  %v140 = vunpack.c.l.b16 %v20
  %v141 = vunpack.c.h.b16 %v20
  %v142 = vunpack.c.l.b16 %v21
  %v143 = vunpack.c.h.b16 %v21
  %v144 = vunpack.c.l.b16 %v22
  %v145 = vunpack.c.h.b16 %v22
  %v146 = vunpack.c.l.b16 %v23
  %v147 = vunpack.c.h.b16 %v23
  %v148 = vunpack.c.l.b16 %v24
  %v149 = vunpack.c.h.b16 %v24
  %v150 = vunpack.c.l.b16 %v25
  %v151 = vunpack.c.h.b16 %v25
  %v152 = vunpack.c.l.b16 %v26
  %v153 = vunpack.c.h.b16 %v26
  %v154 = vpack.c.b16 %v136, %v130
  %v155 = vpack.c.b16 %v137, %v131
  %v156 = vpack.c.b16 %v138, %v132
  %v157 = vpack.c.b16 %v139, %v133
  %v158 = vpack.c.b16 %v140, %v134
  %v159 = vpack.c.b16 %v141, %v135
  %v160 = vpack.c.b16 %v148, %v142
  %v161 = vpack.c.b16 %v149, %v143
  %v162 = vpack.c.b16 %v150, %v144
  %v163 = vpack.c.b16 %v151, %v145
  %v164 = vpack.c.b16 %v152, %v146
  %v165 = vpack.c.b16 %v153, %v147
  %v260 = vunpack.c.l.b16 %v27
  %v261 = vunpack.c.l.b16 %v28
  %v262 = vunpack.c.l.b16 %v29
  %v263 = vunpack.c.l.b16 %v30
  %v264 = vunpack.c.l.b16 %v31
  %v265 = vunpack.c.l.b16 %v32
  %v266 = vunpack.c.l.b16 %v33
  %v267 = vunpack.c.l.b16 %v34
  %v268 = vunpack.c.l.b16 %v35
  %v269 = vunpack.c.l.b16 %v36
  %v270 = vunpack.c.l.b16 %v37
  %v271 = vunpack.c.l.b16 %v38
  %v272 = vunpack.c.l.b16 %v39
  %v273 = vunpack.c.l.b16 %v40
  %v274 = vunpack.c.l.b16 %v41
  %v275 = vunpack.c.l.b16 %v42
  %v276 = vunpack.c.l.b16 %v43
  %v277 = vunpack.c.l.b16 %v44
  %v278 = vunpack.c.l.b16 %v45
  %v279 = vunpack.c.l.b16 %v46
  %v280 = vunpack.c.l.b16 %v47
  %v281 = vunpack.c.l.b16 %v48
  %v282 = vunpack.c.l.b16 %v49
  %v283 = vunpack.c.l.b16 %v50
  %v284 = vunpack.c.l.b16 %v51
  %v285 = vunpack.c.l.b16 %v52
  %v286 = vunpack.c.l.b16 %v53
  %v287 = vunpack.c.l.b16 %v54
  %v288 = vunpack.c.l.b16 %v55
  %v289 = vunpack.c.l.b16 %v56
  %v290 = vunpack.c.l.b16 %v57
  %v291 = vunpack.c.l.b16 %v58
  %v292 = vunpack.c.l.b16 %v59
  %v293 = vunpack.c.l.b16 %v60
  %v294 = vunpack.c.l.b16 %v61
  %v295 = vunpack.c.l.b16 %v62
  %v296 = vunpack.c.l.b16 %v63
  %v297 = vunpack.c.l.b16 %v64
  %v298 = vunpack.c.l.b16 %v65
  %v299 = vunpack.c.l.b16 %v66
  %v300 = vunpack.c.l.b16 %v67
  %v301 = vunpack.c.l.b16 %v68
  %v302 = vunpack.c.l.b16 %v69
  %v303 = vunpack.c.l.b16 %v70
  %v304 = vunpack.c.l.b16 %v71
  %v305 = vunpack.c.l.b16 %v72
  %v306 = vunpack.c.l.b16 %v73
  %v307 = vunpack.c.l.b16 %v74
  %v308 = vunpack.c.l.b16 %v75
  %v309 = vunpack.c.l.b16 %v76
  %v310 = vunpack.c.l.b16 %v77
  %v311 = vunpack.c.l.b16 %v78
  %v312 = vunpack.c.l.b16 %v79
  %v313 = vunpack.c.l.b16 %v80
  %v314 = vunpack.c.l.b16 %v81
  %v315 = vunpack.c.l.b16 %v82
  %v316 = vunpack.c.l.b16 %v83
  %v317 = vunpack.c.l.b16 %v84
  %v318 = vunpack.c.l.b16 %v85
  %v319 = vunpack.c.l.b16 %v86
  %v320 = vunpack.c.l.b16 %v87
  %v321 = vunpack.c.l.b16 %v88
  %v322 = vunpack.c.l.b16 %v89
  %v323 = vunpack.c.l.b16 %v90
  %v324 = vunpack.c.l.b16 %v91
  %v325 = vunpack.c.l.b16 %v92
  %v326 = vunpack.c.l.b16 %v93
  %v327 = vunpack.c.l.b16 %v94
  %v328 = vunpack.c.l.b16 %v95
  %v329 = vunpack.c.l.b16 %v96
  %v330 = vunpack.c.l.b16 %v97
  %v331 = vunpack.c.l.b16 %v98
  %v332 = vunpack.c.l.b16 %v99
  %v333 = vunpack.c.l.b16 %v100
  %v334 = vunpack.c.l.b16 %v101
  %v335 = vunpack.c.l.b16 %v102
  %v336 = vunpack.c.l.b16 %v103
  %v337 = vunpack.c.l.b16 %v104
  %v338 = vunpack.c.l.b16 %v105
  %v339 = vunpack.c.l.b16 %v106
  %v340 = vunpack.c.l.b16 %v107
  %v341 = vunpack.c.l.b16 %v108
  %v342 = vunpack.c.l.b16 %v109
  %v343 = vunpack.c.l.b16 %v110
  %v344 = vpack.c.b16 %v261, %v260
  %v345 = vpack.c.b16 %v263, %v262
  %v346 = vpack.c.b16 %v265, %v264
  %v347 = vpack.c.b16 %v267, %v266
  %v348 = vpack.c.b16 %v269, %v268
  %v349 = vpack.c.b16 %v271, %v270
  %v350 = vpack.c.b16 %v273, %v272
  %v351 = vpack.c.b16 %v275, %v274
  %v352 = vpack.c.b16 %v277, %v276
  %v353 = vpack.c.b16 %v279, %v278
  %v354 = vpack.c.b16 %v281, %v280
  %v355 = vpack.c.b16 %v283, %v282
  %v356 = vpack.c.b16 %v285, %v284
  %v357 = vpack.c.b16 %v287, %v286
  %v358 = vpack.c.b16 %v289, %v288
  %v359 = vpack.c.b16 %v291, %v290
  %v360 = vpack.c.b16 %v293, %v292
  %v361 = vpack.c.b16 %v295, %v294
  %v362 = vpack.c.b16 %v297, %v296
  %v363 = vpack.c.b16 %v299, %v298
  %v364 = vpack.c.b16 %v301, %v300
  %v365 = vpack.c.b16 %v303, %v302
  %v366 = vpack.c.b16 %v305, %v304
  %v367 = vpack.c.b16 %v307, %v306
  %v368 = vpack.c.b16 %v309, %v308
  %v369 = vpack.c.b16 %v311, %v310
  %v370 = vpack.c.b16 %v313, %v312
  %v371 = vpack.c.b16 %v315, %v314
  %v372 = vpack.c.b16 %v317, %v316
  %v373 = vpack.c.b16 %v319, %v318
  %v374 = vpack.c.b16 %v321, %v320
  %v375 = vpack.c.b16 %v323, %v322
  %v376 = vpack.c.b16 %v325, %v324
  %v377 = vpack.c.b16 %v327, %v326
  %v378 = vpack.c.b16 %v329, %v328
  %v379 = vpack.c.b16 %v331, %v330
  %v380 = vpack.c.b16 %v333, %v332
  %v381 = vpack.c.b16 %v335, %v334
  %v382 = vpack.c.b16 %v337, %v336
  %v383 = vpack.c.b16 %v339, %v338
  %v384 = vpack.c.b16 %v341, %v340
  %v385 = vpack.c.b16 %v343, %v342
  %vm428 = vcmask 261120
  %v430 = vsel %vm428, %v159, 0
  %v433 = vsel %vm428, %v165, 0
  %435 = vmatprep.subr.bf16.mxu0 0
  %436 = vmatpush1.bf16.msra.mxu0 %v344
  %437 = vmatprep.subr.bf16.mxu0 0
  %438 = vmatpush1.bf16.msra.mxu0 %v345
  %439 = vmatprep.subr.bf16.mxu0 0
  %440 = vmatpush1.bf16.msra.mxu0 %v346
  %441 = vmatprep.subr.bf16.mxu0 0
  %442 = vmatpush1.bf16.msra.mxu0 %v347
  %443 = vmatprep.subr.bf16.mxu0 0
  %444 = vmatpush1.bf16.msra.mxu0 %v348
  %445 = vmatprep.subr.bf16.mxu0 0
  %446 = vmatpush1.bf16.msra.mxu0 %v349
  %447 = vmatprep.subr.bf16.mxu0 0
  %448 = vmatpush1.bf16.msra.mxu0 %v350
  %449 = vmatprep.subr.bf16.mxu0 0
  %450 = vmatpush1.bf16.msra.mxu0 %v351
  %451 = vmatprep.subr.bf16.mxu0 0
  %452 = vmatpush1.bf16.msra.mxu0 %v352
  %453 = vmatprep.subr.bf16.mxu0 0
  %454 = vmatpush1.bf16.msra.mxu0 %v353
  %455 = vmatprep.subr.bf16.mxu0 0
  %456 = vmatpush1.bf16.msra.mxu0 %v354
  %457 = vmatprep.subr.bf16.mxu0 0
  %458 = vmatpush1.bf16.msra.mxu0 %v355
  %459 = vmatprep.subr.bf16.mxu0 0
  %460 = vmatpush1.bf16.msra.mxu0 %v356
  %461 = vmatprep.subr.bf16.mxu0 0
  %462 = vmatpush1.bf16.msra.mxu0 %v357
  %463 = vmatprep.subr.bf16.mxu0 0
  %464 = vmatpush1.bf16.msra.mxu0 %v358
  %465 = vmatprep.subr.bf16.mxu0 0
  %466 = vmatpush1.bf16.msra.mxu0 %v359
  %467 = vmatprep.mubr.bf16.mxu0 %v155
  %468 = vmatmul.mubr.bf16.gmra.mrb[0].mxu0 %v154
  %v469 = vpop.f32.mrb[0].mxu0
  %v470 = vadd.f32 %v116, %v469
  %v471 = vpop.f32.mrb[0].mxu0
  %v472 = vpop.f32.mrb[0].mxu0
  %v473 = vadd.f32 %v116, %v472
  %v474 = vpop.f32.mrb[0].mxu0
  %475 = vmatprep.mubr.bf16.mxu0 %v161
  %476 = vmatmul.mubr.bf16.gmra.mrb[0].mxu0 %v160
  %v477 = vpop.f32.mrb[0].mxu0
  %v478 = vadd.f32 %v116, %v477
  %v479 = vpop.f32.mrb[0].mxu0
  %v480 = vpop.f32.mrb[0].mxu0
  %v481 = vadd.f32 %v116, %v480
  %v482 = vpop.f32.mrb[0].mxu0
  %483 = vdwg.mxu0
  %484 = vmatprep.subr.bf16.mxu0 0
  %485 = vmatpush1.bf16.msra.mxu0 %v360
  %486 = vmatprep.subr.bf16.mxu0 0
  %487 = vmatpush1.bf16.msra.mxu0 %v361
  %488 = vmatprep.subr.bf16.mxu0 0
  %489 = vmatpush1.bf16.msra.mxu0 %v362
  %490 = vmatprep.subr.bf16.mxu0 0
  %491 = vmatpush1.bf16.msra.mxu0 %v363
  %492 = vmatprep.subr.bf16.mxu0 0
  %493 = vmatpush1.bf16.msra.mxu0 %v364
  %494 = vmatprep.subr.bf16.mxu0 0
  %495 = vmatpush1.bf16.msra.mxu0 %v365
  %496 = vmatprep.subr.bf16.mxu0 0
  %497 = vmatpush1.bf16.msra.mxu0 %v366
  %498 = vmatprep.subr.bf16.mxu0 0
  %499 = vmatpush1.bf16.msra.mxu0 %v367
  %500 = vmatprep.subr.bf16.mxu0 0
  %501 = vmatpush1.bf16.msra.mxu0 %v368
  %502 = vmatprep.subr.bf16.mxu0 0
  %503 = vmatpush1.bf16.msra.mxu0 %v369
  %504 = vmatprep.subr.bf16.mxu0 0
  %505 = vmatpush1.bf16.msra.mxu0 %v370
  %506 = vmatprep.subr.bf16.mxu0 0
  %507 = vmatpush1.bf16.msra.mxu0 %v371
  %508 = vmatprep.subr.bf16.mxu0 0
  %509 = vmatpush1.bf16.msra.mxu0 %v372
  %510 = vmatprep.subr.bf16.mxu0 0
  %511 = vmatpush1.bf16.msra.mxu0 %v373
  %512 = vmatprep.subr.bf16.mxu0 0
  %513 = vmatpush1.bf16.msra.mxu0 %v374
  %514 = vmatprep.subr.bf16.mxu0 0
  %515 = vmatpush1.bf16.msra.mxu0 %v375
  %516 = vmatprep.mubr.bf16.mxu0 %v157
  %517 = vmatmul.mubr.bf16.gmra.mrb[0].mxu0 %v156
  %v518 = vpop.f32.mrb[0].mxu0
  %v519 = vadd.f32 %v470, %v518
  %v520 = vpop.f32.mrb[0].mxu0
  %v521 = vpop.f32.mrb[0].mxu0
  %v522 = vadd.f32 %v473, %v521
  %v523 = vpop.f32.mrb[0].mxu0
  %524 = vmatprep.mubr.bf16.mxu0 %v163
  %525 = vmatmul.mubr.bf16.gmra.mrb[0].mxu0 %v162
  %v526 = vpop.f32.mrb[0].mxu0
  %v527 = vadd.f32 %v478, %v526
  %v528 = vpop.f32.mrb[0].mxu0
  %v529 = vpop.f32.mrb[0].mxu0
  %v530 = vadd.f32 %v481, %v529
  %v531 = vpop.f32.mrb[0].mxu0
  %532 = vdwg.mxu0
  %533 = vmatprep.subr.bf16.mxu0 0
  %534 = vmatpush1.bf16.msra.mxu0 %v376
  %535 = vmatprep.subr.bf16.mxu0 0
  %536 = vmatpush1.bf16.msra.mxu0 %v377
  %537 = vmatprep.subr.bf16.mxu0 0
  %538 = vmatpush1.bf16.msra.mxu0 %v378
  %539 = vmatprep.subr.bf16.mxu0 0
  %540 = vmatpush1.bf16.msra.mxu0 %v379
  %541 = vmatprep.subr.bf16.mxu0 0
  %542 = vmatpush1.bf16.msra.mxu0 %v380
  %543 = vmatprep.subr.bf16.mxu0 0
  %544 = vmatpush1.bf16.msra.mxu0 %v381
  %545 = vmatprep.subr.bf16.mxu0 0
  %546 = vmatpush1.bf16.msra.mxu0 %v382
  %547 = vmatprep.subr.bf16.mxu0 0
  %548 = vmatpush1.bf16.msra.mxu0 %v383
  %549 = vmatprep.subr.bf16.mxu0 0
  %550 = vmatpush1.bf16.msra.mxu0 %v384
  %551 = vmatprep.subr.bf16.mxu0 0
  %552 = vmatpush1.bf16.msra.mxu0 %v385
  %553 = vmatprep.subr.bf16.mxu0 0
  %554 = vmatpush1.bf16.msra.mxu0 0
  %555 = vmatprep.subr.bf16.mxu0 0
  %556 = vmatpush1.bf16.msra.mxu0 0
  %557 = vmatprep.subr.bf16.mxu0 0
  %558 = vmatpush1.bf16.msra.mxu0 0
  %559 = vmatprep.subr.bf16.mxu0 0
  %560 = vmatpush1.bf16.msra.mxu0 0
  %561 = vmatprep.subr.bf16.mxu0 0
  %562 = vmatpush1.bf16.msra.mxu0 0
  %563 = vmatprep.subr.bf16.mxu0 0
  %564 = vmatpush1.bf16.msra.mxu0 0
  %565 = vmatprep.mubr.bf16.mxu0 %v430
  %566 = vmatmul.mubr.bf16.gmra.mrb[0].mxu0 %v158
  %v567 = vpop.f32.mrb[0].mxu0
  %v568 = vadd.f32 %v519, %v567
  %v569 = vpop.f32.mrb[0].mxu0
  %v570 = vpop.f32.mrb[0].mxu0
  %v571 = vadd.f32 %v522, %v570
  %v572 = vpop.f32.mrb[0].mxu0
  %573 = vmatprep.mubr.bf16.mxu0 %v433
  %574 = vmatmul.mubr.bf16.gmra.mrb[0].mxu0 %v164
  %v575 = vpop.f32.mrb[0].mxu0
  %v576 = vadd.f32 %v527, %v575
  %v577 = vpop.f32.mrb[0].mxu0
  %v578 = vpop.f32.mrb[0].mxu0
  %v579 = vadd.f32 %v530, %v578
  %v580 = vpop.f32.mrb[0].mxu0
  %581 = vdwg.mxu0
  %v582 = vmax.f32 %v568, 0.0
  %v583 = vmax.f32 %v571, 0.0
  %v584 = vmax.f32 %v576, 0.0
  %v585 = vmax.f32 %v579, 0.0
  %v586 = vpack.c.bf16 %v583, %v582
  %v587 = vpack.c.bf16 %v585, %v584
  %v590 = vunpack.c.l.b16 %v586
  %v591 = vunpack.c.h.b16 %v586
  %v592 = vunpack.c.l.b16 %v587
  %v593 = vunpack.c.h.b16 %v587
  %v594 = vpack.c.b16 %v590, %v590
  %v595 = vpack.c.b16 %v591, %v591
  %v596 = vpack.c.b16 %v592, %v592
  %v597 = vpack.c.b16 %v593, %v593
  %602 = vst [vmem:[%s3] sm:$0xf] %v594
  %603 = vst [vmem:[%s3 + $0x4] sm:$0xf] %v595
  %604 = vst [vmem:[%s3 + $0x8] sm:$0xf] %v596
  %605 = vst [vmem:[%s3 + $0xc] sm:$0xf] %v597
  // Predicated region
  $region14: #{_lambda_.2} parent=0 // pred_check
    _
  $region15: #{_lambda_.2} parent=0 // pred_check_branch
    %607 = sbr.rel (0) target = $region17
  $region16: #{_lambda_.2} parent=0 // pred_region
    _
  $region17: #{_lambda_.2} parent=0 // pred_fallthru
    _
  // Predicated region
  $region18: #{_lambda_.2} parent=0 // pred_check
    _
  $region19: #{_lambda_.2} parent=0 // pred_check_branch
    %609 = sbr.rel (0) target = $region21
  $region20: #{_lambda_.2} parent=0 // pred_region
    _
  $region21: #{_lambda_.2} parent=0 // pred_fallthru
    _

// kernel: _lambda_.3
$region0: #{_lambda_.3}
  #allocation0 [shape = 'u32[]', space=smem, size = 0x4, offset = 0x4, fixed_abs, tag = 'smem constant byte address 0x4 - core index']
  #allocation1 [shape = 'u32[144,128]{1,0:T(1,128)}', space=vmem, size = 0x12000, scoped, tag = 'internal scratch']
  %s0 = inlined_call_operand.smem [shape: u32[43], index: -1, kind: input, shape index: {}]
  %s1 = sld [smem:[%s0]]
  %s2 = scalar_lea.smem %s0, 1
  %s3 = sld [smem:[%s2]]
  %s4 = scalar_lea.smem %s0, 2
  %s5 = sld [smem:[%s4]]
  %s6 = scalar_lea.smem %s0, 3
  %s7 = sld [smem:[%s6]]
  %s8 = scalar_lea.smem %s0, 4
  %s9 = sld [smem:[%s8]]
  %s10 = scalar_lea.smem %s0, 5
  %s11 = sld [smem:[%s10]]
  %s12 = scalar_lea.smem %s0, 6
  %s13 = sld [smem:[%s12]]
  %s14 = scalar_lea.smem %s0, 7
  %s15 = sld [smem:[%s14]]
  %s16 = scalar_lea.smem %s0, 8
  %s17 = sld [smem:[%s16]]
  %s18 = scalar_lea.smem %s0, 9
  %s19 = sld [smem:[%s18]]
  %s20 = scalar_lea.smem %s0, 10
  %s21 = sld [smem:[%s20]]
  %s22 = scalar_lea.smem %s0, 11
  %s23 = sld [smem:[%s22]]
  %s24 = scalar_lea.smem %s0, 12
  %s25 = sld [smem:[%s24]]
  %s26 = scalar_lea.smem %s0, 13
  %s27 = sld [smem:[%s26]]
  %s28 = scalar_lea.smem %s0, 14
  %s29 = sld [smem:[%s28]]
  %s30 = scalar_lea.smem %s0, 15
  %s31 = sld [smem:[%s30]]
  %s32 = scalar_lea.smem %s0, 16
  %s33 = sld [smem:[%s32]]
  %s34 = scalar_lea.smem %s0, 17
  %s35 = sld [smem:[%s34]]
  %s36 = scalar_lea.smem %s0, 18
  %s37 = sld [smem:[%s36]]
  %s38 = scalar_lea.smem %s0, 19
  %s39 = sld [smem:[%s38]]
  %s40 = scalar_lea.smem %s0, 20
  %s41 = sld [smem:[%s40]]
  %s42 = scalar_lea.smem %s0, 21
  %s43 = sld [smem:[%s42]]
  %s44 = scalar_lea.smem %s0, 22
  %s45 = sld [smem:[%s44]]
  %s46 = scalar_lea.smem %s0, 23
  %s47 = sld [smem:[%s46]]
  %s48 = scalar_lea.smem %s0, 24
  %s49 = sld [smem:[%s48]]
  %s50 = scalar_lea.smem %s0, 25
  %s51 = sld [smem:[%s50]]
  %s52 = scalar_lea.smem %s0, 26
  %s53 = sld [smem:[%s52]]
  %s54 = scalar_lea.smem %s0, 27
  %s55 = sld [smem:[%s54]]
  %s56 = scalar_lea.smem %s0, 28
  %s57 = sld [smem:[%s56]]
  %s58 = scalar_lea.smem %s0, 29
  %s59 = sld [smem:[%s58]]
  %s60 = scalar_lea.smem %s0, 30
  %s61 = sld [smem:[%s60]]
  %s62 = scalar_lea.smem %s0, 31
  %s63 = sld [smem:[%s62]]
  %s64 = scalar_lea.smem %s0, 32
  %s65 = sld [smem:[%s64]]
  %s66 = scalar_lea.smem %s0, 33
  %s67 = sld [smem:[%s66]]
  %s68 = scalar_lea.smem %s0, 34
  %s69 = sld [smem:[%s68]]
  %s70 = scalar_lea.smem %s0, 35
  %s71 = sld [smem:[%s70]]
  %s72 = scalar_lea.smem %s0, 36
  %s73 = sld [smem:[%s72]]
  %s74 = scalar_lea.smem %s0, 37
  %s75 = sld [smem:[%s74]]
  %s76 = scalar_lea.smem %s0, 38
  %s77 = sld [smem:[%s76]]
  %s78 = scalar_lea.smem %s0, 39
  %s79 = sld [smem:[%s78]]
  %s80 = scalar_lea.smem %s0, 40
  %s81 = sld [smem:[%s80]]
  %s82 = scalar_lea.smem %s0, 41
  %s83 = sld [smem:[%s82]]
  %s84 = scalar_lea.smem %s0, 42
  %s85 = sld [smem:[%s84]]
  %s86 = sld [smem:[#allocation0]]
  $region178: #{_lambda_.3} parent=0
    _
  %s88 = ssub.s32 1, %s86
  %s89 = scalar_select 0, %s88, %s86
  $region1: #{_lambda_.3} parent=0
    #allocation2 [shape = 'u8[1024]{0}', space=vmem, size = 0x400, scoped, tag = 'output window, operand 0, single buffered']
    #allocation3 [shape = 's32[1]{0}', space=sflag, size = 0x4, scoped, tag = 'scoped memory for _lambda_.3']
    %90 = vsyncpa [#allocation3], 0
    // Predicated region
    $region2: #{_lambda_.3} parent=1 // pred_check
      _
    $region3: #{_lambda_.3} parent=1 // pred_check_branch
      %92 = sbr.rel (0) target = $region5
    $region4: #{_lambda_.3} parent=1 // pred_region
      _
    $region5: #{_lambda_.3} parent=1 // pred_fallthru
      _
    // Predicated region
    $region6: #{_lambda_.3} parent=1 // pred_check
      _
    $region7: #{_lambda_.3} parent=1 // pred_check_branch
      %94 = sbr.rel (0) target = $region9
    $region8: #{_lambda_.3} parent=1 // pred_region
      _
    $region9: #{_lambda_.3} parent=1 // pred_fallthru
      _
    // Predicated region
    $region10: #{_lambda_.3} parent=1 // pred_check
      _
    $region11: #{_lambda_.3} parent=1 // pred_check_branch
      %96 = sbr.rel (0) target = $region13
    $region12: #{_lambda_.3} parent=1 // pred_region
      _
    $region13: #{_lambda_.3} parent=1 // pred_fallthru
      _
    // Predicated region
    $region14: #{_lambda_.3} parent=1 // pred_check
      _
    $region15: #{_lambda_.3} parent=1 // pred_check_branch
      %98 = sbr.rel (0) target = $region17
    $region16: #{_lambda_.3} parent=1 // pred_region
      _
    $region17: #{_lambda_.3} parent=1 // pred_fallthru
      _
    // Predicated region
    $region18: #{_lambda_.3} parent=1 // pred_check
      _
    $region19: #{_lambda_.3} parent=1 // pred_check_branch
      %100 = sbr.rel (0) target = $region21
    $region20: #{_lambda_.3} parent=1 // pred_region
      _
    $region21: #{_lambda_.3} parent=1 // pred_fallthru
      _
    // Predicated region
    $region22: #{_lambda_.3} parent=1 // pred_check
      _
    $region23: #{_lambda_.3} parent=1 // pred_check_branch
      %102 = sbr.rel (0) target = $region25
    $region24: #{_lambda_.3} parent=1 // pred_region
      _
    $region25: #{_lambda_.3} parent=1 // pred_fallthru
      _
    // Predicated region
    $region26: #{_lambda_.3} parent=1 // pred_check
      _
    $region27: #{_lambda_.3} parent=1 // pred_check_branch
      %104 = sbr.rel (0) target = $region29
    $region28: #{_lambda_.3} parent=1 // pred_region
      _
    $region29: #{_lambda_.3} parent=1 // pred_fallthru
      _
    // Predicated region
    $region30: #{_lambda_.3} parent=1 // pred_check
      _
    $region31: #{_lambda_.3} parent=1 // pred_check_branch
      %106 = sbr.rel (0) target = $region33
    $region32: #{_lambda_.3} parent=1 // pred_region
      _
    $region33: #{_lambda_.3} parent=1 // pred_fallthru
      _
    // Predicated region
    $region34: #{_lambda_.3} parent=1 // pred_check
      _
    $region35: #{_lambda_.3} parent=1 // pred_check_branch
      %108 = sbr.rel (0) target = $region37
    $region36: #{_lambda_.3} parent=1 // pred_region
      _
    $region37: #{_lambda_.3} parent=1 // pred_fallthru
      _
    // Predicated region
    $region38: #{_lambda_.3} parent=1 // pred_check
      _
    $region39: #{_lambda_.3} parent=1 // pred_check_branch
      %110 = sbr.rel (0) target = $region41
    $region40: #{_lambda_.3} parent=1 // pred_region
      _
    $region41: #{_lambda_.3} parent=1 // pred_fallthru
      _
    // Predicated region
    $region42: #{_lambda_.3} parent=1 // pred_check
      _
    $region43: #{_lambda_.3} parent=1 // pred_check_branch
      %112 = sbr.rel (0) target = $region45
    $region44: #{_lambda_.3} parent=1 // pred_region
      _
    $region45: #{_lambda_.3} parent=1 // pred_fallthru
      _
    // Predicated region
    $region46: #{_lambda_.3} parent=1 // pred_check
      _
    $region47: #{_lambda_.3} parent=1 // pred_check_branch
      %114 = sbr.rel (0) target = $region49
    $region48: #{_lambda_.3} parent=1 // pred_region
      _
    $region49: #{_lambda_.3} parent=1 // pred_fallthru
      _
    // Predicated region
    $region50: #{_lambda_.3} parent=1 // pred_check
      _
    $region51: #{_lambda_.3} parent=1 // pred_check_branch
      %116 = sbr.rel (0) target = $region53
    $region52: #{_lambda_.3} parent=1 // pred_region
      _
    $region53: #{_lambda_.3} parent=1 // pred_fallthru
      _
    // Predicated region
    $region54: #{_lambda_.3} parent=1 // pred_check
      _
    $region55: #{_lambda_.3} parent=1 // pred_check_branch
      %118 = sbr.rel (0) target = $region57
    $region56: #{_lambda_.3} parent=1 // pred_region
      _
    $region57: #{_lambda_.3} parent=1 // pred_fallthru
      _
    // Predicated region
    $region58: #{_lambda_.3} parent=1 // pred_check
      _
    $region59: #{_lambda_.3} parent=1 // pred_check_branch
      %120 = sbr.rel (0) target = $region61
    $region60: #{_lambda_.3} parent=1 // pred_region
      _
    $region61: #{_lambda_.3} parent=1 // pred_fallthru
      _
    // Predicated region
    $region62: #{_lambda_.3} parent=1 // pred_check
      _
    $region63: #{_lambda_.3} parent=1 // pred_check_branch
      %122 = sbr.rel (0) target = $region65
    $region64: #{_lambda_.3} parent=1 // pred_region
      _
    $region65: #{_lambda_.3} parent=1 // pred_fallthru
      _
    // Predicated region
    $region66: #{_lambda_.3} parent=1 // pred_check
      _
    $region67: #{_lambda_.3} parent=1 // pred_check_branch
      %124 = sbr.rel (0) target = $region69
    $region68: #{_lambda_.3} parent=1 // pred_region
      _
    $region69: #{_lambda_.3} parent=1 // pred_fallthru
      _
    // Predicated region
    $region70: #{_lambda_.3} parent=1 // pred_check
      _
    $region71: #{_lambda_.3} parent=1 // pred_check_branch
      %126 = sbr.rel (0) target = $region73
    $region72: #{_lambda_.3} parent=1 // pred_region
      _
    $region73: #{_lambda_.3} parent=1 // pred_fallthru
      _
    // Predicated region
    $region74: #{_lambda_.3} parent=1 // pred_check
      _
    $region75: #{_lambda_.3} parent=1 // pred_check_branch
      %128 = sbr.rel (0) target = $region77
    $region76: #{_lambda_.3} parent=1 // pred_region
      _
    $region77: #{_lambda_.3} parent=1 // pred_fallthru
      _
    // Predicated region
    $region78: #{_lambda_.3} parent=1 // pred_check
      _
    $region79: #{_lambda_.3} parent=1 // pred_check_branch
      %130 = sbr.rel (0) target = $region81
    $region80: #{_lambda_.3} parent=1 // pred_region
      _
    $region81: #{_lambda_.3} parent=1 // pred_fallthru
      _
    // Predicated region
    $region82: #{_lambda_.3} parent=1 // pred_check
      _
    $region83: #{_lambda_.3} parent=1 // pred_check_branch
      %132 = sbr.rel (0) target = $region85
    $region84: #{_lambda_.3} parent=1 // pred_region
      _
    $region85: #{_lambda_.3} parent=1 // pred_fallthru
      _
    // Predicated region
    $region86: #{_lambda_.3} parent=1 // pred_check
      _
    $region87: #{_lambda_.3} parent=1 // pred_check_branch
      %134 = sbr.rel (0) target = $region89
    $region88: #{_lambda_.3} parent=1 // pred_region
      _
    $region89: #{_lambda_.3} parent=1 // pred_fallthru
      _
    // Predicated region
    $region90: #{_lambda_.3} parent=1 // pred_check
      _
    $region91: #{_lambda_.3} parent=1 // pred_check_branch
      %136 = sbr.rel (0) target = $region93
    $region92: #{_lambda_.3} parent=1 // pred_region
      _
    $region93: #{_lambda_.3} parent=1 // pred_fallthru
      _
    // Predicated region
    $region94: #{_lambda_.3} parent=1 // pred_check
      _
    $region95: #{_lambda_.3} parent=1 // pred_check_branch
      %138 = sbr.rel (0) target = $region97
    $region96: #{_lambda_.3} parent=1 // pred_region
      _
    $region97: #{_lambda_.3} parent=1 // pred_fallthru
      _
    // Predicated region
    $region98: #{_lambda_.3} parent=1 // pred_check
      _
    $region99: #{_lambda_.3} parent=1 // pred_check_branch
      %140 = sbr.rel (0) target = $region101
    $region100: #{_lambda_.3} parent=1 // pred_region
      _
    $region101: #{_lambda_.3} parent=1 // pred_fallthru
      _
    // Predicated region
    $region102: #{_lambda_.3} parent=1 // pred_check
      _
    $region103: #{_lambda_.3} parent=1 // pred_check_branch
      %142 = sbr.rel (0) target = $region105
    $region104: #{_lambda_.3} parent=1 // pred_region
      _
    $region105: #{_lambda_.3} parent=1 // pred_fallthru
      _
    // Predicated region
    $region106: #{_lambda_.3} parent=1 // pred_check
      _
    $region107: #{_lambda_.3} parent=1 // pred_check_branch
      %144 = sbr.rel (0) target = $region109
    $region108: #{_lambda_.3} parent=1 // pred_region
      _
    $region109: #{_lambda_.3} parent=1 // pred_fallthru
      _
    // Predicated region
    $region110: #{_lambda_.3} parent=1 // pred_check
      _
    $region111: #{_lambda_.3} parent=1 // pred_check_branch
      %146 = sbr.rel (0) target = $region113
    $region112: #{_lambda_.3} parent=1 // pred_region
      _
    $region113: #{_lambda_.3} parent=1 // pred_fallthru
      _
    // Predicated region
    $region114: #{_lambda_.3} parent=1 // pred_check
      _
    $region115: #{_lambda_.3} parent=1 // pred_check_branch
      %148 = sbr.rel (0) target = $region117
    $region116: #{_lambda_.3} parent=1 // pred_region
      _
    $region117: #{_lambda_.3} parent=1 // pred_fallthru
      _
    // Predicated region
    $region118: #{_lambda_.3} parent=1 // pred_check
      _
    $region119: #{_lambda_.3} parent=1 // pred_check_branch
      %150 = sbr.rel (0) target = $region121
    $region120: #{_lambda_.3} parent=1 // pred_region
      _
    $region121: #{_lambda_.3} parent=1 // pred_fallthru
      _
    // Predicated region
    $region122: #{_lambda_.3} parent=1 // pred_check
      _
    $region123: #{_lambda_.3} parent=1 // pred_check_branch
      %152 = sbr.rel (0) target = $region125
    $region124: #{_lambda_.3} parent=1 // pred_region
      _
    $region125: #{_lambda_.3} parent=1 // pred_fallthru
      _
    // Predicated region
    $region126: #{_lambda_.3} parent=1 // pred_check
      _
    $region127: #{_lambda_.3} parent=1 // pred_check_branch
      %154 = sbr.rel (0) target = $region129
    $region128: #{_lambda_.3} parent=1 // pred_region
      _
    $region129: #{_lambda_.3} parent=1 // pred_fallthru
      _
    // Predicated region
    $region130: #{_lambda_.3} parent=1 // pred_check
      _
    $region131: #{_lambda_.3} parent=1 // pred_check_branch
      %156 = sbr.rel (0) target = $region133
    $region132: #{_lambda_.3} parent=1 // pred_region
      _
    $region133: #{_lambda_.3} parent=1 // pred_fallthru
      _
    // Predicated region
    $region134: #{_lambda_.3} parent=1 // pred_check
      _
    $region135: #{_lambda_.3} parent=1 // pred_check_branch
      %158 = sbr.rel (0) target = $region137
    $region136: #{_lambda_.3} parent=1 // pred_region
      _
    $region137: #{_lambda_.3} parent=1 // pred_fallthru
      _
    // Predicated region
    $region138: #{_lambda_.3} parent=1 // pred_check
      _
    $region139: #{_lambda_.3} parent=1 // pred_check_branch
      %160 = sbr.rel (0) target = $region141
    $region140: #{_lambda_.3} parent=1 // pred_region
      _
    $region141: #{_lambda_.3} parent=1 // pred_fallthru
      _
    // Predicated region
    $region142: #{_lambda_.3} parent=1 // pred_check
      _
    $region143: #{_lambda_.3} parent=1 // pred_check_branch
      %162 = sbr.rel (0) target = $region145
    $region144: #{_lambda_.3} parent=1 // pred_region
      _
    $region145: #{_lambda_.3} parent=1 // pred_fallthru
      _
    // Predicated region
    $region146: #{_lambda_.3} parent=1 // pred_check
      _
    $region147: #{_lambda_.3} parent=1 // pred_check_branch
      %164 = sbr.rel (0) target = $region149
    $region148: #{_lambda_.3} parent=1 // pred_region
      _
    $region149: #{_lambda_.3} parent=1 // pred_fallthru
      _
    // Predicated region
    $region150: #{_lambda_.3} parent=1 // pred_check
      _
    $region151: #{_lambda_.3} parent=1 // pred_check_branch
      %166 = sbr.rel (0) target = $region153
    $region152: #{_lambda_.3} parent=1 // pred_region
      _
    $region153: #{_lambda_.3} parent=1 // pred_fallthru
      _
    // Predicated region
    $region154: #{_lambda_.3} parent=1 // pred_check
      _
    $region155: #{_lambda_.3} parent=1 // pred_check_branch
      %168 = sbr.rel (0) target = $region157
    $region156: #{_lambda_.3} parent=1 // pred_region
      _
    $region157: #{_lambda_.3} parent=1 // pred_fallthru
      _
    // Predicated region
    $region158: #{_lambda_.3} parent=1 // pred_check
      _
    $region159: #{_lambda_.3} parent=1 // pred_check_branch
      %170 = sbr.rel (0) target = $region161
    $region160: #{_lambda_.3} parent=1 // pred_region
      _
    $region161: #{_lambda_.3} parent=1 // pred_fallthru
      _
    // Predicated region
    $region162: #{_lambda_.3} parent=1 // pred_check
      _
    $region163: #{_lambda_.3} parent=1 // pred_check_branch
      %172 = sbr.rel (0) target = $region165
    $region164: #{_lambda_.3} parent=1 // pred_region
      _
    $region165: #{_lambda_.3} parent=1 // pred_fallthru
      _
    // Predicated region
    $region166: #{_lambda_.3} parent=1 // pred_check
      _
    $region167: #{_lambda_.3} parent=1 // pred_check_branch
      %174 = sbr.rel (0) target = $region169
    $region168: #{_lambda_.3} parent=1 // pred_region
      _
    $region169: #{_lambda_.3} parent=1 // pred_fallthru
      _
    %v176 = vld [vmem:[%s1] sm:$0xf]
    %v177 = vld [vmem:[%s3] sm:$0xff]
    %v178 = vld [vmem:[%s3 + $0x8] sm:$0xff]
    %v179 = vld [vmem:[%s3 + $0x10] sm:$0xff]
    %v180 = vld [vmem:[%s3 + $0x18] sm:$0xff]
    %v181 = vld [vmem:[%s3 + $0x20] sm:$0xff]
    %v182 = vld [vmem:[%s3 + $0x28] sm:$0xff]
    %v183 = vld [vmem:[%s3 + $0x30] sm:$0xff]
    %v184 = vld [vmem:[%s3 + $0x38] sm:$0xff]
    %v185 = vld [vmem:[%s3 + $0x40] sm:$0xff]
    %v186 = vld [vmem:[%s3 + $0x48] sm:$0xff]
    %v187 = vld [vmem:[%s3 + $0x50] sm:$0xff]
    %v188 = vld [vmem:[%s3 + $0x58] sm:$0xff]
    %v189 = vld [vmem:[%s3 + $0x60] sm:$0xff]
    %v190 = vld [vmem:[%s3 + $0x68] sm:$0xff]
    %v191 = vld [vmem:[%s3 + $0x70] sm:$0xff]
    %v192 = vld [vmem:[%s3 + $0x78] sm:$0xff]
    %v193 = vld [vmem:[%s3 + $0x80] sm:$0xff]
    %v194 = vld [vmem:[%s3 + $0x88] sm:$0xff]
    %v195 = vld [vmem:[%s3 + $0x90] sm:$0xff]
    %v196 = vld [vmem:[%s3 + $0x98] sm:$0xff]
    %v197 = vld [vmem:[%s3 + $0xa0] sm:$0xff]
    %v198 = vld [vmem:[%s3 + $0xa8] sm:$0xff]
    %v199 = vld [vmem:[%s3 + $0xb0] sm:$0xff]
    %v200 = vld [vmem:[%s3 + $0xb8] sm:$0xff]
    %v201 = vld [vmem:[%s3 + $0xc0] sm:$0xff]
    %v202 = vld [vmem:[%s3 + $0xc8] sm:$0xff]
    %v203 = vld [vmem:[%s3 + $0xd0] sm:$0xff]
    %v204 = vld [vmem:[%s3 + $0xd8] sm:$0xff]
    %v205 = vld [vmem:[%s3 + $0xe0] sm:$0xff]
    %v206 = vld [vmem:[%s3 + $0xe8] sm:$0xff]
    %v207 = vld [vmem:[%s3 + $0xf0] sm:$0xff]
    %v208 = vld [vmem:[%s3 + $0xf8] sm:$0xff]
    %v209 = vld [vmem:[%s3 + $0x100] sm:$0xff]
    %v210 = vld [vmem:[%s3 + $0x108] sm:$0xff]
    %v211 = vld [vmem:[%s3 + $0x110] sm:$0xff]
    %v212 = vld [vmem:[%s3 + $0x118] sm:$0xff]
    %v213 = vld [vmem:[%s3 + $0x120] sm:$0xff]
    %v214 = vld [vmem:[%s3 + $0x128] sm:$0xff]
    %v215 = vld [vmem:[%s3 + $0x130] sm:$0xff]
    %v216 = vld [vmem:[%s3 + $0x138] sm:$0xff]
    %v217 = vld [vmem:[%s3 + $0x140] sm:$0xff]
    %v218 = vld [vmem:[%s3 + $0x148] sm:$0xff]
    %v219 = vld [vmem:[%s3 + $0x150] sm:$0xff]
    %v220 = vld [vmem:[%s3 + $0x158] sm:$0xff]
    %v221 = vld [vmem:[%s3 + $0x160] sm:$0xff]
    %v222 = vld [vmem:[%s3 + $0x168] sm:$0xff]
    %v223 = vld [vmem:[%s3 + $0x170] sm:$0xff]
    %v224 = vld [vmem:[%s3 + $0x178] sm:$0xff]
    %v225 = vld [vmem:[%s3 + $0x180] sm:$0xff]
    %v226 = vld [vmem:[%s3 + $0x188] sm:$0xff]
    %v227 = vld [vmem:[%s3 + $0x190] sm:$0xff]
    %v228 = vld [vmem:[%s3 + $0x198] sm:$0xff]
    %v229 = vld [vmem:[%s3 + $0x1a0] sm:$0xff]
    %v230 = vld [vmem:[%s3 + $0x1a8] sm:$0xff]
    %v231 = vld [vmem:[%s3 + $0x1b0] sm:$0xff]
    %v232 = vld [vmem:[%s3 + $0x1b8] sm:$0xff]
    %v233 = vld [vmem:[%s3 + $0x1c0] sm:$0xff]
    %v234 = vld [vmem:[%s3 + $0x1c8] sm:$0xff]
    %v235 = vld [vmem:[%s3 + $0x1d0] sm:$0xff]
    %v236 = vld [vmem:[%s3 + $0x1d8] sm:$0xff]
    %v237 = vld [vmem:[%s3 + $0x1e0] sm:$0xff]
    %v238 = vld [vmem:[%s3 + $0x1e8] sm:$0xff]
    %v239 = vld [vmem:[%s3 + $0x1f0] sm:$0xff]
    %v240 = vld [vmem:[%s3 + $0x1f8] sm:$0xff]
    %v241 = vld [vmem:[%s3 + $0x200] sm:$0xff]
    %v242 = vld [vmem:[%s3 + $0x208] sm:$0xff]
    %v243 = vld [vmem:[%s3 + $0x210] sm:$0xff]
    %v244 = vld [vmem:[%s3 + $0x218] sm:$0xff]
    %v245 = vld [vmem:[%s3 + $0x220] sm:$0xff]
    %v246 = vld [vmem:[%s3 + $0x228] sm:$0xff]
    %v247 = vld [vmem:[%s3 + $0x230] sm:$0xff]
    %v248 = vld [vmem:[%s3 + $0x238] sm:$0xff]
    %v249 = vld [vmem:[%s3 + $0x240] sm:$0xff]
    %v250 = vld [vmem:[%s3 + $0x248] sm:$0xff]
    %v251 = vld [vmem:[%s3 + $0x250] sm:$0xff]
    %v252 = vld [vmem:[%s3 + $0x258] sm:$0xff]
    %v253 = vld [vmem:[%s3 + $0x260] sm:$0xff]
    %v254 = vld [vmem:[%s3 + $0x268] sm:$0xff]
    %v255 = vld [vmem:[%s3 + $0x270] sm:$0xff]
    %v256 = vld [vmem:[%s3 + $0x278] sm:$0xff]
    %v257 = vld [vmem:[%s3 + $0x280] sm:$0xff]
    %v258 = vld [vmem:[%s3 + $0x288] sm:$0xff]
    %v259 = vld [vmem:[%s3 + $0x290] sm:$0xff]
    %v260 = vld [vmem:[%s3 + $0x298] sm:$0xff]
    %v261 = vld [vmem:[%s3 + $0x2a0] sm:$0xff]
    %v262 = vld [vmem:[%s3 + $0x2a8] sm:$0xff]
    %v263 = vld [vmem:[%s3 + $0x2b0] sm:$0xff]
    %v264 = vld [vmem:[%s3 + $0x2b8] sm:$0xff]
    %v265 = vld [vmem:[%s3 + $0x2c0] sm:$0xff]
    %v266 = vld [vmem:[%s3 + $0x2c8] sm:$0xff]
    %v267 = vld [vmem:[%s3 + $0x2d0] sm:$0xff]
    %v268 = vld [vmem:[%s3 + $0x2d8] sm:$0xff]
    %v269 = vld [vmem:[%s3 + $0x2e0] sm:$0xff]
    %v270 = vld [vmem:[%s3 + $0x2e8] sm:$0xff]
    %v271 = vld [vmem:[%s3 + $0x2f0] sm:$0xff]
    %v272 = vld [vmem:[%s3 + $0x2f8] sm:$0xff]
    %v273 = vld [vmem:[%s3 + $0x300] sm:$0xff]
    %v274 = vld [vmem:[%s3 + $0x308] sm:$0xff]
    %v275 = vld [vmem:[%s3 + $0x310] sm:$0xff]
    %v276 = vld [vmem:[%s3 + $0x318] sm:$0xff]
    %v277 = vld [vmem:[%s3 + $0x320] sm:$0xff]
    %v278 = vld [vmem:[%s3 + $0x328] sm:$0xff]
    %v279 = vld [vmem:[%s3 + $0x330] sm:$0xff]
    %v280 = vld [vmem:[%s3 + $0x338] sm:$0xff]
    %v281 = vld [vmem:[%s3 + $0x340] sm:$0xff]
    %v282 = vld [vmem:[%s3 + $0x348] sm:$0xff]
    %v283 = vld [vmem:[%s3 + $0x350] sm:$0xff]
    %v284 = vld [vmem:[%s3 + $0x358] sm:$0xff]
    %v285 = vld [vmem:[%s3 + $0x360] sm:$0xff]
    %v286 = vld [vmem:[%s3 + $0x368] sm:$0xff]
    %v287 = vld [vmem:[%s3 + $0x370] sm:$0xff]
    %v288 = vld [vmem:[%s3 + $0x378] sm:$0xff]
    %v289 = vld [vmem:[%s3 + $0x380] sm:$0xff]
    %v290 = vld [vmem:[%s3 + $0x388] sm:$0xff]
    %v291 = vld [vmem:[%s3 + $0x390] sm:$0xff]
    %v292 = vld [vmem:[%s3 + $0x398] sm:$0xff]
    %v293 = vld [vmem:[%s3 + $0x3a0] sm:$0xff]
    %v294 = vld [vmem:[%s3 + $0x3a8] sm:$0xff]
    %v295 = vld [vmem:[%s3 + $0x3b0] sm:$0xff]
    %v296 = vld [vmem:[%s3 + $0x3b8] sm:$0xff]
    %v297 = vld [vmem:[%s3 + $0x3c0] sm:$0xff]
    %v298 = vld [vmem:[%s3 + $0x3c8] sm:$0xff]
    %v299 = vld [vmem:[%s3 + $0x3d0] sm:$0xff]
    %v300 = vld [vmem:[%s3 + $0x3d8] sm:$0xff]
    %v301 = vld [vmem:[%s3 + $0x3e0] sm:$0xff]
    %v302 = vld [vmem:[%s3 + $0x3e8] sm:$0xff]
    %v303 = vld [vmem:[%s3 + $0x3f0] sm:$0xff]
    %v304 = vld [vmem:[%s3 + $0x3f8] sm:$0xff]
    %v305 = vld [vmem:[%s5] sm:$0xf]
    %v307 = vlaneseq
    %v308 = vshrl.u32 %v307, 7
    %v309 = vsub.s32 0, %v308
    %v310 = vrot.slane %v305, %v309
    %v311 = vlaneseq
    %v312 = vshrl.u32 %v311, 7
    %v313 = vsub.s32 1, %v312
    %v314 = vrot.slane %v305, %v313
    %v315 = vlaneseq
    %v316 = vshrl.u32 %v315, 7
    %v317 = vsub.s32 2, %v316
    %v318 = vrot.slane %v305, %v317
    %v319 = vlaneseq
    %v320 = vshrl.u32 %v319, 7
    %v321 = vsub.s32 3, %v320
    %v322 = vrot.slane %v305, %v321
    %v329 = vunpack.c.l.s4 1966171168
    %v330 = vunpack.c.0.s8 %v329
    %v331 = vlaneseq
    %v332 = vshrl.u32 %v331, 7
    %v333 = vsub.s32 %v330, %v332
    %v334 = vrot.slane %v176, %v333
    %v335 = vcombine.high %v334, %v334
    %v337 = vunpack.c.l.s4 1966171168
    %v338 = vunpack.c.0.s8 %v337
    %v339 = vlaneseq
    %v340 = vshrl.u32 %v339, 7
    %v341 = vsub.s32 %v338, %v340
    %v342 = vrot.slane %v334, %v341
    %v344 = vunpack.c.l.s4 1966171168
    %v345 = vunpack.c.0.s8 %v344
    %v346 = vlaneseq
    %v347 = vshrl.u32 %v346, 7
    %v348 = vsub.s32 %v345, %v347
    %v349 = vrot.slane %v335, %v348
    %v350 = vcombine.high %v342, %v342
    %v351 = vcombine.high %v349, %v349
    %v484 = vunpack.c.l.b16 %v177
    %v485 = vunpack.c.h.b16 %v177
    %v486 = vunpack.c.l.b16 %v178
    %v487 = vunpack.c.h.b16 %v178
    %v488 = vunpack.c.l.b16 %v179
    %v489 = vunpack.c.h.b16 %v179
    %v490 = vunpack.c.l.b16 %v180
    %v491 = vunpack.c.h.b16 %v180
    %v492 = vunpack.c.l.b16 %v181
    %v493 = vunpack.c.h.b16 %v181
    %v494 = vunpack.c.l.b16 %v182
    %v495 = vunpack.c.h.b16 %v182
    %v496 = vunpack.c.l.b16 %v183
    %v497 = vunpack.c.h.b16 %v183
    %v498 = vunpack.c.l.b16 %v184
    %v499 = vunpack.c.h.b16 %v184
    %v500 = vunpack.c.l.b16 %v185
    %v501 = vunpack.c.h.b16 %v185
    %v502 = vunpack.c.l.b16 %v186
    %v503 = vunpack.c.h.b16 %v186
    %v504 = vunpack.c.l.b16 %v187
    %v505 = vunpack.c.h.b16 %v187
    %v506 = vunpack.c.l.b16 %v188
    %v507 = vunpack.c.h.b16 %v188
    %v508 = vunpack.c.l.b16 %v189
    %v509 = vunpack.c.h.b16 %v189
    %v510 = vunpack.c.l.b16 %v190
    %v511 = vunpack.c.h.b16 %v190
    %v512 = vunpack.c.l.b16 %v191
    %v513 = vunpack.c.h.b16 %v191
    %v514 = vunpack.c.l.b16 %v192
    %v515 = vunpack.c.h.b16 %v192
    %v516 = vunpack.c.l.b16 %v193
    %v517 = vunpack.c.h.b16 %v193
    %v518 = vunpack.c.l.b16 %v194
    %v519 = vunpack.c.h.b16 %v194
    %v520 = vunpack.c.l.b16 %v195
    %v521 = vunpack.c.h.b16 %v195
    %v522 = vunpack.c.l.b16 %v196
    %v523 = vunpack.c.h.b16 %v196
    %v524 = vunpack.c.l.b16 %v197
    %v525 = vunpack.c.h.b16 %v197
    %v526 = vunpack.c.l.b16 %v198
    %v527 = vunpack.c.h.b16 %v198
    %v528 = vunpack.c.l.b16 %v199
    %v529 = vunpack.c.h.b16 %v199
    %v530 = vunpack.c.l.b16 %v200
    %v531 = vunpack.c.h.b16 %v200
    %v532 = vunpack.c.l.b16 %v201
    %v533 = vunpack.c.h.b16 %v201
    %v534 = vunpack.c.l.b16 %v202
    %v535 = vunpack.c.h.b16 %v202
    %v536 = vunpack.c.l.b16 %v203
    %v537 = vunpack.c.h.b16 %v203
    %v538 = vunpack.c.l.b16 %v204
    %v539 = vunpack.c.h.b16 %v204
    %v540 = vunpack.c.l.b16 %v205
    %v541 = vunpack.c.h.b16 %v205
    %v542 = vunpack.c.l.b16 %v206
    %v543 = vunpack.c.h.b16 %v206
    %v544 = vunpack.c.l.b16 %v207
    %v545 = vunpack.c.h.b16 %v207
    %v546 = vunpack.c.l.b16 %v208
    %v547 = vunpack.c.h.b16 %v208
    %v548 = vunpack.c.l.b16 %v209
    %v549 = vunpack.c.h.b16 %v209
    %v550 = vunpack.c.l.b16 %v210
    %v551 = vunpack.c.h.b16 %v210
    %v552 = vunpack.c.l.b16 %v211
    %v553 = vunpack.c.h.b16 %v211
    %v554 = vunpack.c.l.b16 %v212
    %v555 = vunpack.c.h.b16 %v212
    %v556 = vunpack.c.l.b16 %v213
    %v557 = vunpack.c.h.b16 %v213
    %v558 = vunpack.c.l.b16 %v214
    %v559 = vunpack.c.h.b16 %v214
    %v560 = vunpack.c.l.b16 %v215
    %v561 = vunpack.c.h.b16 %v215
    %v562 = vunpack.c.l.b16 %v216
    %v563 = vunpack.c.h.b16 %v216
    %v564 = vunpack.c.l.b16 %v217
    %v565 = vunpack.c.h.b16 %v217
    %v566 = vunpack.c.l.b16 %v218
    %v567 = vunpack.c.h.b16 %v218
    %v568 = vunpack.c.l.b16 %v219
    %v569 = vunpack.c.h.b16 %v219
    %v570 = vunpack.c.l.b16 %v220
    %v571 = vunpack.c.h.b16 %v220
    %v572 = vunpack.c.l.b16 %v221
    %v573 = vunpack.c.h.b16 %v221
    %v574 = vunpack.c.l.b16 %v222
    %v575 = vunpack.c.h.b16 %v222
    %v576 = vunpack.c.l.b16 %v223
    %v577 = vunpack.c.h.b16 %v223
    %v578 = vunpack.c.l.b16 %v224
    %v579 = vunpack.c.h.b16 %v224
    %v580 = vunpack.c.l.b16 %v225
    %v581 = vunpack.c.h.b16 %v225
    %v582 = vunpack.c.l.b16 %v226
    %v583 = vunpack.c.h.b16 %v226
    %v584 = vunpack.c.l.b16 %v227
    %v585 = vunpack.c.h.b16 %v227
    %v586 = vunpack.c.l.b16 %v228
    %v587 = vunpack.c.h.b16 %v228
    %v588 = vunpack.c.l.b16 %v229
    %v589 = vunpack.c.h.b16 %v229
    %v590 = vunpack.c.l.b16 %v230
    %v591 = vunpack.c.h.b16 %v230
    %v592 = vunpack.c.l.b16 %v231
    %v593 = vunpack.c.h.b16 %v231
    %v594 = vunpack.c.l.b16 %v232
    %v595 = vunpack.c.h.b16 %v232
    %v596 = vunpack.c.l.b16 %v233
    %v597 = vunpack.c.h.b16 %v233
    %v598 = vunpack.c.l.b16 %v234
    %v599 = vunpack.c.h.b16 %v234
    %v600 = vunpack.c.l.b16 %v235
    %v601 = vunpack.c.h.b16 %v235
    %v602 = vunpack.c.l.b16 %v236
    %v603 = vunpack.c.h.b16 %v236
    %v604 = vunpack.c.l.b16 %v237
    %v605 = vunpack.c.h.b16 %v237
    %v606 = vunpack.c.l.b16 %v238
    %v607 = vunpack.c.h.b16 %v238
    %v608 = vunpack.c.l.b16 %v239
    %v609 = vunpack.c.h.b16 %v239
    %v610 = vunpack.c.l.b16 %v240
    %v611 = vunpack.c.h.b16 %v240
    %v612 = vunpack.c.l.b16 %v241
    %v613 = vunpack.c.h.b16 %v241
    %v614 = vunpack.c.l.b16 %v242
    %v615 = vunpack.c.h.b16 %v242
    %v616 = vunpack.c.l.b16 %v243
    %v617 = vunpack.c.h.b16 %v243
    %v618 = vunpack.c.l.b16 %v244
    %v619 = vunpack.c.h.b16 %v244
    %v620 = vunpack.c.l.b16 %v245
    %v621 = vunpack.c.h.b16 %v245
    %v622 = vunpack.c.l.b16 %v246
    %v623 = vunpack.c.h.b16 %v246
    %v624 = vunpack.c.l.b16 %v247
    %v625 = vunpack.c.h.b16 %v247
    %v626 = vunpack.c.l.b16 %v248
    %v627 = vunpack.c.h.b16 %v248
    %v628 = vunpack.c.l.b16 %v249
    %v629 = vunpack.c.h.b16 %v249
    %v630 = vunpack.c.l.b16 %v250
    %v631 = vunpack.c.h.b16 %v250
    %v632 = vunpack.c.l.b16 %v251
    %v633 = vunpack.c.h.b16 %v251
    %v634 = vunpack.c.l.b16 %v252
    %v635 = vunpack.c.h.b16 %v252
    %v636 = vunpack.c.l.b16 %v253
    %v637 = vunpack.c.h.b16 %v253
    %v638 = vunpack.c.l.b16 %v254
    %v639 = vunpack.c.h.b16 %v254
    %v640 = vunpack.c.l.b16 %v255
    %v641 = vunpack.c.h.b16 %v255
    %v642 = vunpack.c.l.b16 %v256
    %v643 = vunpack.c.h.b16 %v256
    %v644 = vunpack.c.l.b16 %v257
    %v645 = vunpack.c.h.b16 %v257
    %v646 = vunpack.c.l.b16 %v258
    %v647 = vunpack.c.h.b16 %v258
    %v648 = vunpack.c.l.b16 %v259
    %v649 = vunpack.c.h.b16 %v259
    %v650 = vunpack.c.l.b16 %v260
    %v651 = vunpack.c.h.b16 %v260
    %v652 = vunpack.c.l.b16 %v261
    %v653 = vunpack.c.h.b16 %v261
    %v654 = vunpack.c.l.b16 %v262
    %v655 = vunpack.c.h.b16 %v262
    %v656 = vunpack.c.l.b16 %v263
    %v657 = vunpack.c.h.b16 %v263
    %v658 = vunpack.c.l.b16 %v264
    %v659 = vunpack.c.h.b16 %v264
    %v660 = vunpack.c.l.b16 %v265
    %v661 = vunpack.c.h.b16 %v265
    %v662 = vunpack.c.l.b16 %v266
    %v663 = vunpack.c.h.b16 %v266
    %v664 = vunpack.c.l.b16 %v267
    %v665 = vunpack.c.h.b16 %v267
    %v666 = vunpack.c.l.b16 %v268
    %v667 = vunpack.c.h.b16 %v268
    %v668 = vunpack.c.l.b16 %v269
    %v669 = vunpack.c.h.b16 %v269
    %v670 = vunpack.c.l.b16 %v270
    %v671 = vunpack.c.h.b16 %v270
    %v672 = vunpack.c.l.b16 %v271
    %v673 = vunpack.c.h.b16 %v271
    %v674 = vunpack.c.l.b16 %v272
    %v675 = vunpack.c.h.b16 %v272
    %v676 = vunpack.c.l.b16 %v273
    %v677 = vunpack.c.h.b16 %v273
    %v678 = vunpack.c.l.b16 %v274
    %v679 = vunpack.c.h.b16 %v274
    %v680 = vunpack.c.l.b16 %v275
    %v681 = vunpack.c.h.b16 %v275
    %v682 = vunpack.c.l.b16 %v276
    %v683 = vunpack.c.h.b16 %v276
    %v684 = vunpack.c.l.b16 %v277
    %v685 = vunpack.c.h.b16 %v277
    %v686 = vunpack.c.l.b16 %v278
    %v687 = vunpack.c.h.b16 %v278
    %v688 = vunpack.c.l.b16 %v279
    %v689 = vunpack.c.h.b16 %v279
    %v690 = vunpack.c.l.b16 %v280
    %v691 = vunpack.c.h.b16 %v280
    %v692 = vunpack.c.l.b16 %v281
    %v693 = vunpack.c.h.b16 %v281
    %v694 = vunpack.c.l.b16 %v282
    %v695 = vunpack.c.h.b16 %v282
    %v696 = vunpack.c.l.b16 %v283
    %v697 = vunpack.c.h.b16 %v283
    %v698 = vunpack.c.l.b16 %v284
    %v699 = vunpack.c.h.b16 %v284
    %v700 = vunpack.c.l.b16 %v285
    %v701 = vunpack.c.h.b16 %v285
    %v702 = vunpack.c.l.b16 %v286
    %v703 = vunpack.c.h.b16 %v286
    %v704 = vunpack.c.l.b16 %v287
    %v705 = vunpack.c.h.b16 %v287
    %v706 = vunpack.c.l.b16 %v288
    %v707 = vunpack.c.h.b16 %v288
    %v708 = vunpack.c.l.b16 %v289
    %v709 = vunpack.c.h.b16 %v289
    %v710 = vunpack.c.l.b16 %v290
    %v711 = vunpack.c.h.b16 %v290
    %v712 = vunpack.c.l.b16 %v291
    %v713 = vunpack.c.h.b16 %v291
    %v714 = vunpack.c.l.b16 %v292
    %v715 = vunpack.c.h.b16 %v292
    %v716 = vunpack.c.l.b16 %v293
    %v717 = vunpack.c.h.b16 %v293
    %v718 = vunpack.c.l.b16 %v294
    %v719 = vunpack.c.h.b16 %v294
    %v720 = vunpack.c.l.b16 %v295
    %v721 = vunpack.c.h.b16 %v295
    %v722 = vunpack.c.l.b16 %v296
    %v723 = vunpack.c.h.b16 %v296
    %v724 = vunpack.c.l.b16 %v297
    %v725 = vunpack.c.h.b16 %v297
    %v726 = vunpack.c.l.b16 %v298
    %v727 = vunpack.c.h.b16 %v298
    %v728 = vunpack.c.l.b16 %v299
    %v729 = vunpack.c.h.b16 %v299
    %v730 = vunpack.c.l.b16 %v300
    %v731 = vunpack.c.h.b16 %v300
    %v732 = vunpack.c.l.b16 %v301
    %v733 = vunpack.c.h.b16 %v301
    %v734 = vunpack.c.l.b16 %v302
    %v735 = vunpack.c.h.b16 %v302
    %v736 = vunpack.c.l.b16 %v303
    %v737 = vunpack.c.h.b16 %v303
    %v738 = vunpack.c.l.b16 %v304
    %v739 = vunpack.c.h.b16 %v304
    %v740 = vpack.c.b16 %v488, %v484
    %v741 = vpack.c.b16 %v489, %v485
    %v742 = vpack.c.b16 %v490, %v486
    %v743 = vpack.c.b16 %v491, %v487
    %v744 = vpack.c.b16 %v496, %v492
    %v745 = vpack.c.b16 %v497, %v493
    %v746 = vpack.c.b16 %v498, %v494
    %v747 = vpack.c.b16 %v499, %v495
    %v748 = vpack.c.b16 %v504, %v500
    %v749 = vpack.c.b16 %v505, %v501
    %v750 = vpack.c.b16 %v506, %v502
    %v751 = vpack.c.b16 %v507, %v503
    %v752 = vpack.c.b16 %v512, %v508
    %v753 = vpack.c.b16 %v513, %v509
    %v754 = vpack.c.b16 %v514, %v510
    %v755 = vpack.c.b16 %v515, %v511
    %v756 = vpack.c.b16 %v520, %v516
    %v757 = vpack.c.b16 %v521, %v517
    %v758 = vpack.c.b16 %v522, %v518
    %v759 = vpack.c.b16 %v523, %v519
    %v760 = vpack.c.b16 %v528, %v524
    %v761 = vpack.c.b16 %v529, %v525
    %v762 = vpack.c.b16 %v530, %v526
    %v763 = vpack.c.b16 %v531, %v527
    %v764 = vpack.c.b16 %v536, %v532
    %v765 = vpack.c.b16 %v537, %v533
    %v766 = vpack.c.b16 %v538, %v534
    %v767 = vpack.c.b16 %v539, %v535
    %v768 = vpack.c.b16 %v544, %v540
    %v769 = vpack.c.b16 %v545, %v541
    %v770 = vpack.c.b16 %v546, %v542
    %v771 = vpack.c.b16 %v547, %v543
    %v772 = vpack.c.b16 %v552, %v548
    %v773 = vpack.c.b16 %v553, %v549
    %v774 = vpack.c.b16 %v554, %v550
    %v775 = vpack.c.b16 %v555, %v551
    %v776 = vpack.c.b16 %v560, %v556
    %v777 = vpack.c.b16 %v561, %v557
    %v778 = vpack.c.b16 %v562, %v558
    %v779 = vpack.c.b16 %v563, %v559
    %v780 = vpack.c.b16 %v568, %v564
    %v781 = vpack.c.b16 %v569, %v565
    %v782 = vpack.c.b16 %v570, %v566
    %v783 = vpack.c.b16 %v571, %v567
    %v784 = vpack.c.b16 %v576, %v572
    %v785 = vpack.c.b16 %v577, %v573
    %v786 = vpack.c.b16 %v578, %v574
    %v787 = vpack.c.b16 %v579, %v575
    %v788 = vpack.c.b16 %v584, %v580
    %v789 = vpack.c.b16 %v585, %v581
    %v790 = vpack.c.b16 %v586, %v582
    %v791 = vpack.c.b16 %v587, %v583
    %v792 = vpack.c.b16 %v592, %v588
    %v793 = vpack.c.b16 %v593, %v589
    %v794 = vpack.c.b16 %v594, %v590
    %v795 = vpack.c.b16 %v595, %v591
    %v796 = vpack.c.b16 %v600, %v596
    %v797 = vpack.c.b16 %v601, %v597
    %v798 = vpack.c.b16 %v602, %v598
    %v799 = vpack.c.b16 %v603, %v599
    %v800 = vpack.c.b16 %v608, %v604
    %v801 = vpack.c.b16 %v609, %v605
    %v802 = vpack.c.b16 %v610, %v606
    %v803 = vpack.c.b16 %v611, %v607
    %v804 = vpack.c.b16 %v616, %v612
    %v805 = vpack.c.b16 %v617, %v613
    %v806 = vpack.c.b16 %v618, %v614
    %v807 = vpack.c.b16 %v619, %v615
    %v808 = vpack.c.b16 %v624, %v620
    %v809 = vpack.c.b16 %v625, %v621
    %v810 = vpack.c.b16 %v626, %v622
    %v811 = vpack.c.b16 %v627, %v623
    %v812 = vpack.c.b16 %v632, %v628
    %v813 = vpack.c.b16 %v633, %v629
    %v814 = vpack.c.b16 %v634, %v630
    %v815 = vpack.c.b16 %v635, %v631
    %v816 = vpack.c.b16 %v640, %v636
    %v817 = vpack.c.b16 %v641, %v637
    %v818 = vpack.c.b16 %v642, %v638
    %v819 = vpack.c.b16 %v643, %v639
    %v820 = vpack.c.b16 %v648, %v644
    %v821 = vpack.c.b16 %v649, %v645
    %v822 = vpack.c.b16 %v650, %v646
    %v823 = vpack.c.b16 %v651, %v647
    %v824 = vpack.c.b16 %v656, %v652
    %v825 = vpack.c.b16 %v657, %v653
    %v826 = vpack.c.b16 %v658, %v654
    %v827 = vpack.c.b16 %v659, %v655
    %v828 = vpack.c.b16 %v664, %v660
    %v829 = vpack.c.b16 %v665, %v661
    %v830 = vpack.c.b16 %v666, %v662
    %v831 = vpack.c.b16 %v667, %v663
    %v832 = vpack.c.b16 %v672, %v668
    %v833 = vpack.c.b16 %v673, %v669
    %v834 = vpack.c.b16 %v674, %v670
    %v835 = vpack.c.b16 %v675, %v671
    %v836 = vpack.c.b16 %v680, %v676
    %v837 = vpack.c.b16 %v681, %v677
    %v838 = vpack.c.b16 %v682, %v678
    %v839 = vpack.c.b16 %v683, %v679
    %v840 = vpack.c.b16 %v688, %v684
    %v841 = vpack.c.b16 %v689, %v685
    %v842 = vpack.c.b16 %v690, %v686
    %v843 = vpack.c.b16 %v691, %v687
    %v844 = vpack.c.b16 %v696, %v692
    %v845 = vpack.c.b16 %v697, %v693
    %v846 = vpack.c.b16 %v698, %v694
    %v847 = vpack.c.b16 %v699, %v695
    %v848 = vpack.c.b16 %v704, %v700
    %v849 = vpack.c.b16 %v705, %v701
    %v850 = vpack.c.b16 %v706, %v702
    %v851 = vpack.c.b16 %v707, %v703
    %v852 = vpack.c.b16 %v712, %v708
    %v853 = vpack.c.b16 %v713, %v709
    %v854 = vpack.c.b16 %v714, %v710
    %v855 = vpack.c.b16 %v715, %v711
    %v856 = vpack.c.b16 %v720, %v716
    %v857 = vpack.c.b16 %v721, %v717
    %v858 = vpack.c.b16 %v722, %v718
    %v859 = vpack.c.b16 %v723, %v719
    %v860 = vpack.c.b16 %v728, %v724
    %v861 = vpack.c.b16 %v729, %v725
    %v862 = vpack.c.b16 %v730, %v726
    %v863 = vpack.c.b16 %v731, %v727
    %v864 = vpack.c.b16 %v736, %v732
    %v865 = vpack.c.b16 %v737, %v733
    %v866 = vpack.c.b16 %v738, %v734
    %v867 = vpack.c.b16 %v739, %v735
    %996 = vmatprep.subr.bf16.mxu0 %v741
    %997 = vmatpush1.bf16.msra.mxu0 %v740
    %998 = vmatprep.subr.bf16.mxu0 %v745
    %999 = vmatpush1.bf16.msra.mxu0 %v744
    %1000 = vmatprep.subr.bf16.mxu0 %v749
    %1001 = vmatpush1.bf16.msra.mxu0 %v748
    %1002 = vmatprep.subr.bf16.mxu0 %v753
    %1003 = vmatpush1.bf16.msra.mxu0 %v752
    %1004 = vmatprep.subr.bf16.mxu0 %v757
    %1005 = vmatpush1.bf16.msra.mxu0 %v756
    %1006 = vmatprep.subr.bf16.mxu0 %v761
    %1007 = vmatpush1.bf16.msra.mxu0 %v760
    %1008 = vmatprep.subr.bf16.mxu0 %v765
    %1009 = vmatpush1.bf16.msra.mxu0 %v764
    %1010 = vmatprep.subr.bf16.mxu0 %v769
    %1011 = vmatpush1.bf16.msra.mxu0 %v768
    %1012 = vmatprep.subr.bf16.mxu0 %v773
    %1013 = vmatpush1.bf16.msra.mxu0 %v772
    %1014 = vmatprep.subr.bf16.mxu0 %v777
    %1015 = vmatpush1.bf16.msra.mxu0 %v776
    %1016 = vmatprep.subr.bf16.mxu0 %v781
    %1017 = vmatpush1.bf16.msra.mxu0 %v780
    %1018 = vmatprep.subr.bf16.mxu0 %v785
    %1019 = vmatpush1.bf16.msra.mxu0 %v784
    %1020 = vmatprep.subr.bf16.mxu0 %v789
    %1021 = vmatpush1.bf16.msra.mxu0 %v788
    %1022 = vmatprep.subr.bf16.mxu0 %v793
    %1023 = vmatpush1.bf16.msra.mxu0 %v792
    %1024 = vmatprep.subr.bf16.mxu0 %v797
    %1025 = vmatpush1.bf16.msra.mxu0 %v796
    %1026 = vmatprep.subr.bf16.mxu0 %v801
    %1027 = vmatpush1.bf16.msra.mxu0 %v800
    %1028 = vmatprep.mubr.bf16.mxu0 %v349
    %1029 = vmatmul.mubr.bf16.gmra.mrb[0].mxu0 %v342
    %v1030 = vpop.f32.mrb[0].mxu0
    %v1031 = vadd.f32 %v310, %v1030
    %v1032 = vpop.f32.mrb[0].mxu0
    %v1033 = vadd.f32 %v314, %v1032
    %v1034 = vpop.f32.mrb[0].mxu0
    %v1035 = vpop.f32.mrb[0].mxu0
    %1036 = vdwg.mxu0
    %1037 = vmatprep.subr.bf16.mxu0 %v805
    %1038 = vmatpush1.bf16.msra.mxu0 %v804
    %1039 = vmatprep.subr.bf16.mxu0 %v809
    %1040 = vmatpush1.bf16.msra.mxu0 %v808
    %1041 = vmatprep.subr.bf16.mxu0 %v813
    %1042 = vmatpush1.bf16.msra.mxu0 %v812
    %1043 = vmatprep.subr.bf16.mxu0 %v817
    %1044 = vmatpush1.bf16.msra.mxu0 %v816
    %1045 = vmatprep.subr.bf16.mxu0 %v821
    %1046 = vmatpush1.bf16.msra.mxu0 %v820
    %1047 = vmatprep.subr.bf16.mxu0 %v825
    %1048 = vmatpush1.bf16.msra.mxu0 %v824
    %1049 = vmatprep.subr.bf16.mxu0 %v829
    %1050 = vmatpush1.bf16.msra.mxu0 %v828
    %1051 = vmatprep.subr.bf16.mxu0 %v833
    %1052 = vmatpush1.bf16.msra.mxu0 %v832
    %1053 = vmatprep.subr.bf16.mxu0 %v837
    %1054 = vmatpush1.bf16.msra.mxu0 %v836
    %1055 = vmatprep.subr.bf16.mxu0 %v841
    %1056 = vmatpush1.bf16.msra.mxu0 %v840
    %1057 = vmatprep.subr.bf16.mxu0 %v845
    %1058 = vmatpush1.bf16.msra.mxu0 %v844
    %1059 = vmatprep.subr.bf16.mxu0 %v849
    %1060 = vmatpush1.bf16.msra.mxu0 %v848
    %1061 = vmatprep.subr.bf16.mxu0 %v853
    %1062 = vmatpush1.bf16.msra.mxu0 %v852
    %1063 = vmatprep.subr.bf16.mxu0 %v857
    %1064 = vmatpush1.bf16.msra.mxu0 %v856
    %1065 = vmatprep.subr.bf16.mxu0 %v861
    %1066 = vmatpush1.bf16.msra.mxu0 %v860
    %1067 = vmatprep.subr.bf16.mxu0 %v865
    %1068 = vmatpush1.bf16.msra.mxu0 %v864
    %1069 = vmatprep.mubr.bf16.mxu0 %v351
    %1070 = vmatmul.mubr.bf16.gmra.mrb[0].mxu0 %v350
    %v1071 = vpop.f32.mrb[0].mxu0
    %v1072 = vadd.f32 %v1031, %v1071
    %v1073 = vpop.f32.mrb[0].mxu0
    %v1074 = vadd.f32 %v1033, %v1073
    %v1075 = vpop.f32.mrb[0].mxu0
    %v1076 = vpop.f32.mrb[0].mxu0
    %1077 = vdwg.mxu0
    %1078 = vmatprep.subr.bf16.mxu0 %v743
    %1079 = vmatpush1.bf16.msra.mxu0 %v742
    %1080 = vmatprep.subr.bf16.mxu0 %v747
    %1081 = vmatpush1.bf16.msra.mxu0 %v746
    %1082 = vmatprep.subr.bf16.mxu0 %v751
    %1083 = vmatpush1.bf16.msra.mxu0 %v750
    %1084 = vmatprep.subr.bf16.mxu0 %v755
    %1085 = vmatpush1.bf16.msra.mxu0 %v754
    %1086 = vmatprep.subr.bf16.mxu0 %v759
    %1087 = vmatpush1.bf16.msra.mxu0 %v758
    %1088 = vmatprep.subr.bf16.mxu0 %v763
    %1089 = vmatpush1.bf16.msra.mxu0 %v762
    %1090 = vmatprep.subr.bf16.mxu0 %v767
    %1091 = vmatpush1.bf16.msra.mxu0 %v766
    %1092 = vmatprep.subr.bf16.mxu0 %v771
    %1093 = vmatpush1.bf16.msra.mxu0 %v770
    %1094 = vmatprep.subr.bf16.mxu0 %v775
    %1095 = vmatpush1.bf16.msra.mxu0 %v774
    %1096 = vmatprep.subr.bf16.mxu0 %v779
    %1097 = vmatpush1.bf16.msra.mxu0 %v778
    %1098 = vmatprep.subr.bf16.mxu0 %v783
    %1099 = vmatpush1.bf16.msra.mxu0 %v782
    %1100 = vmatprep.subr.bf16.mxu0 %v787
    %1101 = vmatpush1.bf16.msra.mxu0 %v786
    %1102 = vmatprep.subr.bf16.mxu0 %v791
    %1103 = vmatpush1.bf16.msra.mxu0 %v790
    %1104 = vmatprep.subr.bf16.mxu0 %v795
    %1105 = vmatpush1.bf16.msra.mxu0 %v794
    %1106 = vmatprep.subr.bf16.mxu0 %v799
    %1107 = vmatpush1.bf16.msra.mxu0 %v798
    %1108 = vmatprep.subr.bf16.mxu0 %v803
    %1109 = vmatpush1.bf16.msra.mxu0 %v802
    %1110 = vmatprep.mubr.bf16.mxu0 %v349
    %1111 = vmatmul.mubr.bf16.gmra.mrb[0].mxu0 %v342
    %v1112 = vpop.f32.mrb[0].mxu0
    %v1113 = vadd.f32 %v318, %v1112
    %v1114 = vpop.f32.mrb[0].mxu0
    %v1115 = vadd.f32 %v322, %v1114
    %v1116 = vpop.f32.mrb[0].mxu0
    %v1117 = vpop.f32.mrb[0].mxu0
    %1118 = vdwg.mxu0
    %1119 = vmatprep.subr.bf16.mxu0 %v807
    %1120 = vmatpush1.bf16.msra.mxu0 %v806
    %1121 = vmatprep.subr.bf16.mxu0 %v811
    %1122 = vmatpush1.bf16.msra.mxu0 %v810
    %1123 = vmatprep.subr.bf16.mxu0 %v815
    %1124 = vmatpush1.bf16.msra.mxu0 %v814
    %1125 = vmatprep.subr.bf16.mxu0 %v819
    %1126 = vmatpush1.bf16.msra.mxu0 %v818
    %1127 = vmatprep.subr.bf16.mxu0 %v823
    %1128 = vmatpush1.bf16.msra.mxu0 %v822
    %1129 = vmatprep.subr.bf16.mxu0 %v827
    %1130 = vmatpush1.bf16.msra.mxu0 %v826
    %1131 = vmatprep.subr.bf16.mxu0 %v831
    %1132 = vmatpush1.bf16.msra.mxu0 %v830
    %1133 = vmatprep.subr.bf16.mxu0 %v835
    %1134 = vmatpush1.bf16.msra.mxu0 %v834
    %1135 = vmatprep.subr.bf16.mxu0 %v839
    %1136 = vmatpush1.bf16.msra.mxu0 %v838
    %1137 = vmatprep.subr.bf16.mxu0 %v843
    %1138 = vmatpush1.bf16.msra.mxu0 %v842
    %1139 = vmatprep.subr.bf16.mxu0 %v847
    %1140 = vmatpush1.bf16.msra.mxu0 %v846
    %1141 = vmatprep.subr.bf16.mxu0 %v851
    %1142 = vmatpush1.bf16.msra.mxu0 %v850
    %1143 = vmatprep.subr.bf16.mxu0 %v855
    %1144 = vmatpush1.bf16.msra.mxu0 %v854
    %1145 = vmatprep.subr.bf16.mxu0 %v859
    %1146 = vmatpush1.bf16.msra.mxu0 %v858
    %1147 = vmatprep.subr.bf16.mxu0 %v863
    %1148 = vmatpush1.bf16.msra.mxu0 %v862
    %1149 = vmatprep.subr.bf16.mxu0 %v867
    %1150 = vmatpush1.bf16.msra.mxu0 %v866
    %1151 = vmatprep.mubr.bf16.mxu0 %v351
    %1152 = vmatmul.mubr.bf16.gmra.mrb[0].mxu0 %v350
    %v1153 = vpop.f32.mrb[0].mxu0
    %v1154 = vadd.f32 %v1113, %v1153
    %v1155 = vpop.f32.mrb[0].mxu0
    %v1156 = vadd.f32 %v1115, %v1155
    %v1157 = vpop.f32.mrb[0].mxu0
    %v1158 = vpop.f32.mrb[0].mxu0
    %1159 = vdwg.mxu0
    %v1160 = vmax.f32 %v1072, 0.0
    %v1161 = vmax.f32 %v1074, 0.0
    %v1162 = vmax.f32 %v1154, 0.0
    %v1163 = vmax.f32 %v1156, 0.0
    %v1164 = vpack.c.bf16 %v1160, %v1160
    %v1165 = vpack.c.bf16 %v1161, %v1161
    %v1166 = vpack.c.bf16 %v1162, %v1162
    %v1167 = vpack.c.bf16 %v1163, %v1163
    %v1168 = vld [vmem:[%s7] sm:$0xff]
    %v1169 = vld [vmem:[%s7 + $0x8] sm:$0xff]
    %v1170 = vld [vmem:[%s7 + $0x10] sm:$0xff]
    %v1171 = vld [vmem:[%s7 + $0x18] sm:$0xff]
    %v1172 = vld [vmem:[%s7 + $0x20] sm:$0xff]
    %v1173 = vld [vmem:[%s7 + $0x28] sm:$0xff]
    %v1174 = vld [vmem:[%s7 + $0x30] sm:$0xff]
    %v1175 = vld [vmem:[%s7 + $0x38] sm:$0xff]
    %v1176 = vld [vmem:[%s7 + $0x40] sm:$0xff]
    %v1177 = vld [vmem:[%s7 + $0x48] sm:$0xff]
    %v1178 = vld [vmem:[%s7 + $0x50] sm:$0xff]
    %v1179 = vld [vmem:[%s7 + $0x58] sm:$0xff]
    %v1180 = vld [vmem:[%s7 + $0x60] sm:$0xff]
    %v1181 = vld [vmem:[%s7 + $0x68] sm:$0xff]
    %v1182 = vld [vmem:[%s7 + $0x70] sm:$0xff]
    %v1183 = vld [vmem:[%s7 + $0x78] sm:$0xff]
    %v1184 = vld [vmem:[%s7 + $0x80] sm:$0xff]
    %v1185 = vld [vmem:[%s7 + $0x88] sm:$0xff]
    %v1186 = vld [vmem:[%s7 + $0x90] sm:$0xff]
    %v1187 = vld [vmem:[%s7 + $0x98] sm:$0xff]
    %v1188 = vld [vmem:[%s7 + $0xa0] sm:$0xff]
    %v1189 = vld [vmem:[%s7 + $0xa8] sm:$0xff]
    %v1190 = vld [vmem:[%s7 + $0xb0] sm:$0xff]
    %v1191 = vld [vmem:[%s7 + $0xb8] sm:$0xff]
    %v1192 = vld [vmem:[%s7 + $0xc0] sm:$0xff]
    %v1193 = vld [vmem:[%s7 + $0xc8] sm:$0xff]
    %v1194 = vld [vmem:[%s7 + $0xd0] sm:$0xff]
    %v1195 = vld [vmem:[%s7 + $0xd8] sm:$0xff]
    %v1196 = vld [vmem:[%s7 + $0xe0] sm:$0xff]
    %v1197 = vld [vmem:[%s7 + $0xe8] sm:$0xff]
    %v1198 = vld [vmem:[%s7 + $0xf0] sm:$0xff]
    %v1199 = vld [vmem:[%s7 + $0xf8] sm:$0xff]
    %v1200 = vld [vmem:[%s7 + $0x100] sm:$0xff]
    %v1201 = vld [vmem:[%s7 + $0x108] sm:$0xff]
    %v1202 = vld [vmem:[%s7 + $0x110] sm:$0xff]
    %v1203 = vld [vmem:[%s7 + $0x118] sm:$0xff]
    %v1204 = vld [vmem:[%s7 + $0x120] sm:$0xff]
    %v1205 = vld [vmem:[%s7 + $0x128] sm:$0xff]
    %v1206 = vld [vmem:[%s7 + $0x130] sm:$0xff]
    %v1207 = vld [vmem:[%s7 + $0x138] sm:$0xff]
    %v1208 = vld [vmem:[%s7 + $0x140] sm:$0xff]
    %v1209 = vld [vmem:[%s7 + $0x148] sm:$0xff]
    %v1210 = vld [vmem:[%s7 + $0x150] sm:$0xff]
    %v1211 = vld [vmem:[%s7 + $0x158] sm:$0xff]
    %v1212 = vld [vmem:[%s7 + $0x160] sm:$0xff]
    %v1213 = vld [vmem:[%s7 + $0x168] sm:$0xff]
    %v1214 = vld [vmem:[%s7 + $0x170] sm:$0xff]
    %v1215 = vld [vmem:[%s7 + $0x178] sm:$0xff]
    %v1216 = vld [vmem:[%s7 + $0x180] sm:$0xff]
    %v1217 = vld [vmem:[%s7 + $0x188] sm:$0xff]
    %v1218 = vld [vmem:[%s7 + $0x190] sm:$0xff]
    %v1219 = vld [vmem:[%s7 + $0x198] sm:$0xff]
    %v1220 = vld [vmem:[%s7 + $0x1a0] sm:$0xff]
    %v1221 = vld [vmem:[%s7 + $0x1a8] sm:$0xff]
    %v1222 = vld [vmem:[%s7 + $0x1b0] sm:$0xff]
    %v1223 = vld [vmem:[%s7 + $0x1b8] sm:$0xff]
    %v1224 = vld [vmem:[%s7 + $0x1c0] sm:$0xff]
    %v1225 = vld [vmem:[%s7 + $0x1c8] sm:$0xff]
    %v1226 = vld [vmem:[%s7 + $0x1d0] sm:$0xff]
    %v1227 = vld [vmem:[%s7 + $0x1d8] sm:$0xff]
    %v1228 = vld [vmem:[%s7 + $0x1e0] sm:$0xff]
    %v1229 = vld [vmem:[%s7 + $0x1e8] sm:$0xff]
    %v1230 = vld [vmem:[%s7 + $0x1f0] sm:$0xff]
    %v1231 = vld [vmem:[%s7 + $0x1f8] sm:$0xff]
    %v1232 = vld [vmem:[%s7 + $0x200] sm:$0xff]
    %v1233 = vld [vmem:[%s7 + $0x208] sm:$0xff]
    %v1234 = vld [vmem:[%s7 + $0x210] sm:$0xff]
    %v1235 = vld [vmem:[%s7 + $0x218] sm:$0xff]
    %v1236 = vld [vmem:[%s7 + $0x220] sm:$0xff]
    %v1237 = vld [vmem:[%s7 + $0x228] sm:$0xff]
    %v1238 = vld [vmem:[%s7 + $0x230] sm:$0xff]
    %v1239 = vld [vmem:[%s7 + $0x238] sm:$0xff]
    %v1240 = vld [vmem:[%s7 + $0x240] sm:$0xff]
    %v1241 = vld [vmem:[%s7 + $0x248] sm:$0xff]
    %v1242 = vld [vmem:[%s7 + $0x250] sm:$0xff]
    %v1243 = vld [vmem:[%s7 + $0x258] sm:$0xff]
    %v1244 = vld [vmem:[%s7 + $0x260] sm:$0xff]
    %v1245 = vld [vmem:[%s7 + $0x268] sm:$0xff]
    %v1246 = vld [vmem:[%s7 + $0x270] sm:$0xff]
    %v1247 = vld [vmem:[%s7 + $0x278] sm:$0xff]
    %v1248 = vld [vmem:[%s7 + $0x280] sm:$0xff]
    %v1249 = vld [vmem:[%s7 + $0x288] sm:$0xff]
    %v1250 = vld [vmem:[%s7 + $0x290] sm:$0xff]
    %v1251 = vld [vmem:[%s7 + $0x298] sm:$0xff]
    %v1252 = vld [vmem:[%s7 + $0x2a0] sm:$0xff]
    %v1253 = vld [vmem:[%s7 + $0x2a8] sm:$0xff]
    %v1254 = vld [vmem:[%s7 + $0x2b0] sm:$0xff]
    %v1255 = vld [vmem:[%s7 + $0x2b8] sm:$0xff]
    %v1256 = vld [vmem:[%s7 + $0x2c0] sm:$0xff]
    %v1257 = vld [vmem:[%s7 + $0x2c8] sm:$0xff]
    %v1258 = vld [vmem:[%s7 + $0x2d0] sm:$0xff]
    %v1259 = vld [vmem:[%s7 + $0x2d8] sm:$0xff]
    %v1260 = vld [vmem:[%s7 + $0x2e0] sm:$0xff]
    %v1261 = vld [vmem:[%s7 + $0x2e8] sm:$0xff]
    %v1262 = vld [vmem:[%s7 + $0x2f0] sm:$0xff]
    %v1263 = vld [vmem:[%s7 + $0x2f8] sm:$0xff]
    %v1264 = vld [vmem:[%s7 + $0x300] sm:$0xff]
    %v1265 = vld [vmem:[%s7 + $0x308] sm:$0xff]
    %v1266 = vld [vmem:[%s7 + $0x310] sm:$0xff]
    %v1267 = vld [vmem:[%s7 + $0x318] sm:$0xff]
    %v1268 = vld [vmem:[%s7 + $0x320] sm:$0xff]
    %v1269 = vld [vmem:[%s7 + $0x328] sm:$0xff]
    %v1270 = vld [vmem:[%s7 + $0x330] sm:$0xff]
    %v1271 = vld [vmem:[%s7 + $0x338] sm:$0xff]
    %v1272 = vld [vmem:[%s7 + $0x340] sm:$0xff]
    %v1273 = vld [vmem:[%s7 + $0x348] sm:$0xff]
    %v1274 = vld [vmem:[%s7 + $0x350] sm:$0xff]
    %v1275 = vld [vmem:[%s7 + $0x358] sm:$0xff]
    %v1276 = vld [vmem:[%s7 + $0x360] sm:$0xff]
    %v1277 = vld [vmem:[%s7 + $0x368] sm:$0xff]
    %v1278 = vld [vmem:[%s7 + $0x370] sm:$0xff]
    %v1279 = vld [vmem:[%s7 + $0x378] sm:$0xff]
    %v1280 = vld [vmem:[%s7 + $0x380] sm:$0xff]
    %v1281 = vld [vmem:[%s7 + $0x388] sm:$0xff]
    %v1282 = vld [vmem:[%s7 + $0x390] sm:$0xff]
    %v1283 = vld [vmem:[%s7 + $0x398] sm:$0xff]
    %v1284 = vld [vmem:[%s7 + $0x3a0] sm:$0xff]
    %v1285 = vld [vmem:[%s7 + $0x3a8] sm:$0xff]
    %v1286 = vld [vmem:[%s7 + $0x3b0] sm:$0xff]
    %v1287 = vld [vmem:[%s7 + $0x3b8] sm:$0xff]
    %v1288 = vld [vmem:[%s7 + $0x3c0] sm:$0xff]
    %v1289 = vld [vmem:[%s7 + $0x3c8] sm:$0xff]
    %v1290 = vld [vmem:[%s7 + $0x3d0] sm:$0xff]
    %v1291 = vld [vmem:[%s7 + $0x3d8] sm:$0xff]
    %v1292 = vld [vmem:[%s7 + $0x3e0] sm:$0xff]
    %v1293 = vld [vmem:[%s7 + $0x3e8] sm:$0xff]
    %v1294 = vld [vmem:[%s7 + $0x3f0] sm:$0xff]
    %v1295 = vld [vmem:[%s7 + $0x3f8] sm:$0xff]
    %v1296 = vld [vmem:[%s9] sm:$0xf]
    %v1298 = vlaneseq
    %v1299 = vshrl.u32 %v1298, 7
    %v1300 = vsub.s32 0, %v1299
    %v1301 = vrot.slane %v1296, %v1300
    %v1302 = vlaneseq
    %v1303 = vshrl.u32 %v1302, 7
    %v1304 = vsub.s32 1, %v1303
    %v1305 = vrot.slane %v1296, %v1304
    %v1306 = vlaneseq
    %v1307 = vshrl.u32 %v1306, 7
    %v1308 = vsub.s32 2, %v1307
    %v1309 = vrot.slane %v1296, %v1308
    %v1310 = vlaneseq
    %v1311 = vshrl.u32 %v1310, 7
    %v1312 = vsub.s32 3, %v1311
    %v1313 = vrot.slane %v1296, %v1312
    %v1446 = vunpack.c.l.b16 %v1168
    %v1447 = vunpack.c.h.b16 %v1168
    %v1448 = vunpack.c.l.b16 %v1169
    %v1449 = vunpack.c.h.b16 %v1169
    %v1450 = vunpack.c.l.b16 %v1170
    %v1451 = vunpack.c.h.b16 %v1170
    %v1452 = vunpack.c.l.b16 %v1171
    %v1453 = vunpack.c.h.b16 %v1171
    %v1454 = vunpack.c.l.b16 %v1172
    %v1455 = vunpack.c.h.b16 %v1172
    %v1456 = vunpack.c.l.b16 %v1173
    %v1457 = vunpack.c.h.b16 %v1173
    %v1458 = vunpack.c.l.b16 %v1174
    %v1459 = vunpack.c.h.b16 %v1174
    %v1460 = vunpack.c.l.b16 %v1175
    %v1461 = vunpack.c.h.b16 %v1175
    %v1462 = vunpack.c.l.b16 %v1176
    %v1463 = vunpack.c.h.b16 %v1176
    %v1464 = vunpack.c.l.b16 %v1177
    %v1465 = vunpack.c.h.b16 %v1177
    %v1466 = vunpack.c.l.b16 %v1178
    %v1467 = vunpack.c.h.b16 %v1178
    %v1468 = vunpack.c.l.b16 %v1179
    %v1469 = vunpack.c.h.b16 %v1179
    %v1470 = vunpack.c.l.b16 %v1180
    %v1471 = vunpack.c.h.b16 %v1180
    %v1472 = vunpack.c.l.b16 %v1181
    %v1473 = vunpack.c.h.b16 %v1181
    %v1474 = vunpack.c.l.b16 %v1182
    %v1475 = vunpack.c.h.b16 %v1182
    %v1476 = vunpack.c.l.b16 %v1183
    %v1477 = vunpack.c.h.b16 %v1183
    %v1478 = vunpack.c.l.b16 %v1184
    %v1479 = vunpack.c.h.b16 %v1184
    %v1480 = vunpack.c.l.b16 %v1185
    %v1481 = vunpack.c.h.b16 %v1185
    %v1482 = vunpack.c.l.b16 %v1186
    %v1483 = vunpack.c.h.b16 %v1186
    %v1484 = vunpack.c.l.b16 %v1187
    %v1485 = vunpack.c.h.b16 %v1187
    %v1486 = vunpack.c.l.b16 %v1188
    %v1487 = vunpack.c.h.b16 %v1188
    %v1488 = vunpack.c.l.b16 %v1189
    %v1489 = vunpack.c.h.b16 %v1189
    %v1490 = vunpack.c.l.b16 %v1190
    %v1491 = vunpack.c.h.b16 %v1190
    %v1492 = vunpack.c.l.b16 %v1191
    %v1493 = vunpack.c.h.b16 %v1191
    %v1494 = vunpack.c.l.b16 %v1192
    %v1495 = vunpack.c.h.b16 %v1192
    %v1496 = vunpack.c.l.b16 %v1193
    %v1497 = vunpack.c.h.b16 %v1193
    %v1498 = vunpack.c.l.b16 %v1194
    %v1499 = vunpack.c.h.b16 %v1194
    %v1500 = vunpack.c.l.b16 %v1195
    %v1501 = vunpack.c.h.b16 %v1195
    %v1502 = vunpack.c.l.b16 %v1196
    %v1503 = vunpack.c.h.b16 %v1196
    %v1504 = vunpack.c.l.b16 %v1197
    %v1505 = vunpack.c.h.b16 %v1197
    %v1506 = vunpack.c.l.b16 %v1198
    %v1507 = vunpack.c.h.b16 %v1198
    %v1508 = vunpack.c.l.b16 %v1199
    %v1509 = vunpack.c.h.b16 %v1199
    %v1510 = vunpack.c.l.b16 %v1200
    %v1511 = vunpack.c.h.b16 %v1200
    %v1512 = vunpack.c.l.b16 %v1201
    %v1513 = vunpack.c.h.b16 %v1201
    %v1514 = vunpack.c.l.b16 %v1202
    %v1515 = vunpack.c.h.b16 %v1202
    %v1516 = vunpack.c.l.b16 %v1203
    %v1517 = vunpack.c.h.b16 %v1203
    %v1518 = vunpack.c.l.b16 %v1204
    %v1519 = vunpack.c.h.b16 %v1204
    %v1520 = vunpack.c.l.b16 %v1205
    %v1521 = vunpack.c.h.b16 %v1205
    %v1522 = vunpack.c.l.b16 %v1206
    %v1523 = vunpack.c.h.b16 %v1206
    %v1524 = vunpack.c.l.b16 %v1207
    %v1525 = vunpack.c.h.b16 %v1207
    %v1526 = vunpack.c.l.b16 %v1208
    %v1527 = vunpack.c.h.b16 %v1208
    %v1528 = vunpack.c.l.b16 %v1209
    %v1529 = vunpack.c.h.b16 %v1209
    %v1530 = vunpack.c.l.b16 %v1210
    %v1531 = vunpack.c.h.b16 %v1210
    %v1532 = vunpack.c.l.b16 %v1211
    %v1533 = vunpack.c.h.b16 %v1211
    %v1534 = vunpack.c.l.b16 %v1212
    %v1535 = vunpack.c.h.b16 %v1212
    %v1536 = vunpack.c.l.b16 %v1213
    %v1537 = vunpack.c.h.b16 %v1213
    %v1538 = vunpack.c.l.b16 %v1214
    %v1539 = vunpack.c.h.b16 %v1214
    %v1540 = vunpack.c.l.b16 %v1215
    %v1541 = vunpack.c.h.b16 %v1215
    %v1542 = vunpack.c.l.b16 %v1216
    %v1543 = vunpack.c.h.b16 %v1216
    %v1544 = vunpack.c.l.b16 %v1217
    %v1545 = vunpack.c.h.b16 %v1217
    %v1546 = vunpack.c.l.b16 %v1218
    %v1547 = vunpack.c.h.b16 %v1218
    %v1548 = vunpack.c.l.b16 %v1219
    %v1549 = vunpack.c.h.b16 %v1219
    %v1550 = vunpack.c.l.b16 %v1220
    %v1551 = vunpack.c.h.b16 %v1220
    %v1552 = vunpack.c.l.b16 %v1221
    %v1553 = vunpack.c.h.b16 %v1221
    %v1554 = vunpack.c.l.b16 %v1222
    %v1555 = vunpack.c.h.b16 %v1222
    %v1556 = vunpack.c.l.b16 %v1223
    %v1557 = vunpack.c.h.b16 %v1223
    %v1558 = vunpack.c.l.b16 %v1224
    %v1559 = vunpack.c.h.b16 %v1224
    %v1560 = vunpack.c.l.b16 %v1225
    %v1561 = vunpack.c.h.b16 %v1225
    %v1562 = vunpack.c.l.b16 %v1226
    %v1563 = vunpack.c.h.b16 %v1226
    %v1564 = vunpack.c.l.b16 %v1227
    %v1565 = vunpack.c.h.b16 %v1227
    %v1566 = vunpack.c.l.b16 %v1228
    %v1567 = vunpack.c.h.b16 %v1228
    %v1568 = vunpack.c.l.b16 %v1229
    %v1569 = vunpack.c.h.b16 %v1229
    %v1570 = vunpack.c.l.b16 %v1230
    %v1571 = vunpack.c.h.b16 %v1230
    %v1572 = vunpack.c.l.b16 %v1231
    %v1573 = vunpack.c.h.b16 %v1231
    %v1574 = vunpack.c.l.b16 %v1232
    %v1575 = vunpack.c.h.b16 %v1232
    %v1576 = vunpack.c.l.b16 %v1233
    %v1577 = vunpack.c.h.b16 %v1233
    %v1578 = vunpack.c.l.b16 %v1234
    %v1579 = vunpack.c.h.b16 %v1234
    %v1580 = vunpack.c.l.b16 %v1235
    %v1581 = vunpack.c.h.b16 %v1235
    %v1582 = vunpack.c.l.b16 %v1236
    %v1583 = vunpack.c.h.b16 %v1236
    %v1584 = vunpack.c.l.b16 %v1237
    %v1585 = vunpack.c.h.b16 %v1237
    %v1586 = vunpack.c.l.b16 %v1238
    %v1587 = vunpack.c.h.b16 %v1238
    %v1588 = vunpack.c.l.b16 %v1239
    %v1589 = vunpack.c.h.b16 %v1239
    %v1590 = vunpack.c.l.b16 %v1240
    %v1591 = vunpack.c.h.b16 %v1240
    %v1592 = vunpack.c.l.b16 %v1241
    %v1593 = vunpack.c.h.b16 %v1241
    %v1594 = vunpack.c.l.b16 %v1242
    %v1595 = vunpack.c.h.b16 %v1242
    %v1596 = vunpack.c.l.b16 %v1243
    %v1597 = vunpack.c.h.b16 %v1243
    %v1598 = vunpack.c.l.b16 %v1244
    %v1599 = vunpack.c.h.b16 %v1244
    %v1600 = vunpack.c.l.b16 %v1245
    %v1601 = vunpack.c.h.b16 %v1245
    %v1602 = vunpack.c.l.b16 %v1246
    %v1603 = vunpack.c.h.b16 %v1246
    %v1604 = vunpack.c.l.b16 %v1247
    %v1605 = vunpack.c.h.b16 %v1247
    %v1606 = vunpack.c.l.b16 %v1248
    %v1607 = vunpack.c.h.b16 %v1248
    %v1608 = vunpack.c.l.b16 %v1249
    %v1609 = vunpack.c.h.b16 %v1249
    %v1610 = vunpack.c.l.b16 %v1250
    %v1611 = vunpack.c.h.b16 %v1250
    %v1612 = vunpack.c.l.b16 %v1251
    %v1613 = vunpack.c.h.b16 %v1251
    %v1614 = vunpack.c.l.b16 %v1252
    %v1615 = vunpack.c.h.b16 %v1252
    %v1616 = vunpack.c.l.b16 %v1253
    %v1617 = vunpack.c.h.b16 %v1253
    %v1618 = vunpack.c.l.b16 %v1254
    %v1619 = vunpack.c.h.b16 %v1254
    %v1620 = vunpack.c.l.b16 %v1255
    %v1621 = vunpack.c.h.b16 %v1255
    %v1622 = vunpack.c.l.b16 %v1256
    %v1623 = vunpack.c.h.b16 %v1256
    %v1624 = vunpack.c.l.b16 %v1257
    %v1625 = vunpack.c.h.b16 %v1257
    %v1626 = vunpack.c.l.b16 %v1258
    %v1627 = vunpack.c.h.b16 %v1258
    %v1628 = vunpack.c.l.b16 %v1259
    %v1629 = vunpack.c.h.b16 %v1259
    %v1630 = vunpack.c.l.b16 %v1260
    %v1631 = vunpack.c.h.b16 %v1260
    %v1632 = vunpack.c.l.b16 %v1261
    %v1633 = vunpack.c.h.b16 %v1261
    %v1634 = vunpack.c.l.b16 %v1262
    %v1635 = vunpack.c.h.b16 %v1262
    %v1636 = vunpack.c.l.b16 %v1263
    %v1637 = vunpack.c.h.b16 %v1263
    %v1638 = vunpack.c.l.b16 %v1264
    %v1639 = vunpack.c.h.b16 %v1264
    %v1640 = vunpack.c.l.b16 %v1265
    %v1641 = vunpack.c.h.b16 %v1265
    %v1642 = vunpack.c.l.b16 %v1266
    %v1643 = vunpack.c.h.b16 %v1266
    %v1644 = vunpack.c.l.b16 %v1267
    %v1645 = vunpack.c.h.b16 %v1267
    %v1646 = vunpack.c.l.b16 %v1268
    %v1647 = vunpack.c.h.b16 %v1268
    %v1648 = vunpack.c.l.b16 %v1269
    %v1649 = vunpack.c.h.b16 %v1269
    %v1650 = vunpack.c.l.b16 %v1270
    %v1651 = vunpack.c.h.b16 %v1270
    %v1652 = vunpack.c.l.b16 %v1271
    %v1653 = vunpack.c.h.b16 %v1271
    %v1654 = vunpack.c.l.b16 %v1272
    %v1655 = vunpack.c.h.b16 %v1272
    %v1656 = vunpack.c.l.b16 %v1273
    %v1657 = vunpack.c.h.b16 %v1273
    %v1658 = vunpack.c.l.b16 %v1274
    %v1659 = vunpack.c.h.b16 %v1274
    %v1660 = vunpack.c.l.b16 %v1275
    %v1661 = vunpack.c.h.b16 %v1275
    %v1662 = vunpack.c.l.b16 %v1276
    %v1663 = vunpack.c.h.b16 %v1276
    %v1664 = vunpack.c.l.b16 %v1277
    %v1665 = vunpack.c.h.b16 %v1277
    %v1666 = vunpack.c.l.b16 %v1278
    %v1667 = vunpack.c.h.b16 %v1278
    %v1668 = vunpack.c.l.b16 %v1279
    %v1669 = vunpack.c.h.b16 %v1279
    %v1670 = vunpack.c.l.b16 %v1280
    %v1671 = vunpack.c.h.b16 %v1280
    %v1672 = vunpack.c.l.b16 %v1281
    %v1673 = vunpack.c.h.b16 %v1281
    %v1674 = vunpack.c.l.b16 %v1282
    %v1675 = vunpack.c.h.b16 %v1282
    %v1676 = vunpack.c.l.b16 %v1283
    %v1677 = vunpack.c.h.b16 %v1283
    %v1678 = vunpack.c.l.b16 %v1284
    %v1679 = vunpack.c.h.b16 %v1284
    %v1680 = vunpack.c.l.b16 %v1285
    %v1681 = vunpack.c.h.b16 %v1285
    %v1682 = vunpack.c.l.b16 %v1286
    %v1683 = vunpack.c.h.b16 %v1286
    %v1684 = vunpack.c.l.b16 %v1287
    %v1685 = vunpack.c.h.b16 %v1287
    %v1686 = vunpack.c.l.b16 %v1288
    %v1687 = vunpack.c.h.b16 %v1288
    %v1688 = vunpack.c.l.b16 %v1289
    %v1689 = vunpack.c.h.b16 %v1289
    %v1690 = vunpack.c.l.b16 %v1290
    %v1691 = vunpack.c.h.b16 %v1290
    %v1692 = vunpack.c.l.b16 %v1291
    %v1693 = vunpack.c.h.b16 %v1291
    %v1694 = vunpack.c.l.b16 %v1292
    %v1695 = vunpack.c.h.b16 %v1292
    %v1696 = vunpack.c.l.b16 %v1293
    %v1697 = vunpack.c.h.b16 %v1293
    %v1698 = vunpack.c.l.b16 %v1294
    %v1699 = vunpack.c.h.b16 %v1294
    %v1700 = vunpack.c.l.b16 %v1295
    %v1701 = vunpack.c.h.b16 %v1295
    %v1702 = vpack.c.b16 %v1450, %v1446
    %v1703 = vpack.c.b16 %v1451, %v1447
    %v1704 = vpack.c.b16 %v1452, %v1448
    %v1705 = vpack.c.b16 %v1453, %v1449
    %v1706 = vpack.c.b16 %v1458, %v1454
    %v1707 = vpack.c.b16 %v1459, %v1455
    %v1708 = vpack.c.b16 %v1460, %v1456
    %v1709 = vpack.c.b16 %v1461, %v1457
    %v1710 = vpack.c.b16 %v1466, %v1462
    %v1711 = vpack.c.b16 %v1467, %v1463
    %v1712 = vpack.c.b16 %v1468, %v1464
    %v1713 = vpack.c.b16 %v1469, %v1465
    %v1714 = vpack.c.b16 %v1474, %v1470
    %v1715 = vpack.c.b16 %v1475, %v1471
    %v1716 = vpack.c.b16 %v1476, %v1472
    %v1717 = vpack.c.b16 %v1477, %v1473
    %v1718 = vpack.c.b16 %v1482, %v1478
    %v1719 = vpack.c.b16 %v1483, %v1479
    %v1720 = vpack.c.b16 %v1484, %v1480
    %v1721 = vpack.c.b16 %v1485, %v1481
    %v1722 = vpack.c.b16 %v1490, %v1486
    %v1723 = vpack.c.b16 %v1491, %v1487
    %v1724 = vpack.c.b16 %v1492, %v1488
    %v1725 = vpack.c.b16 %v1493, %v1489
    %v1726 = vpack.c.b16 %v1498, %v1494
    %v1727 = vpack.c.b16 %v1499, %v1495
    %v1728 = vpack.c.b16 %v1500, %v1496
    %v1729 = vpack.c.b16 %v1501, %v1497
    %v1730 = vpack.c.b16 %v1506, %v1502
    %v1731 = vpack.c.b16 %v1507, %v1503
    %v1732 = vpack.c.b16 %v1508, %v1504
    %v1733 = vpack.c.b16 %v1509, %v1505
    %v1734 = vpack.c.b16 %v1514, %v1510
    %v1735 = vpack.c.b16 %v1515, %v1511
    %v1736 = vpack.c.b16 %v1516, %v1512
    %v1737 = vpack.c.b16 %v1517, %v1513
    %v1738 = vpack.c.b16 %v1522, %v1518
    %v1739 = vpack.c.b16 %v1523, %v1519
    %v1740 = vpack.c.b16 %v1524, %v1520
    %v1741 = vpack.c.b16 %v1525, %v1521
    %v1742 = vpack.c.b16 %v1530, %v1526
    %v1743 = vpack.c.b16 %v1531, %v1527
    %v1744 = vpack.c.b16 %v1532, %v1528
    %v1745 = vpack.c.b16 %v1533, %v1529
    %v1746 = vpack.c.b16 %v1538, %v1534
    %v1747 = vpack.c.b16 %v1539, %v1535
    %v1748 = vpack.c.b16 %v1540, %v1536
    %v1749 = vpack.c.b16 %v1541, %v1537
    %v1750 = vpack.c.b16 %v1546, %v1542
    %v1751 = vpack.c.b16 %v1547, %v1543
    %v1752 = vpack.c.b16 %v1548, %v1544
    %v1753 = vpack.c.b16 %v1549, %v1545
    %v1754 = vpack.c.b16 %v1554, %v1550
    %v1755 = vpack.c.b16 %v1555, %v1551
    %v1756 = vpack.c.b16 %v1556, %v1552
    %v1757 = vpack.c.b16 %v1557, %v1553
    %v1758 = vpack.c.b16 %v1562, %v1558
    %v1759 = vpack.c.b16 %v1563, %v1559
    %v1760 = vpack.c.b16 %v1564, %v1560
    %v1761 = vpack.c.b16 %v1565, %v1561
    %v1762 = vpack.c.b16 %v1570, %v1566
    %v1763 = vpack.c.b16 %v1571, %v1567
    %v1764 = vpack.c.b16 %v1572, %v1568
    %v1765 = vpack.c.b16 %v1573, %v1569
    %v1766 = vpack.c.b16 %v1578, %v1574
    %v1767 = vpack.c.b16 %v1579, %v1575
    %v1768 = vpack.c.b16 %v1580, %v1576
    %v1769 = vpack.c.b16 %v1581, %v1577
    %v1770 = vpack.c.b16 %v1586, %v1582
    %v1771 = vpack.c.b16 %v1587, %v1583
    %v1772 = vpack.c.b16 %v1588, %v1584
    %v1773 = vpack.c.b16 %v1589, %v1585
    %v1774 = vpack.c.b16 %v1594, %v1590
    %v1775 = vpack.c.b16 %v1595, %v1591
    %v1776 = vpack.c.b16 %v1596, %v1592
    %v1777 = vpack.c.b16 %v1597, %v1593
    %v1778 = vpack.c.b16 %v1602, %v1598
    %v1779 = vpack.c.b16 %v1603, %v1599
    %v1780 = vpack.c.b16 %v1604, %v1600
    %v1781 = vpack.c.b16 %v1605, %v1601
    %v1782 = vpack.c.b16 %v1610, %v1606
    %v1783 = vpack.c.b16 %v1611, %v1607
    %v1784 = vpack.c.b16 %v1612, %v1608
    %v1785 = vpack.c.b16 %v1613, %v1609
    %v1786 = vpack.c.b16 %v1618, %v1614
    %v1787 = vpack.c.b16 %v1619, %v1615
    %v1788 = vpack.c.b16 %v1620, %v1616
    %v1789 = vpack.c.b16 %v1621, %v1617
    %v1790 = vpack.c.b16 %v1626, %v1622
    %v1791 = vpack.c.b16 %v1627, %v1623
    %v1792 = vpack.c.b16 %v1628, %v1624
    %v1793 = vpack.c.b16 %v1629, %v1625
    %v1794 = vpack.c.b16 %v1634, %v1630
    %v1795 = vpack.c.b16 %v1635, %v1631
    %v1796 = vpack.c.b16 %v1636, %v1632
    %v1797 = vpack.c.b16 %v1637, %v1633
    %v1798 = vpack.c.b16 %v1642, %v1638
    %v1799 = vpack.c.b16 %v1643, %v1639
    %v1800 = vpack.c.b16 %v1644, %v1640
    %v1801 = vpack.c.b16 %v1645, %v1641
    %v1802 = vpack.c.b16 %v1650, %v1646
    %v1803 = vpack.c.b16 %v1651, %v1647
    %v1804 = vpack.c.b16 %v1652, %v1648
    %v1805 = vpack.c.b16 %v1653, %v1649
    %v1806 = vpack.c.b16 %v1658, %v1654
    %v1807 = vpack.c.b16 %v1659, %v1655
    %v1808 = vpack.c.b16 %v1660, %v1656
    %v1809 = vpack.c.b16 %v1661, %v1657
    %v1810 = vpack.c.b16 %v1666, %v1662
    %v1811 = vpack.c.b16 %v1667, %v1663
    %v1812 = vpack.c.b16 %v1668, %v1664
    %v1813 = vpack.c.b16 %v1669, %v1665
    %v1814 = vpack.c.b16 %v1674, %v1670
    %v1815 = vpack.c.b16 %v1675, %v1671
    %v1816 = vpack.c.b16 %v1676, %v1672
    %v1817 = vpack.c.b16 %v1677, %v1673
    %v1818 = vpack.c.b16 %v1682, %v1678
    %v1819 = vpack.c.b16 %v1683, %v1679
    %v1820 = vpack.c.b16 %v1684, %v1680
    %v1821 = vpack.c.b16 %v1685, %v1681
    %v1822 = vpack.c.b16 %v1690, %v1686
    %v1823 = vpack.c.b16 %v1691, %v1687
    %v1824 = vpack.c.b16 %v1692, %v1688
    %v1825 = vpack.c.b16 %v1693, %v1689
    %v1826 = vpack.c.b16 %v1698, %v1694
    %v1827 = vpack.c.b16 %v1699, %v1695
    %v1828 = vpack.c.b16 %v1700, %v1696
    %v1829 = vpack.c.b16 %v1701, %v1697
    %1958 = vmatprep.subr.bf16.mxu0 %v1703
    %1959 = vmatpush1.bf16.msra.mxu0 %v1702
    %1960 = vmatprep.subr.bf16.mxu0 %v1707
    %1961 = vmatpush1.bf16.msra.mxu0 %v1706
    %1962 = vmatprep.subr.bf16.mxu0 %v1711
    %1963 = vmatpush1.bf16.msra.mxu0 %v1710
    %1964 = vmatprep.subr.bf16.mxu0 %v1715
    %1965 = vmatpush1.bf16.msra.mxu0 %v1714
    %1966 = vmatprep.subr.bf16.mxu0 %v1719
    %1967 = vmatpush1.bf16.msra.mxu0 %v1718
    %1968 = vmatprep.subr.bf16.mxu0 %v1723
    %1969 = vmatpush1.bf16.msra.mxu0 %v1722
    %1970 = vmatprep.subr.bf16.mxu0 %v1727
    %1971 = vmatpush1.bf16.msra.mxu0 %v1726
    %1972 = vmatprep.subr.bf16.mxu0 %v1731
    %1973 = vmatpush1.bf16.msra.mxu0 %v1730
    %1974 = vmatprep.subr.bf16.mxu0 %v1735
    %1975 = vmatpush1.bf16.msra.mxu0 %v1734
    %1976 = vmatprep.subr.bf16.mxu0 %v1739
    %1977 = vmatpush1.bf16.msra.mxu0 %v1738
    %1978 = vmatprep.subr.bf16.mxu0 %v1743
    %1979 = vmatpush1.bf16.msra.mxu0 %v1742
    %1980 = vmatprep.subr.bf16.mxu0 %v1747
    %1981 = vmatpush1.bf16.msra.mxu0 %v1746
    %1982 = vmatprep.subr.bf16.mxu0 %v1751
    %1983 = vmatpush1.bf16.msra.mxu0 %v1750
    %1984 = vmatprep.subr.bf16.mxu0 %v1755
    %1985 = vmatpush1.bf16.msra.mxu0 %v1754
    %1986 = vmatprep.subr.bf16.mxu0 %v1759
    %1987 = vmatpush1.bf16.msra.mxu0 %v1758
    %1988 = vmatprep.subr.bf16.mxu0 %v1763
    %1989 = vmatpush1.bf16.msra.mxu0 %v1762
    %1990 = vmatprep.mubr.bf16.mxu0 %v1165
    %1991 = vmatmul.mubr.bf16.gmra.mrb[0].mxu0 %v1164
    %v1992 = vpop.f32.mrb[0].mxu0
    %v1993 = vadd.f32 %v1301, %v1992
    %v1994 = vpop.f32.mrb[0].mxu0
    %v1995 = vadd.f32 %v1305, %v1994
    %v1996 = vpop.f32.mrb[0].mxu0
    %v1997 = vpop.f32.mrb[0].mxu0
    %1998 = vdwg.mxu0
    %1999 = vmatprep.subr.bf16.mxu0 %v1767
    %2000 = vmatpush1.bf16.msra.mxu0 %v1766
    %2001 = vmatprep.subr.bf16.mxu0 %v1771
    %2002 = vmatpush1.bf16.msra.mxu0 %v1770
    %2003 = vmatprep.subr.bf16.mxu0 %v1775
    %2004 = vmatpush1.bf16.msra.mxu0 %v1774
    %2005 = vmatprep.subr.bf16.mxu0 %v1779
    %2006 = vmatpush1.bf16.msra.mxu0 %v1778
    %2007 = vmatprep.subr.bf16.mxu0 %v1783
    %2008 = vmatpush1.bf16.msra.mxu0 %v1782
    %2009 = vmatprep.subr.bf16.mxu0 %v1787
    %2010 = vmatpush1.bf16.msra.mxu0 %v1786
    %2011 = vmatprep.subr.bf16.mxu0 %v1791
    %2012 = vmatpush1.bf16.msra.mxu0 %v1790
    %2013 = vmatprep.subr.bf16.mxu0 %v1795
    %2014 = vmatpush1.bf16.msra.mxu0 %v1794
    %2015 = vmatprep.subr.bf16.mxu0 %v1799
    %2016 = vmatpush1.bf16.msra.mxu0 %v1798
    %2017 = vmatprep.subr.bf16.mxu0 %v1803
    %2018 = vmatpush1.bf16.msra.mxu0 %v1802
    %2019 = vmatprep.subr.bf16.mxu0 %v1807
    %2020 = vmatpush1.bf16.msra.mxu0 %v1806
    %2021 = vmatprep.subr.bf16.mxu0 %v1811
    %2022 = vmatpush1.bf16.msra.mxu0 %v1810
    %2023 = vmatprep.subr.bf16.mxu0 %v1815
    %2024 = vmatpush1.bf16.msra.mxu0 %v1814
    %2025 = vmatprep.subr.bf16.mxu0 %v1819
    %2026 = vmatpush1.bf16.msra.mxu0 %v1818
    %2027 = vmatprep.subr.bf16.mxu0 %v1823
    %2028 = vmatpush1.bf16.msra.mxu0 %v1822
    %2029 = vmatprep.subr.bf16.mxu0 %v1827
    %2030 = vmatpush1.bf16.msra.mxu0 %v1826
    %2031 = vmatprep.mubr.bf16.mxu0 %v1167
    %2032 = vmatmul.mubr.bf16.gmra.mrb[0].mxu0 %v1166
    %v2033 = vpop.f32.mrb[0].mxu0
    %v2034 = vadd.f32 %v1993, %v2033
    %v2035 = vpop.f32.mrb[0].mxu0
    %v2036 = vadd.f32 %v1995, %v2035
    %v2037 = vpop.f32.mrb[0].mxu0
    %v2038 = vpop.f32.mrb[0].mxu0
    %2039 = vdwg.mxu0
    %2040 = vmatprep.subr.bf16.mxu0 %v1705
    %2041 = vmatpush1.bf16.msra.mxu0 %v1704
    %2042 = vmatprep.subr.bf16.mxu0 %v1709
    %2043 = vmatpush1.bf16.msra.mxu0 %v1708
    %2044 = vmatprep.subr.bf16.mxu0 %v1713
    %2045 = vmatpush1.bf16.msra.mxu0 %v1712
    %2046 = vmatprep.subr.bf16.mxu0 %v1717
    %2047 = vmatpush1.bf16.msra.mxu0 %v1716
    %2048 = vmatprep.subr.bf16.mxu0 %v1721
    %2049 = vmatpush1.bf16.msra.mxu0 %v1720
    %2050 = vmatprep.subr.bf16.mxu0 %v1725
    %2051 = vmatpush1.bf16.msra.mxu0 %v1724
    %2052 = vmatprep.subr.bf16.mxu0 %v1729
    %2053 = vmatpush1.bf16.msra.mxu0 %v1728
    %2054 = vmatprep.subr.bf16.mxu0 %v1733
    %2055 = vmatpush1.bf16.msra.mxu0 %v1732
    %2056 = vmatprep.subr.bf16.mxu0 %v1737
    %2057 = vmatpush1.bf16.msra.mxu0 %v1736
    %2058 = vmatprep.subr.bf16.mxu0 %v1741
    %2059 = vmatpush1.bf16.msra.mxu0 %v1740
    %2060 = vmatprep.subr.bf16.mxu0 %v1745
    %2061 = vmatpush1.bf16.msra.mxu0 %v1744
    %2062 = vmatprep.subr.bf16.mxu0 %v1749
    %2063 = vmatpush1.bf16.msra.mxu0 %v1748
    %2064 = vmatprep.subr.bf16.mxu0 %v1753
    %2065 = vmatpush1.bf16.msra.mxu0 %v1752
    %2066 = vmatprep.subr.bf16.mxu0 %v1757
    %2067 = vmatpush1.bf16.msra.mxu0 %v1756
    %2068 = vmatprep.subr.bf16.mxu0 %v1761
    %2069 = vmatpush1.bf16.msra.mxu0 %v1760
    %2070 = vmatprep.subr.bf16.mxu0 %v1765
    %2071 = vmatpush1.bf16.msra.mxu0 %v1764
    %2072 = vmatprep.mubr.bf16.mxu0 %v1165
    %2073 = vmatmul.mubr.bf16.gmra.mrb[0].mxu0 %v1164
    %v2074 = vpop.f32.mrb[0].mxu0
    %v2075 = vadd.f32 %v1309, %v2074
    %v2076 = vpop.f32.mrb[0].mxu0
    %v2077 = vadd.f32 %v1313, %v2076
    %v2078 = vpop.f32.mrb[0].mxu0
    %v2079 = vpop.f32.mrb[0].mxu0
    %2080 = vdwg.mxu0
    %2081 = vmatprep.subr.bf16.mxu0 %v1769
    %2082 = vmatpush1.bf16.msra.mxu0 %v1768
    %2083 = vmatprep.subr.bf16.mxu0 %v1773
    %2084 = vmatpush1.bf16.msra.mxu0 %v1772
    %2085 = vmatprep.subr.bf16.mxu0 %v1777
    %2086 = vmatpush1.bf16.msra.mxu0 %v1776
    %2087 = vmatprep.subr.bf16.mxu0 %v1781
    %2088 = vmatpush1.bf16.msra.mxu0 %v1780
    %2089 = vmatprep.subr.bf16.mxu0 %v1785
    %2090 = vmatpush1.bf16.msra.mxu0 %v1784
    %2091 = vmatprep.subr.bf16.mxu0 %v1789
    %2092 = vmatpush1.bf16.msra.mxu0 %v1788
    %2093 = vmatprep.subr.bf16.mxu0 %v1793
    %2094 = vmatpush1.bf16.msra.mxu0 %v1792
    %2095 = vmatprep.subr.bf16.mxu0 %v1797
    %2096 = vmatpush1.bf16.msra.mxu0 %v1796
    %2097 = vmatprep.subr.bf16.mxu0 %v1801
    %2098 = vmatpush1.bf16.msra.mxu0 %v1800
    %2099 = vmatprep.subr.bf16.mxu0 %v1805
    %2100 = vmatpush1.bf16.msra.mxu0 %v1804
    %2101 = vmatprep.subr.bf16.mxu0 %v1809
    %2102 = vmatpush1.bf16.msra.mxu0 %v1808
    %2103 = vmatprep.subr.bf16.mxu0 %v1813
    %2104 = vmatpush1.bf16.msra.mxu0 %v1812
    %2105 = vmatprep.subr.bf16.mxu0 %v1817
    %2106 = vmatpush1.bf16.msra.mxu0 %v1816
    %2107 = vmatprep.subr.bf16.mxu0 %v1821
    %2108 = vmatpush1.bf16.msra.mxu0 %v1820
    %2109 = vmatprep.subr.bf16.mxu0 %v1825
    %2110 = vmatpush1.bf16.msra.mxu0 %v1824
    %2111 = vmatprep.subr.bf16.mxu0 %v1829
    %2112 = vmatpush1.bf16.msra.mxu0 %v1828
    %2113 = vmatprep.mubr.bf16.mxu0 %v1167
    %2114 = vmatmul.mubr.bf16.gmra.mrb[0].mxu0 %v1166
    %v2115 = vpop.f32.mrb[0].mxu0
    %v2116 = vadd.f32 %v2075, %v2115
    %v2117 = vpop.f32.mrb[0].mxu0
    %v2118 = vadd.f32 %v2077, %v2117
    %v2119 = vpop.f32.mrb[0].mxu0
    %v2120 = vpop.f32.mrb[0].mxu0
    %2121 = vdwg.mxu0
    %v2122 = vunpack.c.l.bf16 %v176
    %v2124 = vcombine.high %v2122, %v2122
    %v2126 = vunpack.c.l.s4 1983009808
    %v2127 = vunpack.c.0.s8 %v2126
    %v2128 = vlaneseq
    %v2129 = vshrl.u32 %v2128, 7
    %v2130 = vsub.s32 %v2127, %v2129
    %v2131 = vrot.slane %v2122, %v2130
    %v2133 = vunpack.c.l.s4 1983009808
    %v2134 = vunpack.c.0.s8 %v2133
    %v2135 = vlaneseq
    %v2136 = vshrl.u32 %v2135, 7
    %v2137 = vsub.s32 %v2134, %v2136
    %v2138 = vrot.slane %v2124, %v2137
    %v2139 = vcombine.high %v2131, %v2131
    %v2140 = vcombine.high %v2138, %v2138
    %v2145 = vadd.f32 %v2034, %v2131
    %v2146 = vadd.f32 %v2036, %v2139
    %v2147 = vadd.f32 %v2116, %v2138
    %v2148 = vadd.f32 %v2118, %v2140
    %v2149 = vmax.f32 %v2145, 0.0
    %v2150 = vmax.f32 %v2146, 0.0
    %v2151 = vmax.f32 %v2147, 0.0
    %v2152 = vmax.f32 %v2148, 0.0
    %v2153 = vpack.c.bf16 %v2149, %v2149
    %v2154 = vpack.c.bf16 %v2150, %v2150
    %v2155 = vpack.c.bf16 %v2151, %v2151
    %v2156 = vpack.c.bf16 %v2152, %v2152
    %v2157 = vld [vmem:[%s11] sm:$0xff]
    %v2158 = vld [vmem:[%s11 + $0x8] sm:$0xff]
    %v2159 = vld [vmem:[%s11 + $0x10] sm:$0xff]
    %v2160 = vld [vmem:[%s11 + $0x18] sm:$0xff]
    %v2161 = vld [vmem:[%s11 + $0x20] sm:$0xff]
    %v2162 = vld [vmem:[%s11 + $0x28] sm:$0xff]
    %v2163 = vld [vmem:[%s11 + $0x30] sm:$0xff]
    %v2164 = vld [vmem:[%s11 + $0x38] sm:$0xff]
    %v2165 = vld [vmem:[%s11 + $0x40] sm:$0xff]
    %v2166 = vld [vmem:[%s11 + $0x48] sm:$0xff]
    %v2167 = vld [vmem:[%s11 + $0x50] sm:$0xff]
    %v2168 = vld [vmem:[%s11 + $0x58] sm:$0xff]
    %v2169 = vld [vmem:[%s11 + $0x60] sm:$0xff]
    %v2170 = vld [vmem:[%s11 + $0x68] sm:$0xff]
    %v2171 = vld [vmem:[%s11 + $0x70] sm:$0xff]
    %v2172 = vld [vmem:[%s11 + $0x78] sm:$0xff]
    %v2173 = vld [vmem:[%s11 + $0x80] sm:$0xff]
    %v2174 = vld [vmem:[%s11 + $0x88] sm:$0xff]
    %v2175 = vld [vmem:[%s11 + $0x90] sm:$0xff]
    %v2176 = vld [vmem:[%s11 + $0x98] sm:$0xff]
    %v2177 = vld [vmem:[%s11 + $0xa0] sm:$0xff]
    %v2178 = vld [vmem:[%s11 + $0xa8] sm:$0xff]
    %v2179 = vld [vmem:[%s11 + $0xb0] sm:$0xff]
    %v2180 = vld [vmem:[%s11 + $0xb8] sm:$0xff]
    %v2181 = vld [vmem:[%s11 + $0xc0] sm:$0xff]
    %v2182 = vld [vmem:[%s11 + $0xc8] sm:$0xff]
    %v2183 = vld [vmem:[%s11 + $0xd0] sm:$0xff]
    %v2184 = vld [vmem:[%s11 + $0xd8] sm:$0xff]
    %v2185 = vld [vmem:[%s11 + $0xe0] sm:$0xff]
    %v2186 = vld [vmem:[%s11 + $0xe8] sm:$0xff]
    %v2187 = vld [vmem:[%s11 + $0xf0] sm:$0xff]
    %v2188 = vld [vmem:[%s11 + $0xf8] sm:$0xff]
    %v2189 = vld [vmem:[%s11 + $0x100] sm:$0xff]
    %v2190 = vld [vmem:[%s11 + $0x108] sm:$0xff]
    %v2191 = vld [vmem:[%s11 + $0x110] sm:$0xff]
    %v2192 = vld [vmem:[%s11 + $0x118] sm:$0xff]
    %v2193 = vld [vmem:[%s11 + $0x120] sm:$0xff]
    %v2194 = vld [vmem:[%s11 + $0x128] sm:$0xff]
    %v2195 = vld [vmem:[%s11 + $0x130] sm:$0xff]
    %v2196 = vld [vmem:[%s11 + $0x138] sm:$0xff]
    %v2197 = vld [vmem:[%s11 + $0x140] sm:$0xff]
    %v2198 = vld [vmem:[%s11 + $0x148] sm:$0xff]
    %v2199 = vld [vmem:[%s11 + $0x150] sm:$0xff]
    %v2200 = vld [vmem:[%s11 + $0x158] sm:$0xff]
    %v2201 = vld [vmem:[%s11 + $0x160] sm:$0xff]
    %v2202 = vld [vmem:[%s11 + $0x168] sm:$0xff]
    %v2203 = vld [vmem:[%s11 + $0x170] sm:$0xff]
    %v2204 = vld [vmem:[%s11 + $0x178] sm:$0xff]
    %v2205 = vld [vmem:[%s11 + $0x180] sm:$0xff]
    %v2206 = vld [vmem:[%s11 + $0x188] sm:$0xff]
    %v2207 = vld [vmem:[%s11 + $0x190] sm:$0xff]
    %v2208 = vld [vmem:[%s11 + $0x198] sm:$0xff]
    %v2209 = vld [vmem:[%s11 + $0x1a0] sm:$0xff]
    %v2210 = vld [vmem:[%s11 + $0x1a8] sm:$0xff]
    %v2211 = vld [vmem:[%s11 + $0x1b0] sm:$0xff]
    %v2212 = vld [vmem:[%s11 + $0x1b8] sm:$0xff]
    %v2213 = vld [vmem:[%s11 + $0x1c0] sm:$0xff]
    %v2214 = vld [vmem:[%s11 + $0x1c8] sm:$0xff]
    %v2215 = vld [vmem:[%s11 + $0x1d0] sm:$0xff]
    %v2216 = vld [vmem:[%s11 + $0x1d8] sm:$0xff]
    %v2217 = vld [vmem:[%s11 + $0x1e0] sm:$0xff]
    %v2218 = vld [vmem:[%s11 + $0x1e8] sm:$0xff]
    %v2219 = vld [vmem:[%s11 + $0x1f0] sm:$0xff]
    %v2220 = vld [vmem:[%s11 + $0x1f8] sm:$0xff]
    %v2221 = vld [vmem:[%s11 + $0x200] sm:$0xff]
    %v2222 = vld [vmem:[%s11 + $0x208] sm:$0xff]
    %v2223 = vld [vmem:[%s11 + $0x210] sm:$0xff]
    %v2224 = vld [vmem:[%s11 + $0x218] sm:$0xff]
    %v2225 = vld [vmem:[%s11 + $0x220] sm:$0xff]
    %v2226 = vld [vmem:[%s11 + $0x228] sm:$0xff]
    %v2227 = vld [vmem:[%s11 + $0x230] sm:$0xff]
    %v2228 = vld [vmem:[%s11 + $0x238] sm:$0xff]
    %v2229 = vld [vmem:[%s11 + $0x240] sm:$0xff]
    %v2230 = vld [vmem:[%s11 + $0x248] sm:$0xff]
    %v2231 = vld [vmem:[%s11 + $0x250] sm:$0xff]
    %v2232 = vld [vmem:[%s11 + $0x258] sm:$0xff]
    %v2233 = vld [vmem:[%s11 + $0x260] sm:$0xff]
    %v2234 = vld [vmem:[%s11 + $0x268] sm:$0xff]
    %v2235 = vld [vmem:[%s11 + $0x270] sm:$0xff]
    %v2236 = vld [vmem:[%s11 + $0x278] sm:$0xff]
    %v2237 = vld [vmem:[%s11 + $0x280] sm:$0xff]
    %v2238 = vld [vmem:[%s11 + $0x288] sm:$0xff]
    %v2239 = vld [vmem:[%s11 + $0x290] sm:$0xff]
    %v2240 = vld [vmem:[%s11 + $0x298] sm:$0xff]
    %v2241 = vld [vmem:[%s11 + $0x2a0] sm:$0xff]
    %v2242 = vld [vmem:[%s11 + $0x2a8] sm:$0xff]
    %v2243 = vld [vmem:[%s11 + $0x2b0] sm:$0xff]
    %v2244 = vld [vmem:[%s11 + $0x2b8] sm:$0xff]
    %v2245 = vld [vmem:[%s11 + $0x2c0] sm:$0xff]
    %v2246 = vld [vmem:[%s11 + $0x2c8] sm:$0xff]
    %v2247 = vld [vmem:[%s11 + $0x2d0] sm:$0xff]
    %v2248 = vld [vmem:[%s11 + $0x2d8] sm:$0xff]
    %v2249 = vld [vmem:[%s11 + $0x2e0] sm:$0xff]
    %v2250 = vld [vmem:[%s11 + $0x2e8] sm:$0xff]
    %v2251 = vld [vmem:[%s11 + $0x2f0] sm:$0xff]
    %v2252 = vld [vmem:[%s11 + $0x2f8] sm:$0xff]
    %v2253 = vld [vmem:[%s11 + $0x300] sm:$0xff]
    %v2254 = vld [vmem:[%s11 + $0x308] sm:$0xff]
    %v2255 = vld [vmem:[%s11 + $0x310] sm:$0xff]
    %v2256 = vld [vmem:[%s11 + $0x318] sm:$0xff]
    %v2257 = vld [vmem:[%s11 + $0x320] sm:$0xff]
    %v2258 = vld [vmem:[%s11 + $0x328] sm:$0xff]
    %v2259 = vld [vmem:[%s11 + $0x330] sm:$0xff]
    %v2260 = vld [vmem:[%s11 + $0x338] sm:$0xff]
    %v2261 = vld [vmem:[%s11 + $0x340] sm:$0xff]
    %v2262 = vld [vmem:[%s11 + $0x348] sm:$0xff]
    %v2263 = vld [vmem:[%s11 + $0x350] sm:$0xff]
    %v2264 = vld [vmem:[%s11 + $0x358] sm:$0xff]
    %v2265 = vld [vmem:[%s11 + $0x360] sm:$0xff]
    %v2266 = vld [vmem:[%s11 + $0x368] sm:$0xff]
    %v2267 = vld [vmem:[%s11 + $0x370] sm:$0xff]
    %v2268 = vld [vmem:[%s11 + $0x378] sm:$0xff]
    %v2269 = vld [vmem:[%s11 + $0x380] sm:$0xff]
    %v2270 = vld [vmem:[%s11 + $0x388] sm:$0xff]
    %v2271 = vld [vmem:[%s11 + $0x390] sm:$0xff]
    %v2272 = vld [vmem:[%s11 + $0x398] sm:$0xff]
    %v2273 = vld [vmem:[%s11 + $0x3a0] sm:$0xff]
    %v2274 = vld [vmem:[%s11 + $0x3a8] sm:$0xff]
    %v2275 = vld [vmem:[%s11 + $0x3b0] sm:$0xff]
    %v2276 = vld [vmem:[%s11 + $0x3b8] sm:$0xff]
    %v2277 = vld [vmem:[%s11 + $0x3c0] sm:$0xff]
    %v2278 = vld [vmem:[%s11 + $0x3c8] sm:$0xff]
    %v2279 = vld [vmem:[%s11 + $0x3d0] sm:$0xff]
    %v2280 = vld [vmem:[%s11 + $0x3d8] sm:$0xff]
    %v2281 = vld [vmem:[%s11 + $0x3e0] sm:$0xff]
    %v2282 = vld [vmem:[%s11 + $0x3e8] sm:$0xff]
    %v2283 = vld [vmem:[%s11 + $0x3f0] sm:$0xff]
    %v2284 = vld [vmem:[%s11 + $0x3f8] sm:$0xff]
    %v2285 = vld [vmem:[%s13] sm:$0xf]
    %v2287 = vlaneseq
    %v2288 = vshrl.u32 %v2287, 7
    %v2289 = vsub.s32 0, %v2288
    %v2290 = vrot.slane %v2285, %v2289
    %v2291 = vlaneseq
    %v2292 = vshrl.u32 %v2291, 7
    %v2293 = vsub.s32 1, %v2292
    %v2294 = vrot.slane %v2285, %v2293
    %v2295 = vlaneseq
    %v2296 = vshrl.u32 %v2295, 7
    %v2297 = vsub.s32 2, %v2296
    %v2298 = vrot.slane %v2285, %v2297
    %v2299 = vlaneseq
    %v2300 = vshrl.u32 %v2299, 7
    %v2301 = vsub.s32 3, %v2300
    %v2302 = vrot.slane %v2285, %v2301
    %v2435 = vunpack.c.l.b16 %v2157
    %v2436 = vunpack.c.h.b16 %v2157
    %v2437 = vunpack.c.l.b16 %v2158
    %v2438 = vunpack.c.h.b16 %v2158
    %v2439 = vunpack.c.l.b16 %v2159
    %v2440 = vunpack.c.h.b16 %v2159
    %v2441 = vunpack.c.l.b16 %v2160
    %v2442 = vunpack.c.h.b16 %v2160
    %v2443 = vunpack.c.l.b16 %v2161
    %v2444 = vunpack.c.h.b16 %v2161
    %v2445 = vunpack.c.l.b16 %v2162
    %v2446 = vunpack.c.h.b16 %v2162
    %v2447 = vunpack.c.l.b16 %v2163
    %v2448 = vunpack.c.h.b16 %v2163
    %v2449 = vunpack.c.l.b16 %v2164
    %v2450 = vunpack.c.h.b16 %v2164
    %v2451 = vunpack.c.l.b16 %v2165
    %v2452 = vunpack.c.h.b16 %v2165
    %v2453 = vunpack.c.l.b16 %v2166
    %v2454 = vunpack.c.h.b16 %v2166
    %v2455 = vunpack.c.l.b16 %v2167
    %v2456 = vunpack.c.h.b16 %v2167
    %v2457 = vunpack.c.l.b16 %v2168
    %v2458 = vunpack.c.h.b16 %v2168
    %v2459 = vunpack.c.l.b16 %v2169
    %v2460 = vunpack.c.h.b16 %v2169
    %v2461 = vunpack.c.l.b16 %v2170
    %v2462 = vunpack.c.h.b16 %v2170
    %v2463 = vunpack.c.l.b16 %v2171
    %v2464 = vunpack.c.h.b16 %v2171
    %v2465 = vunpack.c.l.b16 %v2172
    %v2466 = vunpack.c.h.b16 %v2172
    %v2467 = vunpack.c.l.b16 %v2173
    %v2468 = vunpack.c.h.b16 %v2173
    %v2469 = vunpack.c.l.b16 %v2174
    %v2470 = vunpack.c.h.b16 %v2174
    %v2471 = vunpack.c.l.b16 %v2175
    %v2472 = vunpack.c.h.b16 %v2175
    %v2473 = vunpack.c.l.b16 %v2176
    %v2474 = vunpack.c.h.b16 %v2176
    %v2475 = vunpack.c.l.b16 %v2177
    %v2476 = vunpack.c.h.b16 %v2177
    %v2477 = vunpack.c.l.b16 %v2178
    %v2478 = vunpack.c.h.b16 %v2178
    %v2479 = vunpack.c.l.b16 %v2179
    %v2480 = vunpack.c.h.b16 %v2179
    %v2481 = vunpack.c.l.b16 %v2180
    %v2482 = vunpack.c.h.b16 %v2180
    %v2483 = vunpack.c.l.b16 %v2181
    %v2484 = vunpack.c.h.b16 %v2181
    %v2485 = vunpack.c.l.b16 %v2182
    %v2486 = vunpack.c.h.b16 %v2182
    %v2487 = vunpack.c.l.b16 %v2183
    %v2488 = vunpack.c.h.b16 %v2183
    %v2489 = vunpack.c.l.b16 %v2184
    %v2490 = vunpack.c.h.b16 %v2184
    %v2491 = vunpack.c.l.b16 %v2185
    %v2492 = vunpack.c.h.b16 %v2185
    %v2493 = vunpack.c.l.b16 %v2186
    %v2494 = vunpack.c.h.b16 %v2186
    %v2495 = vunpack.c.l.b16 %v2187
    %v2496 = vunpack.c.h.b16 %v2187
    %v2497 = vunpack.c.l.b16 %v2188
    %v2498 = vunpack.c.h.b16 %v2188
    %v2499 = vunpack.c.l.b16 %v2189
    %v2500 = vunpack.c.h.b16 %v2189
    %v2501 = vunpack.c.l.b16 %v2190
    %v2502 = vunpack.c.h.b16 %v2190
    %v2503 = vunpack.c.l.b16 %v2191
    %v2504 = vunpack.c.h.b16 %v2191
    %v2505 = vunpack.c.l.b16 %v2192
    %v2506 = vunpack.c.h.b16 %v2192
    %v2507 = vunpack.c.l.b16 %v2193
    %v2508 = vunpack.c.h.b16 %v2193
    %v2509 = vunpack.c.l.b16 %v2194
    %v2510 = vunpack.c.h.b16 %v2194
    %v2511 = vunpack.c.l.b16 %v2195
    %v2512 = vunpack.c.h.b16 %v2195
    %v2513 = vunpack.c.l.b16 %v2196
    %v2514 = vunpack.c.h.b16 %v2196
    %v2515 = vunpack.c.l.b16 %v2197
    %v2516 = vunpack.c.h.b16 %v2197
    %v2517 = vunpack.c.l.b16 %v2198
    %v2518 = vunpack.c.h.b16 %v2198
    %v2519 = vunpack.c.l.b16 %v2199
    %v2520 = vunpack.c.h.b16 %v2199
    %v2521 = vunpack.c.l.b16 %v2200
    %v2522 = vunpack.c.h.b16 %v2200
    %v2523 = vunpack.c.l.b16 %v2201
    %v2524 = vunpack.c.h.b16 %v2201
    %v2525 = vunpack.c.l.b16 %v2202
    %v2526 = vunpack.c.h.b16 %v2202
    %v2527 = vunpack.c.l.b16 %v2203
    %v2528 = vunpack.c.h.b16 %v2203
    %v2529 = vunpack.c.l.b16 %v2204
    %v2530 = vunpack.c.h.b16 %v2204
    %v2531 = vunpack.c.l.b16 %v2205
    %v2532 = vunpack.c.h.b16 %v2205
    %v2533 = vunpack.c.l.b16 %v2206
    %v2534 = vunpack.c.h.b16 %v2206
    %v2535 = vunpack.c.l.b16 %v2207
    %v2536 = vunpack.c.h.b16 %v2207
    %v2537 = vunpack.c.l.b16 %v2208
    %v2538 = vunpack.c.h.b16 %v2208
    %v2539 = vunpack.c.l.b16 %v2209
    %v2540 = vunpack.c.h.b16 %v2209
    %v2541 = vunpack.c.l.b16 %v2210
    %v2542 = vunpack.c.h.b16 %v2210
    %v2543 = vunpack.c.l.b16 %v2211
    %v2544 = vunpack.c.h.b16 %v2211
    %v2545 = vunpack.c.l.b16 %v2212
    %v2546 = vunpack.c.h.b16 %v2212
    %v2547 = vunpack.c.l.b16 %v2213
    %v2548 = vunpack.c.h.b16 %v2213
    %v2549 = vunpack.c.l.b16 %v2214
    %v2550 = vunpack.c.h.b16 %v2214
    %v2551 = vunpack.c.l.b16 %v2215
    %v2552 = vunpack.c.h.b16 %v2215
    %v2553 = vunpack.c.l.b16 %v2216
    %v2554 = vunpack.c.h.b16 %v2216
    %v2555 = vunpack.c.l.b16 %v2217
    %v2556 = vunpack.c.h.b16 %v2217
    %v2557 = vunpack.c.l.b16 %v2218
    %v2558 = vunpack.c.h.b16 %v2218
    %v2559 = vunpack.c.l.b16 %v2219
    %v2560 = vunpack.c.h.b16 %v2219
    %v2561 = vunpack.c.l.b16 %v2220
    %v2562 = vunpack.c.h.b16 %v2220
    %v2563 = vunpack.c.l.b16 %v2221
    %v2564 = vunpack.c.h.b16 %v2221
    %v2565 = vunpack.c.l.b16 %v2222
    %v2566 = vunpack.c.h.b16 %v2222
    %v2567 = vunpack.c.l.b16 %v2223
    %v2568 = vunpack.c.h.b16 %v2223
    %v2569 = vunpack.c.l.b16 %v2224
    %v2570 = vunpack.c.h.b16 %v2224
    %v2571 = vunpack.c.l.b16 %v2225
    %v2572 = vunpack.c.h.b16 %v2225
    %v2573 = vunpack.c.l.b16 %v2226
    %v2574 = vunpack.c.h.b16 %v2226
    %v2575 = vunpack.c.l.b16 %v2227
    %v2576 = vunpack.c.h.b16 %v2227
    %v2577 = vunpack.c.l.b16 %v2228
    %v2578 = vunpack.c.h.b16 %v2228
    %v2579 = vunpack.c.l.b16 %v2229
    %v2580 = vunpack.c.h.b16 %v2229
    %v2581 = vunpack.c.l.b16 %v2230
    %v2582 = vunpack.c.h.b16 %v2230
    %v2583 = vunpack.c.l.b16 %v2231
    %v2584 = vunpack.c.h.b16 %v2231
    %v2585 = vunpack.c.l.b16 %v2232
    %v2586 = vunpack.c.h.b16 %v2232
    %v2587 = vunpack.c.l.b16 %v2233
    %v2588 = vunpack.c.h.b16 %v2233
    %v2589 = vunpack.c.l.b16 %v2234
    %v2590 = vunpack.c.h.b16 %v2234
    %v2591 = vunpack.c.l.b16 %v2235
    %v2592 = vunpack.c.h.b16 %v2235
    %v2593 = vunpack.c.l.b16 %v2236
    %v2594 = vunpack.c.h.b16 %v2236
    %v2595 = vunpack.c.l.b16 %v2237
    %v2596 = vunpack.c.h.b16 %v2237
    %v2597 = vunpack.c.l.b16 %v2238
    %v2598 = vunpack.c.h.b16 %v2238
    %v2599 = vunpack.c.l.b16 %v2239
    %v2600 = vunpack.c.h.b16 %v2239
    %v2601 = vunpack.c.l.b16 %v2240
    %v2602 = vunpack.c.h.b16 %v2240
    %v2603 = vunpack.c.l.b16 %v2241
    %v2604 = vunpack.c.h.b16 %v2241
    %v2605 = vunpack.c.l.b16 %v2242
    %v2606 = vunpack.c.h.b16 %v2242
    %v2607 = vunpack.c.l.b16 %v2243
    %v2608 = vunpack.c.h.b16 %v2243
    %v2609 = vunpack.c.l.b16 %v2244
    %v2610 = vunpack.c.h.b16 %v2244
    %v2611 = vunpack.c.l.b16 %v2245
    %v2612 = vunpack.c.h.b16 %v2245
    %v2613 = vunpack.c.l.b16 %v2246
    %v2614 = vunpack.c.h.b16 %v2246
    %v2615 = vunpack.c.l.b16 %v2247
    %v2616 = vunpack.c.h.b16 %v2247
    %v2617 = vunpack.c.l.b16 %v2248
    %v2618 = vunpack.c.h.b16 %v2248
    %v2619 = vunpack.c.l.b16 %v2249
    %v2620 = vunpack.c.h.b16 %v2249
    %v2621 = vunpack.c.l.b16 %v2250
    %v2622 = vunpack.c.h.b16 %v2250
    %v2623 = vunpack.c.l.b16 %v2251
    %v2624 = vunpack.c.h.b16 %v2251
    %v2625 = vunpack.c.l.b16 %v2252
    %v2626 = vunpack.c.h.b16 %v2252
    %v2627 = vunpack.c.l.b16 %v2253
    %v2628 = vunpack.c.h.b16 %v2253
    %v2629 = vunpack.c.l.b16 %v2254
    %v2630 = vunpack.c.h.b16 %v2254
    %v2631 = vunpack.c.l.b16 %v2255
    %v2632 = vunpack.c.h.b16 %v2255
    %v2633 = vunpack.c.l.b16 %v2256
    %v2634 = vunpack.c.h.b16 %v2256
    %v2635 = vunpack.c.l.b16 %v2257
    %v2636 = vunpack.c.h.b16 %v2257
    %v2637 = vunpack.c.l.b16 %v2258
    %v2638 = vunpack.c.h.b16 %v2258
    %v2639 = vunpack.c.l.b16 %v2259
    %v2640 = vunpack.c.h.b16 %v2259
    %v2641 = vunpack.c.l.b16 %v2260
    %v2642 = vunpack.c.h.b16 %v2260
    %v2643 = vunpack.c.l.b16 %v2261
    %v2644 = vunpack.c.h.b16 %v2261
    %v2645 = vunpack.c.l.b16 %v2262
    %v2646 = vunpack.c.h.b16 %v2262
    %v2647 = vunpack.c.l.b16 %v2263
    %v2648 = vunpack.c.h.b16 %v2263
    %v2649 = vunpack.c.l.b16 %v2264
    %v2650 = vunpack.c.h.b16 %v2264
    %v2651 = vunpack.c.l.b16 %v2265
    %v2652 = vunpack.c.h.b16 %v2265
    %v2653 = vunpack.c.l.b16 %v2266
    %v2654 = vunpack.c.h.b16 %v2266
    %v2655 = vunpack.c.l.b16 %v2267
    %v2656 = vunpack.c.h.b16 %v2267
    %v2657 = vunpack.c.l.b16 %v2268
    %v2658 = vunpack.c.h.b16 %v2268
    %v2659 = vunpack.c.l.b16 %v2269
    %v2660 = vunpack.c.h.b16 %v2269
    %v2661 = vunpack.c.l.b16 %v2270
    %v2662 = vunpack.c.h.b16 %v2270
    %v2663 = vunpack.c.l.b16 %v2271
    %v2664 = vunpack.c.h.b16 %v2271
    %v2665 = vunpack.c.l.b16 %v2272
    %v2666 = vunpack.c.h.b16 %v2272
    %v2667 = vunpack.c.l.b16 %v2273
    %v2668 = vunpack.c.h.b16 %v2273
    %v2669 = vunpack.c.l.b16 %v2274
    %v2670 = vunpack.c.h.b16 %v2274
    %v2671 = vunpack.c.l.b16 %v2275
    %v2672 = vunpack.c.h.b16 %v2275
    %v2673 = vunpack.c.l.b16 %v2276
    %v2674 = vunpack.c.h.b16 %v2276
    %v2675 = vunpack.c.l.b16 %v2277
    %v2676 = vunpack.c.h.b16 %v2277
    %v2677 = vunpack.c.l.b16 %v2278
    %v2678 = vunpack.c.h.b16 %v2278
    %v2679 = vunpack.c.l.b16 %v2279
    %v2680 = vunpack.c.h.b16 %v2279
    %v2681 = vunpack.c.l.b16 %v2280
    %v2682 = vunpack.c.h.b16 %v2280
    %v2683 = vunpack.c.l.b16 %v2281
    %v2684 = vunpack.c.h.b16 %v2281
    %v2685 = vunpack.c.l.b16 %v2282
    %v2686 = vunpack.c.h.b16 %v2282
    %v2687 = vunpack.c.l.b16 %v2283
    %v2688 = vunpack.c.h.b16 %v2283
    %v2689 = vunpack.c.l.b16 %v2284
    %v2690 = vunpack.c.h.b16 %v2284
    %v2691 = vpack.c.b16 %v2439, %v2435
    %v2692 = vpack.c.b16 %v2440, %v2436
    %v2693 = vpack.c.b16 %v2441, %v2437
    %v2694 = vpack.c.b16 %v2442, %v2438
    %v2695 = vpack.c.b16 %v2447, %v2443
    %v2696 = vpack.c.b16 %v2448, %v2444
    %v2697 = vpack.c.b16 %v2449, %v2445
    %v2698 = vpack.c.b16 %v2450, %v2446
    %v2699 = vpack.c.b16 %v2455, %v2451
    %v2700 = vpack.c.b16 %v2456, %v2452
    %v2701 = vpack.c.b16 %v2457, %v2453
    %v2702 = vpack.c.b16 %v2458, %v2454
    %v2703 = vpack.c.b16 %v2463, %v2459
    %v2704 = vpack.c.b16 %v2464, %v2460
    %v2705 = vpack.c.b16 %v2465, %v2461
    %v2706 = vpack.c.b16 %v2466, %v2462
    %v2707 = vpack.c.b16 %v2471, %v2467
    %v2708 = vpack.c.b16 %v2472, %v2468
    %v2709 = vpack.c.b16 %v2473, %v2469
    %v2710 = vpack.c.b16 %v2474, %v2470
    %v2711 = vpack.c.b16 %v2479, %v2475
    %v2712 = vpack.c.b16 %v2480, %v2476
    %v2713 = vpack.c.b16 %v2481, %v2477
    %v2714 = vpack.c.b16 %v2482, %v2478
    %v2715 = vpack.c.b16 %v2487, %v2483
    %v2716 = vpack.c.b16 %v2488, %v2484
    %v2717 = vpack.c.b16 %v2489, %v2485
    %v2718 = vpack.c.b16 %v2490, %v2486
    %v2719 = vpack.c.b16 %v2495, %v2491
    %v2720 = vpack.c.b16 %v2496, %v2492
    %v2721 = vpack.c.b16 %v2497, %v2493
    %v2722 = vpack.c.b16 %v2498, %v2494
    %v2723 = vpack.c.b16 %v2503, %v2499
    %v2724 = vpack.c.b16 %v2504, %v2500
    %v2725 = vpack.c.b16 %v2505, %v2501
    %v2726 = vpack.c.b16 %v2506, %v2502
    %v2727 = vpack.c.b16 %v2511, %v2507
    %v2728 = vpack.c.b16 %v2512, %v2508
    %v2729 = vpack.c.b16 %v2513, %v2509
    %v2730 = vpack.c.b16 %v2514, %v2510
    %v2731 = vpack.c.b16 %v2519, %v2515
    %v2732 = vpack.c.b16 %v2520, %v2516
    %v2733 = vpack.c.b16 %v2521, %v2517
    %v2734 = vpack.c.b16 %v2522, %v2518
    %v2735 = vpack.c.b16 %v2527, %v2523
    %v2736 = vpack.c.b16 %v2528, %v2524
    %v2737 = vpack.c.b16 %v2529, %v2525
    %v2738 = vpack.c.b16 %v2530, %v2526
    %v2739 = vpack.c.b16 %v2535, %v2531
    %v2740 = vpack.c.b16 %v2536, %v2532
    %v2741 = vpack.c.b16 %v2537, %v2533
    %v2742 = vpack.c.b16 %v2538, %v2534
    %v2743 = vpack.c.b16 %v2543, %v2539
    %v2744 = vpack.c.b16 %v2544, %v2540
    %v2745 = vpack.c.b16 %v2545, %v2541
    %v2746 = vpack.c.b16 %v2546, %v2542
    %v2747 = vpack.c.b16 %v2551, %v2547
    %v2748 = vpack.c.b16 %v2552, %v2548
    %v2749 = vpack.c.b16 %v2553, %v2549
    %v2750 = vpack.c.b16 %v2554, %v2550
    %v2751 = vpack.c.b16 %v2559, %v2555
    %v2752 = vpack.c.b16 %v2560, %v2556
    %v2753 = vpack.c.b16 %v2561, %v2557
    %v2754 = vpack.c.b16 %v2562, %v2558
    %v2755 = vpack.c.b16 %v2567, %v2563
    %v2756 = vpack.c.b16 %v2568, %v2564
    %v2757 = vpack.c.b16 %v2569, %v2565
    %v2758 = vpack.c.b16 %v2570, %v2566
    %v2759 = vpack.c.b16 %v2575, %v2571
    %v2760 = vpack.c.b16 %v2576, %v2572
    %v2761 = vpack.c.b16 %v2577, %v2573
    %v2762 = vpack.c.b16 %v2578, %v2574
    %v2763 = vpack.c.b16 %v2583, %v2579
    %v2764 = vpack.c.b16 %v2584, %v2580
    %v2765 = vpack.c.b16 %v2585, %v2581
    %v2766 = vpack.c.b16 %v2586, %v2582
    %v2767 = vpack.c.b16 %v2591, %v2587
    %v2768 = vpack.c.b16 %v2592, %v2588
    %v2769 = vpack.c.b16 %v2593, %v2589
    %v2770 = vpack.c.b16 %v2594, %v2590
    %v2771 = vpack.c.b16 %v2599, %v2595
    %v2772 = vpack.c.b16 %v2600, %v2596
    %v2773 = vpack.c.b16 %v2601, %v2597
    %v2774 = vpack.c.b16 %v2602, %v2598
    %v2775 = vpack.c.b16 %v2607, %v2603
    %v2776 = vpack.c.b16 %v2608, %v2604
    %v2777 = vpack.c.b16 %v2609, %v2605
    %v2778 = vpack.c.b16 %v2610, %v2606
    %v2779 = vpack.c.b16 %v2615, %v2611
    %v2780 = vpack.c.b16 %v2616, %v2612
    %v2781 = vpack.c.b16 %v2617, %v2613
    %v2782 = vpack.c.b16 %v2618, %v2614
    %v2783 = vpack.c.b16 %v2623, %v2619
    %v2784 = vpack.c.b16 %v2624, %v2620
    %v2785 = vpack.c.b16 %v2625, %v2621
    %v2786 = vpack.c.b16 %v2626, %v2622
    %v2787 = vpack.c.b16 %v2631, %v2627
    %v2788 = vpack.c.b16 %v2632, %v2628
    %v2789 = vpack.c.b16 %v2633, %v2629
    %v2790 = vpack.c.b16 %v2634, %v2630
    %v2791 = vpack.c.b16 %v2639, %v2635
    %v2792 = vpack.c.b16 %v2640, %v2636
    %v2793 = vpack.c.b16 %v2641, %v2637
    %v2794 = vpack.c.b16 %v2642, %v2638
    %v2795 = vpack.c.b16 %v2647, %v2643
    %v2796 = vpack.c.b16 %v2648, %v2644
    %v2797 = vpack.c.b16 %v2649, %v2645
    %v2798 = vpack.c.b16 %v2650, %v2646
    %v2799 = vpack.c.b16 %v2655, %v2651
    %v2800 = vpack.c.b16 %v2656, %v2652
    %v2801 = vpack.c.b16 %v2657, %v2653
    %v2802 = vpack.c.b16 %v2658, %v2654
    %v2803 = vpack.c.b16 %v2663, %v2659
    %v2804 = vpack.c.b16 %v2664, %v2660
    %v2805 = vpack.c.b16 %v2665, %v2661
    %v2806 = vpack.c.b16 %v2666, %v2662
    %v2807 = vpack.c.b16 %v2671, %v2667
    %v2808 = vpack.c.b16 %v2672, %v2668
    %v2809 = vpack.c.b16 %v2673, %v2669
    %v2810 = vpack.c.b16 %v2674, %v2670
    %v2811 = vpack.c.b16 %v2679, %v2675
    %v2812 = vpack.c.b16 %v2680, %v2676
    %v2813 = vpack.c.b16 %v2681, %v2677
    %v2814 = vpack.c.b16 %v2682, %v2678
    %v2815 = vpack.c.b16 %v2687, %v2683
    %v2816 = vpack.c.b16 %v2688, %v2684
    %v2817 = vpack.c.b16 %v2689, %v2685
    %v2818 = vpack.c.b16 %v2690, %v2686
    %2947 = vmatprep.subr.bf16.mxu0 %v2692
    %2948 = vmatpush1.bf16.msra.mxu0 %v2691
    %2949 = vmatprep.subr.bf16.mxu0 %v2696
    %2950 = vmatpush1.bf16.msra.mxu0 %v2695
    %2951 = vmatprep.subr.bf16.mxu0 %v2700
    %2952 = vmatpush1.bf16.msra.mxu0 %v2699
    %2953 = vmatprep.subr.bf16.mxu0 %v2704
    %2954 = vmatpush1.bf16.msra.mxu0 %v2703
    %2955 = vmatprep.subr.bf16.mxu0 %v2708
    %2956 = vmatpush1.bf16.msra.mxu0 %v2707
    %2957 = vmatprep.subr.bf16.mxu0 %v2712
    %2958 = vmatpush1.bf16.msra.mxu0 %v2711
    %2959 = vmatprep.subr.bf16.mxu0 %v2716
    %2960 = vmatpush1.bf16.msra.mxu0 %v2715
    %2961 = vmatprep.subr.bf16.mxu0 %v2720
    %2962 = vmatpush1.bf16.msra.mxu0 %v2719
    %2963 = vmatprep.subr.bf16.mxu0 %v2724
    %2964 = vmatpush1.bf16.msra.mxu0 %v2723
    %2965 = vmatprep.subr.bf16.mxu0 %v2728
    %2966 = vmatpush1.bf16.msra.mxu0 %v2727
    %2967 = vmatprep.subr.bf16.mxu0 %v2732
    %2968 = vmatpush1.bf16.msra.mxu0 %v2731
    %2969 = vmatprep.subr.bf16.mxu0 %v2736
    %2970 = vmatpush1.bf16.msra.mxu0 %v2735
    %2971 = vmatprep.subr.bf16.mxu0 %v2740
    %2972 = vmatpush1.bf16.msra.mxu0 %v2739
    %2973 = vmatprep.subr.bf16.mxu0 %v2744
    %2974 = vmatpush1.bf16.msra.mxu0 %v2743
    %2975 = vmatprep.subr.bf16.mxu0 %v2748
    %2976 = vmatpush1.bf16.msra.mxu0 %v2747
    %2977 = vmatprep.subr.bf16.mxu0 %v2752
    %2978 = vmatpush1.bf16.msra.mxu0 %v2751
    %2979 = vmatprep.mubr.bf16.mxu0 %v2154
    %2980 = vmatmul.mubr.bf16.gmra.mrb[0].mxu0 %v2153
    %v2981 = vpop.f32.mrb[0].mxu0
    %v2982 = vadd.f32 %v2290, %v2981
    %v2983 = vpop.f32.mrb[0].mxu0
    %v2984 = vadd.f32 %v2294, %v2983
    %v2985 = vpop.f32.mrb[0].mxu0
    %v2986 = vpop.f32.mrb[0].mxu0
    %2987 = vdwg.mxu0
    %2988 = vmatprep.subr.bf16.mxu0 %v2756
    %2989 = vmatpush1.bf16.msra.mxu0 %v2755
    %2990 = vmatprep.subr.bf16.mxu0 %v2760
    %2991 = vmatpush1.bf16.msra.mxu0 %v2759
    %2992 = vmatprep.subr.bf16.mxu0 %v2764
    %2993 = vmatpush1.bf16.msra.mxu0 %v2763
    %2994 = vmatprep.subr.bf16.mxu0 %v2768
    %2995 = vmatpush1.bf16.msra.mxu0 %v2767
    %2996 = vmatprep.subr.bf16.mxu0 %v2772
    %2997 = vmatpush1.bf16.msra.mxu0 %v2771
    %2998 = vmatprep.subr.bf16.mxu0 %v2776
    %2999 = vmatpush1.bf16.msra.mxu0 %v2775
    %3000 = vmatprep.subr.bf16.mxu0 %v2780
    %3001 = vmatpush1.bf16.msra.mxu0 %v2779
    %3002 = vmatprep.subr.bf16.mxu0 %v2784
    %3003 = vmatpush1.bf16.msra.mxu0 %v2783
    %3004 = vmatprep.subr.bf16.mxu0 %v2788
    %3005 = vmatpush1.bf16.msra.mxu0 %v2787
    %3006 = vmatprep.subr.bf16.mxu0 %v2792
    %3007 = vmatpush1.bf16.msra.mxu0 %v2791
    %3008 = vmatprep.subr.bf16.mxu0 %v2796
    %3009 = vmatpush1.bf16.msra.mxu0 %v2795
    %3010 = vmatprep.subr.bf16.mxu0 %v2800
    %3011 = vmatpush1.bf16.msra.mxu0 %v2799
    %3012 = vmatprep.subr.bf16.mxu0 %v2804
    %3013 = vmatpush1.bf16.msra.mxu0 %v2803
    %3014 = vmatprep.subr.bf16.mxu0 %v2808
    %3015 = vmatpush1.bf16.msra.mxu0 %v2807
    %3016 = vmatprep.subr.bf16.mxu0 %v2812
    %3017 = vmatpush1.bf16.msra.mxu0 %v2811
    %3018 = vmatprep.subr.bf16.mxu0 %v2816
    %3019 = vmatpush1.bf16.msra.mxu0 %v2815
    %3020 = vmatprep.mubr.bf16.mxu0 %v2156
    %3021 = vmatmul.mubr.bf16.gmra.mrb[0].mxu0 %v2155
    %v3022 = vpop.f32.mrb[0].mxu0
    %v3023 = vadd.f32 %v2982, %v3022
    %v3024 = vpop.f32.mrb[0].mxu0
    %v3025 = vadd.f32 %v2984, %v3024
    %v3026 = vpop.f32.mrb[0].mxu0
    %v3027 = vpop.f32.mrb[0].mxu0
    %3028 = vdwg.mxu0
    %3029 = vmatprep.subr.bf16.mxu0 %v2694
    %3030 = vmatpush1.bf16.msra.mxu0 %v2693
    %3031 = vmatprep.subr.bf16.mxu0 %v2698
    %3032 = vmatpush1.bf16.msra.mxu0 %v2697
    %3033 = vmatprep.subr.bf16.mxu0 %v2702
    %3034 = vmatpush1.bf16.msra.mxu0 %v2701
    %3035 = vmatprep.subr.bf16.mxu0 %v2706
    %3036 = vmatpush1.bf16.msra.mxu0 %v2705
    %3037 = vmatprep.subr.bf16.mxu0 %v2710
    %3038 = vmatpush1.bf16.msra.mxu0 %v2709
    %3039 = vmatprep.subr.bf16.mxu0 %v2714
    %3040 = vmatpush1.bf16.msra.mxu0 %v2713
    %3041 = vmatprep.subr.bf16.mxu0 %v2718
    %3042 = vmatpush1.bf16.msra.mxu0 %v2717
    %3043 = vmatprep.subr.bf16.mxu0 %v2722
    %3044 = vmatpush1.bf16.msra.mxu0 %v2721
    %3045 = vmatprep.subr.bf16.mxu0 %v2726
    %3046 = vmatpush1.bf16.msra.mxu0 %v2725
    %3047 = vmatprep.subr.bf16.mxu0 %v2730
    %3048 = vmatpush1.bf16.msra.mxu0 %v2729
    %3049 = vmatprep.subr.bf16.mxu0 %v2734
    %3050 = vmatpush1.bf16.msra.mxu0 %v2733
    %3051 = vmatprep.subr.bf16.mxu0 %v2738
    %3052 = vmatpush1.bf16.msra.mxu0 %v2737
    %3053 = vmatprep.subr.bf16.mxu0 %v2742
    %3054 = vmatpush1.bf16.msra.mxu0 %v2741
    %3055 = vmatprep.subr.bf16.mxu0 %v2746
    %3056 = vmatpush1.bf16.msra.mxu0 %v2745
    %3057 = vmatprep.subr.bf16.mxu0 %v2750
    %3058 = vmatpush1.bf16.msra.mxu0 %v2749
    %3059 = vmatprep.subr.bf16.mxu0 %v2754
    %3060 = vmatpush1.bf16.msra.mxu0 %v2753
    %3061 = vmatprep.mubr.bf16.mxu0 %v2154
    %3062 = vmatmul.mubr.bf16.gmra.mrb[0].mxu0 %v2153
    %v3063 = vpop.f32.mrb[0].mxu0
    %v3064 = vadd.f32 %v2298, %v3063
    %v3065 = vpop.f32.mrb[0].mxu0
    %v3066 = vadd.f32 %v2302, %v3065
    %v3067 = vpop.f32.mrb[0].mxu0
    %v3068 = vpop.f32.mrb[0].mxu0
    %3069 = vdwg.mxu0
    %3070 = vmatprep.subr.bf16.mxu0 %v2758
    %3071 = vmatpush1.bf16.msra.mxu0 %v2757
    %3072 = vmatprep.subr.bf16.mxu0 %v2762
    %3073 = vmatpush1.bf16.msra.mxu0 %v2761
    %3074 = vmatprep.subr.bf16.mxu0 %v2766
    %3075 = vmatpush1.bf16.msra.mxu0 %v2765
    %3076 = vmatprep.subr.bf16.mxu0 %v2770
    %3077 = vmatpush1.bf16.msra.mxu0 %v2769
    %3078 = vmatprep.subr.bf16.mxu0 %v2774
    %3079 = vmatpush1.bf16.msra.mxu0 %v2773
    %3080 = vmatprep.subr.bf16.mxu0 %v2778
    %3081 = vmatpush1.bf16.msra.mxu0 %v2777
    %3082 = vmatprep.subr.bf16.mxu0 %v2782
    %3083 = vmatpush1.bf16.msra.mxu0 %v2781
    %3084 = vmatprep.subr.bf16.mxu0 %v2786
    %3085 = vmatpush1.bf16.msra.mxu0 %v2785
    %3086 = vmatprep.subr.bf16.mxu0 %v2790
    %3087 = vmatpush1.bf16.msra.mxu0 %v2789
    %3088 = vmatprep.subr.bf16.mxu0 %v2794
    %3089 = vmatpush1.bf16.msra.mxu0 %v2793
    %3090 = vmatprep.subr.bf16.mxu0 %v2798
    %3091 = vmatpush1.bf16.msra.mxu0 %v2797
    %3092 = vmatprep.subr.bf16.mxu0 %v2802
    %3093 = vmatpush1.bf16.msra.mxu0 %v2801
    %3094 = vmatprep.subr.bf16.mxu0 %v2806
    %3095 = vmatpush1.bf16.msra.mxu0 %v2805
    %3096 = vmatprep.subr.bf16.mxu0 %v2810
    %3097 = vmatpush1.bf16.msra.mxu0 %v2809
    %3098 = vmatprep.subr.bf16.mxu0 %v2814
    %3099 = vmatpush1.bf16.msra.mxu0 %v2813
    %3100 = vmatprep.subr.bf16.mxu0 %v2818
    %3101 = vmatpush1.bf16.msra.mxu0 %v2817
    %3102 = vmatprep.mubr.bf16.mxu0 %v2156
    %3103 = vmatmul.mubr.bf16.gmra.mrb[0].mxu0 %v2155
    %v3104 = vpop.f32.mrb[0].mxu0
    %v3105 = vadd.f32 %v3064, %v3104
    %v3106 = vpop.f32.mrb[0].mxu0
    %v3107 = vadd.f32 %v3066, %v3106
    %v3108 = vpop.f32.mrb[0].mxu0
    %v3109 = vpop.f32.mrb[0].mxu0
    %3110 = vdwg.mxu0
    %v3111 = vmax.f32 %v3023, 0.0
    %v3112 = vmax.f32 %v3025, 0.0
    %v3113 = vmax.f32 %v3105, 0.0
    %v3114 = vmax.f32 %v3107, 0.0
    %v3115 = vpack.c.bf16 %v3111, %v3111
    %v3116 = vpack.c.bf16 %v3112, %v3112
    %v3117 = vpack.c.bf16 %v3113, %v3113
    %v3118 = vpack.c.bf16 %v3114, %v3114
    %v3119 = vld [vmem:[%s15] sm:$0xff]
    %v3120 = vld [vmem:[%s15 + $0x8] sm:$0xff]
    %v3121 = vld [vmem:[%s15 + $0x10] sm:$0xff]
    %v3122 = vld [vmem:[%s15 + $0x18] sm:$0xff]
    %v3123 = vld [vmem:[%s15 + $0x20] sm:$0xff]
    %v3124 = vld [vmem:[%s15 + $0x28] sm:$0xff]
    %v3125 = vld [vmem:[%s15 + $0x30] sm:$0xff]
    %v3126 = vld [vmem:[%s15 + $0x38] sm:$0xff]
    %v3127 = vld [vmem:[%s15 + $0x40] sm:$0xff]
    %v3128 = vld [vmem:[%s15 + $0x48] sm:$0xff]
    %v3129 = vld [vmem:[%s15 + $0x50] sm:$0xff]
    %v3130 = vld [vmem:[%s15 + $0x58] sm:$0xff]
    %v3131 = vld [vmem:[%s15 + $0x60] sm:$0xff]
    %v3132 = vld [vmem:[%s15 + $0x68] sm:$0xff]
    %v3133 = vld [vmem:[%s15 + $0x70] sm:$0xff]
    %v3134 = vld [vmem:[%s15 + $0x78] sm:$0xff]
    %v3135 = vld [vmem:[%s15 + $0x80] sm:$0xff]
    %v3136 = vld [vmem:[%s15 + $0x88] sm:$0xff]
    %v3137 = vld [vmem:[%s15 + $0x90] sm:$0xff]
    %v3138 = vld [vmem:[%s15 + $0x98] sm:$0xff]
    %v3139 = vld [vmem:[%s15 + $0xa0] sm:$0xff]
    %v3140 = vld [vmem:[%s15 + $0xa8] sm:$0xff]
    %v3141 = vld [vmem:[%s15 + $0xb0] sm:$0xff]
    %v3142 = vld [vmem:[%s15 + $0xb8] sm:$0xff]
    %v3143 = vld [vmem:[%s15 + $0xc0] sm:$0xff]
    %v3144 = vld [vmem:[%s15 + $0xc8] sm:$0xff]
    %v3145 = vld [vmem:[%s15 + $0xd0] sm:$0xff]
    %v3146 = vld [vmem:[%s15 + $0xd8] sm:$0xff]
    %v3147 = vld [vmem:[%s15 + $0xe0] sm:$0xff]
    %v3148 = vld [vmem:[%s15 + $0xe8] sm:$0xff]
    %v3149 = vld [vmem:[%s15 + $0xf0] sm:$0xff]
    %v3150 = vld [vmem:[%s15 + $0xf8] sm:$0xff]
    %v3151 = vld [vmem:[%s15 + $0x100] sm:$0xff]
    %v3152 = vld [vmem:[%s15 + $0x108] sm:$0xff]
    %v3153 = vld [vmem:[%s15 + $0x110] sm:$0xff]
    %v3154 = vld [vmem:[%s15 + $0x118] sm:$0xff]
    %v3155 = vld [vmem:[%s15 + $0x120] sm:$0xff]
    %v3156 = vld [vmem:[%s15 + $0x128] sm:$0xff]
    %v3157 = vld [vmem:[%s15 + $0x130] sm:$0xff]
    %v3158 = vld [vmem:[%s15 + $0x138] sm:$0xff]
    %v3159 = vld [vmem:[%s15 + $0x140] sm:$0xff]
    %v3160 = vld [vmem:[%s15 + $0x148] sm:$0xff]
    %v3161 = vld [vmem:[%s15 + $0x150] sm:$0xff]
    %v3162 = vld [vmem:[%s15 + $0x158] sm:$0xff]
    %v3163 = vld [vmem:[%s15 + $0x160] sm:$0xff]
    %v3164 = vld [vmem:[%s15 + $0x168] sm:$0xff]
    %v3165 = vld [vmem:[%s15 + $0x170] sm:$0xff]
    %v3166 = vld [vmem:[%s15 + $0x178] sm:$0xff]
    %v3167 = vld [vmem:[%s15 + $0x180] sm:$0xff]
    %v3168 = vld [vmem:[%s15 + $0x188] sm:$0xff]
    %v3169 = vld [vmem:[%s15 + $0x190] sm:$0xff]
    %v3170 = vld [vmem:[%s15 + $0x198] sm:$0xff]
    %v3171 = vld [vmem:[%s15 + $0x1a0] sm:$0xff]
    %v3172 = vld [vmem:[%s15 + $0x1a8] sm:$0xff]
    %v3173 = vld [vmem:[%s15 + $0x1b0] sm:$0xff]
    %v3174 = vld [vmem:[%s15 + $0x1b8] sm:$0xff]
    %v3175 = vld [vmem:[%s15 + $0x1c0] sm:$0xff]
    %v3176 = vld [vmem:[%s15 + $0x1c8] sm:$0xff]
    %v3177 = vld [vmem:[%s15 + $0x1d0] sm:$0xff]
    %v3178 = vld [vmem:[%s15 + $0x1d8] sm:$0xff]
    %v3179 = vld [vmem:[%s15 + $0x1e0] sm:$0xff]
    %v3180 = vld [vmem:[%s15 + $0x1e8] sm:$0xff]
    %v3181 = vld [vmem:[%s15 + $0x1f0] sm:$0xff]
    %v3182 = vld [vmem:[%s15 + $0x1f8] sm:$0xff]
    %v3183 = vld [vmem:[%s15 + $0x200] sm:$0xff]
    %v3184 = vld [vmem:[%s15 + $0x208] sm:$0xff]
    %v3185 = vld [vmem:[%s15 + $0x210] sm:$0xff]
    %v3186 = vld [vmem:[%s15 + $0x218] sm:$0xff]
    %v3187 = vld [vmem:[%s15 + $0x220] sm:$0xff]
    %v3188 = vld [vmem:[%s15 + $0x228] sm:$0xff]
    %v3189 = vld [vmem:[%s15 + $0x230] sm:$0xff]
    %v3190 = vld [vmem:[%s15 + $0x238] sm:$0xff]
    %v3191 = vld [vmem:[%s15 + $0x240] sm:$0xff]
    %v3192 = vld [vmem:[%s15 + $0x248] sm:$0xff]
    %v3193 = vld [vmem:[%s15 + $0x250] sm:$0xff]
    %v3194 = vld [vmem:[%s15 + $0x258] sm:$0xff]
    %v3195 = vld [vmem:[%s15 + $0x260] sm:$0xff]
    %v3196 = vld [vmem:[%s15 + $0x268] sm:$0xff]
    %v3197 = vld [vmem:[%s15 + $0x270] sm:$0xff]
    %v3198 = vld [vmem:[%s15 + $0x278] sm:$0xff]
    %v3199 = vld [vmem:[%s15 + $0x280] sm:$0xff]
    %v3200 = vld [vmem:[%s15 + $0x288] sm:$0xff]
    %v3201 = vld [vmem:[%s15 + $0x290] sm:$0xff]
    %v3202 = vld [vmem:[%s15 + $0x298] sm:$0xff]
    %v3203 = vld [vmem:[%s15 + $0x2a0] sm:$0xff]
    %v3204 = vld [vmem:[%s15 + $0x2a8] sm:$0xff]
    %v3205 = vld [vmem:[%s15 + $0x2b0] sm:$0xff]
    %v3206 = vld [vmem:[%s15 + $0x2b8] sm:$0xff]
    %v3207 = vld [vmem:[%s15 + $0x2c0] sm:$0xff]
    %v3208 = vld [vmem:[%s15 + $0x2c8] sm:$0xff]
    %v3209 = vld [vmem:[%s15 + $0x2d0] sm:$0xff]
    %v3210 = vld [vmem:[%s15 + $0x2d8] sm:$0xff]
    %v3211 = vld [vmem:[%s15 + $0x2e0] sm:$0xff]
    %v3212 = vld [vmem:[%s15 + $0x2e8] sm:$0xff]
    %v3213 = vld [vmem:[%s15 + $0x2f0] sm:$0xff]
    %v3214 = vld [vmem:[%s15 + $0x2f8] sm:$0xff]
    %v3215 = vld [vmem:[%s15 + $0x300] sm:$0xff]
    %v3216 = vld [vmem:[%s15 + $0x308] sm:$0xff]
    %v3217 = vld [vmem:[%s15 + $0x310] sm:$0xff]
    %v3218 = vld [vmem:[%s15 + $0x318] sm:$0xff]
    %v3219 = vld [vmem:[%s15 + $0x320] sm:$0xff]
    %v3220 = vld [vmem:[%s15 + $0x328] sm:$0xff]
    %v3221 = vld [vmem:[%s15 + $0x330] sm:$0xff]
    %v3222 = vld [vmem:[%s15 + $0x338] sm:$0xff]
    %v3223 = vld [vmem:[%s15 + $0x340] sm:$0xff]
    %v3224 = vld [vmem:[%s15 + $0x348] sm:$0xff]
    %v3225 = vld [vmem:[%s15 + $0x350] sm:$0xff]
    %v3226 = vld [vmem:[%s15 + $0x358] sm:$0xff]
    %v3227 = vld [vmem:[%s15 + $0x360] sm:$0xff]
    %v3228 = vld [vmem:[%s15 + $0x368] sm:$0xff]
    %v3229 = vld [vmem:[%s15 + $0x370] sm:$0xff]
    %v3230 = vld [vmem:[%s15 + $0x378] sm:$0xff]
    %v3231 = vld [vmem:[%s15 + $0x380] sm:$0xff]
    %v3232 = vld [vmem:[%s15 + $0x388] sm:$0xff]
    %v3233 = vld [vmem:[%s15 + $0x390] sm:$0xff]
    %v3234 = vld [vmem:[%s15 + $0x398] sm:$0xff]
    %v3235 = vld [vmem:[%s15 + $0x3a0] sm:$0xff]
    %v3236 = vld [vmem:[%s15 + $0x3a8] sm:$0xff]
    %v3237 = vld [vmem:[%s15 + $0x3b0] sm:$0xff]
    %v3238 = vld [vmem:[%s15 + $0x3b8] sm:$0xff]
    %v3239 = vld [vmem:[%s15 + $0x3c0] sm:$0xff]
    %v3240 = vld [vmem:[%s15 + $0x3c8] sm:$0xff]
    %v3241 = vld [vmem:[%s15 + $0x3d0] sm:$0xff]
    %v3242 = vld [vmem:[%s15 + $0x3d8] sm:$0xff]
    %v3243 = vld [vmem:[%s15 + $0x3e0] sm:$0xff]
    %v3244 = vld [vmem:[%s15 + $0x3e8] sm:$0xff]
    %v3245 = vld [vmem:[%s15 + $0x3f0] sm:$0xff]
    %v3246 = vld [vmem:[%s15 + $0x3f8] sm:$0xff]
    %v3247 = vld [vmem:[%s17] sm:$0xf]
    %v3249 = vlaneseq
    %v3250 = vshrl.u32 %v3249, 7
    %v3251 = vsub.s32 0, %v3250
    %v3252 = vrot.slane %v3247, %v3251
    %v3253 = vlaneseq
    %v3254 = vshrl.u32 %v3253, 7
    %v3255 = vsub.s32 1, %v3254
    %v3256 = vrot.slane %v3247, %v3255
    %v3257 = vlaneseq
    %v3258 = vshrl.u32 %v3257, 7
    %v3259 = vsub.s32 2, %v3258
    %v3260 = vrot.slane %v3247, %v3259
    %v3261 = vlaneseq
    %v3262 = vshrl.u32 %v3261, 7
    %v3263 = vsub.s32 3, %v3262
    %v3264 = vrot.slane %v3247, %v3263
    %v3397 = vunpack.c.l.b16 %v3119
    %v3398 = vunpack.c.h.b16 %v3119
    %v3399 = vunpack.c.l.b16 %v3120
    %v3400 = vunpack.c.h.b16 %v3120
    %v3401 = vunpack.c.l.b16 %v3121
    %v3402 = vunpack.c.h.b16 %v3121
    %v3403 = vunpack.c.l.b16 %v3122
    %v3404 = vunpack.c.h.b16 %v3122
    %v3405 = vunpack.c.l.b16 %v3123
    %v3406 = vunpack.c.h.b16 %v3123
    %v3407 = vunpack.c.l.b16 %v3124
    %v3408 = vunpack.c.h.b16 %v3124
    %v3409 = vunpack.c.l.b16 %v3125
    %v3410 = vunpack.c.h.b16 %v3125
    %v3411 = vunpack.c.l.b16 %v3126
    %v3412 = vunpack.c.h.b16 %v3126
    %v3413 = vunpack.c.l.b16 %v3127
    %v3414 = vunpack.c.h.b16 %v3127
    %v3415 = vunpack.c.l.b16 %v3128
    %v3416 = vunpack.c.h.b16 %v3128
    %v3417 = vunpack.c.l.b16 %v3129
    %v3418 = vunpack.c.h.b16 %v3129
    %v3419 = vunpack.c.l.b16 %v3130
    %v3420 = vunpack.c.h.b16 %v3130
    %v3421 = vunpack.c.l.b16 %v3131
    %v3422 = vunpack.c.h.b16 %v3131
    %v3423 = vunpack.c.l.b16 %v3132
    %v3424 = vunpack.c.h.b16 %v3132
    %v3425 = vunpack.c.l.b16 %v3133
    %v3426 = vunpack.c.h.b16 %v3133
    %v3427 = vunpack.c.l.b16 %v3134
    %v3428 = vunpack.c.h.b16 %v3134
    %v3429 = vunpack.c.l.b16 %v3135
    %v3430 = vunpack.c.h.b16 %v3135
    %v3431 = vunpack.c.l.b16 %v3136
    %v3432 = vunpack.c.h.b16 %v3136
    %v3433 = vunpack.c.l.b16 %v3137
    %v3434 = vunpack.c.h.b16 %v3137
    %v3435 = vunpack.c.l.b16 %v3138
    %v3436 = vunpack.c.h.b16 %v3138
    %v3437 = vunpack.c.l.b16 %v3139
    %v3438 = vunpack.c.h.b16 %v3139
    %v3439 = vunpack.c.l.b16 %v3140
    %v3440 = vunpack.c.h.b16 %v3140
    %v3441 = vunpack.c.l.b16 %v3141
    %v3442 = vunpack.c.h.b16 %v3141
    %v3443 = vunpack.c.l.b16 %v3142
    %v3444 = vunpack.c.h.b16 %v3142
    %v3445 = vunpack.c.l.b16 %v3143
    %v3446 = vunpack.c.h.b16 %v3143
    %v3447 = vunpack.c.l.b16 %v3144
    %v3448 = vunpack.c.h.b16 %v3144
    %v3449 = vunpack.c.l.b16 %v3145
    %v3450 = vunpack.c.h.b16 %v3145
    %v3451 = vunpack.c.l.b16 %v3146
    %v3452 = vunpack.c.h.b16 %v3146
    %v3453 = vunpack.c.l.b16 %v3147
    %v3454 = vunpack.c.h.b16 %v3147
    %v3455 = vunpack.c.l.b16 %v3148
    %v3456 = vunpack.c.h.b16 %v3148
    %v3457 = vunpack.c.l.b16 %v3149
    %v3458 = vunpack.c.h.b16 %v3149
    %v3459 = vunpack.c.l.b16 %v3150
    %v3460 = vunpack.c.h.b16 %v3150
    %v3461 = vunpack.c.l.b16 %v3151
    %v3462 = vunpack.c.h.b16 %v3151
    %v3463 = vunpack.c.l.b16 %v3152
    %v3464 = vunpack.c.h.b16 %v3152
    %v3465 = vunpack.c.l.b16 %v3153
    %v3466 = vunpack.c.h.b16 %v3153
    %v3467 = vunpack.c.l.b16 %v3154
    %v3468 = vunpack.c.h.b16 %v3154
    %v3469 = vunpack.c.l.b16 %v3155
    %v3470 = vunpack.c.h.b16 %v3155
    %v3471 = vunpack.c.l.b16 %v3156
    %v3472 = vunpack.c.h.b16 %v3156
    %v3473 = vunpack.c.l.b16 %v3157
    %v3474 = vunpack.c.h.b16 %v3157
    %v3475 = vunpack.c.l.b16 %v3158
    %v3476 = vunpack.c.h.b16 %v3158
    %v3477 = vunpack.c.l.b16 %v3159
    %v3478 = vunpack.c.h.b16 %v3159
    %v3479 = vunpack.c.l.b16 %v3160
    %v3480 = vunpack.c.h.b16 %v3160
    %v3481 = vunpack.c.l.b16 %v3161
    %v3482 = vunpack.c.h.b16 %v3161
    %v3483 = vunpack.c.l.b16 %v3162
    %v3484 = vunpack.c.h.b16 %v3162
    %v3485 = vunpack.c.l.b16 %v3163
    %v3486 = vunpack.c.h.b16 %v3163
    %v3487 = vunpack.c.l.b16 %v3164
    %v3488 = vunpack.c.h.b16 %v3164
    %v3489 = vunpack.c.l.b16 %v3165
    %v3490 = vunpack.c.h.b16 %v3165
    %v3491 = vunpack.c.l.b16 %v3166
    %v3492 = vunpack.c.h.b16 %v3166
    %v3493 = vunpack.c.l.b16 %v3167
    %v3494 = vunpack.c.h.b16 %v3167
    %v3495 = vunpack.c.l.b16 %v3168
    %v3496 = vunpack.c.h.b16 %v3168
    %v3497 = vunpack.c.l.b16 %v3169
    %v3498 = vunpack.c.h.b16 %v3169
    %v3499 = vunpack.c.l.b16 %v3170
    %v3500 = vunpack.c.h.b16 %v3170
    %v3501 = vunpack.c.l.b16 %v3171
    %v3502 = vunpack.c.h.b16 %v3171
    %v3503 = vunpack.c.l.b16 %v3172
    %v3504 = vunpack.c.h.b16 %v3172
    %v3505 = vunpack.c.l.b16 %v3173
    %v3506 = vunpack.c.h.b16 %v3173
    %v3507 = vunpack.c.l.b16 %v3174
    %v3508 = vunpack.c.h.b16 %v3174
    %v3509 = vunpack.c.l.b16 %v3175
    %v3510 = vunpack.c.h.b16 %v3175
    %v3511 = vunpack.c.l.b16 %v3176
    %v3512 = vunpack.c.h.b16 %v3176
    %v3513 = vunpack.c.l.b16 %v3177
    %v3514 = vunpack.c.h.b16 %v3177
    %v3515 = vunpack.c.l.b16 %v3178
    %v3516 = vunpack.c.h.b16 %v3178
    %v3517 = vunpack.c.l.b16 %v3179
    %v3518 = vunpack.c.h.b16 %v3179
    %v3519 = vunpack.c.l.b16 %v3180
    %v3520 = vunpack.c.h.b16 %v3180
    %v3521 = vunpack.c.l.b16 %v3181
    %v3522 = vunpack.c.h.b16 %v3181
    %v3523 = vunpack.c.l.b16 %v3182
    %v3524 = vunpack.c.h.b16 %v3182
    %v3525 = vunpack.c.l.b16 %v3183
    %v3526 = vunpack.c.h.b16 %v3183
    %v3527 = vunpack.c.l.b16 %v3184
    %v3528 = vunpack.c.h.b16 %v3184
    %v3529 = vunpack.c.l.b16 %v3185
    %v3530 = vunpack.c.h.b16 %v3185
    %v3531 = vunpack.c.l.b16 %v3186
    %v3532 = vunpack.c.h.b16 %v3186
    %v3533 = vunpack.c.l.b16 %v3187
    %v3534 = vunpack.c.h.b16 %v3187
    %v3535 = vunpack.c.l.b16 %v3188
    %v3536 = vunpack.c.h.b16 %v3188
    %v3537 = vunpack.c.l.b16 %v3189
    %v3538 = vunpack.c.h.b16 %v3189
    %v3539 = vunpack.c.l.b16 %v3190
    %v3540 = vunpack.c.h.b16 %v3190
    %v3541 = vunpack.c.l.b16 %v3191
    %v3542 = vunpack.c.h.b16 %v3191
    %v3543 = vunpack.c.l.b16 %v3192
    %v3544 = vunpack.c.h.b16 %v3192
    %v3545 = vunpack.c.l.b16 %v3193
    %v3546 = vunpack.c.h.b16 %v3193
    %v3547 = vunpack.c.l.b16 %v3194
    %v3548 = vunpack.c.h.b16 %v3194
    %v3549 = vunpack.c.l.b16 %v3195
    %v3550 = vunpack.c.h.b16 %v3195
    %v3551 = vunpack.c.l.b16 %v3196
    %v3552 = vunpack.c.h.b16 %v3196
    %v3553 = vunpack.c.l.b16 %v3197
    %v3554 = vunpack.c.h.b16 %v3197
    %v3555 = vunpack.c.l.b16 %v3198
    %v3556 = vunpack.c.h.b16 %v3198
    %v3557 = vunpack.c.l.b16 %v3199
    %v3558 = vunpack.c.h.b16 %v3199
    %v3559 = vunpack.c.l.b16 %v3200
    %v3560 = vunpack.c.h.b16 %v3200
    %v3561 = vunpack.c.l.b16 %v3201
    %v3562 = vunpack.c.h.b16 %v3201
    %v3563 = vunpack.c.l.b16 %v3202
    %v3564 = vunpack.c.h.b16 %v3202
    %v3565 = vunpack.c.l.b16 %v3203
    %v3566 = vunpack.c.h.b16 %v3203
    %v3567 = vunpack.c.l.b16 %v3204
    %v3568 = vunpack.c.h.b16 %v3204
    %v3569 = vunpack.c.l.b16 %v3205
    %v3570 = vunpack.c.h.b16 %v3205
    %v3571 = vunpack.c.l.b16 %v3206
    %v3572 = vunpack.c.h.b16 %v3206
    %v3573 = vunpack.c.l.b16 %v3207
    %v3574 = vunpack.c.h.b16 %v3207
    %v3575 = vunpack.c.l.b16 %v3208
    %v3576 = vunpack.c.h.b16 %v3208
    %v3577 = vunpack.c.l.b16 %v3209
    %v3578 = vunpack.c.h.b16 %v3209
    %v3579 = vunpack.c.l.b16 %v3210
    %v3580 = vunpack.c.h.b16 %v3210
    %v3581 = vunpack.c.l.b16 %v3211
    %v3582 = vunpack.c.h.b16 %v3211
    %v3583 = vunpack.c.l.b16 %v3212
    %v3584 = vunpack.c.h.b16 %v3212
    %v3585 = vunpack.c.l.b16 %v3213
    %v3586 = vunpack.c.h.b16 %v3213
    %v3587 = vunpack.c.l.b16 %v3214
    %v3588 = vunpack.c.h.b16 %v3214
    %v3589 = vunpack.c.l.b16 %v3215
    %v3590 = vunpack.c.h.b16 %v3215
    %v3591 = vunpack.c.l.b16 %v3216
    %v3592 = vunpack.c.h.b16 %v3216
    %v3593 = vunpack.c.l.b16 %v3217
    %v3594 = vunpack.c.h.b16 %v3217
    %v3595 = vunpack.c.l.b16 %v3218
    %v3596 = vunpack.c.h.b16 %v3218
    %v3597 = vunpack.c.l.b16 %v3219
    %v3598 = vunpack.c.h.b16 %v3219
    %v3599 = vunpack.c.l.b16 %v3220
    %v3600 = vunpack.c.h.b16 %v3220
    %v3601 = vunpack.c.l.b16 %v3221
    %v3602 = vunpack.c.h.b16 %v3221
    %v3603 = vunpack.c.l.b16 %v3222
    %v3604 = vunpack.c.h.b16 %v3222
    %v3605 = vunpack.c.l.b16 %v3223
    %v3606 = vunpack.c.h.b16 %v3223
    %v3607 = vunpack.c.l.b16 %v3224
    %v3608 = vunpack.c.h.b16 %v3224
    %v3609 = vunpack.c.l.b16 %v3225
    %v3610 = vunpack.c.h.b16 %v3225
    %v3611 = vunpack.c.l.b16 %v3226
    %v3612 = vunpack.c.h.b16 %v3226
    %v3613 = vunpack.c.l.b16 %v3227
    %v3614 = vunpack.c.h.b16 %v3227
    %v3615 = vunpack.c.l.b16 %v3228
    %v3616 = vunpack.c.h.b16 %v3228
    %v3617 = vunpack.c.l.b16 %v3229
    %v3618 = vunpack.c.h.b16 %v3229
    %v3619 = vunpack.c.l.b16 %v3230
    %v3620 = vunpack.c.h.b16 %v3230
    %v3621 = vunpack.c.l.b16 %v3231
    %v3622 = vunpack.c.h.b16 %v3231
    %v3623 = vunpack.c.l.b16 %v3232
    %v3624 = vunpack.c.h.b16 %v3232
    %v3625 = vunpack.c.l.b16 %v3233
    %v3626 = vunpack.c.h.b16 %v3233
    %v3627 = vunpack.c.l.b16 %v3234
    %v3628 = vunpack.c.h.b16 %v3234
    %v3629 = vunpack.c.l.b16 %v3235
    %v3630 = vunpack.c.h.b16 %v3235
    %v3631 = vunpack.c.l.b16 %v3236
    %v3632 = vunpack.c.h.b16 %v3236
    %v3633 = vunpack.c.l.b16 %v3237
    %v3634 = vunpack.c.h.b16 %v3237
    %v3635 = vunpack.c.l.b16 %v3238
    %v3636 = vunpack.c.h.b16 %v3238
    %v3637 = vunpack.c.l.b16 %v3239
    %v3638 = vunpack.c.h.b16 %v3239
    %v3639 = vunpack.c.l.b16 %v3240
    %v3640 = vunpack.c.h.b16 %v3240
    %v3641 = vunpack.c.l.b16 %v3241
    %v3642 = vunpack.c.h.b16 %v3241
    %v3643 = vunpack.c.l.b16 %v3242
    %v3644 = vunpack.c.h.b16 %v3242
    %v3645 = vunpack.c.l.b16 %v3243
    %v3646 = vunpack.c.h.b16 %v3243
    %v3647 = vunpack.c.l.b16 %v3244
    %v3648 = vunpack.c.h.b16 %v3244
    %v3649 = vunpack.c.l.b16 %v3245
    %v3650 = vunpack.c.h.b16 %v3245
    %v3651 = vunpack.c.l.b16 %v3246
    %v3652 = vunpack.c.h.b16 %v3246
    %v3653 = vpack.c.b16 %v3401, %v3397
    %v3654 = vpack.c.b16 %v3402, %v3398
    %v3655 = vpack.c.b16 %v3403, %v3399
    %v3656 = vpack.c.b16 %v3404, %v3400
    %v3657 = vpack.c.b16 %v3409, %v3405
    %v3658 = vpack.c.b16 %v3410, %v3406
    %v3659 = vpack.c.b16 %v3411, %v3407
    %v3660 = vpack.c.b16 %v3412, %v3408
    %v3661 = vpack.c.b16 %v3417, %v3413
    %v3662 = vpack.c.b16 %v3418, %v3414
    %v3663 = vpack.c.b16 %v3419, %v3415
    %v3664 = vpack.c.b16 %v3420, %v3416
    %v3665 = vpack.c.b16 %v3425, %v3421
    %v3666 = vpack.c.b16 %v3426, %v3422
    %v3667 = vpack.c.b16 %v3427, %v3423
    %v3668 = vpack.c.b16 %v3428, %v3424
    %v3669 = vpack.c.b16 %v3433, %v3429
    %v3670 = vpack.c.b16 %v3434, %v3430
    %v3671 = vpack.c.b16 %v3435, %v3431
    %v3672 = vpack.c.b16 %v3436, %v3432
    %v3673 = vpack.c.b16 %v3441, %v3437
    %v3674 = vpack.c.b16 %v3442, %v3438
    %v3675 = vpack.c.b16 %v3443, %v3439
    %v3676 = vpack.c.b16 %v3444, %v3440
    %v3677 = vpack.c.b16 %v3449, %v3445
    %v3678 = vpack.c.b16 %v3450, %v3446
    %v3679 = vpack.c.b16 %v3451, %v3447
    %v3680 = vpack.c.b16 %v3452, %v3448
    %v3681 = vpack.c.b16 %v3457, %v3453
    %v3682 = vpack.c.b16 %v3458, %v3454
    %v3683 = vpack.c.b16 %v3459, %v3455
    %v3684 = vpack.c.b16 %v3460, %v3456
    %v3685 = vpack.c.b16 %v3465, %v3461
    %v3686 = vpack.c.b16 %v3466, %v3462
    %v3687 = vpack.c.b16 %v3467, %v3463
    %v3688 = vpack.c.b16 %v3468, %v3464
    %v3689 = vpack.c.b16 %v3473, %v3469
    %v3690 = vpack.c.b16 %v3474, %v3470
    %v3691 = vpack.c.b16 %v3475, %v3471
    %v3692 = vpack.c.b16 %v3476, %v3472
    %v3693 = vpack.c.b16 %v3481, %v3477
    %v3694 = vpack.c.b16 %v3482, %v3478
    %v3695 = vpack.c.b16 %v3483, %v3479
    %v3696 = vpack.c.b16 %v3484, %v3480
    %v3697 = vpack.c.b16 %v3489, %v3485
    %v3698 = vpack.c.b16 %v3490, %v3486
    %v3699 = vpack.c.b16 %v3491, %v3487
    %v3700 = vpack.c.b16 %v3492, %v3488
    %v3701 = vpack.c.b16 %v3497, %v3493
    %v3702 = vpack.c.b16 %v3498, %v3494
    %v3703 = vpack.c.b16 %v3499, %v3495
    %v3704 = vpack.c.b16 %v3500, %v3496
    %v3705 = vpack.c.b16 %v3505, %v3501
    %v3706 = vpack.c.b16 %v3506, %v3502
    %v3707 = vpack.c.b16 %v3507, %v3503
    %v3708 = vpack.c.b16 %v3508, %v3504
    %v3709 = vpack.c.b16 %v3513, %v3509
    %v3710 = vpack.c.b16 %v3514, %v3510
    %v3711 = vpack.c.b16 %v3515, %v3511
    %v3712 = vpack.c.b16 %v3516, %v3512
    %v3713 = vpack.c.b16 %v3521, %v3517
    %v3714 = vpack.c.b16 %v3522, %v3518
    %v3715 = vpack.c.b16 %v3523, %v3519
    %v3716 = vpack.c.b16 %v3524, %v3520
    %v3717 = vpack.c.b16 %v3529, %v3525
    %v3718 = vpack.c.b16 %v3530, %v3526
    %v3719 = vpack.c.b16 %v3531, %v3527
    %v3720 = vpack.c.b16 %v3532, %v3528
    %v3721 = vpack.c.b16 %v3537, %v3533
    %v3722 = vpack.c.b16 %v3538, %v3534
    %v3723 = vpack.c.b16 %v3539, %v3535
    %v3724 = vpack.c.b16 %v3540, %v3536
    %v3725 = vpack.c.b16 %v3545, %v3541
    %v3726 = vpack.c.b16 %v3546, %v3542
    %v3727 = vpack.c.b16 %v3547, %v3543
    %v3728 = vpack.c.b16 %v3548, %v3544
    %v3729 = vpack.c.b16 %v3553, %v3549
    %v3730 = vpack.c.b16 %v3554, %v3550
    %v3731 = vpack.c.b16 %v3555, %v3551
    %v3732 = vpack.c.b16 %v3556, %v3552
    %v3733 = vpack.c.b16 %v3561, %v3557
    %v3734 = vpack.c.b16 %v3562, %v3558
    %v3735 = vpack.c.b16 %v3563, %v3559
    %v3736 = vpack.c.b16 %v3564, %v3560
    %v3737 = vpack.c.b16 %v3569, %v3565
    %v3738 = vpack.c.b16 %v3570, %v3566
    %v3739 = vpack.c.b16 %v3571, %v3567
    %v3740 = vpack.c.b16 %v3572, %v3568
    %v3741 = vpack.c.b16 %v3577, %v3573
    %v3742 = vpack.c.b16 %v3578, %v3574
    %v3743 = vpack.c.b16 %v3579, %v3575
    %v3744 = vpack.c.b16 %v3580, %v3576
    %v3745 = vpack.c.b16 %v3585, %v3581
    %v3746 = vpack.c.b16 %v3586, %v3582
    %v3747 = vpack.c.b16 %v3587, %v3583
    %v3748 = vpack.c.b16 %v3588, %v3584
    %v3749 = vpack.c.b16 %v3593, %v3589
    %v3750 = vpack.c.b16 %v3594, %v3590
    %v3751 = vpack.c.b16 %v3595, %v3591
    %v3752 = vpack.c.b16 %v3596, %v3592
    %v3753 = vpack.c.b16 %v3601, %v3597
    %v3754 = vpack.c.b16 %v3602, %v3598
    %v3755 = vpack.c.b16 %v3603, %v3599
    %v3756 = vpack.c.b16 %v3604, %v3600
    %v3757 = vpack.c.b16 %v3609, %v3605
    %v3758 = vpack.c.b16 %v3610, %v3606
    %v3759 = vpack.c.b16 %v3611, %v3607
    %v3760 = vpack.c.b16 %v3612, %v3608
    %v3761 = vpack.c.b16 %v3617, %v3613
    %v3762 = vpack.c.b16 %v3618, %v3614
    %v3763 = vpack.c.b16 %v3619, %v3615
    %v3764 = vpack.c.b16 %v3620, %v3616
    %v3765 = vpack.c.b16 %v3625, %v3621
    %v3766 = vpack.c.b16 %v3626, %v3622
    %v3767 = vpack.c.b16 %v3627, %v3623
    %v3768 = vpack.c.b16 %v3628, %v3624
    %v3769 = vpack.c.b16 %v3633, %v3629
    %v3770 = vpack.c.b16 %v3634, %v3630
    %v3771 = vpack.c.b16 %v3635, %v3631
    %v3772 = vpack.c.b16 %v3636, %v3632
    %v3773 = vpack.c.b16 %v3641, %v3637
    %v3774 = vpack.c.b16 %v3642, %v3638
    %v3775 = vpack.c.b16 %v3643, %v3639
    %v3776 = vpack.c.b16 %v3644, %v3640
    %v3777 = vpack.c.b16 %v3649, %v3645
    %v3778 = vpack.c.b16 %v3650, %v3646
    %v3779 = vpack.c.b16 %v3651, %v3647
    %v3780 = vpack.c.b16 %v3652, %v3648
    %3909 = vmatprep.subr.bf16.mxu0 %v3654
    %3910 = vmatpush1.bf16.msra.mxu0 %v3653
    %3911 = vmatprep.subr.bf16.mxu0 %v3658
    %3912 = vmatpush1.bf16.msra.mxu0 %v3657
    %3913 = vmatprep.subr.bf16.mxu0 %v3662
    %3914 = vmatpush1.bf16.msra.mxu0 %v3661
    %3915 = vmatprep.subr.bf16.mxu0 %v3666
    %3916 = vmatpush1.bf16.msra.mxu0 %v3665
    %3917 = vmatprep.subr.bf16.mxu0 %v3670
    %3918 = vmatpush1.bf16.msra.mxu0 %v3669
    %3919 = vmatprep.subr.bf16.mxu0 %v3674
    %3920 = vmatpush1.bf16.msra.mxu0 %v3673
    %3921 = vmatprep.subr.bf16.mxu0 %v3678
    %3922 = vmatpush1.bf16.msra.mxu0 %v3677
    %3923 = vmatprep.subr.bf16.mxu0 %v3682
    %3924 = vmatpush1.bf16.msra.mxu0 %v3681
    %3925 = vmatprep.subr.bf16.mxu0 %v3686
    %3926 = vmatpush1.bf16.msra.mxu0 %v3685
    %3927 = vmatprep.subr.bf16.mxu0 %v3690
    %3928 = vmatpush1.bf16.msra.mxu0 %v3689
    %3929 = vmatprep.subr.bf16.mxu0 %v3694
    %3930 = vmatpush1.bf16.msra.mxu0 %v3693
    %3931 = vmatprep.subr.bf16.mxu0 %v3698
    %3932 = vmatpush1.bf16.msra.mxu0 %v3697
    %3933 = vmatprep.subr.bf16.mxu0 %v3702
    %3934 = vmatpush1.bf16.msra.mxu0 %v3701
    %3935 = vmatprep.subr.bf16.mxu0 %v3706
    %3936 = vmatpush1.bf16.msra.mxu0 %v3705
    %3937 = vmatprep.subr.bf16.mxu0 %v3710
    %3938 = vmatpush1.bf16.msra.mxu0 %v3709
    %3939 = vmatprep.subr.bf16.mxu0 %v3714
    %3940 = vmatpush1.bf16.msra.mxu0 %v3713
    %3941 = vmatprep.mubr.bf16.mxu0 %v3116
    %3942 = vmatmul.mubr.bf16.gmra.mrb[0].mxu0 %v3115
    %v3943 = vpop.f32.mrb[0].mxu0
    %v3944 = vadd.f32 %v3252, %v3943
    %v3945 = vpop.f32.mrb[0].mxu0
    %v3946 = vadd.f32 %v3256, %v3945
    %v3947 = vpop.f32.mrb[0].mxu0
    %v3948 = vpop.f32.mrb[0].mxu0
    %3949 = vdwg.mxu0
    %3950 = vmatprep.subr.bf16.mxu0 %v3718
    %3951 = vmatpush1.bf16.msra.mxu0 %v3717
    %3952 = vmatprep.subr.bf16.mxu0 %v3722
    %3953 = vmatpush1.bf16.msra.mxu0 %v3721
    %3954 = vmatprep.subr.bf16.mxu0 %v3726
    %3955 = vmatpush1.bf16.msra.mxu0 %v3725
    %3956 = vmatprep.subr.bf16.mxu0 %v3730
    %3957 = vmatpush1.bf16.msra.mxu0 %v3729
    %3958 = vmatprep.subr.bf16.mxu0 %v3734
    %3959 = vmatpush1.bf16.msra.mxu0 %v3733
    %3960 = vmatprep.subr.bf16.mxu0 %v3738
    %3961 = vmatpush1.bf16.msra.mxu0 %v3737
    %3962 = vmatprep.subr.bf16.mxu0 %v3742
    %3963 = vmatpush1.bf16.msra.mxu0 %v3741
    %3964 = vmatprep.subr.bf16.mxu0 %v3746
    %3965 = vmatpush1.bf16.msra.mxu0 %v3745
    %3966 = vmatprep.subr.bf16.mxu0 %v3750
    %3967 = vmatpush1.bf16.msra.mxu0 %v3749
    %3968 = vmatprep.subr.bf16.mxu0 %v3754
    %3969 = vmatpush1.bf16.msra.mxu0 %v3753
    %3970 = vmatprep.subr.bf16.mxu0 %v3758
    %3971 = vmatpush1.bf16.msra.mxu0 %v3757
    %3972 = vmatprep.subr.bf16.mxu0 %v3762
    %3973 = vmatpush1.bf16.msra.mxu0 %v3761
    %3974 = vmatprep.subr.bf16.mxu0 %v3766
    %3975 = vmatpush1.bf16.msra.mxu0 %v3765
    %3976 = vmatprep.subr.bf16.mxu0 %v3770
    %3977 = vmatpush1.bf16.msra.mxu0 %v3769
    %3978 = vmatprep.subr.bf16.mxu0 %v3774
    %3979 = vmatpush1.bf16.msra.mxu0 %v3773
    %3980 = vmatprep.subr.bf16.mxu0 %v3778
    %3981 = vmatpush1.bf16.msra.mxu0 %v3777
    %3982 = vmatprep.mubr.bf16.mxu0 %v3118
    %3983 = vmatmul.mubr.bf16.gmra.mrb[0].mxu0 %v3117
    %v3984 = vpop.f32.mrb[0].mxu0
    %v3985 = vadd.f32 %v3944, %v3984
    %v3986 = vpop.f32.mrb[0].mxu0
    %v3987 = vadd.f32 %v3946, %v3986
    %v3988 = vpop.f32.mrb[0].mxu0
    %v3989 = vpop.f32.mrb[0].mxu0
    %3990 = vdwg.mxu0
    %3991 = vmatprep.subr.bf16.mxu0 %v3656
    %3992 = vmatpush1.bf16.msra.mxu0 %v3655
    %3993 = vmatprep.subr.bf16.mxu0 %v3660
    %3994 = vmatpush1.bf16.msra.mxu0 %v3659
    %3995 = vmatprep.subr.bf16.mxu0 %v3664
    %3996 = vmatpush1.bf16.msra.mxu0 %v3663
    %3997 = vmatprep.subr.bf16.mxu0 %v3668
    %3998 = vmatpush1.bf16.msra.mxu0 %v3667
    %3999 = vmatprep.subr.bf16.mxu0 %v3672
    %4000 = vmatpush1.bf16.msra.mxu0 %v3671
    %4001 = vmatprep.subr.bf16.mxu0 %v3676
    %4002 = vmatpush1.bf16.msra.mxu0 %v3675
    %4003 = vmatprep.subr.bf16.mxu0 %v3680
    %4004 = vmatpush1.bf16.msra.mxu0 %v3679
    %4005 = vmatprep.subr.bf16.mxu0 %v3684
    %4006 = vmatpush1.bf16.msra.mxu0 %v3683
    %4007 = vmatprep.subr.bf16.mxu0 %v3688
    %4008 = vmatpush1.bf16.msra.mxu0 %v3687
    %4009 = vmatprep.subr.bf16.mxu0 %v3692
    %4010 = vmatpush1.bf16.msra.mxu0 %v3691
    %4011 = vmatprep.subr.bf16.mxu0 %v3696
    %4012 = vmatpush1.bf16.msra.mxu0 %v3695
    %4013 = vmatprep.subr.bf16.mxu0 %v3700
    %4014 = vmatpush1.bf16.msra.mxu0 %v3699
    %4015 = vmatprep.subr.bf16.mxu0 %v3704
    %4016 = vmatpush1.bf16.msra.mxu0 %v3703
    %4017 = vmatprep.subr.bf16.mxu0 %v3708
    %4018 = vmatpush1.bf16.msra.mxu0 %v3707
    %4019 = vmatprep.subr.bf16.mxu0 %v3712
    %4020 = vmatpush1.bf16.msra.mxu0 %v3711
    %4021 = vmatprep.subr.bf16.mxu0 %v3716
    %4022 = vmatpush1.bf16.msra.mxu0 %v3715
    %4023 = vmatprep.mubr.bf16.mxu0 %v3116
    %4024 = vmatmul.mubr.bf16.gmra.mrb[0].mxu0 %v3115
    %v4025 = vpop.f32.mrb[0].mxu0
    %v4026 = vadd.f32 %v3260, %v4025
    %v4027 = vpop.f32.mrb[0].mxu0
    %v4028 = vadd.f32 %v3264, %v4027
    %v4029 = vpop.f32.mrb[0].mxu0
    %v4030 = vpop.f32.mrb[0].mxu0
    %4031 = vdwg.mxu0
    %4032 = vmatprep.subr.bf16.mxu0 %v3720
    %4033 = vmatpush1.bf16.msra.mxu0 %v3719
    %4034 = vmatprep.subr.bf16.mxu0 %v3724
    %4035 = vmatpush1.bf16.msra.mxu0 %v3723
    %4036 = vmatprep.subr.bf16.mxu0 %v3728
    %4037 = vmatpush1.bf16.msra.mxu0 %v3727
    %4038 = vmatprep.subr.bf16.mxu0 %v3732
    %4039 = vmatpush1.bf16.msra.mxu0 %v3731
    %4040 = vmatprep.subr.bf16.mxu0 %v3736
    %4041 = vmatpush1.bf16.msra.mxu0 %v3735
    %4042 = vmatprep.subr.bf16.mxu0 %v3740
    %4043 = vmatpush1.bf16.msra.mxu0 %v3739
    %4044 = vmatprep.subr.bf16.mxu0 %v3744
    %4045 = vmatpush1.bf16.msra.mxu0 %v3743
    %4046 = vmatprep.subr.bf16.mxu0 %v3748
    %4047 = vmatpush1.bf16.msra.mxu0 %v3747
    %4048 = vmatprep.subr.bf16.mxu0 %v3752
    %4049 = vmatpush1.bf16.msra.mxu0 %v3751
    %4050 = vmatprep.subr.bf16.mxu0 %v3756
    %4051 = vmatpush1.bf16.msra.mxu0 %v3755
    %4052 = vmatprep.subr.bf16.mxu0 %v3760
    %4053 = vmatpush1.bf16.msra.mxu0 %v3759
    %4054 = vmatprep.subr.bf16.mxu0 %v3764
    %4055 = vmatpush1.bf16.msra.mxu0 %v3763
    %4056 = vmatprep.subr.bf16.mxu0 %v3768
    %4057 = vmatpush1.bf16.msra.mxu0 %v3767
    %4058 = vmatprep.subr.bf16.mxu0 %v3772
    %4059 = vmatpush1.bf16.msra.mxu0 %v3771
    %4060 = vmatprep.subr.bf16.mxu0 %v3776
    %4061 = vmatpush1.bf16.msra.mxu0 %v3775
    %4062 = vmatprep.subr.bf16.mxu0 %v3780
    %4063 = vmatpush1.bf16.msra.mxu0 %v3779
    %4064 = vmatprep.mubr.bf16.mxu0 %v3118
    %4065 = vmatmul.mubr.bf16.gmra.mrb[0].mxu0 %v3117
    %v4066 = vpop.f32.mrb[0].mxu0
    %v4067 = vadd.f32 %v4026, %v4066
    %v4068 = vpop.f32.mrb[0].mxu0
    %v4069 = vadd.f32 %v4028, %v4068
    %v4070 = vpop.f32.mrb[0].mxu0
    %v4071 = vpop.f32.mrb[0].mxu0
    %4072 = vdwg.mxu0
    %v4073 = vunpack.c.l.bf16 %v2153
    %v4074 = vunpack.c.l.bf16 %v2154
    %v4075 = vunpack.c.l.bf16 %v2155
    %v4076 = vunpack.c.l.bf16 %v2156
    %v4077 = vadd.f32 %v3985, %v4073
    %v4078 = vadd.f32 %v3987, %v4074
    %v4079 = vadd.f32 %v4067, %v4075
    %v4080 = vadd.f32 %v4069, %v4076
    %v4081 = vmax.f32 %v4077, 0.0
    %v4082 = vmax.f32 %v4078, 0.0
    %v4083 = vmax.f32 %v4079, 0.0
    %v4084 = vmax.f32 %v4080, 0.0
    %v4085 = vpack.c.bf16 %v4081, %v4081
    %v4086 = vpack.c.bf16 %v4082, %v4082
    %v4087 = vpack.c.bf16 %v4083, %v4083
    %v4088 = vpack.c.bf16 %v4084, %v4084
    %v4089 = vld [vmem:[%s19] sm:$0xff]
    %v4090 = vld [vmem:[%s19 + $0x8] sm:$0xff]
    %v4091 = vld [vmem:[%s19 + $0x10] sm:$0xff]
    %v4092 = vld [vmem:[%s19 + $0x18] sm:$0xff]
    %v4093 = vld [vmem:[%s19 + $0x20] sm:$0xff]
    %v4094 = vld [vmem:[%s19 + $0x28] sm:$0xff]
    %v4095 = vld [vmem:[%s19 + $0x30] sm:$0xff]
    %v4096 = vld [vmem:[%s19 + $0x38] sm:$0xff]
    %v4097 = vld [vmem:[%s19 + $0x40] sm:$0xff]
    %v4098 = vld [vmem:[%s19 + $0x48] sm:$0xff]
    %v4099 = vld [vmem:[%s19 + $0x50] sm:$0xff]
    %v4100 = vld [vmem:[%s19 + $0x58] sm:$0xff]
    %v4101 = vld [vmem:[%s19 + $0x60] sm:$0xff]
    %v4102 = vld [vmem:[%s19 + $0x68] sm:$0xff]
    %v4103 = vld [vmem:[%s19 + $0x70] sm:$0xff]
    %v4104 = vld [vmem:[%s19 + $0x78] sm:$0xff]
    %v4105 = vld [vmem:[%s19 + $0x80] sm:$0xff]
    %v4106 = vld [vmem:[%s19 + $0x88] sm:$0xff]
    %v4107 = vld [vmem:[%s19 + $0x90] sm:$0xff]
    %v4108 = vld [vmem:[%s19 + $0x98] sm:$0xff]
    %v4109 = vld [vmem:[%s19 + $0xa0] sm:$0xff]
    %v4110 = vld [vmem:[%s19 + $0xa8] sm:$0xff]
    %v4111 = vld [vmem:[%s19 + $0xb0] sm:$0xff]
    %v4112 = vld [vmem:[%s19 + $0xb8] sm:$0xff]
    %v4113 = vld [vmem:[%s19 + $0xc0] sm:$0xff]
    %v4114 = vld [vmem:[%s19 + $0xc8] sm:$0xff]
    %v4115 = vld [vmem:[%s19 + $0xd0] sm:$0xff]
    %v4116 = vld [vmem:[%s19 + $0xd8] sm:$0xff]
    %v4117 = vld [vmem:[%s19 + $0xe0] sm:$0xff]
    %v4118 = vld [vmem:[%s19 + $0xe8] sm:$0xff]
    %v4119 = vld [vmem:[%s19 + $0xf0] sm:$0xff]
    %v4120 = vld [vmem:[%s19 + $0xf8] sm:$0xff]
    %v4121 = vld [vmem:[%s19 + $0x100] sm:$0xff]
    %v4122 = vld [vmem:[%s19 + $0x108] sm:$0xff]
    %v4123 = vld [vmem:[%s19 + $0x110] sm:$0xff]
    %v4124 = vld [vmem:[%s19 + $0x118] sm:$0xff]
    %v4125 = vld [vmem:[%s19 + $0x120] sm:$0xff]
    %v4126 = vld [vmem:[%s19 + $0x128] sm:$0xff]
    %v4127 = vld [vmem:[%s19 + $0x130] sm:$0xff]
    %v4128 = vld [vmem:[%s19 + $0x138] sm:$0xff]
    %v4129 = vld [vmem:[%s19 + $0x140] sm:$0xff]
    %v4130 = vld [vmem:[%s19 + $0x148] sm:$0xff]
    %v4131 = vld [vmem:[%s19 + $0x150] sm:$0xff]
    %v4132 = vld [vmem:[%s19 + $0x158] sm:$0xff]
    %v4133 = vld [vmem:[%s19 + $0x160] sm:$0xff]
    %v4134 = vld [vmem:[%s19 + $0x168] sm:$0xff]
    %v4135 = vld [vmem:[%s19 + $0x170] sm:$0xff]
    %v4136 = vld [vmem:[%s19 + $0x178] sm:$0xff]
    %v4137 = vld [vmem:[%s19 + $0x180] sm:$0xff]
    %v4138 = vld [vmem:[%s19 + $0x188] sm:$0xff]
    %v4139 = vld [vmem:[%s19 + $0x190] sm:$0xff]
    %v4140 = vld [vmem:[%s19 + $0x198] sm:$0xff]
    %v4141 = vld [vmem:[%s19 + $0x1a0] sm:$0xff]
    %v4142 = vld [vmem:[%s19 + $0x1a8] sm:$0xff]
    %v4143 = vld [vmem:[%s19 + $0x1b0] sm:$0xff]
    %v4144 = vld [vmem:[%s19 + $0x1b8] sm:$0xff]
    %v4145 = vld [vmem:[%s19 + $0x1c0] sm:$0xff]
    %v4146 = vld [vmem:[%s19 + $0x1c8] sm:$0xff]
    %v4147 = vld [vmem:[%s19 + $0x1d0] sm:$0xff]
    %v4148 = vld [vmem:[%s19 + $0x1d8] sm:$0xff]
    %v4149 = vld [vmem:[%s19 + $0x1e0] sm:$0xff]
    %v4150 = vld [vmem:[%s19 + $0x1e8] sm:$0xff]
    %v4151 = vld [vmem:[%s19 + $0x1f0] sm:$0xff]
    %v4152 = vld [vmem:[%s19 + $0x1f8] sm:$0xff]
    %v4153 = vld [vmem:[%s21] sm:$0x3]
    %v4155 = vlaneseq
    %v4156 = vshrl.u32 %v4155, 7
    %v4157 = vsub.s32 0, %v4156
    %v4158 = vrot.slane %v4153, %v4157
    %v4159 = vlaneseq
    %v4160 = vshrl.u32 %v4159, 7
    %v4161 = vsub.s32 1, %v4160
    %v4162 = vrot.slane %v4153, %v4161
    %v4229 = vunpack.c.l.b16 %v4089
    %v4230 = vunpack.c.h.b16 %v4089
    %v4231 = vunpack.c.l.b16 %v4090
    %v4232 = vunpack.c.h.b16 %v4090
    %v4233 = vunpack.c.l.b16 %v4091
    %v4234 = vunpack.c.h.b16 %v4091
    %v4235 = vunpack.c.l.b16 %v4092
    %v4236 = vunpack.c.h.b16 %v4092
    %v4237 = vunpack.c.l.b16 %v4093
    %v4238 = vunpack.c.h.b16 %v4093
    %v4239 = vunpack.c.l.b16 %v4094
    %v4240 = vunpack.c.h.b16 %v4094
    %v4241 = vunpack.c.l.b16 %v4095
    %v4242 = vunpack.c.h.b16 %v4095
    %v4243 = vunpack.c.l.b16 %v4096
    %v4244 = vunpack.c.h.b16 %v4096
    %v4245 = vunpack.c.l.b16 %v4097
    %v4246 = vunpack.c.h.b16 %v4097
    %v4247 = vunpack.c.l.b16 %v4098
    %v4248 = vunpack.c.h.b16 %v4098
    %v4249 = vunpack.c.l.b16 %v4099
    %v4250 = vunpack.c.h.b16 %v4099
    %v4251 = vunpack.c.l.b16 %v4100
    %v4252 = vunpack.c.h.b16 %v4100
    %v4253 = vunpack.c.l.b16 %v4101
    %v4254 = vunpack.c.h.b16 %v4101
    %v4255 = vunpack.c.l.b16 %v4102
    %v4256 = vunpack.c.h.b16 %v4102
    %v4257 = vunpack.c.l.b16 %v4103
    %v4258 = vunpack.c.h.b16 %v4103
    %v4259 = vunpack.c.l.b16 %v4104
    %v4260 = vunpack.c.h.b16 %v4104
    %v4261 = vunpack.c.l.b16 %v4105
    %v4262 = vunpack.c.h.b16 %v4105
    %v4263 = vunpack.c.l.b16 %v4106
    %v4264 = vunpack.c.h.b16 %v4106
    %v4265 = vunpack.c.l.b16 %v4107
    %v4266 = vunpack.c.h.b16 %v4107
    %v4267 = vunpack.c.l.b16 %v4108
    %v4268 = vunpack.c.h.b16 %v4108
    %v4269 = vunpack.c.l.b16 %v4109
    %v4270 = vunpack.c.h.b16 %v4109
    %v4271 = vunpack.c.l.b16 %v4110
    %v4272 = vunpack.c.h.b16 %v4110
    %v4273 = vunpack.c.l.b16 %v4111
    %v4274 = vunpack.c.h.b16 %v4111
    %v4275 = vunpack.c.l.b16 %v4112
    %v4276 = vunpack.c.h.b16 %v4112
    %v4277 = vunpack.c.l.b16 %v4113
    %v4278 = vunpack.c.h.b16 %v4113
    %v4279 = vunpack.c.l.b16 %v4114
    %v4280 = vunpack.c.h.b16 %v4114
    %v4281 = vunpack.c.l.b16 %v4115
    %v4282 = vunpack.c.h.b16 %v4115
    %v4283 = vunpack.c.l.b16 %v4116
    %v4284 = vunpack.c.h.b16 %v4116
    %v4285 = vunpack.c.l.b16 %v4117
    %v4286 = vunpack.c.h.b16 %v4117
    %v4287 = vunpack.c.l.b16 %v4118
    %v4288 = vunpack.c.h.b16 %v4118
    %v4289 = vunpack.c.l.b16 %v4119
    %v4290 = vunpack.c.h.b16 %v4119
    %v4291 = vunpack.c.l.b16 %v4120
    %v4292 = vunpack.c.h.b16 %v4120
    %v4293 = vunpack.c.l.b16 %v4121
    %v4294 = vunpack.c.h.b16 %v4121
    %v4295 = vunpack.c.l.b16 %v4122
    %v4296 = vunpack.c.h.b16 %v4122
    %v4297 = vunpack.c.l.b16 %v4123
    %v4298 = vunpack.c.h.b16 %v4123
    %v4299 = vunpack.c.l.b16 %v4124
    %v4300 = vunpack.c.h.b16 %v4124
    %v4301 = vunpack.c.l.b16 %v4125
    %v4302 = vunpack.c.h.b16 %v4125
    %v4303 = vunpack.c.l.b16 %v4126
    %v4304 = vunpack.c.h.b16 %v4126
    %v4305 = vunpack.c.l.b16 %v4127
    %v4306 = vunpack.c.h.b16 %v4127
    %v4307 = vunpack.c.l.b16 %v4128
    %v4308 = vunpack.c.h.b16 %v4128
    %v4309 = vunpack.c.l.b16 %v4129
    %v4310 = vunpack.c.h.b16 %v4129
    %v4311 = vunpack.c.l.b16 %v4130
    %v4312 = vunpack.c.h.b16 %v4130
    %v4313 = vunpack.c.l.b16 %v4131
    %v4314 = vunpack.c.h.b16 %v4131
    %v4315 = vunpack.c.l.b16 %v4132
    %v4316 = vunpack.c.h.b16 %v4132
    %v4317 = vunpack.c.l.b16 %v4133
    %v4318 = vunpack.c.h.b16 %v4133
    %v4319 = vunpack.c.l.b16 %v4134
    %v4320 = vunpack.c.h.b16 %v4134
    %v4321 = vunpack.c.l.b16 %v4135
    %v4322 = vunpack.c.h.b16 %v4135
    %v4323 = vunpack.c.l.b16 %v4136
    %v4324 = vunpack.c.h.b16 %v4136
    %v4325 = vunpack.c.l.b16 %v4137
    %v4326 = vunpack.c.h.b16 %v4137
    %v4327 = vunpack.c.l.b16 %v4138
    %v4328 = vunpack.c.h.b16 %v4138
    %v4329 = vunpack.c.l.b16 %v4139
    %v4330 = vunpack.c.h.b16 %v4139
    %v4331 = vunpack.c.l.b16 %v4140
    %v4332 = vunpack.c.h.b16 %v4140
    %v4333 = vunpack.c.l.b16 %v4141
    %v4334 = vunpack.c.h.b16 %v4141
    %v4335 = vunpack.c.l.b16 %v4142
    %v4336 = vunpack.c.h.b16 %v4142
    %v4337 = vunpack.c.l.b16 %v4143
    %v4338 = vunpack.c.h.b16 %v4143
    %v4339 = vunpack.c.l.b16 %v4144
    %v4340 = vunpack.c.h.b16 %v4144
    %v4341 = vunpack.c.l.b16 %v4145
    %v4342 = vunpack.c.h.b16 %v4145
    %v4343 = vunpack.c.l.b16 %v4146
    %v4344 = vunpack.c.h.b16 %v4146
    %v4345 = vunpack.c.l.b16 %v4147
    %v4346 = vunpack.c.h.b16 %v4147
    %v4347 = vunpack.c.l.b16 %v4148
    %v4348 = vunpack.c.h.b16 %v4148
    %v4349 = vunpack.c.l.b16 %v4149
    %v4350 = vunpack.c.h.b16 %v4149
    %v4351 = vunpack.c.l.b16 %v4150
    %v4352 = vunpack.c.h.b16 %v4150
    %v4353 = vunpack.c.l.b16 %v4151
    %v4354 = vunpack.c.h.b16 %v4151
    %v4355 = vunpack.c.l.b16 %v4152
    %v4356 = vunpack.c.h.b16 %v4152
    %v4357 = vpack.c.b16 %v4231, %v4229
    %v4358 = vpack.c.b16 %v4232, %v4230
    %v4359 = vpack.c.b16 %v4235, %v4233
    %v4360 = vpack.c.b16 %v4236, %v4234
    %v4361 = vpack.c.b16 %v4239, %v4237
    %v4362 = vpack.c.b16 %v4240, %v4238
    %v4363 = vpack.c.b16 %v4243, %v4241
    %v4364 = vpack.c.b16 %v4244, %v4242
    %v4365 = vpack.c.b16 %v4247, %v4245
    %v4366 = vpack.c.b16 %v4248, %v4246
    %v4367 = vpack.c.b16 %v4251, %v4249
    %v4368 = vpack.c.b16 %v4252, %v4250
    %v4369 = vpack.c.b16 %v4255, %v4253
    %v4370 = vpack.c.b16 %v4256, %v4254
    %v4371 = vpack.c.b16 %v4259, %v4257
    %v4372 = vpack.c.b16 %v4260, %v4258
    %v4373 = vpack.c.b16 %v4263, %v4261
    %v4374 = vpack.c.b16 %v4264, %v4262
    %v4375 = vpack.c.b16 %v4267, %v4265
    %v4376 = vpack.c.b16 %v4268, %v4266
    %v4377 = vpack.c.b16 %v4271, %v4269
    %v4378 = vpack.c.b16 %v4272, %v4270
    %v4379 = vpack.c.b16 %v4275, %v4273
    %v4380 = vpack.c.b16 %v4276, %v4274
    %v4381 = vpack.c.b16 %v4279, %v4277
    %v4382 = vpack.c.b16 %v4280, %v4278
    %v4383 = vpack.c.b16 %v4283, %v4281
    %v4384 = vpack.c.b16 %v4284, %v4282
    %v4385 = vpack.c.b16 %v4287, %v4285
    %v4386 = vpack.c.b16 %v4288, %v4286
    %v4387 = vpack.c.b16 %v4291, %v4289
    %v4388 = vpack.c.b16 %v4292, %v4290
    %v4389 = vpack.c.b16 %v4295, %v4293
    %v4390 = vpack.c.b16 %v4296, %v4294
    %v4391 = vpack.c.b16 %v4299, %v4297
    %v4392 = vpack.c.b16 %v4300, %v4298
    %v4393 = vpack.c.b16 %v4303, %v4301
    %v4394 = vpack.c.b16 %v4304, %v4302
    %v4395 = vpack.c.b16 %v4307, %v4305
    %v4396 = vpack.c.b16 %v4308, %v4306
    %v4397 = vpack.c.b16 %v4311, %v4309
    %v4398 = vpack.c.b16 %v4312, %v4310
    %v4399 = vpack.c.b16 %v4315, %v4313
    %v4400 = vpack.c.b16 %v4316, %v4314
    %v4401 = vpack.c.b16 %v4319, %v4317
    %v4402 = vpack.c.b16 %v4320, %v4318
    %v4403 = vpack.c.b16 %v4323, %v4321
    %v4404 = vpack.c.b16 %v4324, %v4322
    %v4405 = vpack.c.b16 %v4327, %v4325
    %v4406 = vpack.c.b16 %v4328, %v4326
    %v4407 = vpack.c.b16 %v4331, %v4329
    %v4408 = vpack.c.b16 %v4332, %v4330
    %v4409 = vpack.c.b16 %v4335, %v4333
    %v4410 = vpack.c.b16 %v4336, %v4334
    %v4411 = vpack.c.b16 %v4339, %v4337
    %v4412 = vpack.c.b16 %v4340, %v4338
    %v4413 = vpack.c.b16 %v4343, %v4341
    %v4414 = vpack.c.b16 %v4344, %v4342
    %v4415 = vpack.c.b16 %v4347, %v4345
    %v4416 = vpack.c.b16 %v4348, %v4346
    %v4417 = vpack.c.b16 %v4351, %v4349
    %v4418 = vpack.c.b16 %v4352, %v4350
    %v4419 = vpack.c.b16 %v4355, %v4353
    %v4420 = vpack.c.b16 %v4356, %v4354
    %4485 = vmatprep.subr.bf16.mxu0 %v4358
    %4486 = vmatpush1.bf16.msra.mxu0 %v4357
    %4487 = vmatprep.subr.bf16.mxu0 %v4360
    %4488 = vmatpush1.bf16.msra.mxu0 %v4359
    %4489 = vmatprep.subr.bf16.mxu0 %v4362
    %4490 = vmatpush1.bf16.msra.mxu0 %v4361
    %4491 = vmatprep.subr.bf16.mxu0 %v4364
    %4492 = vmatpush1.bf16.msra.mxu0 %v4363
    %4493 = vmatprep.subr.bf16.mxu0 %v4366
    %4494 = vmatpush1.bf16.msra.mxu0 %v4365
    %4495 = vmatprep.subr.bf16.mxu0 %v4368
    %4496 = vmatpush1.bf16.msra.mxu0 %v4367
    %4497 = vmatprep.subr.bf16.mxu0 %v4370
    %4498 = vmatpush1.bf16.msra.mxu0 %v4369
    %4499 = vmatprep.subr.bf16.mxu0 %v4372
    %4500 = vmatpush1.bf16.msra.mxu0 %v4371
    %4501 = vmatprep.subr.bf16.mxu0 %v4374
    %4502 = vmatpush1.bf16.msra.mxu0 %v4373
    %4503 = vmatprep.subr.bf16.mxu0 %v4376
    %4504 = vmatpush1.bf16.msra.mxu0 %v4375
    %4505 = vmatprep.subr.bf16.mxu0 %v4378
    %4506 = vmatpush1.bf16.msra.mxu0 %v4377
    %4507 = vmatprep.subr.bf16.mxu0 %v4380
    %4508 = vmatpush1.bf16.msra.mxu0 %v4379
    %4509 = vmatprep.subr.bf16.mxu0 %v4382
    %4510 = vmatpush1.bf16.msra.mxu0 %v4381
    %4511 = vmatprep.subr.bf16.mxu0 %v4384
    %4512 = vmatpush1.bf16.msra.mxu0 %v4383
    %4513 = vmatprep.subr.bf16.mxu0 %v4386
    %4514 = vmatpush1.bf16.msra.mxu0 %v4385
    %4515 = vmatprep.subr.bf16.mxu0 %v4388
    %4516 = vmatpush1.bf16.msra.mxu0 %v4387
    %4517 = vmatprep.mubr.bf16.mxu0 %v4086
    %4518 = vmatmul.mubr.bf16.gmra.mrb[0].mxu0 %v4085
    %v4519 = vpop.f32.mrb[0].mxu0
    %v4520 = vadd.f32 %v4158, %v4519
    %v4521 = vpop.f32.mrb[0].mxu0
    %v4522 = vadd.f32 %v4162, %v4521
    %v4523 = vpop.f32.mrb[0].mxu0
    %v4524 = vpop.f32.mrb[0].mxu0
    %4525 = vdwg.mxu0
    %4526 = vmatprep.subr.bf16.mxu0 %v4390
    %4527 = vmatpush1.bf16.msra.mxu0 %v4389
    %4528 = vmatprep.subr.bf16.mxu0 %v4392
    %4529 = vmatpush1.bf16.msra.mxu0 %v4391
    %4530 = vmatprep.subr.bf16.mxu0 %v4394
    %4531 = vmatpush1.bf16.msra.mxu0 %v4393
    %4532 = vmatprep.subr.bf16.mxu0 %v4396
    %4533 = vmatpush1.bf16.msra.mxu0 %v4395
    %4534 = vmatprep.subr.bf16.mxu0 %v4398
    %4535 = vmatpush1.bf16.msra.mxu0 %v4397
    %4536 = vmatprep.subr.bf16.mxu0 %v4400
    %4537 = vmatpush1.bf16.msra.mxu0 %v4399
    %4538 = vmatprep.subr.bf16.mxu0 %v4402
    %4539 = vmatpush1.bf16.msra.mxu0 %v4401
    %4540 = vmatprep.subr.bf16.mxu0 %v4404
    %4541 = vmatpush1.bf16.msra.mxu0 %v4403
    %4542 = vmatprep.subr.bf16.mxu0 %v4406
    %4543 = vmatpush1.bf16.msra.mxu0 %v4405
    %4544 = vmatprep.subr.bf16.mxu0 %v4408
    %4545 = vmatpush1.bf16.msra.mxu0 %v4407
    %4546 = vmatprep.subr.bf16.mxu0 %v4410
    %4547 = vmatpush1.bf16.msra.mxu0 %v4409
    %4548 = vmatprep.subr.bf16.mxu0 %v4412
    %4549 = vmatpush1.bf16.msra.mxu0 %v4411
    %4550 = vmatprep.subr.bf16.mxu0 %v4414
    %4551 = vmatpush1.bf16.msra.mxu0 %v4413
    %4552 = vmatprep.subr.bf16.mxu0 %v4416
    %4553 = vmatpush1.bf16.msra.mxu0 %v4415
    %4554 = vmatprep.subr.bf16.mxu0 %v4418
    %4555 = vmatpush1.bf16.msra.mxu0 %v4417
    %4556 = vmatprep.subr.bf16.mxu0 %v4420
    %4557 = vmatpush1.bf16.msra.mxu0 %v4419
    %4558 = vmatprep.mubr.bf16.mxu0 %v4088
    %4559 = vmatmul.mubr.bf16.gmra.mrb[0].mxu0 %v4087
    %v4560 = vpop.f32.mrb[0].mxu0
    %v4561 = vadd.f32 %v4520, %v4560
    %v4562 = vpop.f32.mrb[0].mxu0
    %v4563 = vadd.f32 %v4522, %v4562
    %v4564 = vpop.f32.mrb[0].mxu0
    %v4565 = vpop.f32.mrb[0].mxu0
    %4566 = vdwg.mxu0
    %v4567 = vmax.f32 %v4561, 0.0
    %v4568 = vmax.f32 %v4563, 0.0
    %v4569 = vpack.c.bf16 %v4567, %v4567
    %v4570 = vpack.c.bf16 %v4568, %v4568
    %v4571 = vld [vmem:[%s23] sm:$0xff]
    %v4572 = vld [vmem:[%s23 + $0x8] sm:$0xff]
    %v4573 = vld [vmem:[%s23 + $0x10] sm:$0xff]
    %v4574 = vld [vmem:[%s23 + $0x18] sm:$0xff]
    %v4575 = vld [vmem:[%s23 + $0x20] sm:$0xff]
    %v4576 = vld [vmem:[%s23 + $0x28] sm:$0xff]
    %v4577 = vld [vmem:[%s23 + $0x30] sm:$0xff]
    %v4578 = vld [vmem:[%s23 + $0x38] sm:$0xff]
    %v4579 = vld [vmem:[%s23 + $0x40] sm:$0xff]
    %v4580 = vld [vmem:[%s23 + $0x48] sm:$0xff]
    %v4581 = vld [vmem:[%s23 + $0x50] sm:$0xff]
    %v4582 = vld [vmem:[%s23 + $0x58] sm:$0xff]
    %v4583 = vld [vmem:[%s23 + $0x60] sm:$0xff]
    %v4584 = vld [vmem:[%s23 + $0x68] sm:$0xff]
    %v4585 = vld [vmem:[%s23 + $0x70] sm:$0xff]
    %v4586 = vld [vmem:[%s23 + $0x78] sm:$0xff]
    %v4587 = vld [vmem:[%s23 + $0x80] sm:$0xff]
    %v4588 = vld [vmem:[%s23 + $0x88] sm:$0xff]
    %v4589 = vld [vmem:[%s23 + $0x90] sm:$0xff]
    %v4590 = vld [vmem:[%s23 + $0x98] sm:$0xff]
    %v4591 = vld [vmem:[%s23 + $0xa0] sm:$0xff]
    %v4592 = vld [vmem:[%s23 + $0xa8] sm:$0xff]
    %v4593 = vld [vmem:[%s23 + $0xb0] sm:$0xff]
    %v4594 = vld [vmem:[%s23 + $0xb8] sm:$0xff]
    %v4595 = vld [vmem:[%s23 + $0xc0] sm:$0xff]
    %v4596 = vld [vmem:[%s23 + $0xc8] sm:$0xff]
    %v4597 = vld [vmem:[%s23 + $0xd0] sm:$0xff]
    %v4598 = vld [vmem:[%s23 + $0xd8] sm:$0xff]
    %v4599 = vld [vmem:[%s23 + $0xe0] sm:$0xff]
    %v4600 = vld [vmem:[%s23 + $0xe8] sm:$0xff]
    %v4601 = vld [vmem:[%s23 + $0xf0] sm:$0xff]
    %v4602 = vld [vmem:[%s23 + $0xf8] sm:$0xff]
    %v4603 = vld [vmem:[%s25] sm:$0x3]
    %v4605 = vlaneseq
    %v4606 = vshrl.u32 %v4605, 7
    %v4607 = vsub.s32 0, %v4606
    %v4608 = vrot.slane %v4603, %v4607
    %v4609 = vlaneseq
    %v4610 = vshrl.u32 %v4609, 7
    %v4611 = vsub.s32 1, %v4610
    %v4612 = vrot.slane %v4603, %v4611
    %v4647 = vunpack.c.l.b16 %v4571
    %v4648 = vunpack.c.h.b16 %v4571
    %v4649 = vunpack.c.l.b16 %v4572
    %v4650 = vunpack.c.h.b16 %v4572
    %v4651 = vunpack.c.l.b16 %v4573
    %v4652 = vunpack.c.h.b16 %v4573
    %v4653 = vunpack.c.l.b16 %v4574
    %v4654 = vunpack.c.h.b16 %v4574
    %v4655 = vunpack.c.l.b16 %v4575
    %v4656 = vunpack.c.h.b16 %v4575
    %v4657 = vunpack.c.l.b16 %v4576
    %v4658 = vunpack.c.h.b16 %v4576
    %v4659 = vunpack.c.l.b16 %v4577
    %v4660 = vunpack.c.h.b16 %v4577
    %v4661 = vunpack.c.l.b16 %v4578
    %v4662 = vunpack.c.h.b16 %v4578
    %v4663 = vunpack.c.l.b16 %v4579
    %v4664 = vunpack.c.h.b16 %v4579
    %v4665 = vunpack.c.l.b16 %v4580
    %v4666 = vunpack.c.h.b16 %v4580
    %v4667 = vunpack.c.l.b16 %v4581
    %v4668 = vunpack.c.h.b16 %v4581
    %v4669 = vunpack.c.l.b16 %v4582
    %v4670 = vunpack.c.h.b16 %v4582
    %v4671 = vunpack.c.l.b16 %v4583
    %v4672 = vunpack.c.h.b16 %v4583
    %v4673 = vunpack.c.l.b16 %v4584
    %v4674 = vunpack.c.h.b16 %v4584
    %v4675 = vunpack.c.l.b16 %v4585
    %v4676 = vunpack.c.h.b16 %v4585
    %v4677 = vunpack.c.l.b16 %v4586
    %v4678 = vunpack.c.h.b16 %v4586
    %v4679 = vunpack.c.l.b16 %v4587
    %v4680 = vunpack.c.h.b16 %v4587
    %v4681 = vunpack.c.l.b16 %v4588
    %v4682 = vunpack.c.h.b16 %v4588
    %v4683 = vunpack.c.l.b16 %v4589
    %v4684 = vunpack.c.h.b16 %v4589
    %v4685 = vunpack.c.l.b16 %v4590
    %v4686 = vunpack.c.h.b16 %v4590
    %v4687 = vunpack.c.l.b16 %v4591
    %v4688 = vunpack.c.h.b16 %v4591
    %v4689 = vunpack.c.l.b16 %v4592
    %v4690 = vunpack.c.h.b16 %v4592
    %v4691 = vunpack.c.l.b16 %v4593
    %v4692 = vunpack.c.h.b16 %v4593
    %v4693 = vunpack.c.l.b16 %v4594
    %v4694 = vunpack.c.h.b16 %v4594
    %v4695 = vunpack.c.l.b16 %v4595
    %v4696 = vunpack.c.h.b16 %v4595
    %v4697 = vunpack.c.l.b16 %v4596
    %v4698 = vunpack.c.h.b16 %v4596
    %v4699 = vunpack.c.l.b16 %v4597
    %v4700 = vunpack.c.h.b16 %v4597
    %v4701 = vunpack.c.l.b16 %v4598
    %v4702 = vunpack.c.h.b16 %v4598
    %v4703 = vunpack.c.l.b16 %v4599
    %v4704 = vunpack.c.h.b16 %v4599
    %v4705 = vunpack.c.l.b16 %v4600
    %v4706 = vunpack.c.h.b16 %v4600
    %v4707 = vunpack.c.l.b16 %v4601
    %v4708 = vunpack.c.h.b16 %v4601
    %v4709 = vunpack.c.l.b16 %v4602
    %v4710 = vunpack.c.h.b16 %v4602
    %v4711 = vpack.c.b16 %v4649, %v4647
    %v4712 = vpack.c.b16 %v4650, %v4648
    %v4713 = vpack.c.b16 %v4653, %v4651
    %v4714 = vpack.c.b16 %v4654, %v4652
    %v4715 = vpack.c.b16 %v4657, %v4655
    %v4716 = vpack.c.b16 %v4658, %v4656
    %v4717 = vpack.c.b16 %v4661, %v4659
    %v4718 = vpack.c.b16 %v4662, %v4660
    %v4719 = vpack.c.b16 %v4665, %v4663
    %v4720 = vpack.c.b16 %v4666, %v4664
    %v4721 = vpack.c.b16 %v4669, %v4667
    %v4722 = vpack.c.b16 %v4670, %v4668
    %v4723 = vpack.c.b16 %v4673, %v4671
    %v4724 = vpack.c.b16 %v4674, %v4672
    %v4725 = vpack.c.b16 %v4677, %v4675
    %v4726 = vpack.c.b16 %v4678, %v4676
    %v4727 = vpack.c.b16 %v4681, %v4679
    %v4728 = vpack.c.b16 %v4682, %v4680
    %v4729 = vpack.c.b16 %v4685, %v4683
    %v4730 = vpack.c.b16 %v4686, %v4684
    %v4731 = vpack.c.b16 %v4689, %v4687
    %v4732 = vpack.c.b16 %v4690, %v4688
    %v4733 = vpack.c.b16 %v4693, %v4691
    %v4734 = vpack.c.b16 %v4694, %v4692
    %v4735 = vpack.c.b16 %v4697, %v4695
    %v4736 = vpack.c.b16 %v4698, %v4696
    %v4737 = vpack.c.b16 %v4701, %v4699
    %v4738 = vpack.c.b16 %v4702, %v4700
    %v4739 = vpack.c.b16 %v4705, %v4703
    %v4740 = vpack.c.b16 %v4706, %v4704
    %v4741 = vpack.c.b16 %v4709, %v4707
    %v4742 = vpack.c.b16 %v4710, %v4708
    %4775 = vmatprep.subr.bf16.mxu0 %v4712
    %4776 = vmatpush1.bf16.msra.mxu0 %v4711
    %4777 = vmatprep.subr.bf16.mxu0 %v4714
    %4778 = vmatpush1.bf16.msra.mxu0 %v4713
    %4779 = vmatprep.subr.bf16.mxu0 %v4716
    %4780 = vmatpush1.bf16.msra.mxu0 %v4715
    %4781 = vmatprep.subr.bf16.mxu0 %v4718
    %4782 = vmatpush1.bf16.msra.mxu0 %v4717
    %4783 = vmatprep.subr.bf16.mxu0 %v4720
    %4784 = vmatpush1.bf16.msra.mxu0 %v4719
    %4785 = vmatprep.subr.bf16.mxu0 %v4722
    %4786 = vmatpush1.bf16.msra.mxu0 %v4721
    %4787 = vmatprep.subr.bf16.mxu0 %v4724
    %4788 = vmatpush1.bf16.msra.mxu0 %v4723
    %4789 = vmatprep.subr.bf16.mxu0 %v4726
    %4790 = vmatpush1.bf16.msra.mxu0 %v4725
    %4791 = vmatprep.subr.bf16.mxu0 %v4728
    %4792 = vmatpush1.bf16.msra.mxu0 %v4727
    %4793 = vmatprep.subr.bf16.mxu0 %v4730
    %4794 = vmatpush1.bf16.msra.mxu0 %v4729
    %4795 = vmatprep.subr.bf16.mxu0 %v4732
    %4796 = vmatpush1.bf16.msra.mxu0 %v4731
    %4797 = vmatprep.subr.bf16.mxu0 %v4734
    %4798 = vmatpush1.bf16.msra.mxu0 %v4733
    %4799 = vmatprep.subr.bf16.mxu0 %v4736
    %4800 = vmatpush1.bf16.msra.mxu0 %v4735
    %4801 = vmatprep.subr.bf16.mxu0 %v4738
    %4802 = vmatpush1.bf16.msra.mxu0 %v4737
    %4803 = vmatprep.subr.bf16.mxu0 %v4740
    %4804 = vmatpush1.bf16.msra.mxu0 %v4739
    %4805 = vmatprep.subr.bf16.mxu0 %v4742
    %4806 = vmatpush1.bf16.msra.mxu0 %v4741
    %4807 = vmatprep.mubr.bf16.mxu0 %v4570
    %4808 = vmatmul.mubr.bf16.gmra.mrb[0].mxu0 %v4569
    %v4809 = vpop.f32.mrb[0].mxu0
    %v4810 = vadd.f32 %v4608, %v4809
    %v4811 = vpop.f32.mrb[0].mxu0
    %v4812 = vadd.f32 %v4612, %v4811
    %v4813 = vpop.f32.mrb[0].mxu0
    %v4814 = vpop.f32.mrb[0].mxu0
    %4815 = vdwg.mxu0
    %v4816 = vld [vmem:[%s27] sm:$0xff]
    %v4817 = vld [vmem:[%s27 + $0x8] sm:$0xff]
    %v4818 = vld [vmem:[%s27 + $0x10] sm:$0xff]
    %v4819 = vld [vmem:[%s27 + $0x18] sm:$0xff]
    %v4820 = vld [vmem:[%s27 + $0x20] sm:$0xff]
    %v4821 = vld [vmem:[%s27 + $0x28] sm:$0xff]
    %v4822 = vld [vmem:[%s27 + $0x30] sm:$0xff]
    %v4823 = vld [vmem:[%s27 + $0x38] sm:$0xff]
    %v4824 = vld [vmem:[%s27 + $0x40] sm:$0xff]
    %v4825 = vld [vmem:[%s27 + $0x48] sm:$0xff]
    %v4826 = vld [vmem:[%s27 + $0x50] sm:$0xff]
    %v4827 = vld [vmem:[%s27 + $0x58] sm:$0xff]
    %v4828 = vld [vmem:[%s27 + $0x60] sm:$0xff]
    %v4829 = vld [vmem:[%s27 + $0x68] sm:$0xff]
    %v4830 = vld [vmem:[%s27 + $0x70] sm:$0xff]
    %v4831 = vld [vmem:[%s27 + $0x78] sm:$0xff]
    %v4832 = vld [vmem:[%s27 + $0x80] sm:$0xff]
    %v4833 = vld [vmem:[%s27 + $0x88] sm:$0xff]
    %v4834 = vld [vmem:[%s27 + $0x90] sm:$0xff]
    %v4835 = vld [vmem:[%s27 + $0x98] sm:$0xff]
    %v4836 = vld [vmem:[%s27 + $0xa0] sm:$0xff]
    %v4837 = vld [vmem:[%s27 + $0xa8] sm:$0xff]
    %v4838 = vld [vmem:[%s27 + $0xb0] sm:$0xff]
    %v4839 = vld [vmem:[%s27 + $0xb8] sm:$0xff]
    %v4840 = vld [vmem:[%s27 + $0xc0] sm:$0xff]
    %v4841 = vld [vmem:[%s27 + $0xc8] sm:$0xff]
    %v4842 = vld [vmem:[%s27 + $0xd0] sm:$0xff]
    %v4843 = vld [vmem:[%s27 + $0xd8] sm:$0xff]
    %v4844 = vld [vmem:[%s27 + $0xe0] sm:$0xff]
    %v4845 = vld [vmem:[%s27 + $0xe8] sm:$0xff]
    %v4846 = vld [vmem:[%s27 + $0xf0] sm:$0xff]
    %v4847 = vld [vmem:[%s27 + $0xf8] sm:$0xff]
    %v4848 = vld [vmem:[%s27 + $0x100] sm:$0xff]
    %v4849 = vld [vmem:[%s27 + $0x108] sm:$0xff]
    %v4850 = vld [vmem:[%s27 + $0x110] sm:$0xff]
    %v4851 = vld [vmem:[%s27 + $0x118] sm:$0xff]
    %v4852 = vld [vmem:[%s27 + $0x120] sm:$0xff]
    %v4853 = vld [vmem:[%s27 + $0x128] sm:$0xff]
    %v4854 = vld [vmem:[%s27 + $0x130] sm:$0xff]
    %v4855 = vld [vmem:[%s27 + $0x138] sm:$0xff]
    %v4856 = vld [vmem:[%s27 + $0x140] sm:$0xff]
    %v4857 = vld [vmem:[%s27 + $0x148] sm:$0xff]
    %v4858 = vld [vmem:[%s27 + $0x150] sm:$0xff]
    %v4859 = vld [vmem:[%s27 + $0x158] sm:$0xff]
    %v4860 = vld [vmem:[%s27 + $0x160] sm:$0xff]
    %v4861 = vld [vmem:[%s27 + $0x168] sm:$0xff]
    %v4862 = vld [vmem:[%s27 + $0x170] sm:$0xff]
    %v4863 = vld [vmem:[%s27 + $0x178] sm:$0xff]
    %v4864 = vld [vmem:[%s27 + $0x180] sm:$0xff]
    %v4865 = vld [vmem:[%s27 + $0x188] sm:$0xff]
    %v4866 = vld [vmem:[%s27 + $0x190] sm:$0xff]
    %v4867 = vld [vmem:[%s27 + $0x198] sm:$0xff]
    %v4868 = vld [vmem:[%s27 + $0x1a0] sm:$0xff]
    %v4869 = vld [vmem:[%s27 + $0x1a8] sm:$0xff]
    %v4870 = vld [vmem:[%s27 + $0x1b0] sm:$0xff]
    %v4871 = vld [vmem:[%s27 + $0x1b8] sm:$0xff]
    %v4872 = vld [vmem:[%s27 + $0x1c0] sm:$0xff]
    %v4873 = vld [vmem:[%s27 + $0x1c8] sm:$0xff]
    %v4874 = vld [vmem:[%s27 + $0x1d0] sm:$0xff]
    %v4875 = vld [vmem:[%s27 + $0x1d8] sm:$0xff]
    %v4876 = vld [vmem:[%s27 + $0x1e0] sm:$0xff]
    %v4877 = vld [vmem:[%s27 + $0x1e8] sm:$0xff]
    %v4878 = vld [vmem:[%s27 + $0x1f0] sm:$0xff]
    %v4879 = vld [vmem:[%s27 + $0x1f8] sm:$0xff]
    %v4944 = vunpack.c.l.b16 %v4816
    %v4945 = vunpack.c.h.b16 %v4816
    %v4946 = vunpack.c.l.b16 %v4817
    %v4947 = vunpack.c.h.b16 %v4817
    %v4948 = vunpack.c.l.b16 %v4818
    %v4949 = vunpack.c.h.b16 %v4818
    %v4950 = vunpack.c.l.b16 %v4819
    %v4951 = vunpack.c.h.b16 %v4819
    %v4952 = vunpack.c.l.b16 %v4820
    %v4953 = vunpack.c.h.b16 %v4820
    %v4954 = vunpack.c.l.b16 %v4821
    %v4955 = vunpack.c.h.b16 %v4821
    %v4956 = vunpack.c.l.b16 %v4822
    %v4957 = vunpack.c.h.b16 %v4822
    %v4958 = vunpack.c.l.b16 %v4823
    %v4959 = vunpack.c.h.b16 %v4823
    %v4960 = vunpack.c.l.b16 %v4824
    %v4961 = vunpack.c.h.b16 %v4824
    %v4962 = vunpack.c.l.b16 %v4825
    %v4963 = vunpack.c.h.b16 %v4825
    %v4964 = vunpack.c.l.b16 %v4826
    %v4965 = vunpack.c.h.b16 %v4826
    %v4966 = vunpack.c.l.b16 %v4827
    %v4967 = vunpack.c.h.b16 %v4827
    %v4968 = vunpack.c.l.b16 %v4828
    %v4969 = vunpack.c.h.b16 %v4828
    %v4970 = vunpack.c.l.b16 %v4829
    %v4971 = vunpack.c.h.b16 %v4829
    %v4972 = vunpack.c.l.b16 %v4830
    %v4973 = vunpack.c.h.b16 %v4830
    %v4974 = vunpack.c.l.b16 %v4831
    %v4975 = vunpack.c.h.b16 %v4831
    %v4976 = vunpack.c.l.b16 %v4832
    %v4977 = vunpack.c.h.b16 %v4832
    %v4978 = vunpack.c.l.b16 %v4833
    %v4979 = vunpack.c.h.b16 %v4833
    %v4980 = vunpack.c.l.b16 %v4834
    %v4981 = vunpack.c.h.b16 %v4834
    %v4982 = vunpack.c.l.b16 %v4835
    %v4983 = vunpack.c.h.b16 %v4835
    %v4984 = vunpack.c.l.b16 %v4836
    %v4985 = vunpack.c.h.b16 %v4836
    %v4986 = vunpack.c.l.b16 %v4837
    %v4987 = vunpack.c.h.b16 %v4837
    %v4988 = vunpack.c.l.b16 %v4838
    %v4989 = vunpack.c.h.b16 %v4838
    %v4990 = vunpack.c.l.b16 %v4839
    %v4991 = vunpack.c.h.b16 %v4839
    %v4992 = vunpack.c.l.b16 %v4840
    %v4993 = vunpack.c.h.b16 %v4840
    %v4994 = vunpack.c.l.b16 %v4841
    %v4995 = vunpack.c.h.b16 %v4841
    %v4996 = vunpack.c.l.b16 %v4842
    %v4997 = vunpack.c.h.b16 %v4842
    %v4998 = vunpack.c.l.b16 %v4843
    %v4999 = vunpack.c.h.b16 %v4843
    %v5000 = vunpack.c.l.b16 %v4844
    %v5001 = vunpack.c.h.b16 %v4844
    %v5002 = vunpack.c.l.b16 %v4845
    %v5003 = vunpack.c.h.b16 %v4845
    %v5004 = vunpack.c.l.b16 %v4846
    %v5005 = vunpack.c.h.b16 %v4846
    %v5006 = vunpack.c.l.b16 %v4847
    %v5007 = vunpack.c.h.b16 %v4847
    %v5008 = vunpack.c.l.b16 %v4848
    %v5009 = vunpack.c.h.b16 %v4848
    %v5010 = vunpack.c.l.b16 %v4849
    %v5011 = vunpack.c.h.b16 %v4849
    %v5012 = vunpack.c.l.b16 %v4850
    %v5013 = vunpack.c.h.b16 %v4850
    %v5014 = vunpack.c.l.b16 %v4851
    %v5015 = vunpack.c.h.b16 %v4851
    %v5016 = vunpack.c.l.b16 %v4852
    %v5017 = vunpack.c.h.b16 %v4852
    %v5018 = vunpack.c.l.b16 %v4853
    %v5019 = vunpack.c.h.b16 %v4853
    %v5020 = vunpack.c.l.b16 %v4854
    %v5021 = vunpack.c.h.b16 %v4854
    %v5022 = vunpack.c.l.b16 %v4855
    %v5023 = vunpack.c.h.b16 %v4855
    %v5024 = vunpack.c.l.b16 %v4856
    %v5025 = vunpack.c.h.b16 %v4856
    %v5026 = vunpack.c.l.b16 %v4857
    %v5027 = vunpack.c.h.b16 %v4857
    %v5028 = vunpack.c.l.b16 %v4858
    %v5029 = vunpack.c.h.b16 %v4858
    %v5030 = vunpack.c.l.b16 %v4859
    %v5031 = vunpack.c.h.b16 %v4859
    %v5032 = vunpack.c.l.b16 %v4860
    %v5033 = vunpack.c.h.b16 %v4860
    %v5034 = vunpack.c.l.b16 %v4861
    %v5035 = vunpack.c.h.b16 %v4861
    %v5036 = vunpack.c.l.b16 %v4862
    %v5037 = vunpack.c.h.b16 %v4862
    %v5038 = vunpack.c.l.b16 %v4863
    %v5039 = vunpack.c.h.b16 %v4863
    %v5040 = vunpack.c.l.b16 %v4864
    %v5041 = vunpack.c.h.b16 %v4864
    %v5042 = vunpack.c.l.b16 %v4865
    %v5043 = vunpack.c.h.b16 %v4865
    %v5044 = vunpack.c.l.b16 %v4866
    %v5045 = vunpack.c.h.b16 %v4866
    %v5046 = vunpack.c.l.b16 %v4867
    %v5047 = vunpack.c.h.b16 %v4867
    %v5048 = vunpack.c.l.b16 %v4868
    %v5049 = vunpack.c.h.b16 %v4868
    %v5050 = vunpack.c.l.b16 %v4869
    %v5051 = vunpack.c.h.b16 %v4869
    %v5052 = vunpack.c.l.b16 %v4870
    %v5053 = vunpack.c.h.b16 %v4870
    %v5054 = vunpack.c.l.b16 %v4871
    %v5055 = vunpack.c.h.b16 %v4871
    %v5056 = vunpack.c.l.b16 %v4872
    %v5057 = vunpack.c.h.b16 %v4872
    %v5058 = vunpack.c.l.b16 %v4873
    %v5059 = vunpack.c.h.b16 %v4873
    %v5060 = vunpack.c.l.b16 %v4874
    %v5061 = vunpack.c.h.b16 %v4874
    %v5062 = vunpack.c.l.b16 %v4875
    %v5063 = vunpack.c.h.b16 %v4875
    %v5064 = vunpack.c.l.b16 %v4876
    %v5065 = vunpack.c.h.b16 %v4876
    %v5066 = vunpack.c.l.b16 %v4877
    %v5067 = vunpack.c.h.b16 %v4877
    %v5068 = vunpack.c.l.b16 %v4878
    %v5069 = vunpack.c.h.b16 %v4878
    %v5070 = vunpack.c.l.b16 %v4879
    %v5071 = vunpack.c.h.b16 %v4879
    %v5072 = vpack.c.b16 %v4946, %v4944
    %v5073 = vpack.c.b16 %v4947, %v4945
    %v5074 = vpack.c.b16 %v4950, %v4948
    %v5075 = vpack.c.b16 %v4951, %v4949
    %v5076 = vpack.c.b16 %v4954, %v4952
    %v5077 = vpack.c.b16 %v4955, %v4953
    %v5078 = vpack.c.b16 %v4958, %v4956
    %v5079 = vpack.c.b16 %v4959, %v4957
    %v5080 = vpack.c.b16 %v4962, %v4960
    %v5081 = vpack.c.b16 %v4963, %v4961
    %v5082 = vpack.c.b16 %v4966, %v4964
    %v5083 = vpack.c.b16 %v4967, %v4965
    %v5084 = vpack.c.b16 %v4970, %v4968
    %v5085 = vpack.c.b16 %v4971, %v4969
    %v5086 = vpack.c.b16 %v4974, %v4972
    %v5087 = vpack.c.b16 %v4975, %v4973
    %v5088 = vpack.c.b16 %v4978, %v4976
    %v5089 = vpack.c.b16 %v4979, %v4977
    %v5090 = vpack.c.b16 %v4982, %v4980
    %v5091 = vpack.c.b16 %v4983, %v4981
    %v5092 = vpack.c.b16 %v4986, %v4984
    %v5093 = vpack.c.b16 %v4987, %v4985
    %v5094 = vpack.c.b16 %v4990, %v4988
    %v5095 = vpack.c.b16 %v4991, %v4989
    %v5096 = vpack.c.b16 %v4994, %v4992
    %v5097 = vpack.c.b16 %v4995, %v4993
    %v5098 = vpack.c.b16 %v4998, %v4996
    %v5099 = vpack.c.b16 %v4999, %v4997
    %v5100 = vpack.c.b16 %v5002, %v5000
    %v5101 = vpack.c.b16 %v5003, %v5001
    %v5102 = vpack.c.b16 %v5006, %v5004
    %v5103 = vpack.c.b16 %v5007, %v5005
    %v5104 = vpack.c.b16 %v5010, %v5008
    %v5105 = vpack.c.b16 %v5011, %v5009
    %v5106 = vpack.c.b16 %v5014, %v5012
    %v5107 = vpack.c.b16 %v5015, %v5013
    %v5108 = vpack.c.b16 %v5018, %v5016
    %v5109 = vpack.c.b16 %v5019, %v5017
    %v5110 = vpack.c.b16 %v5022, %v5020
    %v5111 = vpack.c.b16 %v5023, %v5021
    %v5112 = vpack.c.b16 %v5026, %v5024
    %v5113 = vpack.c.b16 %v5027, %v5025
    %v5114 = vpack.c.b16 %v5030, %v5028
    %v5115 = vpack.c.b16 %v5031, %v5029
    %v5116 = vpack.c.b16 %v5034, %v5032
    %v5117 = vpack.c.b16 %v5035, %v5033
    %v5118 = vpack.c.b16 %v5038, %v5036
    %v5119 = vpack.c.b16 %v5039, %v5037
    %v5120 = vpack.c.b16 %v5042, %v5040
    %v5121 = vpack.c.b16 %v5043, %v5041
    %v5122 = vpack.c.b16 %v5046, %v5044
    %v5123 = vpack.c.b16 %v5047, %v5045
    %v5124 = vpack.c.b16 %v5050, %v5048
    %v5125 = vpack.c.b16 %v5051, %v5049
    %v5126 = vpack.c.b16 %v5054, %v5052
    %v5127 = vpack.c.b16 %v5055, %v5053
    %v5128 = vpack.c.b16 %v5058, %v5056
    %v5129 = vpack.c.b16 %v5059, %v5057
    %v5130 = vpack.c.b16 %v5062, %v5060
    %v5131 = vpack.c.b16 %v5063, %v5061
    %v5132 = vpack.c.b16 %v5066, %v5064
    %v5133 = vpack.c.b16 %v5067, %v5065
    %v5134 = vpack.c.b16 %v5070, %v5068
    %v5135 = vpack.c.b16 %v5071, %v5069
    %5200 = vmatprep.subr.bf16.mxu0 %v5073
    %5201 = vmatpush1.bf16.msra.mxu0 %v5072
    %5202 = vmatprep.subr.bf16.mxu0 %v5075
    %5203 = vmatpush1.bf16.msra.mxu0 %v5074
    %5204 = vmatprep.subr.bf16.mxu0 %v5077
    %5205 = vmatpush1.bf16.msra.mxu0 %v5076
    %5206 = vmatprep.subr.bf16.mxu0 %v5079
    %5207 = vmatpush1.bf16.msra.mxu0 %v5078
    %5208 = vmatprep.subr.bf16.mxu0 %v5081
    %5209 = vmatpush1.bf16.msra.mxu0 %v5080
    %5210 = vmatprep.subr.bf16.mxu0 %v5083
    %5211 = vmatpush1.bf16.msra.mxu0 %v5082
    %5212 = vmatprep.subr.bf16.mxu0 %v5085
    %5213 = vmatpush1.bf16.msra.mxu0 %v5084
    %5214 = vmatprep.subr.bf16.mxu0 %v5087
    %5215 = vmatpush1.bf16.msra.mxu0 %v5086
    %5216 = vmatprep.subr.bf16.mxu0 %v5089
    %5217 = vmatpush1.bf16.msra.mxu0 %v5088
    %5218 = vmatprep.subr.bf16.mxu0 %v5091
    %5219 = vmatpush1.bf16.msra.mxu0 %v5090
    %5220 = vmatprep.subr.bf16.mxu0 %v5093
    %5221 = vmatpush1.bf16.msra.mxu0 %v5092
    %5222 = vmatprep.subr.bf16.mxu0 %v5095
    %5223 = vmatpush1.bf16.msra.mxu0 %v5094
    %5224 = vmatprep.subr.bf16.mxu0 %v5097
    %5225 = vmatpush1.bf16.msra.mxu0 %v5096
    %5226 = vmatprep.subr.bf16.mxu0 %v5099
    %5227 = vmatpush1.bf16.msra.mxu0 %v5098
    %5228 = vmatprep.subr.bf16.mxu0 %v5101
    %5229 = vmatpush1.bf16.msra.mxu0 %v5100
    %5230 = vmatprep.subr.bf16.mxu0 %v5103
    %5231 = vmatpush1.bf16.msra.mxu0 %v5102
    %5232 = vmatprep.mubr.bf16.mxu0 %v4086
    %5233 = vmatmul.mubr.bf16.gmra.mrb[0].mxu0 %v4085
    %v5234 = vpop.f32.mrb[0].mxu0
    %v5235 = vadd.f32 0.0, %v5234
    %v5236 = vpop.f32.mrb[0].mxu0
    %v5237 = vadd.f32 0.0, %v5236
    %v5238 = vpop.f32.mrb[0].mxu0
    %v5239 = vpop.f32.mrb[0].mxu0
    %5240 = vdwg.mxu0
    %5241 = vmatprep.subr.bf16.mxu0 %v5105
    %5242 = vmatpush1.bf16.msra.mxu0 %v5104
    %5243 = vmatprep.subr.bf16.mxu0 %v5107
    %5244 = vmatpush1.bf16.msra.mxu0 %v5106
    %5245 = vmatprep.subr.bf16.mxu0 %v5109
    %5246 = vmatpush1.bf16.msra.mxu0 %v5108
    %5247 = vmatprep.subr.bf16.mxu0 %v5111
    %5248 = vmatpush1.bf16.msra.mxu0 %v5110
    %5249 = vmatprep.subr.bf16.mxu0 %v5113
    %5250 = vmatpush1.bf16.msra.mxu0 %v5112
    %5251 = vmatprep.subr.bf16.mxu0 %v5115
    %5252 = vmatpush1.bf16.msra.mxu0 %v5114
    %5253 = vmatprep.subr.bf16.mxu0 %v5117
    %5254 = vmatpush1.bf16.msra.mxu0 %v5116
    %5255 = vmatprep.subr.bf16.mxu0 %v5119
    %5256 = vmatpush1.bf16.msra.mxu0 %v5118
    %5257 = vmatprep.subr.bf16.mxu0 %v5121
    %5258 = vmatpush1.bf16.msra.mxu0 %v5120
    %5259 = vmatprep.subr.bf16.mxu0 %v5123
    %5260 = vmatpush1.bf16.msra.mxu0 %v5122
    %5261 = vmatprep.subr.bf16.mxu0 %v5125
    %5262 = vmatpush1.bf16.msra.mxu0 %v5124
    %5263 = vmatprep.subr.bf16.mxu0 %v5127
    %5264 = vmatpush1.bf16.msra.mxu0 %v5126
    %5265 = vmatprep.subr.bf16.mxu0 %v5129
    %5266 = vmatpush1.bf16.msra.mxu0 %v5128
    %5267 = vmatprep.subr.bf16.mxu0 %v5131
    %5268 = vmatpush1.bf16.msra.mxu0 %v5130
    %5269 = vmatprep.subr.bf16.mxu0 %v5133
    %5270 = vmatpush1.bf16.msra.mxu0 %v5132
    %5271 = vmatprep.subr.bf16.mxu0 %v5135
    %5272 = vmatpush1.bf16.msra.mxu0 %v5134
    %5273 = vmatprep.mubr.bf16.mxu0 %v4088
    %5274 = vmatmul.mubr.bf16.gmra.mrb[0].mxu0 %v4087
    %v5275 = vpop.f32.mrb[0].mxu0
    %v5276 = vadd.f32 %v5235, %v5275
    %v5277 = vpop.f32.mrb[0].mxu0
    %v5278 = vadd.f32 %v5237, %v5277
    %v5279 = vpop.f32.mrb[0].mxu0
    %v5280 = vpop.f32.mrb[0].mxu0
    %5281 = vdwg.mxu0
    %v5282 = vadd.f32 %v4810, %v5276
    %v5283 = vadd.f32 %v4812, %v5278
    %v5284 = vmax.f32 %v5282, 0.0
    %v5285 = vmax.f32 %v5283, 0.0
    %v5286 = vpack.c.bf16 %v5284, %v5284
    %v5287 = vpack.c.bf16 %v5285, %v5285
    %v5288 = vld [vmem:[%s29] sm:$0xff]
    %v5289 = vld [vmem:[%s29 + $0x8] sm:$0xff]
    %v5290 = vld [vmem:[%s29 + $0x10] sm:$0xff]
    %v5291 = vld [vmem:[%s29 + $0x18] sm:$0xff]
    %v5292 = vld [vmem:[%s29 + $0x20] sm:$0xff]
    %v5293 = vld [vmem:[%s29 + $0x28] sm:$0xff]
    %v5294 = vld [vmem:[%s29 + $0x30] sm:$0xff]
    %v5295 = vld [vmem:[%s29 + $0x38] sm:$0xff]
    %v5296 = vld [vmem:[%s29 + $0x40] sm:$0xff]
    %v5297 = vld [vmem:[%s29 + $0x48] sm:$0xff]
    %v5298 = vld [vmem:[%s29 + $0x50] sm:$0xff]
    %v5299 = vld [vmem:[%s29 + $0x58] sm:$0xff]
    %v5300 = vld [vmem:[%s29 + $0x60] sm:$0xff]
    %v5301 = vld [vmem:[%s29 + $0x68] sm:$0xff]
    %v5302 = vld [vmem:[%s29 + $0x70] sm:$0xff]
    %v5303 = vld [vmem:[%s29 + $0x78] sm:$0xff]
    %v5304 = vld [vmem:[%s29 + $0x80] sm:$0xff]
    %v5305 = vld [vmem:[%s29 + $0x88] sm:$0xff]
    %v5306 = vld [vmem:[%s29 + $0x90] sm:$0xff]
    %v5307 = vld [vmem:[%s29 + $0x98] sm:$0xff]
    %v5308 = vld [vmem:[%s29 + $0xa0] sm:$0xff]
    %v5309 = vld [vmem:[%s29 + $0xa8] sm:$0xff]
    %v5310 = vld [vmem:[%s29 + $0xb0] sm:$0xff]
    %v5311 = vld [vmem:[%s29 + $0xb8] sm:$0xff]
    %v5312 = vld [vmem:[%s29 + $0xc0] sm:$0xff]
    %v5313 = vld [vmem:[%s29 + $0xc8] sm:$0xff]
    %v5314 = vld [vmem:[%s29 + $0xd0] sm:$0xff]
    %v5315 = vld [vmem:[%s29 + $0xd8] sm:$0xff]
    %v5316 = vld [vmem:[%s29 + $0xe0] sm:$0xff]
    %v5317 = vld [vmem:[%s29 + $0xe8] sm:$0xff]
    %v5318 = vld [vmem:[%s29 + $0xf0] sm:$0xff]
    %v5319 = vld [vmem:[%s29 + $0xf8] sm:$0xff]
    %v5320 = vld [vmem:[%s31] sm:$0x3]
    %v5322 = vlaneseq
    %v5323 = vshrl.u32 %v5322, 7
    %v5324 = vsub.s32 0, %v5323
    %v5325 = vrot.slane %v5320, %v5324
    %v5326 = vlaneseq
    %v5327 = vshrl.u32 %v5326, 7
    %v5328 = vsub.s32 1, %v5327
    %v5329 = vrot.slane %v5320, %v5328
    %v5364 = vunpack.c.l.b16 %v5288
    %v5365 = vunpack.c.h.b16 %v5288
    %v5366 = vunpack.c.l.b16 %v5289
    %v5367 = vunpack.c.h.b16 %v5289
    %v5368 = vunpack.c.l.b16 %v5290
    %v5369 = vunpack.c.h.b16 %v5290
    %v5370 = vunpack.c.l.b16 %v5291
    %v5371 = vunpack.c.h.b16 %v5291
    %v5372 = vunpack.c.l.b16 %v5292
    %v5373 = vunpack.c.h.b16 %v5292
    %v5374 = vunpack.c.l.b16 %v5293
    %v5375 = vunpack.c.h.b16 %v5293
    %v5376 = vunpack.c.l.b16 %v5294
    %v5377 = vunpack.c.h.b16 %v5294
    %v5378 = vunpack.c.l.b16 %v5295
    %v5379 = vunpack.c.h.b16 %v5295
    %v5380 = vunpack.c.l.b16 %v5296
    %v5381 = vunpack.c.h.b16 %v5296
    %v5382 = vunpack.c.l.b16 %v5297
    %v5383 = vunpack.c.h.b16 %v5297
    %v5384 = vunpack.c.l.b16 %v5298
    %v5385 = vunpack.c.h.b16 %v5298
    %v5386 = vunpack.c.l.b16 %v5299
    %v5387 = vunpack.c.h.b16 %v5299
    %v5388 = vunpack.c.l.b16 %v5300
    %v5389 = vunpack.c.h.b16 %v5300
    %v5390 = vunpack.c.l.b16 %v5301
    %v5391 = vunpack.c.h.b16 %v5301
    %v5392 = vunpack.c.l.b16 %v5302
    %v5393 = vunpack.c.h.b16 %v5302
    %v5394 = vunpack.c.l.b16 %v5303
    %v5395 = vunpack.c.h.b16 %v5303
    %v5396 = vunpack.c.l.b16 %v5304
    %v5397 = vunpack.c.h.b16 %v5304
    %v5398 = vunpack.c.l.b16 %v5305
    %v5399 = vunpack.c.h.b16 %v5305
    %v5400 = vunpack.c.l.b16 %v5306
    %v5401 = vunpack.c.h.b16 %v5306
    %v5402 = vunpack.c.l.b16 %v5307
    %v5403 = vunpack.c.h.b16 %v5307
    %v5404 = vunpack.c.l.b16 %v5308
    %v5405 = vunpack.c.h.b16 %v5308
    %v5406 = vunpack.c.l.b16 %v5309
    %v5407 = vunpack.c.h.b16 %v5309
    %v5408 = vunpack.c.l.b16 %v5310
    %v5409 = vunpack.c.h.b16 %v5310
    %v5410 = vunpack.c.l.b16 %v5311
    %v5411 = vunpack.c.h.b16 %v5311
    %v5412 = vunpack.c.l.b16 %v5312
    %v5413 = vunpack.c.h.b16 %v5312
    %v5414 = vunpack.c.l.b16 %v5313
    %v5415 = vunpack.c.h.b16 %v5313
    %v5416 = vunpack.c.l.b16 %v5314
    %v5417 = vunpack.c.h.b16 %v5314
    %v5418 = vunpack.c.l.b16 %v5315
    %v5419 = vunpack.c.h.b16 %v5315
    %v5420 = vunpack.c.l.b16 %v5316
    %v5421 = vunpack.c.h.b16 %v5316
    %v5422 = vunpack.c.l.b16 %v5317
    %v5423 = vunpack.c.h.b16 %v5317
    %v5424 = vunpack.c.l.b16 %v5318
    %v5425 = vunpack.c.h.b16 %v5318
    %v5426 = vunpack.c.l.b16 %v5319
    %v5427 = vunpack.c.h.b16 %v5319
    %v5428 = vpack.c.b16 %v5366, %v5364
    %v5429 = vpack.c.b16 %v5367, %v5365
    %v5430 = vpack.c.b16 %v5370, %v5368
    %v5431 = vpack.c.b16 %v5371, %v5369
    %v5432 = vpack.c.b16 %v5374, %v5372
    %v5433 = vpack.c.b16 %v5375, %v5373
    %v5434 = vpack.c.b16 %v5378, %v5376
    %v5435 = vpack.c.b16 %v5379, %v5377
    %v5436 = vpack.c.b16 %v5382, %v5380
    %v5437 = vpack.c.b16 %v5383, %v5381
    %v5438 = vpack.c.b16 %v5386, %v5384
    %v5439 = vpack.c.b16 %v5387, %v5385
    %v5440 = vpack.c.b16 %v5390, %v5388
    %v5441 = vpack.c.b16 %v5391, %v5389
    %v5442 = vpack.c.b16 %v5394, %v5392
    %v5443 = vpack.c.b16 %v5395, %v5393
    %v5444 = vpack.c.b16 %v5398, %v5396
    %v5445 = vpack.c.b16 %v5399, %v5397
    %v5446 = vpack.c.b16 %v5402, %v5400
    %v5447 = vpack.c.b16 %v5403, %v5401
    %v5448 = vpack.c.b16 %v5406, %v5404
    %v5449 = vpack.c.b16 %v5407, %v5405
    %v5450 = vpack.c.b16 %v5410, %v5408
    %v5451 = vpack.c.b16 %v5411, %v5409
    %v5452 = vpack.c.b16 %v5414, %v5412
    %v5453 = vpack.c.b16 %v5415, %v5413
    %v5454 = vpack.c.b16 %v5418, %v5416
    %v5455 = vpack.c.b16 %v5419, %v5417
    %v5456 = vpack.c.b16 %v5422, %v5420
    %v5457 = vpack.c.b16 %v5423, %v5421
    %v5458 = vpack.c.b16 %v5426, %v5424
    %v5459 = vpack.c.b16 %v5427, %v5425
    %5492 = vmatprep.subr.bf16.mxu0 %v5429
    %5493 = vmatpush1.bf16.msra.mxu0 %v5428
    %5494 = vmatprep.subr.bf16.mxu0 %v5431
    %5495 = vmatpush1.bf16.msra.mxu0 %v5430
    %5496 = vmatprep.subr.bf16.mxu0 %v5433
    %5497 = vmatpush1.bf16.msra.mxu0 %v5432
    %5498 = vmatprep.subr.bf16.mxu0 %v5435
    %5499 = vmatpush1.bf16.msra.mxu0 %v5434
    %5500 = vmatprep.subr.bf16.mxu0 %v5437
    %5501 = vmatpush1.bf16.msra.mxu0 %v5436
    %5502 = vmatprep.subr.bf16.mxu0 %v5439
    %5503 = vmatpush1.bf16.msra.mxu0 %v5438
    %5504 = vmatprep.subr.bf16.mxu0 %v5441
    %5505 = vmatpush1.bf16.msra.mxu0 %v5440
    %5506 = vmatprep.subr.bf16.mxu0 %v5443
    %5507 = vmatpush1.bf16.msra.mxu0 %v5442
    %5508 = vmatprep.subr.bf16.mxu0 %v5445
    %5509 = vmatpush1.bf16.msra.mxu0 %v5444
    %5510 = vmatprep.subr.bf16.mxu0 %v5447
    %5511 = vmatpush1.bf16.msra.mxu0 %v5446
    %5512 = vmatprep.subr.bf16.mxu0 %v5449
    %5513 = vmatpush1.bf16.msra.mxu0 %v5448
    %5514 = vmatprep.subr.bf16.mxu0 %v5451
    %5515 = vmatpush1.bf16.msra.mxu0 %v5450
    %5516 = vmatprep.subr.bf16.mxu0 %v5453
    %5517 = vmatpush1.bf16.msra.mxu0 %v5452
    %5518 = vmatprep.subr.bf16.mxu0 %v5455
    %5519 = vmatpush1.bf16.msra.mxu0 %v5454
    %5520 = vmatprep.subr.bf16.mxu0 %v5457
    %5521 = vmatpush1.bf16.msra.mxu0 %v5456
    %5522 = vmatprep.subr.bf16.mxu0 %v5459
    %5523 = vmatpush1.bf16.msra.mxu0 %v5458
    %5524 = vmatprep.mubr.bf16.mxu0 %v5287
    %5525 = vmatmul.mubr.bf16.gmra.mrb[0].mxu0 %v5286
    %v5526 = vpop.f32.mrb[0].mxu0
    %v5527 = vadd.f32 %v5325, %v5526
    %v5528 = vpop.f32.mrb[0].mxu0
    %v5529 = vadd.f32 %v5329, %v5528
    %v5530 = vpop.f32.mrb[0].mxu0
    %v5531 = vpop.f32.mrb[0].mxu0
    %5532 = vdwg.mxu0
    %v5533 = vmax.f32 %v5527, 0.0
    %v5534 = vmax.f32 %v5529, 0.0
    %v5535 = vpack.c.bf16 %v5533, %v5533
    %v5536 = vpack.c.bf16 %v5534, %v5534
    %v5537 = vld [vmem:[%s33] sm:$0xff]
    %v5538 = vld [vmem:[%s33 + $0x8] sm:$0xff]
    %v5539 = vld [vmem:[%s33 + $0x10] sm:$0xff]
    %v5540 = vld [vmem:[%s33 + $0x18] sm:$0xff]
    %v5541 = vld [vmem:[%s33 + $0x20] sm:$0xff]
    %v5542 = vld [vmem:[%s33 + $0x28] sm:$0xff]
    %v5543 = vld [vmem:[%s33 + $0x30] sm:$0xff]
    %v5544 = vld [vmem:[%s33 + $0x38] sm:$0xff]
    %v5545 = vld [vmem:[%s33 + $0x40] sm:$0xff]
    %v5546 = vld [vmem:[%s33 + $0x48] sm:$0xff]
    %v5547 = vld [vmem:[%s33 + $0x50] sm:$0xff]
    %v5548 = vld [vmem:[%s33 + $0x58] sm:$0xff]
    %v5549 = vld [vmem:[%s33 + $0x60] sm:$0xff]
    %v5550 = vld [vmem:[%s33 + $0x68] sm:$0xff]
    %v5551 = vld [vmem:[%s33 + $0x70] sm:$0xff]
    %v5552 = vld [vmem:[%s33 + $0x78] sm:$0xff]
    %v5553 = vld [vmem:[%s33 + $0x80] sm:$0xff]
    %v5554 = vld [vmem:[%s33 + $0x88] sm:$0xff]
    %v5555 = vld [vmem:[%s33 + $0x90] sm:$0xff]
    %v5556 = vld [vmem:[%s33 + $0x98] sm:$0xff]
    %v5557 = vld [vmem:[%s33 + $0xa0] sm:$0xff]
    %v5558 = vld [vmem:[%s33 + $0xa8] sm:$0xff]
    %v5559 = vld [vmem:[%s33 + $0xb0] sm:$0xff]
    %v5560 = vld [vmem:[%s33 + $0xb8] sm:$0xff]
    %v5561 = vld [vmem:[%s33 + $0xc0] sm:$0xff]
    %v5562 = vld [vmem:[%s33 + $0xc8] sm:$0xff]
    %v5563 = vld [vmem:[%s33 + $0xd0] sm:$0xff]
    %v5564 = vld [vmem:[%s33 + $0xd8] sm:$0xff]
    %v5565 = vld [vmem:[%s33 + $0xe0] sm:$0xff]
    %v5566 = vld [vmem:[%s33 + $0xe8] sm:$0xff]
    %v5567 = vld [vmem:[%s33 + $0xf0] sm:$0xff]
    %v5568 = vld [vmem:[%s33 + $0xf8] sm:$0xff]
    %v5569 = vld [vmem:[%s35] sm:$0x3]
    %v5571 = vlaneseq
    %v5572 = vshrl.u32 %v5571, 7
    %v5573 = vsub.s32 0, %v5572
    %v5574 = vrot.slane %v5569, %v5573
    %v5575 = vlaneseq
    %v5576 = vshrl.u32 %v5575, 7
    %v5577 = vsub.s32 1, %v5576
    %v5578 = vrot.slane %v5569, %v5577
    %v5613 = vunpack.c.l.b16 %v5537
    %v5614 = vunpack.c.h.b16 %v5537
    %v5615 = vunpack.c.l.b16 %v5538
    %v5616 = vunpack.c.h.b16 %v5538
    %v5617 = vunpack.c.l.b16 %v5539
    %v5618 = vunpack.c.h.b16 %v5539
    %v5619 = vunpack.c.l.b16 %v5540
    %v5620 = vunpack.c.h.b16 %v5540
    %v5621 = vunpack.c.l.b16 %v5541
    %v5622 = vunpack.c.h.b16 %v5541
    %v5623 = vunpack.c.l.b16 %v5542
    %v5624 = vunpack.c.h.b16 %v5542
    %v5625 = vunpack.c.l.b16 %v5543
    %v5626 = vunpack.c.h.b16 %v5543
    %v5627 = vunpack.c.l.b16 %v5544
    %v5628 = vunpack.c.h.b16 %v5544
    %v5629 = vunpack.c.l.b16 %v5545
    %v5630 = vunpack.c.h.b16 %v5545
    %v5631 = vunpack.c.l.b16 %v5546
    %v5632 = vunpack.c.h.b16 %v5546
    %v5633 = vunpack.c.l.b16 %v5547
    %v5634 = vunpack.c.h.b16 %v5547
    %v5635 = vunpack.c.l.b16 %v5548
    %v5636 = vunpack.c.h.b16 %v5548
    %v5637 = vunpack.c.l.b16 %v5549
    %v5638 = vunpack.c.h.b16 %v5549
    %v5639 = vunpack.c.l.b16 %v5550
    %v5640 = vunpack.c.h.b16 %v5550
    %v5641 = vunpack.c.l.b16 %v5551
    %v5642 = vunpack.c.h.b16 %v5551
    %v5643 = vunpack.c.l.b16 %v5552
    %v5644 = vunpack.c.h.b16 %v5552
    %v5645 = vunpack.c.l.b16 %v5553
    %v5646 = vunpack.c.h.b16 %v5553
    %v5647 = vunpack.c.l.b16 %v5554
    %v5648 = vunpack.c.h.b16 %v5554
    %v5649 = vunpack.c.l.b16 %v5555
    %v5650 = vunpack.c.h.b16 %v5555
    %v5651 = vunpack.c.l.b16 %v5556
    %v5652 = vunpack.c.h.b16 %v5556
    %v5653 = vunpack.c.l.b16 %v5557
    %v5654 = vunpack.c.h.b16 %v5557
    %v5655 = vunpack.c.l.b16 %v5558
    %v5656 = vunpack.c.h.b16 %v5558
    %v5657 = vunpack.c.l.b16 %v5559
    %v5658 = vunpack.c.h.b16 %v5559
    %v5659 = vunpack.c.l.b16 %v5560
    %v5660 = vunpack.c.h.b16 %v5560
    %v5661 = vunpack.c.l.b16 %v5561
    %v5662 = vunpack.c.h.b16 %v5561
    %v5663 = vunpack.c.l.b16 %v5562
    %v5664 = vunpack.c.h.b16 %v5562
    %v5665 = vunpack.c.l.b16 %v5563
    %v5666 = vunpack.c.h.b16 %v5563
    %v5667 = vunpack.c.l.b16 %v5564
    %v5668 = vunpack.c.h.b16 %v5564
    %v5669 = vunpack.c.l.b16 %v5565
    %v5670 = vunpack.c.h.b16 %v5565
    %v5671 = vunpack.c.l.b16 %v5566
    %v5672 = vunpack.c.h.b16 %v5566
    %v5673 = vunpack.c.l.b16 %v5567
    %v5674 = vunpack.c.h.b16 %v5567
    %v5675 = vunpack.c.l.b16 %v5568
    %v5676 = vunpack.c.h.b16 %v5568
    %v5677 = vpack.c.b16 %v5615, %v5613
    %v5678 = vpack.c.b16 %v5616, %v5614
    %v5679 = vpack.c.b16 %v5619, %v5617
    %v5680 = vpack.c.b16 %v5620, %v5618
    %v5681 = vpack.c.b16 %v5623, %v5621
    %v5682 = vpack.c.b16 %v5624, %v5622
    %v5683 = vpack.c.b16 %v5627, %v5625
    %v5684 = vpack.c.b16 %v5628, %v5626
    %v5685 = vpack.c.b16 %v5631, %v5629
    %v5686 = vpack.c.b16 %v5632, %v5630
    %v5687 = vpack.c.b16 %v5635, %v5633
    %v5688 = vpack.c.b16 %v5636, %v5634
    %v5689 = vpack.c.b16 %v5639, %v5637
    %v5690 = vpack.c.b16 %v5640, %v5638
    %v5691 = vpack.c.b16 %v5643, %v5641
    %v5692 = vpack.c.b16 %v5644, %v5642
    %v5693 = vpack.c.b16 %v5647, %v5645
    %v5694 = vpack.c.b16 %v5648, %v5646
    %v5695 = vpack.c.b16 %v5651, %v5649
    %v5696 = vpack.c.b16 %v5652, %v5650
    %v5697 = vpack.c.b16 %v5655, %v5653
    %v5698 = vpack.c.b16 %v5656, %v5654
    %v5699 = vpack.c.b16 %v5659, %v5657
    %v5700 = vpack.c.b16 %v5660, %v5658
    %v5701 = vpack.c.b16 %v5663, %v5661
    %v5702 = vpack.c.b16 %v5664, %v5662
    %v5703 = vpack.c.b16 %v5667, %v5665
    %v5704 = vpack.c.b16 %v5668, %v5666
    %v5705 = vpack.c.b16 %v5671, %v5669
    %v5706 = vpack.c.b16 %v5672, %v5670
    %v5707 = vpack.c.b16 %v5675, %v5673
    %v5708 = vpack.c.b16 %v5676, %v5674
    %5741 = vmatprep.subr.bf16.mxu0 %v5678
    %5742 = vmatpush1.bf16.msra.mxu0 %v5677
    %5743 = vmatprep.subr.bf16.mxu0 %v5680
    %5744 = vmatpush1.bf16.msra.mxu0 %v5679
    %5745 = vmatprep.subr.bf16.mxu0 %v5682
    %5746 = vmatpush1.bf16.msra.mxu0 %v5681
    %5747 = vmatprep.subr.bf16.mxu0 %v5684
    %5748 = vmatpush1.bf16.msra.mxu0 %v5683
    %5749 = vmatprep.subr.bf16.mxu0 %v5686
    %5750 = vmatpush1.bf16.msra.mxu0 %v5685
    %5751 = vmatprep.subr.bf16.mxu0 %v5688
    %5752 = vmatpush1.bf16.msra.mxu0 %v5687
    %5753 = vmatprep.subr.bf16.mxu0 %v5690
    %5754 = vmatpush1.bf16.msra.mxu0 %v5689
    %5755 = vmatprep.subr.bf16.mxu0 %v5692
    %5756 = vmatpush1.bf16.msra.mxu0 %v5691
    %5757 = vmatprep.subr.bf16.mxu0 %v5694
    %5758 = vmatpush1.bf16.msra.mxu0 %v5693
    %5759 = vmatprep.subr.bf16.mxu0 %v5696
    %5760 = vmatpush1.bf16.msra.mxu0 %v5695
    %5761 = vmatprep.subr.bf16.mxu0 %v5698
    %5762 = vmatpush1.bf16.msra.mxu0 %v5697
    %5763 = vmatprep.subr.bf16.mxu0 %v5700
    %5764 = vmatpush1.bf16.msra.mxu0 %v5699
    %5765 = vmatprep.subr.bf16.mxu0 %v5702
    %5766 = vmatpush1.bf16.msra.mxu0 %v5701
    %5767 = vmatprep.subr.bf16.mxu0 %v5704
    %5768 = vmatpush1.bf16.msra.mxu0 %v5703
    %5769 = vmatprep.subr.bf16.mxu0 %v5706
    %5770 = vmatpush1.bf16.msra.mxu0 %v5705
    %5771 = vmatprep.subr.bf16.mxu0 %v5708
    %5772 = vmatpush1.bf16.msra.mxu0 %v5707
    %5773 = vmatprep.mubr.bf16.mxu0 %v5536
    %5774 = vmatmul.mubr.bf16.gmra.mrb[0].mxu0 %v5535
    %v5775 = vpop.f32.mrb[0].mxu0
    %v5776 = vadd.f32 %v5574, %v5775
    %v5777 = vpop.f32.mrb[0].mxu0
    %v5778 = vadd.f32 %v5578, %v5777
    %v5779 = vpop.f32.mrb[0].mxu0
    %v5780 = vpop.f32.mrb[0].mxu0
    %5781 = vdwg.mxu0
    %v5782 = vunpack.c.l.bf16 %v5286
    %v5783 = vunpack.c.l.bf16 %v5287
    %v5784 = vadd.f32 %v5776, %v5782
    %v5785 = vadd.f32 %v5778, %v5783
    %v5786 = vmax.f32 %v5784, 0.0
    %v5787 = vmax.f32 %v5785, 0.0
    %v5788 = vpack.c.bf16 %v5786, %v5786
    %v5789 = vpack.c.bf16 %v5787, %v5787
    %v5790 = vld [vmem:[%s37] sm:$0xf]
    %v5791 = vld [vmem:[%s37 + $0x4] sm:$0xf]
    %v5792 = vld [vmem:[%s37 + $0x8] sm:$0xf]
    %v5793 = vld [vmem:[%s37 + $0xc] sm:$0xf]
    %v5794 = vld [vmem:[%s37 + $0x10] sm:$0xf]
    %v5795 = vld [vmem:[%s37 + $0x14] sm:$0xf]
    %v5796 = vld [vmem:[%s37 + $0x18] sm:$0xf]
    %v5797 = vld [vmem:[%s37 + $0x1c] sm:$0xf]
    %v5798 = vld [vmem:[%s37 + $0x20] sm:$0xf]
    %v5799 = vld [vmem:[%s37 + $0x24] sm:$0xf]
    %v5800 = vld [vmem:[%s37 + $0x28] sm:$0xf]
    %v5801 = vld [vmem:[%s37 + $0x2c] sm:$0xf]
    %v5802 = vld [vmem:[%s37 + $0x30] sm:$0xf]
    %v5803 = vld [vmem:[%s37 + $0x34] sm:$0xf]
    %v5804 = vld [vmem:[%s37 + $0x38] sm:$0xf]
    %v5805 = vld [vmem:[%s37 + $0x3c] sm:$0xf]
    %v5806 = vld [vmem:[%s37 + $0x40] sm:$0xf]
    %v5807 = vld [vmem:[%s37 + $0x44] sm:$0xf]
    %v5808 = vld [vmem:[%s37 + $0x48] sm:$0xf]
    %v5809 = vld [vmem:[%s37 + $0x4c] sm:$0xf]
    %v5810 = vld [vmem:[%s37 + $0x50] sm:$0xf]
    %v5811 = vld [vmem:[%s37 + $0x54] sm:$0xf]
    %v5812 = vld [vmem:[%s37 + $0x58] sm:$0xf]
    %v5813 = vld [vmem:[%s37 + $0x5c] sm:$0xf]
    %v5814 = vld [vmem:[%s37 + $0x60] sm:$0xf]
    %v5815 = vld [vmem:[%s37 + $0x64] sm:$0xf]
    %v5816 = vld [vmem:[%s37 + $0x68] sm:$0xf]
    %v5817 = vld [vmem:[%s37 + $0x6c] sm:$0xf]
    %v5818 = vld [vmem:[%s37 + $0x70] sm:$0xf]
    %v5819 = vld [vmem:[%s37 + $0x74] sm:$0xf]
    %v5820 = vld [vmem:[%s37 + $0x78] sm:$0xf]
    %v5821 = vld [vmem:[%s37 + $0x7c] sm:$0xf]
    %v5822 = vld [vmem:[%s39] sm:$0x1]
    %v5824 = vlaneseq
    %v5825 = vshrl.u32 %v5824, 7
    %v5826 = vsub.s32 0, %v5825
    %v5827 = vrot.slane %v5822, %v5826
    %v5861 = vunpack.c.l.b16 %v5790
    %v5862 = vunpack.c.l.b16 %v5791
    %v5863 = vunpack.c.l.b16 %v5792
    %v5864 = vunpack.c.l.b16 %v5793
    %v5865 = vunpack.c.l.b16 %v5794
    %v5866 = vunpack.c.l.b16 %v5795
    %v5867 = vunpack.c.l.b16 %v5796
    %v5868 = vunpack.c.l.b16 %v5797
    %v5869 = vunpack.c.l.b16 %v5798
    %v5870 = vunpack.c.l.b16 %v5799
    %v5871 = vunpack.c.l.b16 %v5800
    %v5872 = vunpack.c.l.b16 %v5801
    %v5873 = vunpack.c.l.b16 %v5802
    %v5874 = vunpack.c.l.b16 %v5803
    %v5875 = vunpack.c.l.b16 %v5804
    %v5876 = vunpack.c.l.b16 %v5805
    %v5877 = vunpack.c.l.b16 %v5806
    %v5878 = vunpack.c.l.b16 %v5807
    %v5879 = vunpack.c.l.b16 %v5808
    %v5880 = vunpack.c.l.b16 %v5809
    %v5881 = vunpack.c.l.b16 %v5810
    %v5882 = vunpack.c.l.b16 %v5811
    %v5883 = vunpack.c.l.b16 %v5812
    %v5884 = vunpack.c.l.b16 %v5813
    %v5885 = vunpack.c.l.b16 %v5814
    %v5886 = vunpack.c.l.b16 %v5815
    %v5887 = vunpack.c.l.b16 %v5816
    %v5888 = vunpack.c.l.b16 %v5817
    %v5889 = vunpack.c.l.b16 %v5818
    %v5890 = vunpack.c.l.b16 %v5819
    %v5891 = vunpack.c.l.b16 %v5820
    %v5892 = vunpack.c.l.b16 %v5821
    %v5893 = vpack.c.b16 %v5862, %v5861
    %v5894 = vpack.c.b16 %v5864, %v5863
    %v5895 = vpack.c.b16 %v5866, %v5865
    %v5896 = vpack.c.b16 %v5868, %v5867
    %v5897 = vpack.c.b16 %v5870, %v5869
    %v5898 = vpack.c.b16 %v5872, %v5871
    %v5899 = vpack.c.b16 %v5874, %v5873
    %v5900 = vpack.c.b16 %v5876, %v5875
    %v5901 = vpack.c.b16 %v5878, %v5877
    %v5902 = vpack.c.b16 %v5880, %v5879
    %v5903 = vpack.c.b16 %v5882, %v5881
    %v5904 = vpack.c.b16 %v5884, %v5883
    %v5905 = vpack.c.b16 %v5886, %v5885
    %v5906 = vpack.c.b16 %v5888, %v5887
    %v5907 = vpack.c.b16 %v5890, %v5889
    %v5908 = vpack.c.b16 %v5892, %v5891
    %5925 = vmatprep.subr.bf16.mxu0 0
    %5926 = vmatpush1.bf16.msra.mxu0 %v5893
    %5927 = vmatprep.subr.bf16.mxu0 0
    %5928 = vmatpush1.bf16.msra.mxu0 %v5894
    %5929 = vmatprep.subr.bf16.mxu0 0
    %5930 = vmatpush1.bf16.msra.mxu0 %v5895
    %5931 = vmatprep.subr.bf16.mxu0 0
    %5932 = vmatpush1.bf16.msra.mxu0 %v5896
    %5933 = vmatprep.subr.bf16.mxu0 0
    %5934 = vmatpush1.bf16.msra.mxu0 %v5897
    %5935 = vmatprep.subr.bf16.mxu0 0
    %5936 = vmatpush1.bf16.msra.mxu0 %v5898
    %5937 = vmatprep.subr.bf16.mxu0 0
    %5938 = vmatpush1.bf16.msra.mxu0 %v5899
    %5939 = vmatprep.subr.bf16.mxu0 0
    %5940 = vmatpush1.bf16.msra.mxu0 %v5900
    %5941 = vmatprep.subr.bf16.mxu0 0
    %5942 = vmatpush1.bf16.msra.mxu0 %v5901
    %5943 = vmatprep.subr.bf16.mxu0 0
    %5944 = vmatpush1.bf16.msra.mxu0 %v5902
    %5945 = vmatprep.subr.bf16.mxu0 0
    %5946 = vmatpush1.bf16.msra.mxu0 %v5903
    %5947 = vmatprep.subr.bf16.mxu0 0
    %5948 = vmatpush1.bf16.msra.mxu0 %v5904
    %5949 = vmatprep.subr.bf16.mxu0 0
    %5950 = vmatpush1.bf16.msra.mxu0 %v5905
    %5951 = vmatprep.subr.bf16.mxu0 0
    %5952 = vmatpush1.bf16.msra.mxu0 %v5906
    %5953 = vmatprep.subr.bf16.mxu0 0
    %5954 = vmatpush1.bf16.msra.mxu0 %v5907
    %5955 = vmatprep.subr.bf16.mxu0 0
    %5956 = vmatpush1.bf16.msra.mxu0 %v5908
    %5957 = vmatprep.mubr.bf16.mxu0 %v5789
    %5958 = vmatmul.mubr.bf16.gmra.mrb[0].mxu0 %v5788
    %v5959 = vpop.f32.mrb[0].mxu0
    %v5960 = vadd.f32 %v5827, %v5959
    %v5961 = vpop.f32.mrb[0].mxu0
    %v5962 = vpop.f32.mrb[0].mxu0
    %v5963 = vpop.f32.mrb[0].mxu0
    %5964 = vdwg.mxu0
    %v5965 = vmax.f32 %v5960, 0.0
    %v5966 = vpack.c.bf16 %v5965, %v5965
    %v5967 = vld [vmem:[%s41] sm:$0xf]
    %v5968 = vld [vmem:[%s41 + $0x4] sm:$0xf]
    %v5969 = vld [vmem:[%s41 + $0x8] sm:$0xf]
    %v5970 = vld [vmem:[%s41 + $0xc] sm:$0xf]
    %v5971 = vld [vmem:[%s41 + $0x10] sm:$0xf]
    %v5972 = vld [vmem:[%s41 + $0x14] sm:$0xf]
    %v5973 = vld [vmem:[%s41 + $0x18] sm:$0xf]
    %v5974 = vld [vmem:[%s41 + $0x1c] sm:$0xf]
    %v5975 = vld [vmem:[%s41 + $0x20] sm:$0xf]
    %v5976 = vld [vmem:[%s41 + $0x24] sm:$0xf]
    %v5977 = vld [vmem:[%s41 + $0x28] sm:$0xf]
    %v5978 = vld [vmem:[%s41 + $0x2c] sm:$0xf]
    %v5979 = vld [vmem:[%s41 + $0x30] sm:$0xf]
    %v5980 = vld [vmem:[%s41 + $0x34] sm:$0xf]
    %v5981 = vld [vmem:[%s41 + $0x38] sm:$0xf]
    %v5982 = vld [vmem:[%s41 + $0x3c] sm:$0xf]
    %v5983 = vld [vmem:[%s43] sm:$0x1]
    %v5985 = vlaneseq
    %v5986 = vshrl.u32 %v5985, 7
    %v5987 = vsub.s32 0, %v5986
    %v5988 = vrot.slane %v5983, %v5987
    %v6006 = vunpack.c.l.b16 %v5967
    %v6007 = vunpack.c.l.b16 %v5968
    %v6008 = vunpack.c.l.b16 %v5969
    %v6009 = vunpack.c.l.b16 %v5970
    %v6010 = vunpack.c.l.b16 %v5971
    %v6011 = vunpack.c.l.b16 %v5972
    %v6012 = vunpack.c.l.b16 %v5973
    %v6013 = vunpack.c.l.b16 %v5974
    %v6014 = vunpack.c.l.b16 %v5975
    %v6015 = vunpack.c.l.b16 %v5976
    %v6016 = vunpack.c.l.b16 %v5977
    %v6017 = vunpack.c.l.b16 %v5978
    %v6018 = vunpack.c.l.b16 %v5979
    %v6019 = vunpack.c.l.b16 %v5980
    %v6020 = vunpack.c.l.b16 %v5981
    %v6021 = vunpack.c.l.b16 %v5982
    %v6022 = vpack.c.b16 %v6007, %v6006
    %v6023 = vpack.c.b16 %v6009, %v6008
    %v6024 = vpack.c.b16 %v6011, %v6010
    %v6025 = vpack.c.b16 %v6013, %v6012
    %v6026 = vpack.c.b16 %v6015, %v6014
    %v6027 = vpack.c.b16 %v6017, %v6016
    %v6028 = vpack.c.b16 %v6019, %v6018
    %v6029 = vpack.c.b16 %v6021, %v6020
    %6038 = vmatprep.subr.bf16.mxu0 0
    %6039 = vmatpush1.bf16.msra.mxu0 %v6022
    %6040 = vmatprep.subr.bf16.mxu0 0
    %6041 = vmatpush1.bf16.msra.mxu0 %v6023
    %6042 = vmatprep.subr.bf16.mxu0 0
    %6043 = vmatpush1.bf16.msra.mxu0 %v6024
    %6044 = vmatprep.subr.bf16.mxu0 0
    %6045 = vmatpush1.bf16.msra.mxu0 %v6025
    %6046 = vmatprep.subr.bf16.mxu0 0
    %6047 = vmatpush1.bf16.msra.mxu0 %v6026
    %6048 = vmatprep.subr.bf16.mxu0 0
    %6049 = vmatpush1.bf16.msra.mxu0 %v6027
    %6050 = vmatprep.subr.bf16.mxu0 0
    %6051 = vmatpush1.bf16.msra.mxu0 %v6028
    %6052 = vmatprep.subr.bf16.mxu0 0
    %6053 = vmatpush1.bf16.msra.mxu0 %v6029
    %6054 = vmatprep.subr.bf16.mxu0 0
    %6055 = vmatpush1.bf16.msra.mxu0 0
    %6056 = vmatprep.subr.bf16.mxu0 0
    %6057 = vmatpush1.bf16.msra.mxu0 0
    %6058 = vmatprep.subr.bf16.mxu0 0
    %6059 = vmatpush1.bf16.msra.mxu0 0
    %6060 = vmatprep.subr.bf16.mxu0 0
    %6061 = vmatpush1.bf16.msra.mxu0 0
    %6062 = vmatprep.subr.bf16.mxu0 0
    %6063 = vmatpush1.bf16.msra.mxu0 0
    %6064 = vmatprep.subr.bf16.mxu0 0
    %6065 = vmatpush1.bf16.msra.mxu0 0
    %6066 = vmatprep.subr.bf16.mxu0 0
    %6067 = vmatpush1.bf16.msra.mxu0 0
    %6068 = vmatprep.subr.bf16.mxu0 0
    %6069 = vmatpush1.bf16.msra.mxu0 0
    %6070 = vmatprep.mubr.bf16.mxu0 0
    %6071 = vmatmul.mubr.bf16.gmra.mrb[0].mxu0 %v5966
    %v6072 = vpop.f32.mrb[0].mxu0
    %v6073 = vadd.f32 %v5988, %v6072
    %v6074 = vpop.f32.mrb[0].mxu0
    %v6075 = vpop.f32.mrb[0].mxu0
    %v6076 = vpop.f32.mrb[0].mxu0
    %6077 = vdwg.mxu0
    %v6078 = vld [vmem:[%s45] sm:$0xf]
    %v6079 = vld [vmem:[%s45 + $0x4] sm:$0xf]
    %v6080 = vld [vmem:[%s45 + $0x8] sm:$0xf]
    %v6081 = vld [vmem:[%s45 + $0xc] sm:$0xf]
    %v6082 = vld [vmem:[%s45 + $0x10] sm:$0xf]
    %v6083 = vld [vmem:[%s45 + $0x14] sm:$0xf]
    %v6084 = vld [vmem:[%s45 + $0x18] sm:$0xf]
    %v6085 = vld [vmem:[%s45 + $0x1c] sm:$0xf]
    %v6086 = vld [vmem:[%s45 + $0x20] sm:$0xf]
    %v6087 = vld [vmem:[%s45 + $0x24] sm:$0xf]
    %v6088 = vld [vmem:[%s45 + $0x28] sm:$0xf]
    %v6089 = vld [vmem:[%s45 + $0x2c] sm:$0xf]
    %v6090 = vld [vmem:[%s45 + $0x30] sm:$0xf]
    %v6091 = vld [vmem:[%s45 + $0x34] sm:$0xf]
    %v6092 = vld [vmem:[%s45 + $0x38] sm:$0xf]
    %v6093 = vld [vmem:[%s45 + $0x3c] sm:$0xf]
    %v6094 = vld [vmem:[%s45 + $0x40] sm:$0xf]
    %v6095 = vld [vmem:[%s45 + $0x44] sm:$0xf]
    %v6096 = vld [vmem:[%s45 + $0x48] sm:$0xf]
    %v6097 = vld [vmem:[%s45 + $0x4c] sm:$0xf]
    %v6098 = vld [vmem:[%s45 + $0x50] sm:$0xf]
    %v6099 = vld [vmem:[%s45 + $0x54] sm:$0xf]
    %v6100 = vld [vmem:[%s45 + $0x58] sm:$0xf]
    %v6101 = vld [vmem:[%s45 + $0x5c] sm:$0xf]
    %v6102 = vld [vmem:[%s45 + $0x60] sm:$0xf]
    %v6103 = vld [vmem:[%s45 + $0x64] sm:$0xf]
    %v6104 = vld [vmem:[%s45 + $0x68] sm:$0xf]
    %v6105 = vld [vmem:[%s45 + $0x6c] sm:$0xf]
    %v6106 = vld [vmem:[%s45 + $0x70] sm:$0xf]
    %v6107 = vld [vmem:[%s45 + $0x74] sm:$0xf]
    %v6108 = vld [vmem:[%s45 + $0x78] sm:$0xf]
    %v6109 = vld [vmem:[%s45 + $0x7c] sm:$0xf]
    %v6142 = vunpack.c.l.b16 %v6078
    %v6143 = vunpack.c.l.b16 %v6079
    %v6144 = vunpack.c.l.b16 %v6080
    %v6145 = vunpack.c.l.b16 %v6081
    %v6146 = vunpack.c.l.b16 %v6082
    %v6147 = vunpack.c.l.b16 %v6083
    %v6148 = vunpack.c.l.b16 %v6084
    %v6149 = vunpack.c.l.b16 %v6085
    %v6150 = vunpack.c.l.b16 %v6086
    %v6151 = vunpack.c.l.b16 %v6087
    %v6152 = vunpack.c.l.b16 %v6088
    %v6153 = vunpack.c.l.b16 %v6089
    %v6154 = vunpack.c.l.b16 %v6090
    %v6155 = vunpack.c.l.b16 %v6091
    %v6156 = vunpack.c.l.b16 %v6092
    %v6157 = vunpack.c.l.b16 %v6093
    %v6158 = vunpack.c.l.b16 %v6094
    %v6159 = vunpack.c.l.b16 %v6095
    %v6160 = vunpack.c.l.b16 %v6096
    %v6161 = vunpack.c.l.b16 %v6097
    %v6162 = vunpack.c.l.b16 %v6098
    %v6163 = vunpack.c.l.b16 %v6099
    %v6164 = vunpack.c.l.b16 %v6100
    %v6165 = vunpack.c.l.b16 %v6101
    %v6166 = vunpack.c.l.b16 %v6102
    %v6167 = vunpack.c.l.b16 %v6103
    %v6168 = vunpack.c.l.b16 %v6104
    %v6169 = vunpack.c.l.b16 %v6105
    %v6170 = vunpack.c.l.b16 %v6106
    %v6171 = vunpack.c.l.b16 %v6107
    %v6172 = vunpack.c.l.b16 %v6108
    %v6173 = vunpack.c.l.b16 %v6109
    %v6174 = vpack.c.b16 %v6143, %v6142
    %v6175 = vpack.c.b16 %v6145, %v6144
    %v6176 = vpack.c.b16 %v6147, %v6146
    %v6177 = vpack.c.b16 %v6149, %v6148
    %v6178 = vpack.c.b16 %v6151, %v6150
    %v6179 = vpack.c.b16 %v6153, %v6152
    %v6180 = vpack.c.b16 %v6155, %v6154
    %v6181 = vpack.c.b16 %v6157, %v6156
    %v6182 = vpack.c.b16 %v6159, %v6158
    %v6183 = vpack.c.b16 %v6161, %v6160
    %v6184 = vpack.c.b16 %v6163, %v6162
    %v6185 = vpack.c.b16 %v6165, %v6164
    %v6186 = vpack.c.b16 %v6167, %v6166
    %v6187 = vpack.c.b16 %v6169, %v6168
    %v6188 = vpack.c.b16 %v6171, %v6170
    %v6189 = vpack.c.b16 %v6173, %v6172
    %6206 = vmatprep.subr.bf16.mxu0 0
    %6207 = vmatpush1.bf16.msra.mxu0 %v6174
    %6208 = vmatprep.subr.bf16.mxu0 0
    %6209 = vmatpush1.bf16.msra.mxu0 %v6175
    %6210 = vmatprep.subr.bf16.mxu0 0
    %6211 = vmatpush1.bf16.msra.mxu0 %v6176
    %6212 = vmatprep.subr.bf16.mxu0 0
    %6213 = vmatpush1.bf16.msra.mxu0 %v6177
    %6214 = vmatprep.subr.bf16.mxu0 0
    %6215 = vmatpush1.bf16.msra.mxu0 %v6178
    %6216 = vmatprep.subr.bf16.mxu0 0
    %6217 = vmatpush1.bf16.msra.mxu0 %v6179
    %6218 = vmatprep.subr.bf16.mxu0 0
    %6219 = vmatpush1.bf16.msra.mxu0 %v6180
    %6220 = vmatprep.subr.bf16.mxu0 0
    %6221 = vmatpush1.bf16.msra.mxu0 %v6181
    %6222 = vmatprep.subr.bf16.mxu0 0
    %6223 = vmatpush1.bf16.msra.mxu0 %v6182
    %6224 = vmatprep.subr.bf16.mxu0 0
    %6225 = vmatpush1.bf16.msra.mxu0 %v6183
    %6226 = vmatprep.subr.bf16.mxu0 0
    %6227 = vmatpush1.bf16.msra.mxu0 %v6184
    %6228 = vmatprep.subr.bf16.mxu0 0
    %6229 = vmatpush1.bf16.msra.mxu0 %v6185
    %6230 = vmatprep.subr.bf16.mxu0 0
    %6231 = vmatpush1.bf16.msra.mxu0 %v6186
    %6232 = vmatprep.subr.bf16.mxu0 0
    %6233 = vmatpush1.bf16.msra.mxu0 %v6187
    %6234 = vmatprep.subr.bf16.mxu0 0
    %6235 = vmatpush1.bf16.msra.mxu0 %v6188
    %6236 = vmatprep.subr.bf16.mxu0 0
    %6237 = vmatpush1.bf16.msra.mxu0 %v6189
    %6238 = vmatprep.mubr.bf16.mxu0 %v5789
    %6239 = vmatmul.mubr.bf16.gmra.mrb[0].mxu0 %v5788
    %v6240 = vpop.f32.mrb[0].mxu0
    %v6241 = vadd.f32 0.0, %v6240
    %v6242 = vpop.f32.mrb[0].mxu0
    %v6243 = vpop.f32.mrb[0].mxu0
    %v6244 = vpop.f32.mrb[0].mxu0
    %6245 = vdwg.mxu0
    %v6246 = vadd.f32 %v6073, %v6241
    %v6247 = vmax.f32 %v6246, 0.0
    %v6248 = vpack.c.bf16 %v6247, %v6247
    %v6249 = vld [vmem:[%s47] sm:$0xf]
    %v6250 = vld [vmem:[%s47 + $0x4] sm:$0xf]
    %v6251 = vld [vmem:[%s47 + $0x8] sm:$0xf]
    %v6252 = vld [vmem:[%s47 + $0xc] sm:$0xf]
    %v6253 = vld [vmem:[%s47 + $0x10] sm:$0xf]
    %v6254 = vld [vmem:[%s47 + $0x14] sm:$0xf]
    %v6255 = vld [vmem:[%s47 + $0x18] sm:$0xf]
    %v6256 = vld [vmem:[%s47 + $0x1c] sm:$0xf]
    %v6257 = vld [vmem:[%s47 + $0x20] sm:$0xf]
    %v6258 = vld [vmem:[%s47 + $0x24] sm:$0xf]
    %v6259 = vld [vmem:[%s47 + $0x28] sm:$0xf]
    %v6260 = vld [vmem:[%s47 + $0x2c] sm:$0xf]
    %v6261 = vld [vmem:[%s47 + $0x30] sm:$0xf]
    %v6262 = vld [vmem:[%s47 + $0x34] sm:$0xf]
    %v6263 = vld [vmem:[%s47 + $0x38] sm:$0xf]
    %v6264 = vld [vmem:[%s47 + $0x3c] sm:$0xf]
    %v6265 = vld [vmem:[%s49] sm:$0x1]
    %v6267 = vlaneseq
    %v6268 = vshrl.u32 %v6267, 7
    %v6269 = vsub.s32 0, %v6268
    %v6270 = vrot.slane %v6265, %v6269
    %v6288 = vunpack.c.l.b16 %v6249
    %v6289 = vunpack.c.l.b16 %v6250
    %v6290 = vunpack.c.l.b16 %v6251
    %v6291 = vunpack.c.l.b16 %v6252
    %v6292 = vunpack.c.l.b16 %v6253
    %v6293 = vunpack.c.l.b16 %v6254
    %v6294 = vunpack.c.l.b16 %v6255
    %v6295 = vunpack.c.l.b16 %v6256
    %v6296 = vunpack.c.l.b16 %v6257
    %v6297 = vunpack.c.l.b16 %v6258
    %v6298 = vunpack.c.l.b16 %v6259
    %v6299 = vunpack.c.l.b16 %v6260
    %v6300 = vunpack.c.l.b16 %v6261
    %v6301 = vunpack.c.l.b16 %v6262
    %v6302 = vunpack.c.l.b16 %v6263
    %v6303 = vunpack.c.l.b16 %v6264
    %v6304 = vpack.c.b16 %v6289, %v6288
    %v6305 = vpack.c.b16 %v6291, %v6290
    %v6306 = vpack.c.b16 %v6293, %v6292
    %v6307 = vpack.c.b16 %v6295, %v6294
    %v6308 = vpack.c.b16 %v6297, %v6296
    %v6309 = vpack.c.b16 %v6299, %v6298
    %v6310 = vpack.c.b16 %v6301, %v6300
    %v6311 = vpack.c.b16 %v6303, %v6302
    %6320 = vmatprep.subr.bf16.mxu0 0
    %6321 = vmatpush1.bf16.msra.mxu0 %v6304
    %6322 = vmatprep.subr.bf16.mxu0 0
    %6323 = vmatpush1.bf16.msra.mxu0 %v6305
    %6324 = vmatprep.subr.bf16.mxu0 0
    %6325 = vmatpush1.bf16.msra.mxu0 %v6306
    %6326 = vmatprep.subr.bf16.mxu0 0
    %6327 = vmatpush1.bf16.msra.mxu0 %v6307
    %6328 = vmatprep.subr.bf16.mxu0 0
    %6329 = vmatpush1.bf16.msra.mxu0 %v6308
    %6330 = vmatprep.subr.bf16.mxu0 0
    %6331 = vmatpush1.bf16.msra.mxu0 %v6309
    %6332 = vmatprep.subr.bf16.mxu0 0
    %6333 = vmatpush1.bf16.msra.mxu0 %v6310
    %6334 = vmatprep.subr.bf16.mxu0 0
    %6335 = vmatpush1.bf16.msra.mxu0 %v6311
    %6336 = vmatprep.subr.bf16.mxu0 0
    %6337 = vmatpush1.bf16.msra.mxu0 0
    %6338 = vmatprep.subr.bf16.mxu0 0
    %6339 = vmatpush1.bf16.msra.mxu0 0
    %6340 = vmatprep.subr.bf16.mxu0 0
    %6341 = vmatpush1.bf16.msra.mxu0 0
    %6342 = vmatprep.subr.bf16.mxu0 0
    %6343 = vmatpush1.bf16.msra.mxu0 0
    %6344 = vmatprep.subr.bf16.mxu0 0
    %6345 = vmatpush1.bf16.msra.mxu0 0
    %6346 = vmatprep.subr.bf16.mxu0 0
    %6347 = vmatpush1.bf16.msra.mxu0 0
    %6348 = vmatprep.subr.bf16.mxu0 0
    %6349 = vmatpush1.bf16.msra.mxu0 0
    %6350 = vmatprep.subr.bf16.mxu0 0
    %6351 = vmatpush1.bf16.msra.mxu0 0
    %6352 = vmatprep.mubr.bf16.mxu0 0
    %6353 = vmatmul.mubr.bf16.gmra.mrb[0].mxu0 %v6248
    %v6354 = vpop.f32.mrb[0].mxu0
    %v6355 = vadd.f32 %v6270, %v6354
    %v6356 = vpop.f32.mrb[0].mxu0
    %v6357 = vpop.f32.mrb[0].mxu0
    %v6358 = vpop.f32.mrb[0].mxu0
    %6359 = vdwg.mxu0
    %v6360 = vmax.f32 %v6355, 0.0
    %v6361 = vpack.c.bf16 %v6360, %v6360
    %v6362 = vld [vmem:[%s51] sm:$0xf]
    %v6363 = vld [vmem:[%s51 + $0x4] sm:$0xf]
    %v6364 = vld [vmem:[%s51 + $0x8] sm:$0xf]
    %v6365 = vld [vmem:[%s51 + $0xc] sm:$0xf]
    %v6366 = vld [vmem:[%s51 + $0x10] sm:$0xf]
    %v6367 = vld [vmem:[%s51 + $0x14] sm:$0xf]
    %v6368 = vld [vmem:[%s51 + $0x18] sm:$0xf]
    %v6369 = vld [vmem:[%s51 + $0x1c] sm:$0xf]
    %v6370 = vld [vmem:[%s51 + $0x20] sm:$0xf]
    %v6371 = vld [vmem:[%s51 + $0x24] sm:$0xf]
    %v6372 = vld [vmem:[%s51 + $0x28] sm:$0xf]
    %v6373 = vld [vmem:[%s51 + $0x2c] sm:$0xf]
    %v6374 = vld [vmem:[%s51 + $0x30] sm:$0xf]
    %v6375 = vld [vmem:[%s51 + $0x34] sm:$0xf]
    %v6376 = vld [vmem:[%s51 + $0x38] sm:$0xf]
    %v6377 = vld [vmem:[%s51 + $0x3c] sm:$0xf]
    %v6378 = vld [vmem:[%s53] sm:$0x1]
    %v6380 = vlaneseq
    %v6381 = vshrl.u32 %v6380, 7
    %v6382 = vsub.s32 0, %v6381
    %v6383 = vrot.slane %v6378, %v6382
    %v6401 = vunpack.c.l.b16 %v6362
    %v6402 = vunpack.c.l.b16 %v6363
    %v6403 = vunpack.c.l.b16 %v6364
    %v6404 = vunpack.c.l.b16 %v6365
    %v6405 = vunpack.c.l.b16 %v6366
    %v6406 = vunpack.c.l.b16 %v6367
    %v6407 = vunpack.c.l.b16 %v6368
    %v6408 = vunpack.c.l.b16 %v6369
    %v6409 = vunpack.c.l.b16 %v6370
    %v6410 = vunpack.c.l.b16 %v6371
    %v6411 = vunpack.c.l.b16 %v6372
    %v6412 = vunpack.c.l.b16 %v6373
    %v6413 = vunpack.c.l.b16 %v6374
    %v6414 = vunpack.c.l.b16 %v6375
    %v6415 = vunpack.c.l.b16 %v6376
    %v6416 = vunpack.c.l.b16 %v6377
    %v6417 = vpack.c.b16 %v6402, %v6401
    %v6418 = vpack.c.b16 %v6404, %v6403
    %v6419 = vpack.c.b16 %v6406, %v6405
    %v6420 = vpack.c.b16 %v6408, %v6407
    %v6421 = vpack.c.b16 %v6410, %v6409
    %v6422 = vpack.c.b16 %v6412, %v6411
    %v6423 = vpack.c.b16 %v6414, %v6413
    %v6424 = vpack.c.b16 %v6416, %v6415
    %6433 = vmatprep.subr.bf16.mxu0 0
    %6434 = vmatpush1.bf16.msra.mxu0 %v6417
    %6435 = vmatprep.subr.bf16.mxu0 0
    %6436 = vmatpush1.bf16.msra.mxu0 %v6418
    %6437 = vmatprep.subr.bf16.mxu0 0
    %6438 = vmatpush1.bf16.msra.mxu0 %v6419
    %6439 = vmatprep.subr.bf16.mxu0 0
    %6440 = vmatpush1.bf16.msra.mxu0 %v6420
    %6441 = vmatprep.subr.bf16.mxu0 0
    %6442 = vmatpush1.bf16.msra.mxu0 %v6421
    %6443 = vmatprep.subr.bf16.mxu0 0
    %6444 = vmatpush1.bf16.msra.mxu0 %v6422
    %6445 = vmatprep.subr.bf16.mxu0 0
    %6446 = vmatpush1.bf16.msra.mxu0 %v6423
    %6447 = vmatprep.subr.bf16.mxu0 0
    %6448 = vmatpush1.bf16.msra.mxu0 %v6424
    %6449 = vmatprep.subr.bf16.mxu0 0
    %6450 = vmatpush1.bf16.msra.mxu0 0
    %6451 = vmatprep.subr.bf16.mxu0 0
    %6452 = vmatpush1.bf16.msra.mxu0 0
    %6453 = vmatprep.subr.bf16.mxu0 0
    %6454 = vmatpush1.bf16.msra.mxu0 0
    %6455 = vmatprep.subr.bf16.mxu0 0
    %6456 = vmatpush1.bf16.msra.mxu0 0
    %6457 = vmatprep.subr.bf16.mxu0 0
    %6458 = vmatpush1.bf16.msra.mxu0 0
    %6459 = vmatprep.subr.bf16.mxu0 0
    %6460 = vmatpush1.bf16.msra.mxu0 0
    %6461 = vmatprep.subr.bf16.mxu0 0
    %6462 = vmatpush1.bf16.msra.mxu0 0
    %6463 = vmatprep.subr.bf16.mxu0 0
    %6464 = vmatpush1.bf16.msra.mxu0 0
    %6465 = vmatprep.mubr.bf16.mxu0 0
    %6466 = vmatmul.mubr.bf16.gmra.mrb[0].mxu0 %v6361
    %v6467 = vpop.f32.mrb[0].mxu0
    %v6468 = vadd.f32 %v6383, %v6467
    %v6469 = vpop.f32.mrb[0].mxu0
    %v6470 = vpop.f32.mrb[0].mxu0
    %v6471 = vpop.f32.mrb[0].mxu0
    %6472 = vdwg.mxu0
    %v6473 = vunpack.c.l.bf16 %v6248
    %v6474 = vadd.f32 %v6468, %v6473
    %v6475 = vmax.f32 %v6474, 0.0
    %v6476 = vpack.c.bf16 %v6475, %v6475
    %v6477 = vld [vmem:[%s55] sm:$0xf]
    %v6478 = vld [vmem:[%s55 + $0x4] sm:$0xf]
    %v6479 = vld [vmem:[%s55 + $0x8] sm:$0xf]
    %v6480 = vld [vmem:[%s55 + $0xc] sm:$0xf]
    %v6481 = vld [vmem:[%s55 + $0x10] sm:$0xf]
    %v6482 = vld [vmem:[%s55 + $0x14] sm:$0xf]
    %v6483 = vld [vmem:[%s55 + $0x18] sm:$0xf]
    %v6484 = vld [vmem:[%s55 + $0x1c] sm:$0xf]
    %v6485 = vld [vmem:[%s55 + $0x20] sm:$0xf]
    %v6486 = vld [vmem:[%s55 + $0x24] sm:$0xf]
    %v6487 = vld [vmem:[%s55 + $0x28] sm:$0xf]
    %v6488 = vld [vmem:[%s55 + $0x2c] sm:$0xf]
    %v6489 = vld [vmem:[%s55 + $0x30] sm:$0xf]
    %v6490 = vld [vmem:[%s55 + $0x34] sm:$0xf]
    %v6491 = vld [vmem:[%s55 + $0x38] sm:$0xf]
    %v6492 = vld [vmem:[%s55 + $0x3c] sm:$0xf]
    %v6493 = vld [vmem:[%s57] sm:$0x1]
    %v6495 = vlaneseq
    %v6496 = vshrl.u32 %v6495, 7
    %v6497 = vsub.s32 0, %v6496
    %v6498 = vrot.slane %v6493, %v6497
    %v6516 = vunpack.c.l.b16 %v6477
    %v6517 = vunpack.c.l.b16 %v6478
    %v6518 = vunpack.c.l.b16 %v6479
    %v6519 = vunpack.c.l.b16 %v6480
    %v6520 = vunpack.c.l.b16 %v6481
    %v6521 = vunpack.c.l.b16 %v6482
    %v6522 = vunpack.c.l.b16 %v6483
    %v6523 = vunpack.c.l.b16 %v6484
    %v6524 = vunpack.c.l.b16 %v6485
    %v6525 = vunpack.c.l.b16 %v6486
    %v6526 = vunpack.c.l.b16 %v6487
    %v6527 = vunpack.c.l.b16 %v6488
    %v6528 = vunpack.c.l.b16 %v6489
    %v6529 = vunpack.c.l.b16 %v6490
    %v6530 = vunpack.c.l.b16 %v6491
    %v6531 = vunpack.c.l.b16 %v6492
    %v6532 = vpack.c.b16 %v6517, %v6516
    %v6533 = vpack.c.b16 %v6519, %v6518
    %v6534 = vpack.c.b16 %v6521, %v6520
    %v6535 = vpack.c.b16 %v6523, %v6522
    %v6536 = vpack.c.b16 %v6525, %v6524
    %v6537 = vpack.c.b16 %v6527, %v6526
    %v6538 = vpack.c.b16 %v6529, %v6528
    %v6539 = vpack.c.b16 %v6531, %v6530
    %6548 = vmatprep.subr.bf16.mxu0 0
    %6549 = vmatpush1.bf16.msra.mxu0 %v6532
    %6550 = vmatprep.subr.bf16.mxu0 0
    %6551 = vmatpush1.bf16.msra.mxu0 %v6533
    %6552 = vmatprep.subr.bf16.mxu0 0
    %6553 = vmatpush1.bf16.msra.mxu0 %v6534
    %6554 = vmatprep.subr.bf16.mxu0 0
    %6555 = vmatpush1.bf16.msra.mxu0 %v6535
    %6556 = vmatprep.subr.bf16.mxu0 0
    %6557 = vmatpush1.bf16.msra.mxu0 %v6536
    %6558 = vmatprep.subr.bf16.mxu0 0
    %6559 = vmatpush1.bf16.msra.mxu0 %v6537
    %6560 = vmatprep.subr.bf16.mxu0 0
    %6561 = vmatpush1.bf16.msra.mxu0 %v6538
    %6562 = vmatprep.subr.bf16.mxu0 0
    %6563 = vmatpush1.bf16.msra.mxu0 %v6539
    %6564 = vmatprep.subr.bf16.mxu0 0
    %6565 = vmatpush1.bf16.msra.mxu0 0
    %6566 = vmatprep.subr.bf16.mxu0 0
    %6567 = vmatpush1.bf16.msra.mxu0 0
    %6568 = vmatprep.subr.bf16.mxu0 0
    %6569 = vmatpush1.bf16.msra.mxu0 0
    %6570 = vmatprep.subr.bf16.mxu0 0
    %6571 = vmatpush1.bf16.msra.mxu0 0
    %6572 = vmatprep.subr.bf16.mxu0 0
    %6573 = vmatpush1.bf16.msra.mxu0 0
    %6574 = vmatprep.subr.bf16.mxu0 0
    %6575 = vmatpush1.bf16.msra.mxu0 0
    %6576 = vmatprep.subr.bf16.mxu0 0
    %6577 = vmatpush1.bf16.msra.mxu0 0
    %6578 = vmatprep.subr.bf16.mxu0 0
    %6579 = vmatpush1.bf16.msra.mxu0 0
    %6580 = vmatprep.mubr.bf16.mxu0 0
    %6581 = vmatmul.mubr.bf16.gmra.mrb[0].mxu0 %v6476
    %v6582 = vpop.f32.mrb[0].mxu0
    %v6583 = vadd.f32 %v6498, %v6582
    %v6584 = vpop.f32.mrb[0].mxu0
    %v6585 = vpop.f32.mrb[0].mxu0
    %v6586 = vpop.f32.mrb[0].mxu0
    %6587 = vdwg.mxu0
    %v6588 = vmax.f32 %v6583, 0.0
    %v6589 = vpack.c.bf16 %v6588, %v6588
    %v6590 = vld [vmem:[%s59] sm:$0xf]
    %v6591 = vld [vmem:[%s59 + $0x4] sm:$0xf]
    %v6592 = vld [vmem:[%s59 + $0x8] sm:$0xf]
    %v6593 = vld [vmem:[%s59 + $0xc] sm:$0xf]
    %v6594 = vld [vmem:[%s59 + $0x10] sm:$0xf]
    %v6595 = vld [vmem:[%s59 + $0x14] sm:$0xf]
    %v6596 = vld [vmem:[%s59 + $0x18] sm:$0xf]
    %v6597 = vld [vmem:[%s59 + $0x1c] sm:$0xf]
    %v6598 = vld [vmem:[%s61] sm:$0x1]
    %v6600 = vlaneseq
    %v6601 = vshrl.u32 %v6600, 7
    %v6602 = vsub.s32 0, %v6601
    %v6603 = vrot.slane %v6598, %v6602
    %v6613 = vunpack.c.l.b16 %v6590
    %v6614 = vunpack.c.l.b16 %v6591
    %v6615 = vunpack.c.l.b16 %v6592
    %v6616 = vunpack.c.l.b16 %v6593
    %v6617 = vunpack.c.l.b16 %v6594
    %v6618 = vunpack.c.l.b16 %v6595
    %v6619 = vunpack.c.l.b16 %v6596
    %v6620 = vunpack.c.l.b16 %v6597
    %v6621 = vpack.c.b16 %v6614, %v6613
    %v6622 = vpack.c.b16 %v6616, %v6615
    %v6623 = vpack.c.b16 %v6618, %v6617
    %v6624 = vpack.c.b16 %v6620, %v6619
    %vm6629 = vcmask 523264
    %v6631 = vsel %vm6629, %v6589, 0
    %6633 = vmatprep.subr.bf16.mxu0 0
    %6634 = vmatpush1.bf16.msra.mxu0 %v6621
    %6635 = vmatprep.subr.bf16.mxu0 0
    %6636 = vmatpush1.bf16.msra.mxu0 %v6622
    %6637 = vmatprep.subr.bf16.mxu0 0
    %6638 = vmatpush1.bf16.msra.mxu0 %v6623
    %6639 = vmatprep.subr.bf16.mxu0 0
    %6640 = vmatpush1.bf16.msra.mxu0 %v6624
    %6641 = vmatprep.subr.bf16.mxu0 0
    %6642 = vmatpush1.bf16.msra.mxu0 0
    %6643 = vmatprep.subr.bf16.mxu0 0
    %6644 = vmatpush1.bf16.msra.mxu0 0
    %6645 = vmatprep.subr.bf16.mxu0 0
    %6646 = vmatpush1.bf16.msra.mxu0 0
    %6647 = vmatprep.subr.bf16.mxu0 0
    %6648 = vmatpush1.bf16.msra.mxu0 0
    %6649 = vmatprep.subr.bf16.mxu0 0
    %6650 = vmatpush1.bf16.msra.mxu0 0
    %6651 = vmatprep.subr.bf16.mxu0 0
    %6652 = vmatpush1.bf16.msra.mxu0 0
    %6653 = vmatprep.subr.bf16.mxu0 0
    %6654 = vmatpush1.bf16.msra.mxu0 0
    %6655 = vmatprep.subr.bf16.mxu0 0
    %6656 = vmatpush1.bf16.msra.mxu0 0
    %6657 = vmatprep.subr.bf16.mxu0 0
    %6658 = vmatpush1.bf16.msra.mxu0 0
    %6659 = vmatprep.subr.bf16.mxu0 0
    %6660 = vmatpush1.bf16.msra.mxu0 0
    %6661 = vmatprep.subr.bf16.mxu0 0
    %6662 = vmatpush1.bf16.msra.mxu0 0
    %6663 = vmatprep.subr.bf16.mxu0 0
    %6664 = vmatpush1.bf16.msra.mxu0 0
    %6665 = vmatprep.mubr.bf16.mxu0 0
    %6666 = vmatmul.mubr.bf16.gmra.mrb[0].mxu0 %v6631
    %v6667 = vpop.f32.mrb[0].mxu0
    %v6668 = vadd.f32 %v6603, %v6667
    %v6669 = vpop.f32.mrb[0].mxu0
    %v6670 = vpop.f32.mrb[0].mxu0
    %v6671 = vpop.f32.mrb[0].mxu0
    %6672 = vdwg.mxu0
    %v6673 = vld [vmem:[%s63] sm:$0xf]
    %v6674 = vld [vmem:[%s63 + $0x4] sm:$0xf]
    %v6675 = vld [vmem:[%s63 + $0x8] sm:$0xf]
    %v6676 = vld [vmem:[%s63 + $0xc] sm:$0xf]
    %v6677 = vld [vmem:[%s63 + $0x10] sm:$0xf]
    %v6678 = vld [vmem:[%s63 + $0x14] sm:$0xf]
    %v6679 = vld [vmem:[%s63 + $0x18] sm:$0xf]
    %v6680 = vld [vmem:[%s63 + $0x1c] sm:$0xf]
    %v6681 = vld [vmem:[%s63 + $0x20] sm:$0xf]
    %v6682 = vld [vmem:[%s63 + $0x24] sm:$0xf]
    %v6683 = vld [vmem:[%s63 + $0x28] sm:$0xf]
    %v6684 = vld [vmem:[%s63 + $0x2c] sm:$0xf]
    %v6685 = vld [vmem:[%s63 + $0x30] sm:$0xf]
    %v6686 = vld [vmem:[%s63 + $0x34] sm:$0xf]
    %v6687 = vld [vmem:[%s63 + $0x38] sm:$0xf]
    %v6688 = vld [vmem:[%s63 + $0x3c] sm:$0xf]
    %v6705 = vunpack.c.l.b16 %v6673
    %v6706 = vunpack.c.l.b16 %v6674
    %v6707 = vunpack.c.l.b16 %v6675
    %v6708 = vunpack.c.l.b16 %v6676
    %v6709 = vunpack.c.l.b16 %v6677
    %v6710 = vunpack.c.l.b16 %v6678
    %v6711 = vunpack.c.l.b16 %v6679
    %v6712 = vunpack.c.l.b16 %v6680
    %v6713 = vunpack.c.l.b16 %v6681
    %v6714 = vunpack.c.l.b16 %v6682
    %v6715 = vunpack.c.l.b16 %v6683
    %v6716 = vunpack.c.l.b16 %v6684
    %v6717 = vunpack.c.l.b16 %v6685
    %v6718 = vunpack.c.l.b16 %v6686
    %v6719 = vunpack.c.l.b16 %v6687
    %v6720 = vunpack.c.l.b16 %v6688
    %v6721 = vpack.c.b16 %v6706, %v6705
    %v6722 = vpack.c.b16 %v6708, %v6707
    %v6723 = vpack.c.b16 %v6710, %v6709
    %v6724 = vpack.c.b16 %v6712, %v6711
    %v6725 = vpack.c.b16 %v6714, %v6713
    %v6726 = vpack.c.b16 %v6716, %v6715
    %v6727 = vpack.c.b16 %v6718, %v6717
    %v6728 = vpack.c.b16 %v6720, %v6719
    %6737 = vmatprep.subr.bf16.mxu0 0
    %6738 = vmatpush1.bf16.msra.mxu0 %v6721
    %6739 = vmatprep.subr.bf16.mxu0 0
    %6740 = vmatpush1.bf16.msra.mxu0 %v6722
    %6741 = vmatprep.subr.bf16.mxu0 0
    %6742 = vmatpush1.bf16.msra.mxu0 %v6723
    %6743 = vmatprep.subr.bf16.mxu0 0
    %6744 = vmatpush1.bf16.msra.mxu0 %v6724
    %6745 = vmatprep.subr.bf16.mxu0 0
    %6746 = vmatpush1.bf16.msra.mxu0 %v6725
    %6747 = vmatprep.subr.bf16.mxu0 0
    %6748 = vmatpush1.bf16.msra.mxu0 %v6726
    %6749 = vmatprep.subr.bf16.mxu0 0
    %6750 = vmatpush1.bf16.msra.mxu0 %v6727
    %6751 = vmatprep.subr.bf16.mxu0 0
    %6752 = vmatpush1.bf16.msra.mxu0 %v6728
    %6753 = vmatprep.subr.bf16.mxu0 0
    %6754 = vmatpush1.bf16.msra.mxu0 0
    %6755 = vmatprep.subr.bf16.mxu0 0
    %6756 = vmatpush1.bf16.msra.mxu0 0
    %6757 = vmatprep.subr.bf16.mxu0 0
    %6758 = vmatpush1.bf16.msra.mxu0 0
    %6759 = vmatprep.subr.bf16.mxu0 0
    %6760 = vmatpush1.bf16.msra.mxu0 0
    %6761 = vmatprep.subr.bf16.mxu0 0
    %6762 = vmatpush1.bf16.msra.mxu0 0
    %6763 = vmatprep.subr.bf16.mxu0 0
    %6764 = vmatpush1.bf16.msra.mxu0 0
    %6765 = vmatprep.subr.bf16.mxu0 0
    %6766 = vmatpush1.bf16.msra.mxu0 0
    %6767 = vmatprep.subr.bf16.mxu0 0
    %6768 = vmatpush1.bf16.msra.mxu0 0
    %6769 = vmatprep.mubr.bf16.mxu0 0
    %6770 = vmatmul.mubr.bf16.gmra.mrb[0].mxu0 %v6476
    %v6771 = vpop.f32.mrb[0].mxu0
    %v6772 = vadd.f32 0.0, %v6771
    %v6773 = vpop.f32.mrb[0].mxu0
    %v6774 = vpop.f32.mrb[0].mxu0
    %v6775 = vpop.f32.mrb[0].mxu0
    %6776 = vdwg.mxu0
    %v6777 = vadd.f32 %v6668, %v6772
    %v6778 = vmax.f32 %v6777, 0.0
    %v6779 = vpack.c.bf16 %v6778, %v6778
    %v6780 = vld [vmem:[%s65] sm:$0xf]
    %v6781 = vld [vmem:[%s65 + $0x4] sm:$0xf]
    %v6782 = vld [vmem:[%s65 + $0x8] sm:$0xf]
    %v6783 = vld [vmem:[%s65 + $0xc] sm:$0xf]
    %v6784 = vld [vmem:[%s65 + $0x10] sm:$0xf]
    %v6785 = vld [vmem:[%s65 + $0x14] sm:$0xf]
    %v6786 = vld [vmem:[%s65 + $0x18] sm:$0xf]
    %v6787 = vld [vmem:[%s65 + $0x1c] sm:$0xf]
    %v6788 = vld [vmem:[%s67] sm:$0x1]
    %v6790 = vlaneseq
    %v6791 = vshrl.u32 %v6790, 7
    %v6792 = vsub.s32 0, %v6791
    %v6793 = vrot.slane %v6788, %v6792
    %v6803 = vunpack.c.l.b16 %v6780
    %v6804 = vunpack.c.l.b16 %v6781
    %v6805 = vunpack.c.l.b16 %v6782
    %v6806 = vunpack.c.l.b16 %v6783
    %v6807 = vunpack.c.l.b16 %v6784
    %v6808 = vunpack.c.l.b16 %v6785
    %v6809 = vunpack.c.l.b16 %v6786
    %v6810 = vunpack.c.l.b16 %v6787
    %v6811 = vpack.c.b16 %v6804, %v6803
    %v6812 = vpack.c.b16 %v6806, %v6805
    %v6813 = vpack.c.b16 %v6808, %v6807
    %v6814 = vpack.c.b16 %v6810, %v6809
    %v6820 = vsel %vm6629, %v6779, 0
    %6822 = vmatprep.subr.bf16.mxu0 0
    %6823 = vmatpush1.bf16.msra.mxu0 %v6811
    %6824 = vmatprep.subr.bf16.mxu0 0
    %6825 = vmatpush1.bf16.msra.mxu0 %v6812
    %6826 = vmatprep.subr.bf16.mxu0 0
    %6827 = vmatpush1.bf16.msra.mxu0 %v6813
    %6828 = vmatprep.subr.bf16.mxu0 0
    %6829 = vmatpush1.bf16.msra.mxu0 %v6814
    %6830 = vmatprep.subr.bf16.mxu0 0
    %6831 = vmatpush1.bf16.msra.mxu0 0
    %6832 = vmatprep.subr.bf16.mxu0 0
    %6833 = vmatpush1.bf16.msra.mxu0 0
    %6834 = vmatprep.subr.bf16.mxu0 0
    %6835 = vmatpush1.bf16.msra.mxu0 0
    %6836 = vmatprep.subr.bf16.mxu0 0
    %6837 = vmatpush1.bf16.msra.mxu0 0
    %6838 = vmatprep.subr.bf16.mxu0 0
    %6839 = vmatpush1.bf16.msra.mxu0 0
    %6840 = vmatprep.subr.bf16.mxu0 0
    %6841 = vmatpush1.bf16.msra.mxu0 0
    %6842 = vmatprep.subr.bf16.mxu0 0
    %6843 = vmatpush1.bf16.msra.mxu0 0
    %6844 = vmatprep.subr.bf16.mxu0 0
    %6845 = vmatpush1.bf16.msra.mxu0 0
    %6846 = vmatprep.subr.bf16.mxu0 0
    %6847 = vmatpush1.bf16.msra.mxu0 0
    %6848 = vmatprep.subr.bf16.mxu0 0
    %6849 = vmatpush1.bf16.msra.mxu0 0
    %6850 = vmatprep.subr.bf16.mxu0 0
    %6851 = vmatpush1.bf16.msra.mxu0 0
    %6852 = vmatprep.subr.bf16.mxu0 0
    %6853 = vmatpush1.bf16.msra.mxu0 0
    %6854 = vmatprep.mubr.bf16.mxu0 0
    %6855 = vmatmul.mubr.bf16.gmra.mrb[0].mxu0 %v6820
    %v6856 = vpop.f32.mrb[0].mxu0
    %v6857 = vadd.f32 %v6793, %v6856
    %v6858 = vpop.f32.mrb[0].mxu0
    %v6859 = vpop.f32.mrb[0].mxu0
    %v6860 = vpop.f32.mrb[0].mxu0
    %6861 = vdwg.mxu0
    %v6862 = vmax.f32 %v6857, 0.0
    %v6863 = vpack.c.bf16 %v6862, %v6862
    %v6864 = vld [vmem:[%s69] sm:$0xf]
    %v6865 = vld [vmem:[%s69 + $0x4] sm:$0xf]
    %v6866 = vld [vmem:[%s69 + $0x8] sm:$0xf]
    %v6867 = vld [vmem:[%s69 + $0xc] sm:$0xf]
    %v6868 = vld [vmem:[%s69 + $0x10] sm:$0xf]
    %v6869 = vld [vmem:[%s69 + $0x14] sm:$0xf]
    %v6870 = vld [vmem:[%s69 + $0x18] sm:$0xf]
    %v6871 = vld [vmem:[%s69 + $0x1c] sm:$0xf]
    %v6872 = vld [vmem:[%s71] sm:$0x1]
    %v6874 = vlaneseq
    %v6875 = vshrl.u32 %v6874, 7
    %v6876 = vsub.s32 0, %v6875
    %v6877 = vrot.slane %v6872, %v6876
    %v6887 = vunpack.c.l.b16 %v6864
    %v6888 = vunpack.c.l.b16 %v6865
    %v6889 = vunpack.c.l.b16 %v6866
    %v6890 = vunpack.c.l.b16 %v6867
    %v6891 = vunpack.c.l.b16 %v6868
    %v6892 = vunpack.c.l.b16 %v6869
    %v6893 = vunpack.c.l.b16 %v6870
    %v6894 = vunpack.c.l.b16 %v6871
    %v6895 = vpack.c.b16 %v6888, %v6887
    %v6896 = vpack.c.b16 %v6890, %v6889
    %v6897 = vpack.c.b16 %v6892, %v6891
    %v6898 = vpack.c.b16 %v6894, %v6893
    %v6904 = vsel %vm6629, %v6863, 0
    %6906 = vmatprep.subr.bf16.mxu0 0
    %6907 = vmatpush1.bf16.msra.mxu0 %v6895
    %6908 = vmatprep.subr.bf16.mxu0 0
    %6909 = vmatpush1.bf16.msra.mxu0 %v6896
    %6910 = vmatprep.subr.bf16.mxu0 0
    %6911 = vmatpush1.bf16.msra.mxu0 %v6897
    %6912 = vmatprep.subr.bf16.mxu0 0
    %6913 = vmatpush1.bf16.msra.mxu0 %v6898
    %6914 = vmatprep.subr.bf16.mxu0 0
    %6915 = vmatpush1.bf16.msra.mxu0 0
    %6916 = vmatprep.subr.bf16.mxu0 0
    %6917 = vmatpush1.bf16.msra.mxu0 0
    %6918 = vmatprep.subr.bf16.mxu0 0
    %6919 = vmatpush1.bf16.msra.mxu0 0
    %6920 = vmatprep.subr.bf16.mxu0 0
    %6921 = vmatpush1.bf16.msra.mxu0 0
    %6922 = vmatprep.subr.bf16.mxu0 0
    %6923 = vmatpush1.bf16.msra.mxu0 0
    %6924 = vmatprep.subr.bf16.mxu0 0
    %6925 = vmatpush1.bf16.msra.mxu0 0
    %6926 = vmatprep.subr.bf16.mxu0 0
    %6927 = vmatpush1.bf16.msra.mxu0 0
    %6928 = vmatprep.subr.bf16.mxu0 0
    %6929 = vmatpush1.bf16.msra.mxu0 0
    %6930 = vmatprep.subr.bf16.mxu0 0
    %6931 = vmatpush1.bf16.msra.mxu0 0
    %6932 = vmatprep.subr.bf16.mxu0 0
    %6933 = vmatpush1.bf16.msra.mxu0 0
    %6934 = vmatprep.subr.bf16.mxu0 0
    %6935 = vmatpush1.bf16.msra.mxu0 0
    %6936 = vmatprep.subr.bf16.mxu0 0
    %6937 = vmatpush1.bf16.msra.mxu0 0
    %6938 = vmatprep.mubr.bf16.mxu0 0
    %6939 = vmatmul.mubr.bf16.gmra.mrb[0].mxu0 %v6904
    %v6940 = vpop.f32.mrb[0].mxu0
    %v6941 = vadd.f32 %v6877, %v6940
    %v6942 = vpop.f32.mrb[0].mxu0
    %v6943 = vpop.f32.mrb[0].mxu0
    %v6944 = vpop.f32.mrb[0].mxu0
    %6945 = vdwg.mxu0
    %v6946 = vunpack.c.l.bf16 %v6779
    %v6947 = vadd.f32 %v6941, %v6946
    %v6948 = vmax.f32 %v6947, 0.0
    %v6949 = vpack.c.bf16 %v6948, %v6948
    %v6950 = vld [vmem:[%s73] sm:$0xf]
    %v6951 = vld [vmem:[%s73 + $0x4] sm:$0xf]
    %v6952 = vld [vmem:[%s73 + $0x8] sm:$0xf]
    %v6953 = vld [vmem:[%s73 + $0xc] sm:$0xf]
    %v6954 = vld [vmem:[%s73 + $0x10] sm:$0xf]
    %v6955 = vld [vmem:[%s73 + $0x14] sm:$0xf]
    %v6956 = vld [vmem:[%s73 + $0x18] sm:$0xf]
    %v6957 = vld [vmem:[%s73 + $0x1c] sm:$0xf]
    %v6958 = vld [vmem:[%s73 + $0x20] sm:$0xf]
    %v6959 = vld [vmem:[%s73 + $0x24] sm:$0xf]
    %v6960 = vld [vmem:[%s73 + $0x28] sm:$0xf]
    %v6961 = vld [vmem:[%s73 + $0x2c] sm:$0xf]
    %v6962 = vld [vmem:[%s73 + $0x30] sm:$0xf]
    %v6963 = vld [vmem:[%s73 + $0x34] sm:$0xf]
    %v6964 = vld [vmem:[%s73 + $0x38] sm:$0xf]
    %v6965 = vld [vmem:[%s73 + $0x3c] sm:$0xf]
    %v6966 = vld [vmem:[%s73 + $0x40] sm:$0xf]
    %v6967 = vld [vmem:[%s73 + $0x44] sm:$0xf]
    %v6968 = vld [vmem:[%s73 + $0x48] sm:$0xf]
    %v6969 = vld [vmem:[%s73 + $0x4c] sm:$0xf]
    %v6970 = vld [vmem:[%s73 + $0x50] sm:$0xf]
    %v6971 = vld [vmem:[%s73 + $0x54] sm:$0xf]
    %v6972 = vld [vmem:[%s73 + $0x58] sm:$0xf]
    %v6973 = vld [vmem:[%s73 + $0x5c] sm:$0xf]
    %v6974 = vld [vmem:[%s73 + $0x60] sm:$0xf]
    %v6975 = vld [vmem:[%s73 + $0x64] sm:$0xf]
    %v6976 = vld [vmem:[%s73 + $0x68] sm:$0xf]
    %v6977 = vld [vmem:[%s73 + $0x6c] sm:$0xf]
    %v6978 = vld [vmem:[%s73 + $0x70] sm:$0xf]
    %v6979 = vld [vmem:[%s73 + $0x74] sm:$0xf]
    %v6980 = vld [vmem:[%s73 + $0x78] sm:$0xf]
    %v6981 = vld [vmem:[%s73 + $0x7c] sm:$0xf]
    %v6982 = vld [vmem:[%s73 + $0x80] sm:$0xf]
    %v6983 = vld [vmem:[%s73 + $0x84] sm:$0xf]
    %v6984 = vld [vmem:[%s73 + $0x88] sm:$0xf]
    %v6985 = vld [vmem:[%s73 + $0x8c] sm:$0xf]
    %v6986 = vld [vmem:[%s73 + $0x90] sm:$0xf]
    %v6987 = vld [vmem:[%s73 + $0x94] sm:$0xf]
    %v6988 = vld [vmem:[%s73 + $0x98] sm:$0xf]
    %v6989 = vld [vmem:[%s73 + $0x9c] sm:$0xf]
    %v6990 = vld [vmem:[%s73 + $0xa0] sm:$0xf]
    %v6991 = vld [vmem:[%s73 + $0xa4] sm:$0xf]
    %v6992 = vld [vmem:[%s73 + $0xa8] sm:$0xf]
    %v6993 = vld [vmem:[%s73 + $0xac] sm:$0xf]
    %v6994 = vld [vmem:[%s73 + $0xb0] sm:$0xf]
    %v6995 = vld [vmem:[%s73 + $0xb4] sm:$0xf]
    %v6996 = vld [vmem:[%s73 + $0xb8] sm:$0xf]
    %v6997 = vld [vmem:[%s73 + $0xbc] sm:$0xf]
    %v6998 = vld [vmem:[%s73 + $0xc0] sm:$0xf]
    %v6999 = vld [vmem:[%s73 + $0xc4] sm:$0xf]
    %v7000 = vld [vmem:[%s73 + $0xc8] sm:$0xf]
    %v7001 = vld [vmem:[%s73 + $0xcc] sm:$0xf]
    %v7002 = vld [vmem:[%s73 + $0xd0] sm:$0xf]
    %v7003 = vld [vmem:[%s73 + $0xd4] sm:$0xf]
    %v7004 = vld [vmem:[%s73 + $0xd8] sm:$0xf]
    %v7005 = vld [vmem:[%s73 + $0xdc] sm:$0xf]
    %v7006 = vld [vmem:[%s73 + $0xe0] sm:$0xf]
    %v7007 = vld [vmem:[%s73 + $0xe4] sm:$0xf]
    %v7008 = vld [vmem:[%s73 + $0xe8] sm:$0xf]
    %v7009 = vld [vmem:[%s73 + $0xec] sm:$0xf]
    %v7010 = vld [vmem:[%s73 + $0xf0] sm:$0xf]
    %v7011 = vld [vmem:[%s73 + $0xf4] sm:$0xf]
    %v7012 = vld [vmem:[%s73 + $0xf8] sm:$0xf]
    %v7013 = vld [vmem:[%s73 + $0xfc] sm:$0xf]
    %v7014 = vld [vmem:[%s75] sm:$0xf]
    %v7015 = vld [vmem:[%s75 + $0x4] sm:$0xf]
    %v7016 = vld [vmem:[%s75 + $0x8] sm:$0xf]
    %v7017 = vld [vmem:[%s75 + $0xc] sm:$0xf]
    %v7018 = vld [vmem:[%s75 + $0x10] sm:$0xf]
    %v7019 = vld [vmem:[%s75 + $0x14] sm:$0xf]
    %v7020 = vld [vmem:[%s75 + $0x18] sm:$0xf]
    %v7021 = vld [vmem:[%s75 + $0x1c] sm:$0xf]
    %v7022 = vld [vmem:[%s75 + $0x20] sm:$0xf]
    %v7023 = vld [vmem:[%s75 + $0x24] sm:$0xf]
    %v7024 = vld [vmem:[%s75 + $0x28] sm:$0xf]
    %v7025 = vld [vmem:[%s75 + $0x2c] sm:$0xf]
    %v7026 = vld [vmem:[%s75 + $0x30] sm:$0xf]
    %v7027 = vld [vmem:[%s75 + $0x34] sm:$0xf]
    %v7028 = vld [vmem:[%s75 + $0x38] sm:$0xf]
    %v7029 = vld [vmem:[%s75 + $0x3c] sm:$0xf]
    %v7030 = vld [vmem:[%s75 + $0x40] sm:$0xf]
    %v7031 = vld [vmem:[%s75 + $0x44] sm:$0xf]
    %v7032 = vld [vmem:[%s75 + $0x48] sm:$0xf]
    %v7033 = vld [vmem:[%s75 + $0x4c] sm:$0xf]
    %v7034 = vld [vmem:[%s75 + $0x50] sm:$0xf]
    %v7035 = vld [vmem:[%s75 + $0x54] sm:$0xf]
    %v7036 = vld [vmem:[%s75 + $0x58] sm:$0xf]
    %v7037 = vld [vmem:[%s75 + $0x5c] sm:$0xf]
    %v7038 = vld [vmem:[%s75 + $0x60] sm:$0xf]
    %v7039 = vld [vmem:[%s75 + $0x64] sm:$0xf]
    %v7040 = vld [vmem:[%s75 + $0x68] sm:$0xf]
    %v7041 = vld [vmem:[%s75 + $0x6c] sm:$0xf]
    %v7042 = vld [vmem:[%s75 + $0x70] sm:$0xf]
    %v7043 = vld [vmem:[%s75 + $0x74] sm:$0xf]
    %v7044 = vld [vmem:[%s75 + $0x78] sm:$0xf]
    %v7045 = vld [vmem:[%s75 + $0x7c] sm:$0xf]
    %v7046 = vld [vmem:[%s75 + $0x80] sm:$0xf]
    %v7047 = vld [vmem:[%s75 + $0x84] sm:$0xf]
    %v7048 = vld [vmem:[%s75 + $0x88] sm:$0xf]
    %v7049 = vld [vmem:[%s75 + $0x8c] sm:$0xf]
    %v7050 = vld [vmem:[%s75 + $0x90] sm:$0xf]
    %v7051 = vld [vmem:[%s75 + $0x94] sm:$0xf]
    %v7052 = vld [vmem:[%s75 + $0x98] sm:$0xf]
    %v7053 = vld [vmem:[%s75 + $0x9c] sm:$0xf]
    %v7054 = vld [vmem:[%s75 + $0xa0] sm:$0xf]
    %v7055 = vld [vmem:[%s75 + $0xa4] sm:$0xf]
    %v7056 = vld [vmem:[%s75 + $0xa8] sm:$0xf]
    %v7057 = vld [vmem:[%s75 + $0xac] sm:$0xf]
    %v7058 = vld [vmem:[%s75 + $0xb0] sm:$0xf]
    %v7059 = vld [vmem:[%s75 + $0xb4] sm:$0xf]
    %v7060 = vld [vmem:[%s75 + $0xb8] sm:$0xf]
    %v7061 = vld [vmem:[%s75 + $0xbc] sm:$0xf]
    %v7062 = vld [vmem:[%s75 + $0xc0] sm:$0xf]
    %v7063 = vld [vmem:[%s75 + $0xc4] sm:$0xf]
    %v7064 = vld [vmem:[%s75 + $0xc8] sm:$0xf]
    %v7065 = vld [vmem:[%s75 + $0xcc] sm:$0xf]
    %v7066 = vld [vmem:[%s75 + $0xd0] sm:$0xf]
    %v7067 = vld [vmem:[%s75 + $0xd4] sm:$0xf]
    %v7068 = vld [vmem:[%s75 + $0xd8] sm:$0xf]
    %v7069 = vld [vmem:[%s75 + $0xdc] sm:$0xf]
    %v7070 = vld [vmem:[%s75 + $0xe0] sm:$0xf]
    %v7071 = vld [vmem:[%s75 + $0xe4] sm:$0xf]
    %v7072 = vld [vmem:[%s75 + $0xe8] sm:$0xf]
    %v7073 = vld [vmem:[%s75 + $0xec] sm:$0xf]
    %v7074 = vld [vmem:[%s75 + $0xf0] sm:$0xf]
    %v7075 = vld [vmem:[%s75 + $0xf4] sm:$0xf]
    %v7076 = vld [vmem:[%s75 + $0xf8] sm:$0xf]
    %v7077 = vld [vmem:[%s75 + $0xfc] sm:$0xf]
    %v7142 = vunpack.c.l.b16 %v7014
    %v7143 = vunpack.c.l.b16 %v7015
    %v7144 = vunpack.c.l.b16 %v7016
    %v7145 = vunpack.c.l.b16 %v7017
    %v7146 = vunpack.c.l.b16 %v7018
    %v7147 = vunpack.c.l.b16 %v7019
    %v7148 = vunpack.c.l.b16 %v7020
    %v7149 = vunpack.c.l.b16 %v7021
    %v7150 = vunpack.c.l.b16 %v7022
    %v7151 = vunpack.c.l.b16 %v7023
    %v7152 = vunpack.c.l.b16 %v7024
    %v7153 = vunpack.c.l.b16 %v7025
    %v7154 = vunpack.c.l.b16 %v7026
    %v7155 = vunpack.c.l.b16 %v7027
    %v7156 = vunpack.c.l.b16 %v7028
    %v7157 = vunpack.c.l.b16 %v7029
    %v7158 = vunpack.c.l.b16 %v7030
    %v7159 = vunpack.c.l.b16 %v7031
    %v7160 = vunpack.c.l.b16 %v7032
    %v7161 = vunpack.c.l.b16 %v7033
    %v7162 = vunpack.c.l.b16 %v7034
    %v7163 = vunpack.c.l.b16 %v7035
    %v7164 = vunpack.c.l.b16 %v7036
    %v7165 = vunpack.c.l.b16 %v7037
    %v7166 = vunpack.c.l.b16 %v7038
    %v7167 = vunpack.c.l.b16 %v7039
    %v7168 = vunpack.c.l.b16 %v7040
    %v7169 = vunpack.c.l.b16 %v7041
    %v7170 = vunpack.c.l.b16 %v7042
    %v7171 = vunpack.c.l.b16 %v7043
    %v7172 = vunpack.c.l.b16 %v7044
    %v7173 = vunpack.c.l.b16 %v7045
    %v7174 = vunpack.c.l.b16 %v7046
    %v7175 = vunpack.c.l.b16 %v7047
    %v7176 = vunpack.c.l.b16 %v7048
    %v7177 = vunpack.c.l.b16 %v7049
    %v7178 = vunpack.c.l.b16 %v7050
    %v7179 = vunpack.c.l.b16 %v7051
    %v7180 = vunpack.c.l.b16 %v7052
    %v7181 = vunpack.c.l.b16 %v7053
    %v7182 = vunpack.c.l.b16 %v7054
    %v7183 = vunpack.c.l.b16 %v7055
    %v7184 = vunpack.c.l.b16 %v7056
    %v7185 = vunpack.c.l.b16 %v7057
    %v7186 = vunpack.c.l.b16 %v7058
    %v7187 = vunpack.c.l.b16 %v7059
    %v7188 = vunpack.c.l.b16 %v7060
    %v7189 = vunpack.c.l.b16 %v7061
    %v7190 = vunpack.c.l.b16 %v7062
    %v7191 = vunpack.c.l.b16 %v7063
    %v7192 = vunpack.c.l.b16 %v7064
    %v7193 = vunpack.c.l.b16 %v7065
    %v7194 = vunpack.c.l.b16 %v7066
    %v7195 = vunpack.c.l.b16 %v7067
    %v7196 = vunpack.c.l.b16 %v7068
    %v7197 = vunpack.c.l.b16 %v7069
    %v7198 = vunpack.c.l.b16 %v7070
    %v7199 = vunpack.c.l.b16 %v7071
    %v7200 = vunpack.c.l.b16 %v7072
    %v7201 = vunpack.c.l.b16 %v7073
    %v7202 = vunpack.c.l.b16 %v7074
    %v7203 = vunpack.c.l.b16 %v7075
    %v7204 = vunpack.c.l.b16 %v7076
    %v7205 = vunpack.c.l.b16 %v7077
    %v7206 = vpack.c.b16 %v7143, %v7142
    %v7207 = vpack.c.b16 %v7145, %v7144
    %v7208 = vpack.c.b16 %v7147, %v7146
    %v7209 = vpack.c.b16 %v7149, %v7148
    %v7210 = vpack.c.b16 %v7151, %v7150
    %v7211 = vpack.c.b16 %v7153, %v7152
    %v7212 = vpack.c.b16 %v7155, %v7154
    %v7213 = vpack.c.b16 %v7157, %v7156
    %v7214 = vpack.c.b16 %v7159, %v7158
    %v7215 = vpack.c.b16 %v7161, %v7160
    %v7216 = vpack.c.b16 %v7163, %v7162
    %v7217 = vpack.c.b16 %v7165, %v7164
    %v7218 = vpack.c.b16 %v7167, %v7166
    %v7219 = vpack.c.b16 %v7169, %v7168
    %v7220 = vpack.c.b16 %v7171, %v7170
    %v7221 = vpack.c.b16 %v7173, %v7172
    %v7222 = vpack.c.b16 %v7175, %v7174
    %v7223 = vpack.c.b16 %v7177, %v7176
    %v7224 = vpack.c.b16 %v7179, %v7178
    %v7225 = vpack.c.b16 %v7181, %v7180
    %v7226 = vpack.c.b16 %v7183, %v7182
    %v7227 = vpack.c.b16 %v7185, %v7184
    %v7228 = vpack.c.b16 %v7187, %v7186
    %v7229 = vpack.c.b16 %v7189, %v7188
    %v7230 = vpack.c.b16 %v7191, %v7190
    %v7231 = vpack.c.b16 %v7193, %v7192
    %v7232 = vpack.c.b16 %v7195, %v7194
    %v7233 = vpack.c.b16 %v7197, %v7196
    %v7234 = vpack.c.b16 %v7199, %v7198
    %v7235 = vpack.c.b16 %v7201, %v7200
    %v7236 = vpack.c.b16 %v7203, %v7202
    %v7237 = vpack.c.b16 %v7205, %v7204
    %7270 = vmatprep.subr.bf16.mxu0 0
    %7271 = vmatpush1.bf16.msra.mxu0 %v7206
    %7272 = vmatprep.subr.bf16.mxu0 0
    %7273 = vmatpush1.bf16.msra.mxu0 %v7207
    %7274 = vmatprep.subr.bf16.mxu0 0
    %7275 = vmatpush1.bf16.msra.mxu0 %v7208
    %7276 = vmatprep.subr.bf16.mxu0 0
    %7277 = vmatpush1.bf16.msra.mxu0 %v7209
    %7278 = vmatprep.subr.bf16.mxu0 0
    %7279 = vmatpush1.bf16.msra.mxu0 %v7210
    %7280 = vmatprep.subr.bf16.mxu0 0
    %7281 = vmatpush1.bf16.msra.mxu0 %v7211
    %7282 = vmatprep.subr.bf16.mxu0 0
    %7283 = vmatpush1.bf16.msra.mxu0 %v7212
    %7284 = vmatprep.subr.bf16.mxu0 0
    %7285 = vmatpush1.bf16.msra.mxu0 %v7213
    %7286 = vmatprep.subr.bf16.mxu0 0
    %7287 = vmatpush1.bf16.msra.mxu0 %v7214
    %7288 = vmatprep.subr.bf16.mxu0 0
    %7289 = vmatpush1.bf16.msra.mxu0 %v7215
    %7290 = vmatprep.subr.bf16.mxu0 0
    %7291 = vmatpush1.bf16.msra.mxu0 %v7216
    %7292 = vmatprep.subr.bf16.mxu0 0
    %7293 = vmatpush1.bf16.msra.mxu0 %v7217
    %7294 = vmatprep.subr.bf16.mxu0 0
    %7295 = vmatpush1.bf16.msra.mxu0 %v7218
    %7296 = vmatprep.subr.bf16.mxu0 0
    %7297 = vmatpush1.bf16.msra.mxu0 %v7219
    %7298 = vmatprep.subr.bf16.mxu0 0
    %7299 = vmatpush1.bf16.msra.mxu0 %v7220
    %7300 = vmatprep.subr.bf16.mxu0 0
    %7301 = vmatpush1.bf16.msra.mxu0 %v7221
    %7302 = vmatprep.mubr.bf16.mxu0 %v4086
    %7303 = vmatmul.mubr.bf16.gmra.mrb[0].mxu0 %v4085
    %v7304 = vpop.f32.mrb[0].mxu0
    %v7305 = vadd.f32 0.0, %v7304
    %v7306 = vpop.f32.mrb[0].mxu0
    %v7307 = vpop.f32.mrb[0].mxu0
    %v7308 = vpop.f32.mrb[0].mxu0
    %7309 = vdwg.mxu0
    %7310 = vmatprep.subr.bf16.mxu0 0
    %7311 = vmatpush1.bf16.msra.mxu0 %v7222
    %7312 = vmatprep.subr.bf16.mxu0 0
    %7313 = vmatpush1.bf16.msra.mxu0 %v7223
    %7314 = vmatprep.subr.bf16.mxu0 0
    %7315 = vmatpush1.bf16.msra.mxu0 %v7224
    %7316 = vmatprep.subr.bf16.mxu0 0
    %7317 = vmatpush1.bf16.msra.mxu0 %v7225
    %7318 = vmatprep.subr.bf16.mxu0 0
    %7319 = vmatpush1.bf16.msra.mxu0 %v7226
    %7320 = vmatprep.subr.bf16.mxu0 0
    %7321 = vmatpush1.bf16.msra.mxu0 %v7227
    %7322 = vmatprep.subr.bf16.mxu0 0
    %7323 = vmatpush1.bf16.msra.mxu0 %v7228
    %7324 = vmatprep.subr.bf16.mxu0 0
    %7325 = vmatpush1.bf16.msra.mxu0 %v7229
    %7326 = vmatprep.subr.bf16.mxu0 0
    %7327 = vmatpush1.bf16.msra.mxu0 %v7230
    %7328 = vmatprep.subr.bf16.mxu0 0
    %7329 = vmatpush1.bf16.msra.mxu0 %v7231
    %7330 = vmatprep.subr.bf16.mxu0 0
    %7331 = vmatpush1.bf16.msra.mxu0 %v7232
    %7332 = vmatprep.subr.bf16.mxu0 0
    %7333 = vmatpush1.bf16.msra.mxu0 %v7233
    %7334 = vmatprep.subr.bf16.mxu0 0
    %7335 = vmatpush1.bf16.msra.mxu0 %v7234
    %7336 = vmatprep.subr.bf16.mxu0 0
    %7337 = vmatpush1.bf16.msra.mxu0 %v7235
    %7338 = vmatprep.subr.bf16.mxu0 0
    %7339 = vmatpush1.bf16.msra.mxu0 %v7236
    %7340 = vmatprep.subr.bf16.mxu0 0
    %7341 = vmatpush1.bf16.msra.mxu0 %v7237
    %7342 = vmatprep.mubr.bf16.mxu0 %v4088
    %7343 = vmatmul.mubr.bf16.gmra.mrb[0].mxu0 %v4087
    %v7344 = vpop.f32.mrb[0].mxu0
    %v7345 = vadd.f32 %v7305, %v7344
    %v7346 = vpop.f32.mrb[0].mxu0
    %v7347 = vpop.f32.mrb[0].mxu0
    %v7348 = vpop.f32.mrb[0].mxu0
    %7349 = vdwg.mxu0
    %v7414 = vunpack.c.l.b16 %v6950
    %v7415 = vunpack.c.l.b16 %v6951
    %v7416 = vunpack.c.l.b16 %v6952
    %v7417 = vunpack.c.l.b16 %v6953
    %v7418 = vunpack.c.l.b16 %v6954
    %v7419 = vunpack.c.l.b16 %v6955
    %v7420 = vunpack.c.l.b16 %v6956
    %v7421 = vunpack.c.l.b16 %v6957
    %v7422 = vunpack.c.l.b16 %v6958
    %v7423 = vunpack.c.l.b16 %v6959
    %v7424 = vunpack.c.l.b16 %v6960
    %v7425 = vunpack.c.l.b16 %v6961
    %v7426 = vunpack.c.l.b16 %v6962
    %v7427 = vunpack.c.l.b16 %v6963
    %v7428 = vunpack.c.l.b16 %v6964
    %v7429 = vunpack.c.l.b16 %v6965
    %v7430 = vunpack.c.l.b16 %v6966
    %v7431 = vunpack.c.l.b16 %v6967
    %v7432 = vunpack.c.l.b16 %v6968
    %v7433 = vunpack.c.l.b16 %v6969
    %v7434 = vunpack.c.l.b16 %v6970
    %v7435 = vunpack.c.l.b16 %v6971
    %v7436 = vunpack.c.l.b16 %v6972
    %v7437 = vunpack.c.l.b16 %v6973
    %v7438 = vunpack.c.l.b16 %v6974
    %v7439 = vunpack.c.l.b16 %v6975
    %v7440 = vunpack.c.l.b16 %v6976
    %v7441 = vunpack.c.l.b16 %v6977
    %v7442 = vunpack.c.l.b16 %v6978
    %v7443 = vunpack.c.l.b16 %v6979
    %v7444 = vunpack.c.l.b16 %v6980
    %v7445 = vunpack.c.l.b16 %v6981
    %v7446 = vunpack.c.l.b16 %v6982
    %v7447 = vunpack.c.l.b16 %v6983
    %v7448 = vunpack.c.l.b16 %v6984
    %v7449 = vunpack.c.l.b16 %v6985
    %v7450 = vunpack.c.l.b16 %v6986
    %v7451 = vunpack.c.l.b16 %v6987
    %v7452 = vunpack.c.l.b16 %v6988
    %v7453 = vunpack.c.l.b16 %v6989
    %v7454 = vunpack.c.l.b16 %v6990
    %v7455 = vunpack.c.l.b16 %v6991
    %v7456 = vunpack.c.l.b16 %v6992
    %v7457 = vunpack.c.l.b16 %v6993
    %v7458 = vunpack.c.l.b16 %v6994
    %v7459 = vunpack.c.l.b16 %v6995
    %v7460 = vunpack.c.l.b16 %v6996
    %v7461 = vunpack.c.l.b16 %v6997
    %v7462 = vunpack.c.l.b16 %v6998
    %v7463 = vunpack.c.l.b16 %v6999
    %v7464 = vunpack.c.l.b16 %v7000
    %v7465 = vunpack.c.l.b16 %v7001
    %v7466 = vunpack.c.l.b16 %v7002
    %v7467 = vunpack.c.l.b16 %v7003
    %v7468 = vunpack.c.l.b16 %v7004
    %v7469 = vunpack.c.l.b16 %v7005
    %v7470 = vunpack.c.l.b16 %v7006
    %v7471 = vunpack.c.l.b16 %v7007
    %v7472 = vunpack.c.l.b16 %v7008
    %v7473 = vunpack.c.l.b16 %v7009
    %v7474 = vunpack.c.l.b16 %v7010
    %v7475 = vunpack.c.l.b16 %v7011
    %v7476 = vunpack.c.l.b16 %v7012
    %v7477 = vunpack.c.l.b16 %v7013
    %v7478 = vpack.c.b16 %v7415, %v7414
    %v7479 = vpack.c.b16 %v7417, %v7416
    %v7480 = vpack.c.b16 %v7419, %v7418
    %v7481 = vpack.c.b16 %v7421, %v7420
    %v7482 = vpack.c.b16 %v7423, %v7422
    %v7483 = vpack.c.b16 %v7425, %v7424
    %v7484 = vpack.c.b16 %v7427, %v7426
    %v7485 = vpack.c.b16 %v7429, %v7428
    %v7486 = vpack.c.b16 %v7431, %v7430
    %v7487 = vpack.c.b16 %v7433, %v7432
    %v7488 = vpack.c.b16 %v7435, %v7434
    %v7489 = vpack.c.b16 %v7437, %v7436
    %v7490 = vpack.c.b16 %v7439, %v7438
    %v7491 = vpack.c.b16 %v7441, %v7440
    %v7492 = vpack.c.b16 %v7443, %v7442
    %v7493 = vpack.c.b16 %v7445, %v7444
    %v7494 = vpack.c.b16 %v7447, %v7446
    %v7495 = vpack.c.b16 %v7449, %v7448
    %v7496 = vpack.c.b16 %v7451, %v7450
    %v7497 = vpack.c.b16 %v7453, %v7452
    %v7498 = vpack.c.b16 %v7455, %v7454
    %v7499 = vpack.c.b16 %v7457, %v7456
    %v7500 = vpack.c.b16 %v7459, %v7458
    %v7501 = vpack.c.b16 %v7461, %v7460
    %v7502 = vpack.c.b16 %v7463, %v7462
    %v7503 = vpack.c.b16 %v7465, %v7464
    %v7504 = vpack.c.b16 %v7467, %v7466
    %v7505 = vpack.c.b16 %v7469, %v7468
    %v7506 = vpack.c.b16 %v7471, %v7470
    %v7507 = vpack.c.b16 %v7473, %v7472
    %v7508 = vpack.c.b16 %v7475, %v7474
    %v7509 = vpack.c.b16 %v7477, %v7476
    %7542 = vmatprep.subr.bf16.mxu0 0
    %7543 = vmatpush1.bf16.msra.mxu0 %v7478
    %7544 = vmatprep.subr.bf16.mxu0 0
    %7545 = vmatpush1.bf16.msra.mxu0 %v7479
    %7546 = vmatprep.subr.bf16.mxu0 0
    %7547 = vmatpush1.bf16.msra.mxu0 %v7480
    %7548 = vmatprep.subr.bf16.mxu0 0
    %7549 = vmatpush1.bf16.msra.mxu0 %v7481
    %7550 = vmatprep.subr.bf16.mxu0 0
    %7551 = vmatpush1.bf16.msra.mxu0 %v7482
    %7552 = vmatprep.subr.bf16.mxu0 0
    %7553 = vmatpush1.bf16.msra.mxu0 %v7483
    %7554 = vmatprep.subr.bf16.mxu0 0
    %7555 = vmatpush1.bf16.msra.mxu0 %v7484
    %7556 = vmatprep.subr.bf16.mxu0 0
    %7557 = vmatpush1.bf16.msra.mxu0 %v7485
    %7558 = vmatprep.subr.bf16.mxu0 0
    %7559 = vmatpush1.bf16.msra.mxu0 %v7486
    %7560 = vmatprep.subr.bf16.mxu0 0
    %7561 = vmatpush1.bf16.msra.mxu0 %v7487
    %7562 = vmatprep.subr.bf16.mxu0 0
    %7563 = vmatpush1.bf16.msra.mxu0 %v7488
    %7564 = vmatprep.subr.bf16.mxu0 0
    %7565 = vmatpush1.bf16.msra.mxu0 %v7489
    %7566 = vmatprep.subr.bf16.mxu0 0
    %7567 = vmatpush1.bf16.msra.mxu0 %v7490
    %7568 = vmatprep.subr.bf16.mxu0 0
    %7569 = vmatpush1.bf16.msra.mxu0 %v7491
    %7570 = vmatprep.subr.bf16.mxu0 0
    %7571 = vmatpush1.bf16.msra.mxu0 %v7492
    %7572 = vmatprep.subr.bf16.mxu0 0
    %7573 = vmatpush1.bf16.msra.mxu0 %v7493
    %7574 = vmatprep.mubr.bf16.mxu0 %v349
    %7575 = vmatmul.mubr.bf16.gmra.mrb[0].mxu0 %v342
    %v7576 = vpop.f32.mrb[0].mxu0
    %v7577 = vadd.f32 %v7345, %v7576
    %v7578 = vpop.f32.mrb[0].mxu0
    %v7579 = vpop.f32.mrb[0].mxu0
    %v7580 = vpop.f32.mrb[0].mxu0
    %7581 = vdwg.mxu0
    %7582 = vmatprep.subr.bf16.mxu0 0
    %7583 = vmatpush1.bf16.msra.mxu0 %v7494
    %7584 = vmatprep.subr.bf16.mxu0 0
    %7585 = vmatpush1.bf16.msra.mxu0 %v7495
    %7586 = vmatprep.subr.bf16.mxu0 0
    %7587 = vmatpush1.bf16.msra.mxu0 %v7496
    %7588 = vmatprep.subr.bf16.mxu0 0
    %7589 = vmatpush1.bf16.msra.mxu0 %v7497
    %7590 = vmatprep.subr.bf16.mxu0 0
    %7591 = vmatpush1.bf16.msra.mxu0 %v7498
    %7592 = vmatprep.subr.bf16.mxu0 0
    %7593 = vmatpush1.bf16.msra.mxu0 %v7499
    %7594 = vmatprep.subr.bf16.mxu0 0
    %7595 = vmatpush1.bf16.msra.mxu0 %v7500
    %7596 = vmatprep.subr.bf16.mxu0 0
    %7597 = vmatpush1.bf16.msra.mxu0 %v7501
    %7598 = vmatprep.subr.bf16.mxu0 0
    %7599 = vmatpush1.bf16.msra.mxu0 %v7502
    %7600 = vmatprep.subr.bf16.mxu0 0
    %7601 = vmatpush1.bf16.msra.mxu0 %v7503
    %7602 = vmatprep.subr.bf16.mxu0 0
    %7603 = vmatpush1.bf16.msra.mxu0 %v7504
    %7604 = vmatprep.subr.bf16.mxu0 0
    %7605 = vmatpush1.bf16.msra.mxu0 %v7505
    %7606 = vmatprep.subr.bf16.mxu0 0
    %7607 = vmatpush1.bf16.msra.mxu0 %v7506
    %7608 = vmatprep.subr.bf16.mxu0 0
    %7609 = vmatpush1.bf16.msra.mxu0 %v7507
    %7610 = vmatprep.subr.bf16.mxu0 0
    %7611 = vmatpush1.bf16.msra.mxu0 %v7508
    %7612 = vmatprep.subr.bf16.mxu0 0
    %7613 = vmatpush1.bf16.msra.mxu0 %v7509
    %7614 = vmatprep.mubr.bf16.mxu0 %v351
    %7615 = vmatmul.mubr.bf16.gmra.mrb[0].mxu0 %v350
    %v7616 = vpop.f32.mrb[0].mxu0
    %v7617 = vadd.f32 %v7577, %v7616
    %v7618 = vpop.f32.mrb[0].mxu0
    %v7619 = vpop.f32.mrb[0].mxu0
    %v7620 = vpop.f32.mrb[0].mxu0
    %7621 = vdwg.mxu0
    %v7622 = vld [vmem:[%s77] sm:$0xf]
    %v7623 = vld [vmem:[%s77 + $0x4] sm:$0xf]
    %v7624 = vld [vmem:[%s77 + $0x8] sm:$0xf]
    %v7625 = vld [vmem:[%s77 + $0xc] sm:$0xf]
    %v7626 = vld [vmem:[%s77 + $0x10] sm:$0xf]
    %v7627 = vld [vmem:[%s77 + $0x14] sm:$0xf]
    %v7628 = vld [vmem:[%s77 + $0x18] sm:$0xf]
    %v7629 = vld [vmem:[%s77 + $0x1c] sm:$0xf]
    %v7630 = vld [vmem:[%s77 + $0x20] sm:$0xf]
    %v7631 = vld [vmem:[%s77 + $0x24] sm:$0xf]
    %v7632 = vld [vmem:[%s77 + $0x28] sm:$0xf]
    %v7633 = vld [vmem:[%s77 + $0x2c] sm:$0xf]
    %v7634 = vld [vmem:[%s77 + $0x30] sm:$0xf]
    %v7635 = vld [vmem:[%s77 + $0x34] sm:$0xf]
    %v7636 = vld [vmem:[%s77 + $0x38] sm:$0xf]
    %v7637 = vld [vmem:[%s77 + $0x3c] sm:$0xf]
    %v7638 = vld [vmem:[%s77 + $0x40] sm:$0xf]
    %v7639 = vld [vmem:[%s77 + $0x44] sm:$0xf]
    %v7640 = vld [vmem:[%s77 + $0x48] sm:$0xf]
    %v7641 = vld [vmem:[%s77 + $0x4c] sm:$0xf]
    %v7642 = vld [vmem:[%s77 + $0x50] sm:$0xf]
    %v7643 = vld [vmem:[%s77 + $0x54] sm:$0xf]
    %v7644 = vld [vmem:[%s77 + $0x58] sm:$0xf]
    %v7645 = vld [vmem:[%s77 + $0x5c] sm:$0xf]
    %v7646 = vld [vmem:[%s77 + $0x60] sm:$0xf]
    %v7647 = vld [vmem:[%s77 + $0x64] sm:$0xf]
    %v7648 = vld [vmem:[%s77 + $0x68] sm:$0xf]
    %v7649 = vld [vmem:[%s77 + $0x6c] sm:$0xf]
    %v7650 = vld [vmem:[%s77 + $0x70] sm:$0xf]
    %v7651 = vld [vmem:[%s77 + $0x74] sm:$0xf]
    %v7652 = vld [vmem:[%s77 + $0x78] sm:$0xf]
    %v7653 = vld [vmem:[%s77 + $0x7c] sm:$0xf]
    %v7686 = vunpack.c.l.b16 %v7622
    %v7687 = vunpack.c.l.b16 %v7623
    %v7688 = vunpack.c.l.b16 %v7624
    %v7689 = vunpack.c.l.b16 %v7625
    %v7690 = vunpack.c.l.b16 %v7626
    %v7691 = vunpack.c.l.b16 %v7627
    %v7692 = vunpack.c.l.b16 %v7628
    %v7693 = vunpack.c.l.b16 %v7629
    %v7694 = vunpack.c.l.b16 %v7630
    %v7695 = vunpack.c.l.b16 %v7631
    %v7696 = vunpack.c.l.b16 %v7632
    %v7697 = vunpack.c.l.b16 %v7633
    %v7698 = vunpack.c.l.b16 %v7634
    %v7699 = vunpack.c.l.b16 %v7635
    %v7700 = vunpack.c.l.b16 %v7636
    %v7701 = vunpack.c.l.b16 %v7637
    %v7702 = vunpack.c.l.b16 %v7638
    %v7703 = vunpack.c.l.b16 %v7639
    %v7704 = vunpack.c.l.b16 %v7640
    %v7705 = vunpack.c.l.b16 %v7641
    %v7706 = vunpack.c.l.b16 %v7642
    %v7707 = vunpack.c.l.b16 %v7643
    %v7708 = vunpack.c.l.b16 %v7644
    %v7709 = vunpack.c.l.b16 %v7645
    %v7710 = vunpack.c.l.b16 %v7646
    %v7711 = vunpack.c.l.b16 %v7647
    %v7712 = vunpack.c.l.b16 %v7648
    %v7713 = vunpack.c.l.b16 %v7649
    %v7714 = vunpack.c.l.b16 %v7650
    %v7715 = vunpack.c.l.b16 %v7651
    %v7716 = vunpack.c.l.b16 %v7652
    %v7717 = vunpack.c.l.b16 %v7653
    %v7718 = vpack.c.b16 %v7687, %v7686
    %v7719 = vpack.c.b16 %v7689, %v7688
    %v7720 = vpack.c.b16 %v7691, %v7690
    %v7721 = vpack.c.b16 %v7693, %v7692
    %v7722 = vpack.c.b16 %v7695, %v7694
    %v7723 = vpack.c.b16 %v7697, %v7696
    %v7724 = vpack.c.b16 %v7699, %v7698
    %v7725 = vpack.c.b16 %v7701, %v7700
    %v7726 = vpack.c.b16 %v7703, %v7702
    %v7727 = vpack.c.b16 %v7705, %v7704
    %v7728 = vpack.c.b16 %v7707, %v7706
    %v7729 = vpack.c.b16 %v7709, %v7708
    %v7730 = vpack.c.b16 %v7711, %v7710
    %v7731 = vpack.c.b16 %v7713, %v7712
    %v7732 = vpack.c.b16 %v7715, %v7714
    %v7733 = vpack.c.b16 %v7717, %v7716
    %7750 = vmatprep.subr.bf16.mxu0 0
    %7751 = vmatpush1.bf16.msra.mxu0 %v7718
    %7752 = vmatprep.subr.bf16.mxu0 0
    %7753 = vmatpush1.bf16.msra.mxu0 %v7719
    %7754 = vmatprep.subr.bf16.mxu0 0
    %7755 = vmatpush1.bf16.msra.mxu0 %v7720
    %7756 = vmatprep.subr.bf16.mxu0 0
    %7757 = vmatpush1.bf16.msra.mxu0 %v7721
    %7758 = vmatprep.subr.bf16.mxu0 0
    %7759 = vmatpush1.bf16.msra.mxu0 %v7722
    %7760 = vmatprep.subr.bf16.mxu0 0
    %7761 = vmatpush1.bf16.msra.mxu0 %v7723
    %7762 = vmatprep.subr.bf16.mxu0 0
    %7763 = vmatpush1.bf16.msra.mxu0 %v7724
    %7764 = vmatprep.subr.bf16.mxu0 0
    %7765 = vmatpush1.bf16.msra.mxu0 %v7725
    %7766 = vmatprep.subr.bf16.mxu0 0
    %7767 = vmatpush1.bf16.msra.mxu0 %v7726
    %7768 = vmatprep.subr.bf16.mxu0 0
    %7769 = vmatpush1.bf16.msra.mxu0 %v7727
    %7770 = vmatprep.subr.bf16.mxu0 0
    %7771 = vmatpush1.bf16.msra.mxu0 %v7728
    %7772 = vmatprep.subr.bf16.mxu0 0
    %7773 = vmatpush1.bf16.msra.mxu0 %v7729
    %7774 = vmatprep.subr.bf16.mxu0 0
    %7775 = vmatpush1.bf16.msra.mxu0 %v7730
    %7776 = vmatprep.subr.bf16.mxu0 0
    %7777 = vmatpush1.bf16.msra.mxu0 %v7731
    %7778 = vmatprep.subr.bf16.mxu0 0
    %7779 = vmatpush1.bf16.msra.mxu0 %v7732
    %7780 = vmatprep.subr.bf16.mxu0 0
    %7781 = vmatpush1.bf16.msra.mxu0 %v7733
    %7782 = vmatprep.mubr.bf16.mxu0 %v5789
    %7783 = vmatmul.mubr.bf16.gmra.mrb[0].mxu0 %v5788
    %v7784 = vpop.f32.mrb[0].mxu0
    %v7785 = vadd.f32 0.0, %v7784
    %v7786 = vpop.f32.mrb[0].mxu0
    %v7787 = vpop.f32.mrb[0].mxu0
    %v7788 = vpop.f32.mrb[0].mxu0
    %7789 = vdwg.mxu0
    %v7790 = vadd.f32 %v7617, %v7785
    %v7791 = vld [vmem:[%s79] sm:$0xf]
    %v7792 = vld [vmem:[%s79 + $0x4] sm:$0xf]
    %v7793 = vld [vmem:[%s79 + $0x8] sm:$0xf]
    %v7794 = vld [vmem:[%s79 + $0xc] sm:$0xf]
    %v7795 = vld [vmem:[%s79 + $0x10] sm:$0xf]
    %v7796 = vld [vmem:[%s79 + $0x14] sm:$0xf]
    %v7797 = vld [vmem:[%s79 + $0x18] sm:$0xf]
    %v7798 = vld [vmem:[%s79 + $0x1c] sm:$0xf]
    %v7799 = vld [vmem:[%s79 + $0x20] sm:$0xf]
    %v7800 = vld [vmem:[%s79 + $0x24] sm:$0xf]
    %v7801 = vld [vmem:[%s79 + $0x28] sm:$0xf]
    %v7802 = vld [vmem:[%s79 + $0x2c] sm:$0xf]
    %v7803 = vld [vmem:[%s79 + $0x30] sm:$0xf]
    %v7804 = vld [vmem:[%s79 + $0x34] sm:$0xf]
    %v7805 = vld [vmem:[%s79 + $0x38] sm:$0xf]
    %v7806 = vld [vmem:[%s79 + $0x3c] sm:$0xf]
    %v7823 = vunpack.c.l.b16 %v7791
    %v7824 = vunpack.c.l.b16 %v7792
    %v7825 = vunpack.c.l.b16 %v7793
    %v7826 = vunpack.c.l.b16 %v7794
    %v7827 = vunpack.c.l.b16 %v7795
    %v7828 = vunpack.c.l.b16 %v7796
    %v7829 = vunpack.c.l.b16 %v7797
    %v7830 = vunpack.c.l.b16 %v7798
    %v7831 = vunpack.c.l.b16 %v7799
    %v7832 = vunpack.c.l.b16 %v7800
    %v7833 = vunpack.c.l.b16 %v7801
    %v7834 = vunpack.c.l.b16 %v7802
    %v7835 = vunpack.c.l.b16 %v7803
    %v7836 = vunpack.c.l.b16 %v7804
    %v7837 = vunpack.c.l.b16 %v7805
    %v7838 = vunpack.c.l.b16 %v7806
    %v7839 = vpack.c.b16 %v7824, %v7823
    %v7840 = vpack.c.b16 %v7826, %v7825
    %v7841 = vpack.c.b16 %v7828, %v7827
    %v7842 = vpack.c.b16 %v7830, %v7829
    %v7843 = vpack.c.b16 %v7832, %v7831
    %v7844 = vpack.c.b16 %v7834, %v7833
    %v7845 = vpack.c.b16 %v7836, %v7835
    %v7846 = vpack.c.b16 %v7838, %v7837
    %7855 = vmatprep.subr.bf16.mxu0 0
    %7856 = vmatpush1.bf16.msra.mxu0 %v7839
    %7857 = vmatprep.subr.bf16.mxu0 0
    %7858 = vmatpush1.bf16.msra.mxu0 %v7840
    %7859 = vmatprep.subr.bf16.mxu0 0
    %7860 = vmatpush1.bf16.msra.mxu0 %v7841
    %7861 = vmatprep.subr.bf16.mxu0 0
    %7862 = vmatpush1.bf16.msra.mxu0 %v7842
    %7863 = vmatprep.subr.bf16.mxu0 0
    %7864 = vmatpush1.bf16.msra.mxu0 %v7843
    %7865 = vmatprep.subr.bf16.mxu0 0
    %7866 = vmatpush1.bf16.msra.mxu0 %v7844
    %7867 = vmatprep.subr.bf16.mxu0 0
    %7868 = vmatpush1.bf16.msra.mxu0 %v7845
    %7869 = vmatprep.subr.bf16.mxu0 0
    %7870 = vmatpush1.bf16.msra.mxu0 %v7846
    %7871 = vmatprep.subr.bf16.mxu0 0
    %7872 = vmatpush1.bf16.msra.mxu0 0
    %7873 = vmatprep.subr.bf16.mxu0 0
    %7874 = vmatpush1.bf16.msra.mxu0 0
    %7875 = vmatprep.subr.bf16.mxu0 0
    %7876 = vmatpush1.bf16.msra.mxu0 0
    %7877 = vmatprep.subr.bf16.mxu0 0
    %7878 = vmatpush1.bf16.msra.mxu0 0
    %7879 = vmatprep.subr.bf16.mxu0 0
    %7880 = vmatpush1.bf16.msra.mxu0 0
    %7881 = vmatprep.subr.bf16.mxu0 0
    %7882 = vmatpush1.bf16.msra.mxu0 0
    %7883 = vmatprep.subr.bf16.mxu0 0
    %7884 = vmatpush1.bf16.msra.mxu0 0
    %7885 = vmatprep.subr.bf16.mxu0 0
    %7886 = vmatpush1.bf16.msra.mxu0 0
    %7887 = vmatprep.mubr.bf16.mxu0 0
    %7888 = vmatmul.mubr.bf16.gmra.mrb[0].mxu0 %v6476
    %v7889 = vpop.f32.mrb[0].mxu0
    %v7890 = vadd.f32 0.0, %v7889
    %v7891 = vpop.f32.mrb[0].mxu0
    %v7892 = vpop.f32.mrb[0].mxu0
    %v7893 = vpop.f32.mrb[0].mxu0
    %7894 = vdwg.mxu0
    %v7895 = vadd.f32 %v7790, %v7890
    %v7896 = vld [vmem:[%s81] sm:$0xf]
    %v7897 = vld [vmem:[%s81 + $0x4] sm:$0xf]
    %v7898 = vld [vmem:[%s81 + $0x8] sm:$0xf]
    %v7899 = vld [vmem:[%s81 + $0xc] sm:$0xf]
    %v7900 = vld [vmem:[%s81 + $0x10] sm:$0xf]
    %v7901 = vld [vmem:[%s81 + $0x14] sm:$0xf]
    %v7902 = vld [vmem:[%s81 + $0x18] sm:$0xf]
    %v7903 = vld [vmem:[%s81 + $0x1c] sm:$0xf]
    %v7912 = vunpack.c.l.b16 %v7896
    %v7913 = vunpack.c.l.b16 %v7897
    %v7914 = vunpack.c.l.b16 %v7898
    %v7915 = vunpack.c.l.b16 %v7899
    %v7916 = vunpack.c.l.b16 %v7900
    %v7917 = vunpack.c.l.b16 %v7901
    %v7918 = vunpack.c.l.b16 %v7902
    %v7919 = vunpack.c.l.b16 %v7903
    %v7920 = vpack.c.b16 %v7913, %v7912
    %v7921 = vpack.c.b16 %v7915, %v7914
    %v7922 = vpack.c.b16 %v7917, %v7916
    %v7923 = vpack.c.b16 %v7919, %v7918
    %v7929 = vsel %vm6629, %v6949, 0
    %7931 = vmatprep.subr.bf16.mxu0 0
    %7932 = vmatpush1.bf16.msra.mxu0 %v7920
    %7933 = vmatprep.subr.bf16.mxu0 0
    %7934 = vmatpush1.bf16.msra.mxu0 %v7921
    %7935 = vmatprep.subr.bf16.mxu0 0
    %7936 = vmatpush1.bf16.msra.mxu0 %v7922
    %7937 = vmatprep.subr.bf16.mxu0 0
    %7938 = vmatpush1.bf16.msra.mxu0 %v7923
    %7939 = vmatprep.subr.bf16.mxu0 0
    %7940 = vmatpush1.bf16.msra.mxu0 0
    %7941 = vmatprep.subr.bf16.mxu0 0
    %7942 = vmatpush1.bf16.msra.mxu0 0
    %7943 = vmatprep.subr.bf16.mxu0 0
    %7944 = vmatpush1.bf16.msra.mxu0 0
    %7945 = vmatprep.subr.bf16.mxu0 0
    %7946 = vmatpush1.bf16.msra.mxu0 0
    %7947 = vmatprep.subr.bf16.mxu0 0
    %7948 = vmatpush1.bf16.msra.mxu0 0
    %7949 = vmatprep.subr.bf16.mxu0 0
    %7950 = vmatpush1.bf16.msra.mxu0 0
    %7951 = vmatprep.subr.bf16.mxu0 0
    %7952 = vmatpush1.bf16.msra.mxu0 0
    %7953 = vmatprep.subr.bf16.mxu0 0
    %7954 = vmatpush1.bf16.msra.mxu0 0
    %7955 = vmatprep.subr.bf16.mxu0 0
    %7956 = vmatpush1.bf16.msra.mxu0 0
    %7957 = vmatprep.subr.bf16.mxu0 0
    %7958 = vmatpush1.bf16.msra.mxu0 0
    %7959 = vmatprep.subr.bf16.mxu0 0
    %7960 = vmatpush1.bf16.msra.mxu0 0
    %7961 = vmatprep.subr.bf16.mxu0 0
    %7962 = vmatpush1.bf16.msra.mxu0 0
    %7963 = vmatprep.mubr.bf16.mxu0 0
    %7964 = vmatmul.mubr.bf16.gmra.mrb[0].mxu0 %v7929
    %v7965 = vpop.f32.mrb[0].mxu0
    %v7966 = vadd.f32 0.0, %v7965
    %v7967 = vpop.f32.mrb[0].mxu0
    %v7968 = vpop.f32.mrb[0].mxu0
    %v7969 = vpop.f32.mrb[0].mxu0
    %7970 = vdwg.mxu0
    %v7971 = vadd.f32 %v7895, %v7966
    %v7972 = vld [vmem:[%s83] sm:$0x1]
    %v7974 = vlaneseq
    %v7975 = vshrl.u32 %v7974, 7
    %v7976 = vsub.s32 0, %v7975
    %v7977 = vrot.slane %v7972, %v7976
    %v7979 = vadd.f32 %v7971, %v7977
    %vm7980 = vcmask 50176
    %7981 = vst.msk [vmem:[#allocation2] sm:$0x3] %vm7980, %v7979
    // Predicated region
    $region170: #{_lambda_.3} parent=1 // pred_check
      _
    $region171: #{_lambda_.3} parent=1 // pred_check_branch
      %7983 = sbr.rel (0) target = $region173
    $region172: #{_lambda_.3} parent=1 // pred_region
      %s7985 = ssub.s32 32, 32
      %7986 = vsyncadd [#allocation3], %s7985
      %s7988 = sshll.u32 [#allocation2], 4
      %s7989 = int_to_ptr.vmem [resolvable:$true] %s7988
      %7991 = dma.vmem_to_hbm [thread:$0]  %s7989, 32, %s85, [#allocation3]
    $region173: #{_lambda_.3} parent=1 // pred_fallthru
      _
    // Predicated region
    $region174: #{_lambda_.3} parent=1 // pred_check
      _
    $region175: #{_lambda_.3} parent=1 // pred_check_branch
      %7993 = sbr.rel (0) target = $region177
    $region176: #{_lambda_.3} parent=1 // pred_region
      %7994 = dma.done [#allocation3], 32
    $region177: #{_lambda_.3} parent=1 // pred_fallthru
      _
    %7995 = vsyncpa [#allocation3], 1

</llo_original>
